<compile_context>
chip_gen: v7x
topology: tpu7x:2x2x1
jax: 0.10.0
libtpu: 0.0.40
codegen_flags: <defaults>
</compile_context>

<pallas_src>
import functools

import jax
import jax.numpy as jnp
from jax.experimental import pallas as pl
from jax.experimental.pallas import tpu as pltpu


# ---------------------------------------------------------------------------
# The fused whole-network kernel (one grid step == one batch element).
# ---------------------------------------------------------------------------

def _fused_kernel(x_col_ref,
                  c1w_ref, c1b_ref, s1w1_ref, s1b1_ref, s1w2_ref, s1b2_ref,
                  c2w_ref, c2b_ref, s2w1_ref, s2b1_ref, s2w2_ref, s2b2_ref,
                  c3w_ref, c3b_ref, s3w1_ref, s3b1_ref, s3w2_ref, s3b2_ref,
                  f1w_ref, f1b_ref, f2w_ref, f2b_ref,
                  out_ref, *, h4, w4):
    f32 = jnp.float32
    bf16 = jnp.bfloat16

    m_grp = h4 * w4            # pixels per parity group of the pooled grids
    m_pool1 = 4 * m_grp        # block-1 pooled pixels (H/2 * W/2)
    m_full1 = 4 * m_pool1      # block-1 full-res pixels (H * W)

    c1 = c1w_ref.shape[-1]     # 64
    c2 = c2w_ref.shape[-1]     # 128

    def se_scale(s, w1_ref, b1_ref, w2_ref, b2_ref):
        # SEBlock MLP: sigmoid(W2 relu(W1 s + b1) + b2); strictly positive.
        h = jnp.dot(s, w1_ref[...], preferred_element_type=f32) + b1_ref[...]
        h = jnp.maximum(h, 0.0)
        z = jnp.dot(h, w2_ref[...], preferred_element_type=f32) + b2_ref[...]
        return 1.0 / (1.0 + jnp.exp(-z))                       # (1, C)

    # ---------------- block 1: conv(1->64) + bias + ReLU ---------------------
    # x_col rows are pre-ordered: [pool phase (a,b)] x [parity group] x [pixel].
    xc = x_col_ref[0]                                          # (m_full1, 9) bf16
    y1 = jnp.dot(xc, c1w_ref[...], preferred_element_type=f32) # one MXU dot
    y1 = jnp.maximum(y1 + c1b_ref[...], 0.0)                   # (m_full1, 64)
    s1 = jnp.sum(y1, axis=0, keepdims=True) * (1.0 / m_full1)  # SE avg-pool
    # 2x2/2 maxpool == max over the 4 pool-phase chunks (contiguous rows).
    p1 = jnp.maximum(jnp.maximum(y1[0 * m_pool1:1 * m_pool1],
                                 y1[1 * m_pool1:2 * m_pool1]),
                     jnp.maximum(y1[2 * m_pool1:3 * m_pool1],
                                 y1[3 * m_pool1:4 * m_pool1]))  # (m_pool1, 64)
    # SE1 scale applied ONCE to the pooled map, then one bf16 cast.
    p1 = (p1 * se_scale(s1, s1w1_ref, s1b1_ref, s1w2_ref, s1b2_ref)).astype(bf16)

    # Pooled rows are pre-grouped by parity (ee, eo, oe, oo) so the zero-padded
    # parity views block 2 needs are built with contiguous slices/concats only.
    chunks = [p1[g * m_grp:(g + 1) * m_grp].reshape(h4, w4, c1) for g in range(4)]

    def pad_part(chunk, row_hi, col_hi):
        cdim = chunk.shape[-1]
        zr = jnp.zeros((1, w4, cdim), chunk.dtype)
        t = jnp.concatenate([chunk, zr] if row_hi else [zr, chunk], axis=0)
        zc = jnp.zeros((h4 + 1, 1, cdim), chunk.dtype)
        return jnp.concatenate([t, zc] if col_hi else [zc, t], axis=1)

    # parts[(rp, cq)][i, j, :] == zero-padded block-2 input at pixel (2i+rp, 2j+cq)
    parts = {(1, 1): pad_part(chunks[0], True, True),
             (1, 0): pad_part(chunks[1], True, False),
             (0, 1): pad_part(chunks[2], False, True),
             (0, 0): pad_part(chunks[3], False, False)}

    # ---------------- block 2: conv(64->128) + ReLU + SE + maxpool -----------
    # K-concatenated im2col slab, 4 pool phases stacked along M: ONE MXU dot.
    phase_rows = []
    for a in (0, 1):
        for b in (0, 1):
            cols = []
            for dy in range(3):
                for dx in range(3):
                    rp, i0 = (a + dy) % 2, (a + dy) // 2
                    cq, j0 = (b + dx) % 2, (b + dx) // 2
                    piece = parts[(rp, cq)][i0:i0 + h4, j0:j0 + w4, :]
                    cols.append(piece.reshape(m_grp, c1))
            phase_rows.append(jnp.concatenate(cols, axis=-1))  # (m_grp, 9*c1)
    slab2 = jnp.concatenate(phase_rows, axis=0)                # (4*m_grp, 9*c1)
    y2 = jnp.dot(slab2, c2w_ref[...], preferred_element_type=f32)
    y2 = jnp.maximum(y2 + c2b_ref[...], 0.0)                   # (4*m_grp, 128)
    s2 = jnp.sum(y2, axis=0, keepdims=True) * (1.0 / (4 * m_grp))
    p2 = jnp.maximum(jnp.maximum(y2[0 * m_grp:1 * m_grp], y2[1 * m_grp:2 * m_grp]),
                     jnp.maximum(y2[2 * m_grp:3 * m_grp], y2[3 * m_grp:4 * m_grp]))
    p2 = (p2 * se_scale(s2, s2w1_ref, s2b1_ref, s2w2_ref, s2b2_ref)).astype(bf16)

    # ---------------- block 3: conv(128->256) + ReLU (no pool) ---------------
    p2 = p2.reshape(h4, w4, c2)                                # row-major (R, C)
    zr = jnp.zeros((1, w4, c2), bf16)
    p2p = jnp.concatenate([zr, p2, zr], axis=0)                # (h4+2, w4, c2)
    zc = jnp.zeros((h4 + 2, 1, c2), bf16)
    p2p = jnp.concatenate([zc, p2p, zc], axis=1)               # (h4+2, w4+2, c2)
    cols = []
    for dy in range(3):
        for dx in range(3):
            cols.append(p2p[dy:dy + h4, dx:dx + w4, :].reshape(m_grp, c2))
    slab3 = jnp.concatenate(cols, axis=-1)                     # (m_grp, 9*c2), 128-aligned
    y3 = jnp.dot(slab3, c3w_ref[...], preferred_element_type=f32)
    y3 = jnp.maximum(y3 + c3b_ref[...], 0.0)                   # (m_grp, 256)
    s3 = jnp.sum(y3, axis=0, keepdims=True) * (1.0 / m_grp)    # (1, 256)

    # ---------------- SE3 + AdaptiveAvgPool(1) + classifier head -------------
    feat = s3 * se_scale(s3, s3w1_ref, s3b1_ref, s3w2_ref, s3b2_ref)
    # TODO(synk): nn.Dropout(0.3) omitted -- eval/inference semantics (identity).
    hid = jnp.maximum(jnp.dot(feat, f1w_ref[...], preferred_element_type=f32)
                      + f1b_ref[...], 0.0)
    logits = jnp.dot(hid, f2w_ref[...], preferred_element_type=f32) + f2b_ref[...]
    out_ref[...] = logits.reshape(1, 1, logits.shape[-1])


# ---------------------------------------------------------------------------
# Host-side prep: tiny im2col of the RAW input only (8 KB at 32x32).  Rows are
# ordered [pool phase (a,b)] x [parity group (dr,dc)] x [(i,j) row-major] so
# that the kernel's pooling and the block-1 -> block-2 hand-off use only
# contiguous slices.  Columns follow tap order t = dy*3 + dx (HWIO weights).
# ---------------------------------------------------------------------------

def _build_input_im2col(x, h, w):
    n = x.shape[0]
    h4, w4 = h // 4, w // 4
    xp = jnp.pad(x, ((0, 0), (1, 1), (1, 1)))                  # (N, H+2, W+2)
    groups = []
    for a in (0, 1):
        for b in (0, 1):
            for dr in (0, 1):
                for dc in (0, 1):
                    taps = []
                    for dy in range(3):
                        for dx in range(3):
                            r0 = 2 * dr + a + dy
                            c0 = 2 * dc + b + dx
                            sl = jax.lax.slice(
                                xp, (0, r0, c0),
                                (n, r0 + 4 * (h4 - 1) + 1, c0 + 4 * (w4 - 1) + 1),
                                (1, 4, 4))                      # (N, h4, w4)
                            taps.append(sl.reshape(n, h4 * w4))
                    groups.append(jnp.stack(taps, axis=-1))     # (N, h4*w4, 9)
    return jnp.concatenate(groups, axis=1).astype(jnp.bfloat16)  # (N, H*W, 9)


# ---------------------------------------------------------------------------
# Forward wrapper: one pallas_call for the whole network.
# ---------------------------------------------------------------------------

def multiclass_cnn3_forward(params, x_nchw):
    n, cin, h, w = x_nchw.shape
    assert cin == 1, "kernel is specialized for in_channels=1"
    assert h % 4 == 0 and w % 4 == 0, "needs H, W divisible by 4 (two 2x2 pools)"
    h4, w4 = h // 4, w // 4

    x_col = _build_input_im2col(x_nchw[:, 0].astype(jnp.float32), h, w)

    p = params
    operands = [
        x_col,
        p["conv1"]["w"], p["conv1"]["b"],
        p["se1"]["w1"], p["se1"]["b1"], p["se1"]["w2"], p["se1"]["b2"],
        p["conv2"]["w"], p["conv2"]["b"],
        p["se2"]["w1"], p["se2"]["b1"], p["se2"]["w2"], p["se2"]["b2"],
        p["conv3"]["w"], p["conv3"]["b"],
        p["se3"]["w1"], p["se3"]["b1"], p["se3"]["w2"], p["se3"]["b2"],
        p["fc1"]["w"], p["fc1"]["b"], p["fc2"]["w"], p["fc2"]["b"],
    ]
    in_specs = [pl.BlockSpec((1, h * w, 9), lambda i: (i, 0, 0))]
    in_specs += [pl.BlockSpec(op.shape, lambda i: (0, 0)) for op in operands[1:]]

    ncls = p["fc2"]["w"].shape[-1]
    c1 = p["conv1"]["w"].shape[-1]
    c2 = p["conv2"]["w"].shape[-1]
    c3 = p["conv3"]["w"].shape[-1]

    flops = 2 * n * (h * w * 9 * 1 * c1
                     + (h * w // 4) * 9 * c1 * c2
                     + (h * w // 16) * 9 * c2 * c3
                     + c3 * p["fc1"]["w"].shape[-1]
                     + p["fc1"]["w"].shape[-1] * ncls)
    bytes_accessed = sum(int(op.size) * op.dtype.itemsize for op in operands)
    bytes_accessed += n * ncls * 4
    transcendentals = n * (c1 + c2 + c3)

    out = pl.pallas_call(
        functools.partial(_fused_kernel, h4=h4, w4=w4),
        out_shape=jax.ShapeDtypeStruct((n, 1, ncls), jnp.float32),
        grid_spec=pltpu.PrefetchScalarGridSpec(
            num_scalar_prefetch=0,
            grid=(n,),
            in_specs=in_specs,
            out_specs=pl.BlockSpec((1, 1, ncls), lambda i: (i, 0, 0))),
        compiler_params=pltpu.CompilerParams(
            dimension_semantics=("parallel",)),
        cost_estimate=pl.CostEstimate(
            flops=int(flops),
            transcendentals=int(transcendentals),
            bytes_accessed=int(bytes_accessed)),
    )(*operands)
    return out.reshape(n, ncls)


# ---------------------------------------------------------------------------
# Deterministic synthetic parameters (same structure as the PyTorch module).
# Conv weights stored HWIO-reshaped to (9*cin, cout): row = (dy*3+dx)*cin + ci,
# matching the kernel's K-concatenated im2col column order.
# ---------------------------------------------------------------------------

def init_params(key, in_channels=1, num_classes=3):
    keys = iter(jax.random.split(key, 32))

    def conv_p(cin, cout):
        wgt = jax.random.normal(next(keys), (3, 3, cin, cout), jnp.float32)
        wgt = wgt / jnp.sqrt(9.0 * cin)
        b = jax.random.normal(next(keys), (1, cout), jnp.float32) * 0.01
        return {"w": wgt.reshape(9 * cin, cout).astype(jnp.bfloat16), "b": b}

    def lin_p(din, dout):
        wgt = jax.random.normal(next(keys), (din, dout), jnp.float32)
        wgt = wgt / jnp.sqrt(float(din))
        b = jax.random.normal(next(keys), (1, dout), jnp.float32) * 0.01
        return {"w": wgt, "b": b}

    def se_p(c, reduction=16):
        a, b = lin_p(c, c // reduction), lin_p(c // reduction, c)
        return {"w1": a["w"], "b1": a["b"], "w2": b["w"], "b2": b["b"]}

    return {
        "conv1": conv_p(in_channels, 64),  "se1": se_p(64),
        "conv2": conv_p(64, 128),          "se2": se_p(128),
        "conv3": conv_p(128, 256),         "se3": se_p(256),
        "fc1": lin_p(256, 128),            "fc2": lin_p(128, num_classes),
    }


if __name__ == "__main__":
    key = jax.random.PRNGKey(0)
    pkey, xkey = jax.random.split(key)
    N, C, H, W = 2, 1, 32, 32
    params = init_params(pkey, in_channels=C)
    x = jax.random.normal(xkey, (N, C, H, W), jnp.float32)

    fwd = jax.jit(multiclass_cnn3_forward)
    out = fwd(params, x)
    jax.block_until_ready(out)

    assert out.shape == (N, 3), out.shape
    assert bool(jnp.all(jnp.isfinite(out)))
    print("KERNEL_OK")
</pallas_src>

<mosaic_0001>
module attributes {stable_mosaic.version = 11 : i64} {
  func.func @_fused_kernel(%arg0: i32, %arg1: memref<1x1024x9xbf16, #tpu.memory_space<vmem>>, %arg2: memref<9x64xbf16, #tpu.memory_space<vmem>>, %arg3: memref<1x64xf32, #tpu.memory_space<vmem>>, %arg4: memref<64x4xf32, #tpu.memory_space<vmem>>, %arg5: memref<1x4xf32, #tpu.memory_space<vmem>>, %arg6: memref<4x64xf32, #tpu.memory_space<vmem>>, %arg7: memref<1x64xf32, #tpu.memory_space<vmem>>, %arg8: memref<576x128xbf16, #tpu.memory_space<vmem>>, %arg9: memref<1x128xf32, #tpu.memory_space<vmem>>, %arg10: memref<128x8xf32, #tpu.memory_space<vmem>>, %arg11: memref<1x8xf32, #tpu.memory_space<vmem>>, %arg12: memref<8x128xf32, #tpu.memory_space<vmem>>, %arg13: memref<1x128xf32, #tpu.memory_space<vmem>>, %arg14: memref<1152x256xbf16, #tpu.memory_space<vmem>>, %arg15: memref<1x256xf32, #tpu.memory_space<vmem>>, %arg16: memref<256x16xf32, #tpu.memory_space<vmem>>, %arg17: memref<1x16xf32, #tpu.memory_space<vmem>>, %arg18: memref<16x256xf32, #tpu.memory_space<vmem>>, %arg19: memref<1x256xf32, #tpu.memory_space<vmem>>, %arg20: memref<256x128xf32, #tpu.memory_space<vmem>>, %arg21: memref<1x128xf32, #tpu.memory_space<vmem>>, %arg22: memref<128x3xf32, #tpu.memory_space<vmem>>, %arg23: memref<1x3xf32, #tpu.memory_space<vmem>>, %arg24: memref<1x1x3xf32, #tpu.memory_space<vmem>>) attributes {dimension_semantics = [#tpu.dimension_semantics<parallel>], iteration_bounds = array<i64: 2>, scalar_prefetch = 0 : i64, scratch_operands = 0 : i64, tpu.core_type = #tpu.core_type<tc>, window_params = [{transform_indices = @transform_0, window_bounds = array<i64: 1, 1024, 9>}, {pipeline_mode = #tpu.pipeline_mode<synchronous>, transform_indices = @transform_1, window_bounds = array<i64: 9, 64>}, {pipeline_mode = #tpu.pipeline_mode<synchronous>, transform_indices = @transform_2, window_bounds = array<i64: 1, 64>}, {pipeline_mode = #tpu.pipeline_mode<synchronous>, transform_indices = @transform_3, window_bounds = array<i64: 64, 4>}, {pipeline_mode = #tpu.pipeline_mode<synchronous>, transform_indices = @transform_4, window_bounds = array<i64: 1, 4>}, {pipeline_mode = #tpu.pipeline_mode<synchronous>, transform_indices = @transform_5, window_bounds = array<i64: 4, 64>}, {pipeline_mode = #tpu.pipeline_mode<synchronous>, transform_indices = @transform_6, window_bounds = array<i64: 1, 64>}, {pipeline_mode = #tpu.pipeline_mode<synchronous>, transform_indices = @transform_7, window_bounds = array<i64: 576, 128>}, {pipeline_mode = #tpu.pipeline_mode<synchronous>, transform_indices = @transform_8, window_bounds = array<i64: 1, 128>}, {pipeline_mode = #tpu.pipeline_mode<synchronous>, transform_indices = @transform_9, window_bounds = array<i64: 128, 8>}, {pipeline_mode = #tpu.pipeline_mode<synchronous>, transform_indices = @transform_10, window_bounds = array<i64: 1, 8>}, {pipeline_mode = #tpu.pipeline_mode<synchronous>, transform_indices = @transform_11, window_bounds = array<i64: 8, 128>}, {pipeline_mode = #tpu.pipeline_mode<synchronous>, transform_indices = @transform_12, window_bounds = array<i64: 1, 128>}, {pipeline_mode = #tpu.pipeline_mode<synchronous>, transform_indices = @transform_13, window_bounds = array<i64: 1152, 256>}, {pipeline_mode = #tpu.pipeline_mode<synchronous>, transform_indices = @transform_14, window_bounds = array<i64: 1, 256>}, {pipeline_mode = #tpu.pipeline_mode<synchronous>, transform_indices = @transform_15, window_bounds = array<i64: 256, 16>}, {pipeline_mode = #tpu.pipeline_mode<synchronous>, transform_indices = @transform_16, window_bounds = array<i64: 1, 16>}, {pipeline_mode = #tpu.pipeline_mode<synchronous>, transform_indices = @transform_17, window_bounds = array<i64: 16, 256>}, {pipeline_mode = #tpu.pipeline_mode<synchronous>, transform_indices = @transform_18, window_bounds = array<i64: 1, 256>}, {pipeline_mode = #tpu.pipeline_mode<synchronous>, transform_indices = @transform_19, window_bounds = array<i64: 256, 128>}, {pipeline_mode = #tpu.pipeline_mode<synchronous>, transform_indices = @transform_20, window_bounds = array<i64: 1, 128>}, {pipeline_mode = #tpu.pipeline_mode<synchronous>, transform_indices = @transform_21, window_bounds = array<i64: 128, 3>}, {pipeline_mode = #tpu.pipeline_mode<synchronous>, transform_indices = @transform_22, window_bounds = array<i64: 1, 3>}, {transform_indices = @transform_23, window_bounds = array<i64: 1, 1, 3>}]} {
    %c0 = arith.constant 0 : index
    %c0_0 = arith.constant 0 : index
    %c0_1 = arith.constant 0 : index
    %0 = vector.load %arg1[%c0, %c0_0, %c0_1] : memref<1x1024x9xbf16, #tpu.memory_space<vmem>>, vector<1x1024x9xbf16>
    %1 = vector.shape_cast %0 : vector<1x1024x9xbf16> to vector<1024x9xbf16>
    %c0_2 = arith.constant 0 : index
    %c0_3 = arith.constant 0 : index
    %2 = vector.load %arg2[%c0_2, %c0_3] : memref<9x64xbf16, #tpu.memory_space<vmem>>, vector<9x64xbf16>
    %cst = arith.constant dense<0.000000e+00> : vector<1024x64xf32>
    %3 = tpu.matmul %1, %2, %cst {dimension_numbers = #tpu.dot_dimension_numbers<[1], [0], [0], [1], [0, 0, 1, 1], [], []>} : vector<1024x9xbf16>, vector<9x64xbf16>, vector<1024x64xf32> -> vector<1024x64xf32>
    %c0_4 = arith.constant 0 : index
    %c0_5 = arith.constant 0 : index
    %4 = vector.load %arg3[%c0_4, %c0_5] : memref<1x64xf32, #tpu.memory_space<vmem>>, vector<1x64xf32>
    %5 = vector.broadcast %4 : vector<1x64xf32> to vector<1024x64xf32>
    %6 = arith.addf %3, %5 : vector<1024x64xf32>
    %cst_6 = arith.constant 0.000000e+00 : f32
    %7 = vector.broadcast %cst_6 : f32 to vector<1024x64xf32>
    %8 = arith.maximumf %6, %7 : vector<1024x64xf32>
    %cst_7 = arith.constant dense<0.000000e+00> : vector<64xf32>
    %9 = vector.multi_reduction <add>, %8, %cst_7 [0] : vector<1024x64xf32> to vector<64xf32>
    %10 = vector.shape_cast %9 : vector<64xf32> to vector<1x64xf32>
    %cst_8 = arith.constant 9.765625E-4 : f32
    %11 = vector.broadcast %cst_8 : f32 to vector<1x64xf32>
    %12 = arith.mulf %10, %11 : vector<1x64xf32>
    %13 = vector.extract_strided_slice %8 {offsets = [0, 0], sizes = [256, 64], strides = [1, 1]} : vector<1024x64xf32> to vector<256x64xf32>
    %14 = vector.extract_strided_slice %8 {offsets = [256, 0], sizes = [256, 64], strides = [1, 1]} : vector<1024x64xf32> to vector<256x64xf32>
    %15 = arith.maximumf %13, %14 : vector<256x64xf32>
    %16 = vector.extract_strided_slice %8 {offsets = [512, 0], sizes = [256, 64], strides = [1, 1]} : vector<1024x64xf32> to vector<256x64xf32>
    %17 = vector.extract_strided_slice %8 {offsets = [768, 0], sizes = [256, 64], strides = [1, 1]} : vector<1024x64xf32> to vector<256x64xf32>
    %18 = arith.maximumf %16, %17 : vector<256x64xf32>
    %19 = arith.maximumf %15, %18 : vector<256x64xf32>
    %c0_9 = arith.constant 0 : index
    %c0_10 = arith.constant 0 : index
    %20 = vector.load %arg4[%c0_9, %c0_10] : memref<64x4xf32, #tpu.memory_space<vmem>>, vector<64x4xf32>
    %cst_11 = arith.constant dense<0.000000e+00> : vector<1x4xf32>
    %21 = tpu.matmul %12, %20, %cst_11 {dimension_numbers = #tpu.dot_dimension_numbers<[1], [0], [0], [1], [0, 0, 1, 1], [], []>} : vector<1x64xf32>, vector<64x4xf32>, vector<1x4xf32> -> vector<1x4xf32>
    %c0_12 = arith.constant 0 : index
    %c0_13 = arith.constant 0 : index
    %22 = vector.load %arg5[%c0_12, %c0_13] : memref<1x4xf32, #tpu.memory_space<vmem>>, vector<1x4xf32>
    %23 = arith.addf %21, %22 : vector<1x4xf32>
    %cst_14 = arith.constant 0.000000e+00 : f32
    %24 = vector.broadcast %cst_14 : f32 to vector<1x4xf32>
    %25 = arith.maximumf %23, %24 : vector<1x4xf32>
    %c0_15 = arith.constant 0 : index
    %c0_16 = arith.constant 0 : index
    %26 = vector.load %arg6[%c0_15, %c0_16] : memref<4x64xf32, #tpu.memory_space<vmem>>, vector<4x64xf32>
    %cst_17 = arith.constant dense<0.000000e+00> : vector<1x64xf32>
    %27 = tpu.matmul %25, %26, %cst_17 {dimension_numbers = #tpu.dot_dimension_numbers<[1], [0], [0], [1], [0, 0, 1, 1], [], []>} : vector<1x4xf32>, vector<4x64xf32>, vector<1x64xf32> -> vector<1x64xf32>
    %c0_18 = arith.constant 0 : index
    %c0_19 = arith.constant 0 : index
    %28 = vector.load %arg7[%c0_18, %c0_19] : memref<1x64xf32, #tpu.memory_space<vmem>>, vector<1x64xf32>
    %29 = arith.addf %27, %28 : vector<1x64xf32>
    %cst_20 = arith.constant 0.000000e+00 : f32
    %30 = vector.broadcast %cst_20 : f32 to vector<1x64xf32>
    %31 = arith.subf %30, %29 : vector<1x64xf32>
    %32 = math.exp %31 : vector<1x64xf32>
    %cst_21 = arith.constant 1.000000e+00 : f32
    %33 = vector.broadcast %cst_21 : f32 to vector<1x64xf32>
    %34 = arith.addf %33, %32 : vector<1x64xf32>
    %cst_22 = arith.constant 1.000000e+00 : f32
    %35 = vector.broadcast %cst_22 : f32 to vector<1x64xf32>
    %36 = arith.divf %35, %34 : vector<1x64xf32>
    %37 = vector.broadcast %36 : vector<1x64xf32> to vector<256x64xf32>
    %38 = arith.mulf %19, %37 : vector<256x64xf32>
    %39 = arith.truncf %38 : vector<256x64xf32> to vector<256x64xbf16>
    %40 = vector.extract_strided_slice %39 {offsets = [0, 0], sizes = [64, 64], strides = [1, 1]} : vector<256x64xbf16> to vector<64x64xbf16>
    %41 = vector.shape_cast %40 : vector<64x64xbf16> to vector<8x8x64xbf16>
    %42 = vector.extract_strided_slice %39 {offsets = [64, 0], sizes = [64, 64], strides = [1, 1]} : vector<256x64xbf16> to vector<64x64xbf16>
    %43 = vector.shape_cast %42 : vector<64x64xbf16> to vector<8x8x64xbf16>
    %44 = vector.extract_strided_slice %39 {offsets = [128, 0], sizes = [64, 64], strides = [1, 1]} : vector<256x64xbf16> to vector<64x64xbf16>
    %45 = vector.shape_cast %44 : vector<64x64xbf16> to vector<8x8x64xbf16>
    %46 = vector.extract_strided_slice %39 {offsets = [192, 0], sizes = [64, 64], strides = [1, 1]} : vector<256x64xbf16> to vector<64x64xbf16>
    %47 = vector.shape_cast %46 : vector<64x64xbf16> to vector<8x8x64xbf16>
    %cst_23 = arith.constant 0.000000e+00 : bf16
    %48 = vector.broadcast %cst_23 : bf16 to vector<1x8x64xbf16>
    %49 = tpu.concatenate %41, %48 in 0 : vector<8x8x64xbf16>, vector<1x8x64xbf16> -> vector<9x8x64xbf16>
    %cst_24 = arith.constant 0.000000e+00 : bf16
    %50 = vector.broadcast %cst_24 : bf16 to vector<9x1x64xbf16>
    %51 = tpu.concatenate %49, %50 in 1 : vector<9x8x64xbf16>, vector<9x1x64xbf16> -> vector<9x9x64xbf16>
    %cst_25 = arith.constant 0.000000e+00 : bf16
    %52 = vector.broadcast %cst_25 : bf16 to vector<1x8x64xbf16>
    %53 = tpu.concatenate %43, %52 in 0 : vector<8x8x64xbf16>, vector<1x8x64xbf16> -> vector<9x8x64xbf16>
    %cst_26 = arith.constant 0.000000e+00 : bf16
    %54 = vector.broadcast %cst_26 : bf16 to vector<9x1x64xbf16>
    %55 = tpu.concatenate %54, %53 in 1 : vector<9x1x64xbf16>, vector<9x8x64xbf16> -> vector<9x9x64xbf16>
    %cst_27 = arith.constant 0.000000e+00 : bf16
    %56 = vector.broadcast %cst_27 : bf16 to vector<1x8x64xbf16>
    %57 = tpu.concatenate %56, %45 in 0 : vector<1x8x64xbf16>, vector<8x8x64xbf16> -> vector<9x8x64xbf16>
    %cst_28 = arith.constant 0.000000e+00 : bf16
    %58 = vector.broadcast %cst_28 : bf16 to vector<9x1x64xbf16>
    %59 = tpu.concatenate %57, %58 in 1 : vector<9x8x64xbf16>, vector<9x1x64xbf16> -> vector<9x9x64xbf16>
    %cst_29 = arith.constant 0.000000e+00 : bf16
    %60 = vector.broadcast %cst_29 : bf16 to vector<1x8x64xbf16>
    %61 = tpu.concatenate %60, %47 in 0 : vector<1x8x64xbf16>, vector<8x8x64xbf16> -> vector<9x8x64xbf16>
    %cst_30 = arith.constant 0.000000e+00 : bf16
    %62 = vector.broadcast %cst_30 : bf16 to vector<9x1x64xbf16>
    %63 = tpu.concatenate %62, %61 in 1 : vector<9x1x64xbf16>, vector<9x8x64xbf16> -> vector<9x9x64xbf16>
    %64 = vector.extract_strided_slice %63 {offsets = [0, 0, 0], sizes = [8, 8, 64], strides = [1, 1, 1]} : vector<9x9x64xbf16> to vector<8x8x64xbf16>
    %65 = vector.shape_cast %64 : vector<8x8x64xbf16> to vector<64x64xbf16>
    %66 = vector.extract_strided_slice %59 {offsets = [0, 0, 0], sizes = [8, 8, 64], strides = [1, 1, 1]} : vector<9x9x64xbf16> to vector<8x8x64xbf16>
    %67 = vector.shape_cast %66 : vector<8x8x64xbf16> to vector<64x64xbf16>
    %68 = vector.extract_strided_slice %63 {offsets = [0, 1, 0], sizes = [8, 8, 64], strides = [1, 1, 1]} : vector<9x9x64xbf16> to vector<8x8x64xbf16>
    %69 = vector.shape_cast %68 : vector<8x8x64xbf16> to vector<64x64xbf16>
    %70 = vector.extract_strided_slice %55 {offsets = [0, 0, 0], sizes = [8, 8, 64], strides = [1, 1, 1]} : vector<9x9x64xbf16> to vector<8x8x64xbf16>
    %71 = vector.shape_cast %70 : vector<8x8x64xbf16> to vector<64x64xbf16>
    %72 = vector.extract_strided_slice %51 {offsets = [0, 0, 0], sizes = [8, 8, 64], strides = [1, 1, 1]} : vector<9x9x64xbf16> to vector<8x8x64xbf16>
    %73 = vector.shape_cast %72 : vector<8x8x64xbf16> to vector<64x64xbf16>
    %74 = vector.extract_strided_slice %55 {offsets = [0, 1, 0], sizes = [8, 8, 64], strides = [1, 1, 1]} : vector<9x9x64xbf16> to vector<8x8x64xbf16>
    %75 = vector.shape_cast %74 : vector<8x8x64xbf16> to vector<64x64xbf16>
    %76 = vector.extract_strided_slice %63 {offsets = [1, 0, 0], sizes = [8, 8, 64], strides = [1, 1, 1]} : vector<9x9x64xbf16> to vector<8x8x64xbf16>
    %77 = vector.shape_cast %76 : vector<8x8x64xbf16> to vector<64x64xbf16>
    %78 = vector.extract_strided_slice %59 {offsets = [1, 0, 0], sizes = [8, 8, 64], strides = [1, 1, 1]} : vector<9x9x64xbf16> to vector<8x8x64xbf16>
    %79 = vector.shape_cast %78 : vector<8x8x64xbf16> to vector<64x64xbf16>
    %80 = vector.extract_strided_slice %63 {offsets = [1, 1, 0], sizes = [8, 8, 64], strides = [1, 1, 1]} : vector<9x9x64xbf16> to vector<8x8x64xbf16>
    %81 = vector.shape_cast %80 : vector<8x8x64xbf16> to vector<64x64xbf16>
    %82 = tpu.concatenate %65, %67, %69, %71, %73, %75, %77, %79, %81 in 1 : vector<64x64xbf16>, vector<64x64xbf16>, vector<64x64xbf16>, vector<64x64xbf16>, vector<64x64xbf16>, vector<64x64xbf16>, vector<64x64xbf16>, vector<64x64xbf16>, vector<64x64xbf16> -> vector<64x576xbf16>
    %83 = vector.extract_strided_slice %59 {offsets = [0, 0, 0], sizes = [8, 8, 64], strides = [1, 1, 1]} : vector<9x9x64xbf16> to vector<8x8x64xbf16>
    %84 = vector.shape_cast %83 : vector<8x8x64xbf16> to vector<64x64xbf16>
    %85 = vector.extract_strided_slice %63 {offsets = [0, 1, 0], sizes = [8, 8, 64], strides = [1, 1, 1]} : vector<9x9x64xbf16> to vector<8x8x64xbf16>
    %86 = vector.shape_cast %85 : vector<8x8x64xbf16> to vector<64x64xbf16>
    %87 = vector.extract_strided_slice %59 {offsets = [0, 1, 0], sizes = [8, 8, 64], strides = [1, 1, 1]} : vector<9x9x64xbf16> to vector<8x8x64xbf16>
    %88 = vector.shape_cast %87 : vector<8x8x64xbf16> to vector<64x64xbf16>
    %89 = vector.extract_strided_slice %51 {offsets = [0, 0, 0], sizes = [8, 8, 64], strides = [1, 1, 1]} : vector<9x9x64xbf16> to vector<8x8x64xbf16>
    %90 = vector.shape_cast %89 : vector<8x8x64xbf16> to vector<64x64xbf16>
    %91 = vector.extract_strided_slice %55 {offsets = [0, 1, 0], sizes = [8, 8, 64], strides = [1, 1, 1]} : vector<9x9x64xbf16> to vector<8x8x64xbf16>
    %92 = vector.shape_cast %91 : vector<8x8x64xbf16> to vector<64x64xbf16>
    %93 = vector.extract_strided_slice %51 {offsets = [0, 1, 0], sizes = [8, 8, 64], strides = [1, 1, 1]} : vector<9x9x64xbf16> to vector<8x8x64xbf16>
    %94 = vector.shape_cast %93 : vector<8x8x64xbf16> to vector<64x64xbf16>
    %95 = vector.extract_strided_slice %59 {offsets = [1, 0, 0], sizes = [8, 8, 64], strides = [1, 1, 1]} : vector<9x9x64xbf16> to vector<8x8x64xbf16>
    %96 = vector.shape_cast %95 : vector<8x8x64xbf16> to vector<64x64xbf16>
    %97 = vector.extract_strided_slice %63 {offsets = [1, 1, 0], sizes = [8, 8, 64], strides = [1, 1, 1]} : vector<9x9x64xbf16> to vector<8x8x64xbf16>
    %98 = vector.shape_cast %97 : vector<8x8x64xbf16> to vector<64x64xbf16>
    %99 = vector.extract_strided_slice %59 {offsets = [1, 1, 0], sizes = [8, 8, 64], strides = [1, 1, 1]} : vector<9x9x64xbf16> to vector<8x8x64xbf16>
    %100 = vector.shape_cast %99 : vector<8x8x64xbf16> to vector<64x64xbf16>
    %101 = tpu.concatenate %84, %86, %88, %90, %92, %94, %96, %98, %100 in 1 : vector<64x64xbf16>, vector<64x64xbf16>, vector<64x64xbf16>, vector<64x64xbf16>, vector<64x64xbf16>, vector<64x64xbf16>, vector<64x64xbf16>, vector<64x64xbf16>, vector<64x64xbf16> -> vector<64x576xbf16>
    %102 = vector.extract_strided_slice %55 {offsets = [0, 0, 0], sizes = [8, 8, 64], strides = [1, 1, 1]} : vector<9x9x64xbf16> to vector<8x8x64xbf16>
    %103 = vector.shape_cast %102 : vector<8x8x64xbf16> to vector<64x64xbf16>
    %104 = vector.extract_strided_slice %51 {offsets = [0, 0, 0], sizes = [8, 8, 64], strides = [1, 1, 1]} : vector<9x9x64xbf16> to vector<8x8x64xbf16>
    %105 = vector.shape_cast %104 : vector<8x8x64xbf16> to vector<64x64xbf16>
    %106 = vector.extract_strided_slice %55 {offsets = [0, 1, 0], sizes = [8, 8, 64], strides = [1, 1, 1]} : vector<9x9x64xbf16> to vector<8x8x64xbf16>
    %107 = vector.shape_cast %106 : vector<8x8x64xbf16> to vector<64x64xbf16>
    %108 = vector.extract_strided_slice %63 {offsets = [1, 0, 0], sizes = [8, 8, 64], strides = [1, 1, 1]} : vector<9x9x64xbf16> to vector<8x8x64xbf16>
    %109 = vector.shape_cast %108 : vector<8x8x64xbf16> to vector<64x64xbf16>
    %110 = vector.extract_strided_slice %59 {offsets = [1, 0, 0], sizes = [8, 8, 64], strides = [1, 1, 1]} : vector<9x9x64xbf16> to vector<8x8x64xbf16>
    %111 = vector.shape_cast %110 : vector<8x8x64xbf16> to vector<64x64xbf16>
    %112 = vector.extract_strided_slice %63 {offsets = [1, 1, 0], sizes = [8, 8, 64], strides = [1, 1, 1]} : vector<9x9x64xbf16> to vector<8x8x64xbf16>
    %113 = vector.shape_cast %112 : vector<8x8x64xbf16> to vector<64x64xbf16>
    %114 = vector.extract_strided_slice %55 {offsets = [1, 0, 0], sizes = [8, 8, 64], strides = [1, 1, 1]} : vector<9x9x64xbf16> to vector<8x8x64xbf16>
    %115 = vector.shape_cast %114 : vector<8x8x64xbf16> to vector<64x64xbf16>
    %116 = vector.extract_strided_slice %51 {offsets = [1, 0, 0], sizes = [8, 8, 64], strides = [1, 1, 1]} : vector<9x9x64xbf16> to vector<8x8x64xbf16>
    %117 = vector.shape_cast %116 : vector<8x8x64xbf16> to vector<64x64xbf16>
    %118 = vector.extract_strided_slice %55 {offsets = [1, 1, 0], sizes = [8, 8, 64], strides = [1, 1, 1]} : vector<9x9x64xbf16> to vector<8x8x64xbf16>
    %119 = vector.shape_cast %118 : vector<8x8x64xbf16> to vector<64x64xbf16>
    %120 = tpu.concatenate %103, %105, %107, %109, %111, %113, %115, %117, %119 in 1 : vector<64x64xbf16>, vector<64x64xbf16>, vector<64x64xbf16>, vector<64x64xbf16>, vector<64x64xbf16>, vector<64x64xbf16>, vector<64x64xbf16>, vector<64x64xbf16>, vector<64x64xbf16> -> vector<64x576xbf16>
    %121 = vector.extract_strided_slice %51 {offsets = [0, 0, 0], sizes = [8, 8, 64], strides = [1, 1, 1]} : vector<9x9x64xbf16> to vector<8x8x64xbf16>
    %122 = vector.shape_cast %121 : vector<8x8x64xbf16> to vector<64x64xbf16>
    %123 = vector.extract_strided_slice %55 {offsets = [0, 1, 0], sizes = [8, 8, 64], strides = [1, 1, 1]} : vector<9x9x64xbf16> to vector<8x8x64xbf16>
    %124 = vector.shape_cast %123 : vector<8x8x64xbf16> to vector<64x64xbf16>
    %125 = vector.extract_strided_slice %51 {offsets = [0, 1, 0], sizes = [8, 8, 64], strides = [1, 1, 1]} : vector<9x9x64xbf16> to vector<8x8x64xbf16>
    %126 = vector.shape_cast %125 : vector<8x8x64xbf16> to vector<64x64xbf16>
    %127 = vector.extract_strided_slice %59 {offsets = [1, 0, 0], sizes = [8, 8, 64], strides = [1, 1, 1]} : vector<9x9x64xbf16> to vector<8x8x64xbf16>
    %128 = vector.shape_cast %127 : vector<8x8x64xbf16> to vector<64x64xbf16>
    %129 = vector.extract_strided_slice %63 {offsets = [1, 1, 0], sizes = [8, 8, 64], strides = [1, 1, 1]} : vector<9x9x64xbf16> to vector<8x8x64xbf16>
    %130 = vector.shape_cast %129 : vector<8x8x64xbf16> to vector<64x64xbf16>
    %131 = vector.extract_strided_slice %59 {offsets = [1, 1, 0], sizes = [8, 8, 64], strides = [1, 1, 1]} : vector<9x9x64xbf16> to vector<8x8x64xbf16>
    %132 = vector.shape_cast %131 : vector<8x8x64xbf16> to vector<64x64xbf16>
    %133 = vector.extract_strided_slice %51 {offsets = [1, 0, 0], sizes = [8, 8, 64], strides = [1, 1, 1]} : vector<9x9x64xbf16> to vector<8x8x64xbf16>
    %134 = vector.shape_cast %133 : vector<8x8x64xbf16> to vector<64x64xbf16>
    %135 = vector.extract_strided_slice %55 {offsets = [1, 1, 0], sizes = [8, 8, 64], strides = [1, 1, 1]} : vector<9x9x64xbf16> to vector<8x8x64xbf16>
    %136 = vector.shape_cast %135 : vector<8x8x64xbf16> to vector<64x64xbf16>
    %137 = vector.extract_strided_slice %51 {offsets = [1, 1, 0], sizes = [8, 8, 64], strides = [1, 1, 1]} : vector<9x9x64xbf16> to vector<8x8x64xbf16>
    %138 = vector.shape_cast %137 : vector<8x8x64xbf16> to vector<64x64xbf16>
    %139 = tpu.concatenate %122, %124, %126, %128, %130, %132, %134, %136, %138 in 1 : vector<64x64xbf16>, vector<64x64xbf16>, vector<64x64xbf16>, vector<64x64xbf16>, vector<64x64xbf16>, vector<64x64xbf16>, vector<64x64xbf16>, vector<64x64xbf16>, vector<64x64xbf16> -> vector<64x576xbf16>
    %140 = tpu.concatenate %82, %101, %120, %139 in 0 : vector<64x576xbf16>, vector<64x576xbf16>, vector<64x576xbf16>, vector<64x576xbf16> -> vector<256x576xbf16>
    %c0_31 = arith.constant 0 : index
    %c0_32 = arith.constant 0 : index
    %141 = vector.load %arg8[%c0_31, %c0_32] : memref<576x128xbf16, #tpu.memory_space<vmem>>, vector<576x128xbf16>
    %cst_33 = arith.constant dense<0.000000e+00> : vector<256x128xf32>
    %142 = tpu.matmul %140, %141, %cst_33 {dimension_numbers = #tpu.dot_dimension_numbers<[1], [0], [0], [1], [0, 0, 1, 1], [], []>} : vector<256x576xbf16>, vector<576x128xbf16>, vector<256x128xf32> -> vector<256x128xf32>
    %c0_34 = arith.constant 0 : index
    %c0_35 = arith.constant 0 : index
    %143 = vector.load %arg9[%c0_34, %c0_35] : memref<1x128xf32, #tpu.memory_space<vmem>>, vector<1x128xf32>
    %144 = vector.broadcast %143 : vector<1x128xf32> to vector<256x128xf32>
    %145 = arith.addf %142, %144 : vector<256x128xf32>
    %cst_36 = arith.constant 0.000000e+00 : f32
    %146 = vector.broadcast %cst_36 : f32 to vector<256x128xf32>
    %147 = arith.maximumf %145, %146 : vector<256x128xf32>
    %cst_37 = arith.constant dense<0.000000e+00> : vector<128xf32>
    %148 = vector.multi_reduction <add>, %147, %cst_37 [0] : vector<256x128xf32> to vector<128xf32>
    %149 = vector.shape_cast %148 : vector<128xf32> to vector<1x128xf32>
    %cst_38 = arith.constant 3.906250e-03 : f32
    %150 = vector.broadcast %cst_38 : f32 to vector<1x128xf32>
    %151 = arith.mulf %149, %150 : vector<1x128xf32>
    %152 = vector.extract_strided_slice %147 {offsets = [0, 0], sizes = [64, 128], strides = [1, 1]} : vector<256x128xf32> to vector<64x128xf32>
    %153 = vector.extract_strided_slice %147 {offsets = [64, 0], sizes = [64, 128], strides = [1, 1]} : vector<256x128xf32> to vector<64x128xf32>
    %154 = arith.maximumf %152, %153 : vector<64x128xf32>
    %155 = vector.extract_strided_slice %147 {offsets = [128, 0], sizes = [64, 128], strides = [1, 1]} : vector<256x128xf32> to vector<64x128xf32>
    %156 = vector.extract_strided_slice %147 {offsets = [192, 0], sizes = [64, 128], strides = [1, 1]} : vector<256x128xf32> to vector<64x128xf32>
    %157 = arith.maximumf %155, %156 : vector<64x128xf32>
    %158 = arith.maximumf %154, %157 : vector<64x128xf32>
    %c0_39 = arith.constant 0 : index
    %c0_40 = arith.constant 0 : index
    %159 = vector.load %arg10[%c0_39, %c0_40] : memref<128x8xf32, #tpu.memory_space<vmem>>, vector<128x8xf32>
    %cst_41 = arith.constant dense<0.000000e+00> : vector<1x8xf32>
    %160 = tpu.matmul %151, %159, %cst_41 {dimension_numbers = #tpu.dot_dimension_numbers<[1], [0], [0], [1], [0, 0, 1, 1], [], []>} : vector<1x128xf32>, vector<128x8xf32>, vector<1x8xf32> -> vector<1x8xf32>
    %c0_42 = arith.constant 0 : index
    %c0_43 = arith.constant 0 : index
    %161 = vector.load %arg11[%c0_42, %c0_43] : memref<1x8xf32, #tpu.memory_space<vmem>>, vector<1x8xf32>
    %162 = arith.addf %160, %161 : vector<1x8xf32>
    %cst_44 = arith.constant 0.000000e+00 : f32
    %163 = vector.broadcast %cst_44 : f32 to vector<1x8xf32>
    %164 = arith.maximumf %162, %163 : vector<1x8xf32>
    %c0_45 = arith.constant 0 : index
    %c0_46 = arith.constant 0 : index
    %165 = vector.load %arg12[%c0_45, %c0_46] : memref<8x128xf32, #tpu.memory_space<vmem>>, vector<8x128xf32>
    %cst_47 = arith.constant dense<0.000000e+00> : vector<1x128xf32>
    %166 = tpu.matmul %164, %165, %cst_47 {dimension_numbers = #tpu.dot_dimension_numbers<[1], [0], [0], [1], [0, 0, 1, 1], [], []>} : vector<1x8xf32>, vector<8x128xf32>, vector<1x128xf32> -> vector<1x128xf32>
    %c0_48 = arith.constant 0 : index
    %c0_49 = arith.constant 0 : index
    %167 = vector.load %arg13[%c0_48, %c0_49] : memref<1x128xf32, #tpu.memory_space<vmem>>, vector<1x128xf32>
    %168 = arith.addf %166, %167 : vector<1x128xf32>
    %cst_50 = arith.constant 0.000000e+00 : f32
    %169 = vector.broadcast %cst_50 : f32 to vector<1x128xf32>
    %170 = arith.subf %169, %168 : vector<1x128xf32>
    %171 = math.exp %170 : vector<1x128xf32>
    %cst_51 = arith.constant 1.000000e+00 : f32
    %172 = vector.broadcast %cst_51 : f32 to vector<1x128xf32>
    %173 = arith.addf %172, %171 : vector<1x128xf32>
    %cst_52 = arith.constant 1.000000e+00 : f32
    %174 = vector.broadcast %cst_52 : f32 to vector<1x128xf32>
    %175 = arith.divf %174, %173 : vector<1x128xf32>
    %176 = vector.broadcast %175 : vector<1x128xf32> to vector<64x128xf32>
    %177 = arith.mulf %158, %176 : vector<64x128xf32>
    %178 = arith.truncf %177 : vector<64x128xf32> to vector<64x128xbf16>
    %179 = vector.shape_cast %178 : vector<64x128xbf16> to vector<8x8x128xbf16>
    %cst_53 = arith.constant 0.000000e+00 : bf16
    %180 = vector.broadcast %cst_53 : bf16 to vector<1x8x128xbf16>
    %181 = tpu.concatenate %180, %179, %180 in 0 : vector<1x8x128xbf16>, vector<8x8x128xbf16>, vector<1x8x128xbf16> -> vector<10x8x128xbf16>
    %cst_54 = arith.constant 0.000000e+00 : bf16
    %182 = vector.broadcast %cst_54 : bf16 to vector<10x1x128xbf16>
    %183 = tpu.concatenate %182, %181, %182 in 1 : vector<10x1x128xbf16>, vector<10x8x128xbf16>, vector<10x1x128xbf16> -> vector<10x10x128xbf16>
    %184 = vector.extract_strided_slice %183 {offsets = [0, 0, 0], sizes = [8, 8, 128], strides = [1, 1, 1]} : vector<10x10x128xbf16> to vector<8x8x128xbf16>
    %185 = vector.shape_cast %184 : vector<8x8x128xbf16> to vector<64x128xbf16>
    %186 = vector.extract_strided_slice %183 {offsets = [0, 1, 0], sizes = [8, 8, 128], strides = [1, 1, 1]} : vector<10x10x128xbf16> to vector<8x8x128xbf16>
    %187 = vector.shape_cast %186 : vector<8x8x128xbf16> to vector<64x128xbf16>
    %188 = vector.extract_strided_slice %183 {offsets = [0, 2, 0], sizes = [8, 8, 128], strides = [1, 1, 1]} : vector<10x10x128xbf16> to vector<8x8x128xbf16>
    %189 = vector.shape_cast %188 : vector<8x8x128xbf16> to vector<64x128xbf16>
    %190 = vector.extract_strided_slice %183 {offsets = [1, 0, 0], sizes = [8, 8, 128], strides = [1, 1, 1]} : vector<10x10x128xbf16> to vector<8x8x128xbf16>
    %191 = vector.shape_cast %190 : vector<8x8x128xbf16> to vector<64x128xbf16>
    %192 = vector.extract_strided_slice %183 {offsets = [1, 1, 0], sizes = [8, 8, 128], strides = [1, 1, 1]} : vector<10x10x128xbf16> to vector<8x8x128xbf16>
    %193 = vector.shape_cast %192 : vector<8x8x128xbf16> to vector<64x128xbf16>
    %194 = vector.extract_strided_slice %183 {offsets = [1, 2, 0], sizes = [8, 8, 128], strides = [1, 1, 1]} : vector<10x10x128xbf16> to vector<8x8x128xbf16>
    %195 = vector.shape_cast %194 : vector<8x8x128xbf16> to vector<64x128xbf16>
    %196 = vector.extract_strided_slice %183 {offsets = [2, 0, 0], sizes = [8, 8, 128], strides = [1, 1, 1]} : vector<10x10x128xbf16> to vector<8x8x128xbf16>
    %197 = vector.shape_cast %196 : vector<8x8x128xbf16> to vector<64x128xbf16>
    %198 = vector.extract_strided_slice %183 {offsets = [2, 1, 0], sizes = [8, 8, 128], strides = [1, 1, 1]} : vector<10x10x128xbf16> to vector<8x8x128xbf16>
    %199 = vector.shape_cast %198 : vector<8x8x128xbf16> to vector<64x128xbf16>
    %200 = vector.extract_strided_slice %183 {offsets = [2, 2, 0], sizes = [8, 8, 128], strides = [1, 1, 1]} : vector<10x10x128xbf16> to vector<8x8x128xbf16>
    %201 = vector.shape_cast %200 : vector<8x8x128xbf16> to vector<64x128xbf16>
    %202 = tpu.concatenate %185, %187, %189, %191, %193, %195, %197, %199, %201 in 1 : vector<64x128xbf16>, vector<64x128xbf16>, vector<64x128xbf16>, vector<64x128xbf16>, vector<64x128xbf16>, vector<64x128xbf16>, vector<64x128xbf16>, vector<64x128xbf16>, vector<64x128xbf16> -> vector<64x1152xbf16>
    %c0_55 = arith.constant 0 : index
    %c0_56 = arith.constant 0 : index
    %203 = vector.load %arg14[%c0_55, %c0_56] : memref<1152x256xbf16, #tpu.memory_space<vmem>>, vector<1152x256xbf16>
    %cst_57 = arith.constant dense<0.000000e+00> : vector<64x256xf32>
    %204 = tpu.matmul %202, %203, %cst_57 {dimension_numbers = #tpu.dot_dimension_numbers<[1], [0], [0], [1], [0, 0, 1, 1], [], []>} : vector<64x1152xbf16>, vector<1152x256xbf16>, vector<64x256xf32> -> vector<64x256xf32>
    %c0_58 = arith.constant 0 : index
    %c0_59 = arith.constant 0 : index
    %205 = vector.load %arg15[%c0_58, %c0_59] : memref<1x256xf32, #tpu.memory_space<vmem>>, vector<1x256xf32>
    %206 = vector.broadcast %205 : vector<1x256xf32> to vector<64x256xf32>
    %207 = arith.addf %204, %206 : vector<64x256xf32>
    %cst_60 = arith.constant 0.000000e+00 : f32
    %208 = vector.broadcast %cst_60 : f32 to vector<64x256xf32>
    %209 = arith.maximumf %207, %208 : vector<64x256xf32>
    %cst_61 = arith.constant dense<0.000000e+00> : vector<256xf32>
    %210 = vector.multi_reduction <add>, %209, %cst_61 [0] : vector<64x256xf32> to vector<256xf32>
    %211 = vector.shape_cast %210 : vector<256xf32> to vector<1x256xf32>
    %cst_62 = arith.constant 1.562500e-02 : f32
    %212 = vector.broadcast %cst_62 : f32 to vector<1x256xf32>
    %213 = arith.mulf %211, %212 : vector<1x256xf32>
    %c0_63 = arith.constant 0 : index
    %c0_64 = arith.constant 0 : index
    %214 = vector.load %arg16[%c0_63, %c0_64] : memref<256x16xf32, #tpu.memory_space<vmem>>, vector<256x16xf32>
    %cst_65 = arith.constant dense<0.000000e+00> : vector<1x16xf32>
    %215 = tpu.matmul %213, %214, %cst_65 {dimension_numbers = #tpu.dot_dimension_numbers<[1], [0], [0], [1], [0, 0, 1, 1], [], []>} : vector<1x256xf32>, vector<256x16xf32>, vector<1x16xf32> -> vector<1x16xf32>
    %c0_66 = arith.constant 0 : index
    %c0_67 = arith.constant 0 : index
    %216 = vector.load %arg17[%c0_66, %c0_67] : memref<1x16xf32, #tpu.memory_space<vmem>>, vector<1x16xf32>
    %217 = arith.addf %215, %216 : vector<1x16xf32>
    %cst_68 = arith.constant 0.000000e+00 : f32
    %218 = vector.broadcast %cst_68 : f32 to vector<1x16xf32>
    %219 = arith.maximumf %217, %218 : vector<1x16xf32>
    %c0_69 = arith.constant 0 : index
    %c0_70 = arith.constant 0 : index
    %220 = vector.load %arg18[%c0_69, %c0_70] : memref<16x256xf32, #tpu.memory_space<vmem>>, vector<16x256xf32>
    %cst_71 = arith.constant dense<0.000000e+00> : vector<1x256xf32>
    %221 = tpu.matmul %219, %220, %cst_71 {dimension_numbers = #tpu.dot_dimension_numbers<[1], [0], [0], [1], [0, 0, 1, 1], [], []>} : vector<1x16xf32>, vector<16x256xf32>, vector<1x256xf32> -> vector<1x256xf32>
    %c0_72 = arith.constant 0 : index
    %c0_73 = arith.constant 0 : index
    %222 = vector.load %arg19[%c0_72, %c0_73] : memref<1x256xf32, #tpu.memory_space<vmem>>, vector<1x256xf32>
    %223 = arith.addf %221, %222 : vector<1x256xf32>
    %cst_74 = arith.constant 0.000000e+00 : f32
    %224 = vector.broadcast %cst_74 : f32 to vector<1x256xf32>
    %225 = arith.subf %224, %223 : vector<1x256xf32>
    %226 = math.exp %225 : vector<1x256xf32>
    %cst_75 = arith.constant 1.000000e+00 : f32
    %227 = vector.broadcast %cst_75 : f32 to vector<1x256xf32>
    %228 = arith.addf %227, %226 : vector<1x256xf32>
    %cst_76 = arith.constant 1.000000e+00 : f32
    %229 = vector.broadcast %cst_76 : f32 to vector<1x256xf32>
    %230 = arith.divf %229, %228 : vector<1x256xf32>
    %231 = arith.mulf %213, %230 : vector<1x256xf32>
    %c0_77 = arith.constant 0 : index
    %c0_78 = arith.constant 0 : index
    %232 = vector.load %arg20[%c0_77, %c0_78] : memref<256x128xf32, #tpu.memory_space<vmem>>, vector<256x128xf32>
    %cst_79 = arith.constant dense<0.000000e+00> : vector<1x128xf32>
    %233 = tpu.matmul %231, %232, %cst_79 {dimension_numbers = #tpu.dot_dimension_numbers<[1], [0], [0], [1], [0, 0, 1, 1], [], []>} : vector<1x256xf32>, vector<256x128xf32>, vector<1x128xf32> -> vector<1x128xf32>
    %c0_80 = arith.constant 0 : index
    %c0_81 = arith.constant 0 : index
    %234 = vector.load %arg21[%c0_80, %c0_81] : memref<1x128xf32, #tpu.memory_space<vmem>>, vector<1x128xf32>
    %235 = arith.addf %233, %234 : vector<1x128xf32>
    %cst_82 = arith.constant 0.000000e+00 : f32
    %236 = vector.broadcast %cst_82 : f32 to vector<1x128xf32>
    %237 = arith.maximumf %235, %236 : vector<1x128xf32>
    %c0_83 = arith.constant 0 : index
    %c0_84 = arith.constant 0 : index
    %238 = vector.load %arg22[%c0_83, %c0_84] : memref<128x3xf32, #tpu.memory_space<vmem>>, vector<128x3xf32>
    %cst_85 = arith.constant dense<0.000000e+00> : vector<1x3xf32>
    %239 = tpu.matmul %237, %238, %cst_85 {dimension_numbers = #tpu.dot_dimension_numbers<[1], [0], [0], [1], [0, 0, 1, 1], [], []>} : vector<1x128xf32>, vector<128x3xf32>, vector<1x3xf32> -> vector<1x3xf32>
    %c0_86 = arith.constant 0 : index
    %c0_87 = arith.constant 0 : index
    %240 = vector.load %arg23[%c0_86, %c0_87] : memref<1x3xf32, #tpu.memory_space<vmem>>, vector<1x3xf32>
    %241 = arith.addf %239, %240 : vector<1x3xf32>
    %242 = vector.shape_cast %241 : vector<1x3xf32> to vector<1x1x3xf32>
    %c0_88 = arith.constant 0 : index
    %c0_89 = arith.constant 0 : index
    %c0_90 = arith.constant 0 : index
    %243 = vector.load %arg24[%c0_88, %c0_89, %c0_90] : memref<1x1x3xf32, #tpu.memory_space<vmem>>, vector<1x1x3xf32>
    tpu.vector_store %arg24[%c0_88, %c0_89, %c0_90], %242 {strides = array<i32>} : memref<1x1x3xf32, #tpu.memory_space<vmem>>, vector<1x1x3xf32>,
    return
  }
  func.func @transform_0(%arg0: i32) -> (i32, i32, i32) {
    %c0_i32 = arith.constant 0 : i32
    %c0_i32_0 = arith.constant 0 : i32
    %c0_i32_1 = arith.constant 0 : i32
    return %arg0, %c0_i32, %c0_i32_0 : i32, i32, i32
  }
  func.func @transform_1(%arg0: i32) -> (i32, i32) {
    %c0_i32 = arith.constant 0 : i32
    %c0_i32_0 = arith.constant 0 : i32
    %c0_i32_1 = arith.constant 0 : i32
    return %c0_i32, %c0_i32_0 : i32, i32
  }
  func.func @transform_2(%arg0: i32) -> (i32, i32) {
    %c0_i32 = arith.constant 0 : i32
    %c0_i32_0 = arith.constant 0 : i32
    %c0_i32_1 = arith.constant 0 : i32
    return %c0_i32, %c0_i32_0 : i32, i32
  }
  func.func @transform_3(%arg0: i32) -> (i32, i32) {
    %c0_i32 = arith.constant 0 : i32
    %c0_i32_0 = arith.constant 0 : i32
    %c0_i32_1 = arith.constant 0 : i32
    return %c0_i32, %c0_i32_0 : i32, i32
  }
  func.func @transform_4(%arg0: i32) -> (i32, i32) {
    %c0_i32 = arith.constant 0 : i32
    %c0_i32_0 = arith.constant 0 : i32
    %c0_i32_1 = arith.constant 0 : i32
    return %c0_i32, %c0_i32_0 : i32, i32
  }
  func.func @transform_5(%arg0: i32) -> (i32, i32) {
    %c0_i32 = arith.constant 0 : i32
    %c0_i32_0 = arith.constant 0 : i32
    %c0_i32_1 = arith.constant 0 : i32
    return %c0_i32, %c0_i32_0 : i32, i32
  }
  func.func @transform_6(%arg0: i32) -> (i32, i32) {
    %c0_i32 = arith.constant 0 : i32
    %c0_i32_0 = arith.constant 0 : i32
    %c0_i32_1 = arith.constant 0 : i32
    return %c0_i32, %c0_i32_0 : i32, i32
  }
  func.func @transform_7(%arg0: i32) -> (i32, i32) {
    %c0_i32 = arith.constant 0 : i32
    %c0_i32_0 = arith.constant 0 : i32
    %c0_i32_1 = arith.constant 0 : i32
    return %c0_i32, %c0_i32_0 : i32, i32
  }
  func.func @transform_8(%arg0: i32) -> (i32, i32) {
    %c0_i32 = arith.constant 0 : i32
    %c0_i32_0 = arith.constant 0 : i32
    %c0_i32_1 = arith.constant 0 : i32
    return %c0_i32, %c0_i32_0 : i32, i32
  }
  func.func @transform_9(%arg0: i32) -> (i32, i32) {
    %c0_i32 = arith.constant 0 : i32
    %c0_i32_0 = arith.constant 0 : i32
    %c0_i32_1 = arith.constant 0 : i32
    return %c0_i32, %c0_i32_0 : i32, i32
  }
  func.func @transform_10(%arg0: i32) -> (i32, i32) {
    %c0_i32 = arith.constant 0 : i32
    %c0_i32_0 = arith.constant 0 : i32
    %c0_i32_1 = arith.constant 0 : i32
    return %c0_i32, %c0_i32_0 : i32, i32
  }
  func.func @transform_11(%arg0: i32) -> (i32, i32) {
    %c0_i32 = arith.constant 0 : i32
    %c0_i32_0 = arith.constant 0 : i32
    %c0_i32_1 = arith.constant 0 : i32
    return %c0_i32, %c0_i32_0 : i32, i32
  }
  func.func @transform_12(%arg0: i32) -> (i32, i32) {
    %c0_i32 = arith.constant 0 : i32
    %c0_i32_0 = arith.constant 0 : i32
    %c0_i32_1 = arith.constant 0 : i32
    return %c0_i32, %c0_i32_0 : i32, i32
  }
  func.func @transform_13(%arg0: i32) -> (i32, i32) {
    %c0_i32 = arith.constant 0 : i32
    %c0_i32_0 = arith.constant 0 : i32
    %c0_i32_1 = arith.constant 0 : i32
    return %c0_i32, %c0_i32_0 : i32, i32
  }
  func.func @transform_14(%arg0: i32) -> (i32, i32) {
    %c0_i32 = arith.constant 0 : i32
    %c0_i32_0 = arith.constant 0 : i32
    %c0_i32_1 = arith.constant 0 : i32
    return %c0_i32, %c0_i32_0 : i32, i32
  }
  func.func @transform_15(%arg0: i32) -> (i32, i32) {
    %c0_i32 = arith.constant 0 : i32
    %c0_i32_0 = arith.constant 0 : i32
    %c0_i32_1 = arith.constant 0 : i32
    return %c0_i32, %c0_i32_0 : i32, i32
  }
  func.func @transform_16(%arg0: i32) -> (i32, i32) {
    %c0_i32 = arith.constant 0 : i32
    %c0_i32_0 = arith.constant 0 : i32
    %c0_i32_1 = arith.constant 0 : i32
    return %c0_i32, %c0_i32_0 : i32, i32
  }
  func.func @transform_17(%arg0: i32) -> (i32, i32) {
    %c0_i32 = arith.constant 0 : i32
    %c0_i32_0 = arith.constant 0 : i32
    %c0_i32_1 = arith.constant 0 : i32
    return %c0_i32, %c0_i32_0 : i32, i32
  }
  func.func @transform_18(%arg0: i32) -> (i32, i32) {
    %c0_i32 = arith.constant 0 : i32
    %c0_i32_0 = arith.constant 0 : i32
    %c0_i32_1 = arith.constant 0 : i32
    return %c0_i32, %c0_i32_0 : i32, i32
  }
  func.func @transform_19(%arg0: i32) -> (i32, i32) {
    %c0_i32 = arith.constant 0 : i32
    %c0_i32_0 = arith.constant 0 : i32
    %c0_i32_1 = arith.constant 0 : i32
    return %c0_i32, %c0_i32_0 : i32, i32
  }
  func.func @transform_20(%arg0: i32) -> (i32, i32) {
    %c0_i32 = arith.constant 0 : i32
    %c0_i32_0 = arith.constant 0 : i32
    %c0_i32_1 = arith.constant 0 : i32
    return %c0_i32, %c0_i32_0 : i32, i32
  }
  func.func @transform_21(%arg0: i32) -> (i32, i32) {
    %c0_i32 = arith.constant 0 : i32
    %c0_i32_0 = arith.constant 0 : i32
    %c0_i32_1 = arith.constant 0 : i32
    return %c0_i32, %c0_i32_0 : i32, i32
  }
  func.func @transform_22(%arg0: i32) -> (i32, i32) {
    %c0_i32 = arith.constant 0 : i32
    %c0_i32_0 = arith.constant 0 : i32
    %c0_i32_1 = arith.constant 0 : i32
    return %c0_i32, %c0_i32_0 : i32, i32
  }
  func.func @transform_23(%arg0: i32) -> (i32, i32, i32) {
    %c0_i32 = arith.constant 0 : i32
    %c0_i32_0 = arith.constant 0 : i32
    %c0_i32_1 = arith.constant 0 : i32
    return %arg0, %c0_i32, %c0_i32_0 : i32, i32, i32
  }
}

</mosaic_0001>

<llo_original>
// kernel: multiclass_cnn3_forward.1
$region0: #{multiclass_cnn3_forward.1}
  #allocation0 [shape = 'u32[]', space=smem, size = 0x4, offset = 0x4, fixed_abs, tag = 'smem constant byte address 0x4 - core index']
  #allocation1 [shape = 'u32[144,128]{1,0:T(1,128)}', space=vmem, size = 0x12000, scoped, tag = 'internal scratch']
  %s0 = inlined_call_operand.vmem [shape: bf16[2,1024,9], index: 0, kind: input, shape index: {}]
  %s1 = inlined_call_operand.vmem [shape: bf16[9,64], index: 1, kind: input, shape index: {}]
  %s2 = inlined_call_operand.vmem [shape: f32[1,64], index: 2, kind: input, shape index: {}]
  %s3 = inlined_call_operand.vmem [shape: f32[64,4], index: 3, kind: input, shape index: {}]
  %s4 = inlined_call_operand.vmem [shape: f32[1,4], index: 4, kind: input, shape index: {}]
  %s5 = inlined_call_operand.vmem [shape: f32[4,64], index: 5, kind: input, shape index: {}]
  %s6 = inlined_call_operand.vmem [shape: f32[1,64], index: 6, kind: input, shape index: {}]
  %s7 = inlined_call_operand.vmem [shape: bf16[576,128], index: 7, kind: input, shape index: {}]
  %s8 = inlined_call_operand.vmem [shape: f32[1,128], index: 8, kind: input, shape index: {}]
  %s9 = inlined_call_operand.vmem [shape: f32[128,8], index: 9, kind: input, shape index: {}]
  %s10 = inlined_call_operand.vmem [shape: f32[1,8], index: 10, kind: input, shape index: {}]
  %s11 = inlined_call_operand.vmem [shape: f32[8,128], index: 11, kind: input, shape index: {}]
  %s12 = inlined_call_operand.vmem [shape: f32[1,128], index: 12, kind: input, shape index: {}]
  %s13 = inlined_call_operand.vmem [shape: bf16[1152,256], index: 13, kind: input, shape index: {}]
  %s14 = inlined_call_operand.vmem [shape: f32[1,256], index: 14, kind: input, shape index: {}]
  %s15 = inlined_call_operand.vmem [shape: f32[256,16], index: 15, kind: input, shape index: {}]
  %s16 = inlined_call_operand.vmem [shape: f32[1,16], index: 16, kind: input, shape index: {}]
  %s17 = inlined_call_operand.vmem [shape: f32[16,256], index: 17, kind: input, shape index: {}]
  %s18 = inlined_call_operand.vmem [shape: f32[1,256], index: 18, kind: input, shape index: {}]
  %s19 = inlined_call_operand.vmem [shape: f32[256,128], index: 19, kind: input, shape index: {}]
  %s20 = inlined_call_operand.vmem [shape: f32[1,128], index: 20, kind: input, shape index: {}]
  %s21 = inlined_call_operand.vmem [shape: f32[128,3], index: 21, kind: input, shape index: {}]
  %s22 = inlined_call_operand.vmem [shape: f32[1,3], index: 22, kind: input, shape index: {}]
  %s23 = inlined_call_operand.hbm [shape: f32[2,1,3], index: 23, kind: output, shape index: {}]
  %s24 = sld [smem:[#allocation0]]
  $region125: #{multiclass_cnn3_forward.1} parent=0
    _
  %s26 = ssub.s32 1, %s24
  %s27 = scalar_select 0, %s26, %s24
  $region1: #{multiclass_cnn3_forward.1} parent=0
    #allocation2 [shape = 'u8[1024]{0}', space=vmem, size = 0x400, scoped, tag = 'output window, operand 0']
    #allocation3 [shape = 's32[2]{0}', space=sflag, size = 0x8, scoped, tag = 'scoped memory for multiclass_cnn3_forward.1']
    %28 = vsyncpa [#allocation3], 0
    %s29 = scalar_lea.sflag [#allocation3], 1
    %30 = vsyncpa %s29, 0
    loop: start=0, step=1, limit=4
    $region2: #{multiclass_cnn3_forward.1} parent=1 // loop_pre_header
      _
    $region3: #{multiclass_cnn3_forward.1} parent=1 // loop_header
      %s32 = sphi 0, %s36
      %p33 = scmp.ge.s32.totalorder %s32, 4
      %s42 = sphi 0, %s44
      %s45 = sphi 0, %s42
      %s46 = sphi 0, %s45
      %s62 = sphi 0, %s46
      %s66 = sphi 0, %s66
      %s68 = sphi 0, %s66
      %s69 = sphi 0, %s68
      %s83 = sphi 0, %s69
      %s87 = sphi 0, %s87
      %s89 = sphi 0, %s87
      %s90 = sphi 0, %s89
      %s104 = sphi 0, %s90
      %s108 = sphi 0, %s108
      %s110 = sphi 0, %s108
      %s111 = sphi 0, %s110
      %s125 = sphi 0, %s111
      %s129 = sphi 0, %s129
      %s131 = sphi 0, %s129
      %s132 = sphi 0, %s131
      %s146 = sphi 0, %s132
      %s150 = sphi 0, %s150
      %s152 = sphi 0, %s150
      %s153 = sphi 0, %s152
      %s167 = sphi 0, %s153
      %s171 = sphi 0, %s171
      %s173 = sphi 0, %s171
      %s174 = sphi 0, %s173
      %s188 = sphi 0, %s174
      %s192 = sphi 0, %s192
      %s194 = sphi 0, %s192
      %s195 = sphi 0, %s194
      %s209 = sphi 0, %s195
      %s213 = sphi 0, %s213
      %s215 = sphi 0, %s213
      %s216 = sphi 0, %s215
      %s230 = sphi 0, %s216
      %s234 = sphi 0, %s234
      %s236 = sphi 0, %s234
      %s237 = sphi 0, %s236
      %s251 = sphi 0, %s237
      %s255 = sphi 0, %s255
      %s257 = sphi 0, %s255
      %s258 = sphi 0, %s257
      %s272 = sphi 0, %s258
      %s276 = sphi 0, %s276
      %s278 = sphi 0, %s276
      %s279 = sphi 0, %s278
      %s293 = sphi 0, %s279
      %s297 = sphi 0, %s297
      %s299 = sphi 0, %s297
      %s300 = sphi 0, %s299
      %s314 = sphi 0, %s300
      %s318 = sphi 0, %s318
      %s320 = sphi 0, %s318
      %s321 = sphi 0, %s320
      %s335 = sphi 0, %s321
      %s339 = sphi 0, %s339
      %s341 = sphi 0, %s339
      %s342 = sphi 0, %s341
      %s356 = sphi 0, %s342
      %s360 = sphi 0, %s360
      %s362 = sphi 0, %s360
      %s363 = sphi 0, %s362
      %s377 = sphi 0, %s363
      %s381 = sphi 0, %s381
      %s383 = sphi 0, %s381
      %s384 = sphi 0, %s383
      %s398 = sphi 0, %s384
      %s402 = sphi 0, %s402
      %s404 = sphi 0, %s402
      %s405 = sphi 0, %s404
      %s419 = sphi 0, %s405
      %s423 = sphi 0, %s423
      %s425 = sphi 0, %s423
      %s426 = sphi 0, %s425
      %s440 = sphi 0, %s426
      %s444 = sphi 0, %s444
      %s446 = sphi 0, %s444
      %s447 = sphi 0, %s446
      %s461 = sphi 0, %s447
      %s465 = sphi 0, %s465
      %s467 = sphi 0, %s465
      %s468 = sphi 0, %s467
      %s482 = sphi 0, %s468
      %s486 = sphi 0, %s486
      %s488 = sphi 0, %s486
      %s489 = sphi 0, %s488
      %s503 = sphi 0, %s489
      %s507 = sphi 0, %s507
      %s509 = sphi 0, %s507
      %s510 = sphi 0, %s509
      %s524 = sphi 0, %s510
      %s530 = sphi 0, %s532
      %s533 = sphi 0, %s530
      %s534 = sphi 0, %s533
      %s550 = sphi 0, %s534
    $region4: #{multiclass_cnn3_forward.1} parent=1 // loop_header_branch
      %35 = sbr.rel (%p33) target = $region8
    $region5: #{multiclass_cnn3_forward.1} parent=1 // loop_body
      %s37 = ssub.s32 %s32, 1
      %s38 = ssub.s32 %s32, 2
      %s39 = sadd.s32 %s32, 1
      %s40 = ssub.s32 %s32, %s39
      %p41 = scmp.eq.s32.totalorder %s40, 0
      %s43 = sadd.s32 %s42, 1
      %s44 = scalar_select %p41, %s42, %s43
      %p47 = pneg %p41
      %p48 = scmp.eq.s32.totalorder %s32, 1
      %p49 = por %p47, %p48
      %p50 = scmp.ne.s32.totalorder %s42, %s45
      %p51 = scmp.eq.s32.totalorder %s32, 0
      %p52 = por %p50, %p51
      %p53 = scmp.ne.s32.totalorder %s42, %s45
      %p54 = scmp.eq.s32.totalorder %s37, 1
      %p55 = por %p53, %p54
      %p56 = scmp.ne.s32.totalorder %s45, %s46
      %p57 = scmp.eq.s32.totalorder %s37, 0
      %p58 = por %p56, %p57
      %p59 = scmp.ne.s32.totalorder %s45, %s46
      %p60 = scmp.eq.s32.totalorder %s38, 1
      %p61 = por %p59, %p60
      %p63 = scmp.ne.s32.totalorder %s46, %s62
      %p64 = scmp.eq.s32.totalorder %s38, 0
      %p65 = por %p63, %p64
      %s67 = sadd.s32 %s66, 1
      %p70 = scmp.eq.s32.totalorder %s32, 1
      %p71 = scmp.ne.s32.totalorder %s66, %s68
      %p72 = scmp.eq.s32.totalorder %s32, 0
      %p73 = por %p71, %p72
      %p74 = scmp.ne.s32.totalorder %s66, %s68
      %p75 = scmp.eq.s32.totalorder %s37, 1
      %p76 = por %p74, %p75
      %p77 = scmp.ne.s32.totalorder %s68, %s69
      %p78 = scmp.eq.s32.totalorder %s37, 0
      %p79 = por %p77, %p78
      %p80 = scmp.ne.s32.totalorder %s68, %s69
      %p81 = scmp.eq.s32.totalorder %s38, 1
      %p82 = por %p80, %p81
      %p84 = scmp.ne.s32.totalorder %s69, %s83
      %p85 = scmp.eq.s32.totalorder %s38, 0
      %p86 = por %p84, %p85
      %s88 = sadd.s32 %s87, 1
      %p91 = scmp.eq.s32.totalorder %s32, 1
      %p92 = scmp.ne.s32.totalorder %s87, %s89
      %p93 = scmp.eq.s32.totalorder %s32, 0
      %p94 = por %p92, %p93
      %p95 = scmp.ne.s32.totalorder %s87, %s89
      %p96 = scmp.eq.s32.totalorder %s37, 1
      %p97 = por %p95, %p96
      %p98 = scmp.ne.s32.totalorder %s89, %s90
      %p99 = scmp.eq.s32.totalorder %s37, 0
      %p100 = por %p98, %p99
      %p101 = scmp.ne.s32.totalorder %s89, %s90
      %p102 = scmp.eq.s32.totalorder %s38, 1
      %p103 = por %p101, %p102
      %p105 = scmp.ne.s32.totalorder %s90, %s104
      %p106 = scmp.eq.s32.totalorder %s38, 0
      %p107 = por %p105, %p106
      %s109 = sadd.s32 %s108, 1
      %p112 = scmp.eq.s32.totalorder %s32, 1
      %p113 = scmp.ne.s32.totalorder %s108, %s110
      %p114 = scmp.eq.s32.totalorder %s32, 0
      %p115 = por %p113, %p114
      %p116 = scmp.ne.s32.totalorder %s108, %s110
      %p117 = scmp.eq.s32.totalorder %s37, 1
      %p118 = por %p116, %p117
      %p119 = scmp.ne.s32.totalorder %s110, %s111
      %p120 = scmp.eq.s32.totalorder %s37, 0
      %p121 = por %p119, %p120
      %p122 = scmp.ne.s32.totalorder %s110, %s111
      %p123 = scmp.eq.s32.totalorder %s38, 1
      %p124 = por %p122, %p123
      %p126 = scmp.ne.s32.totalorder %s111, %s125
      %p127 = scmp.eq.s32.totalorder %s38, 0
      %p128 = por %p126, %p127
      %s130 = sadd.s32 %s129, 1
      %p133 = scmp.eq.s32.totalorder %s32, 1
      %p134 = scmp.ne.s32.totalorder %s129, %s131
      %p135 = scmp.eq.s32.totalorder %s32, 0
      %p136 = por %p134, %p135
      %p137 = scmp.ne.s32.totalorder %s129, %s131
      %p138 = scmp.eq.s32.totalorder %s37, 1
      %p139 = por %p137, %p138
      %p140 = scmp.ne.s32.totalorder %s131, %s132
      %p141 = scmp.eq.s32.totalorder %s37, 0
      %p142 = por %p140, %p141
      %p143 = scmp.ne.s32.totalorder %s131, %s132
      %p144 = scmp.eq.s32.totalorder %s38, 1
      %p145 = por %p143, %p144
      %p147 = scmp.ne.s32.totalorder %s132, %s146
      %p148 = scmp.eq.s32.totalorder %s38, 0
      %p149 = por %p147, %p148
      %s151 = sadd.s32 %s150, 1
      %p154 = scmp.eq.s32.totalorder %s32, 1
      %p155 = scmp.ne.s32.totalorder %s150, %s152
      %p156 = scmp.eq.s32.totalorder %s32, 0
      %p157 = por %p155, %p156
      %p158 = scmp.ne.s32.totalorder %s150, %s152
      %p159 = scmp.eq.s32.totalorder %s37, 1
      %p160 = por %p158, %p159
      %p161 = scmp.ne.s32.totalorder %s152, %s153
      %p162 = scmp.eq.s32.totalorder %s37, 0
      %p163 = por %p161, %p162
      %p164 = scmp.ne.s32.totalorder %s152, %s153
      %p165 = scmp.eq.s32.totalorder %s38, 1
      %p166 = por %p164, %p165
      %p168 = scmp.ne.s32.totalorder %s153, %s167
      %p169 = scmp.eq.s32.totalorder %s38, 0
      %p170 = por %p168, %p169
      %s172 = sadd.s32 %s171, 1
      %p175 = scmp.eq.s32.totalorder %s32, 1
      %p176 = scmp.ne.s32.totalorder %s171, %s173
      %p177 = scmp.eq.s32.totalorder %s32, 0
      %p178 = por %p176, %p177
      %p179 = scmp.ne.s32.totalorder %s171, %s173
      %p180 = scmp.eq.s32.totalorder %s37, 1
      %p181 = por %p179, %p180
      %p182 = scmp.ne.s32.totalorder %s173, %s174
      %p183 = scmp.eq.s32.totalorder %s37, 0
      %p184 = por %p182, %p183
      %p185 = scmp.ne.s32.totalorder %s173, %s174
      %p186 = scmp.eq.s32.totalorder %s38, 1
      %p187 = por %p185, %p186
      %p189 = scmp.ne.s32.totalorder %s174, %s188
      %p190 = scmp.eq.s32.totalorder %s38, 0
      %p191 = por %p189, %p190
      %s193 = sadd.s32 %s192, 1
      %p196 = scmp.eq.s32.totalorder %s32, 1
      %p197 = scmp.ne.s32.totalorder %s192, %s194
      %p198 = scmp.eq.s32.totalorder %s32, 0
      %p199 = por %p197, %p198
      %p200 = scmp.ne.s32.totalorder %s192, %s194
      %p201 = scmp.eq.s32.totalorder %s37, 1
      %p202 = por %p200, %p201
      %p203 = scmp.ne.s32.totalorder %s194, %s195
      %p204 = scmp.eq.s32.totalorder %s37, 0
      %p205 = por %p203, %p204
      %p206 = scmp.ne.s32.totalorder %s194, %s195
      %p207 = scmp.eq.s32.totalorder %s38, 1
      %p208 = por %p206, %p207
      %p210 = scmp.ne.s32.totalorder %s195, %s209
      %p211 = scmp.eq.s32.totalorder %s38, 0
      %p212 = por %p210, %p211
      %s214 = sadd.s32 %s213, 1
      %p217 = scmp.eq.s32.totalorder %s32, 1
      %p218 = scmp.ne.s32.totalorder %s213, %s215
      %p219 = scmp.eq.s32.totalorder %s32, 0
      %p220 = por %p218, %p219
      %p221 = scmp.ne.s32.totalorder %s213, %s215
      %p222 = scmp.eq.s32.totalorder %s37, 1
      %p223 = por %p221, %p222
      %p224 = scmp.ne.s32.totalorder %s215, %s216
      %p225 = scmp.eq.s32.totalorder %s37, 0
      %p226 = por %p224, %p225
      %p227 = scmp.ne.s32.totalorder %s215, %s216
      %p228 = scmp.eq.s32.totalorder %s38, 1
      %p229 = por %p227, %p228
      %p231 = scmp.ne.s32.totalorder %s216, %s230
      %p232 = scmp.eq.s32.totalorder %s38, 0
      %p233 = por %p231, %p232
      %s235 = sadd.s32 %s234, 1
      %p238 = scmp.eq.s32.totalorder %s32, 1
      %p239 = scmp.ne.s32.totalorder %s234, %s236
      %p240 = scmp.eq.s32.totalorder %s32, 0
      %p241 = por %p239, %p240
      %p242 = scmp.ne.s32.totalorder %s234, %s236
      %p243 = scmp.eq.s32.totalorder %s37, 1
      %p244 = por %p242, %p243
      %p245 = scmp.ne.s32.totalorder %s236, %s237
      %p246 = scmp.eq.s32.totalorder %s37, 0
      %p247 = por %p245, %p246
      %p248 = scmp.ne.s32.totalorder %s236, %s237
      %p249 = scmp.eq.s32.totalorder %s38, 1
      %p250 = por %p248, %p249
      %p252 = scmp.ne.s32.totalorder %s237, %s251
      %p253 = scmp.eq.s32.totalorder %s38, 0
      %p254 = por %p252, %p253
      %s256 = sadd.s32 %s255, 1
      %p259 = scmp.eq.s32.totalorder %s32, 1
      %p260 = scmp.ne.s32.totalorder %s255, %s257
      %p261 = scmp.eq.s32.totalorder %s32, 0
      %p262 = por %p260, %p261
      %p263 = scmp.ne.s32.totalorder %s255, %s257
      %p264 = scmp.eq.s32.totalorder %s37, 1
      %p265 = por %p263, %p264
      %p266 = scmp.ne.s32.totalorder %s257, %s258
      %p267 = scmp.eq.s32.totalorder %s37, 0
      %p268 = por %p266, %p267
      %p269 = scmp.ne.s32.totalorder %s257, %s258
      %p270 = scmp.eq.s32.totalorder %s38, 1
      %p271 = por %p269, %p270
      %p273 = scmp.ne.s32.totalorder %s258, %s272
      %p274 = scmp.eq.s32.totalorder %s38, 0
      %p275 = por %p273, %p274
      %s277 = sadd.s32 %s276, 1
      %p280 = scmp.eq.s32.totalorder %s32, 1
      %p281 = scmp.ne.s32.totalorder %s276, %s278
      %p282 = scmp.eq.s32.totalorder %s32, 0
      %p283 = por %p281, %p282
      %p284 = scmp.ne.s32.totalorder %s276, %s278
      %p285 = scmp.eq.s32.totalorder %s37, 1
      %p286 = por %p284, %p285
      %p287 = scmp.ne.s32.totalorder %s278, %s279
      %p288 = scmp.eq.s32.totalorder %s37, 0
      %p289 = por %p287, %p288
      %p290 = scmp.ne.s32.totalorder %s278, %s279
      %p291 = scmp.eq.s32.totalorder %s38, 1
      %p292 = por %p290, %p291
      %p294 = scmp.ne.s32.totalorder %s279, %s293
      %p295 = scmp.eq.s32.totalorder %s38, 0
      %p296 = por %p294, %p295
      %s298 = sadd.s32 %s297, 1
      %p301 = scmp.eq.s32.totalorder %s32, 1
      %p302 = scmp.ne.s32.totalorder %s297, %s299
      %p303 = scmp.eq.s32.totalorder %s32, 0
      %p304 = por %p302, %p303
      %p305 = scmp.ne.s32.totalorder %s297, %s299
      %p306 = scmp.eq.s32.totalorder %s37, 1
      %p307 = por %p305, %p306
      %p308 = scmp.ne.s32.totalorder %s299, %s300
      %p309 = scmp.eq.s32.totalorder %s37, 0
      %p310 = por %p308, %p309
      %p311 = scmp.ne.s32.totalorder %s299, %s300
      %p312 = scmp.eq.s32.totalorder %s38, 1
      %p313 = por %p311, %p312
      %p315 = scmp.ne.s32.totalorder %s300, %s314
      %p316 = scmp.eq.s32.totalorder %s38, 0
      %p317 = por %p315, %p316
      %s319 = sadd.s32 %s318, 1
      %p322 = scmp.eq.s32.totalorder %s32, 1
      %p323 = scmp.ne.s32.totalorder %s318, %s320
      %p324 = scmp.eq.s32.totalorder %s32, 0
      %p325 = por %p323, %p324
      %p326 = scmp.ne.s32.totalorder %s318, %s320
      %p327 = scmp.eq.s32.totalorder %s37, 1
      %p328 = por %p326, %p327
      %p329 = scmp.ne.s32.totalorder %s320, %s321
      %p330 = scmp.eq.s32.totalorder %s37, 0
      %p331 = por %p329, %p330
      %p332 = scmp.ne.s32.totalorder %s320, %s321
      %p333 = scmp.eq.s32.totalorder %s38, 1
      %p334 = por %p332, %p333
      %p336 = scmp.ne.s32.totalorder %s321, %s335
      %p337 = scmp.eq.s32.totalorder %s38, 0
      %p338 = por %p336, %p337
      %s340 = sadd.s32 %s339, 1
      %p343 = scmp.eq.s32.totalorder %s32, 1
      %p344 = scmp.ne.s32.totalorder %s339, %s341
      %p345 = scmp.eq.s32.totalorder %s32, 0
      %p346 = por %p344, %p345
      %p347 = scmp.ne.s32.totalorder %s339, %s341
      %p348 = scmp.eq.s32.totalorder %s37, 1
      %p349 = por %p347, %p348
      %p350 = scmp.ne.s32.totalorder %s341, %s342
      %p351 = scmp.eq.s32.totalorder %s37, 0
      %p352 = por %p350, %p351
      %p353 = scmp.ne.s32.totalorder %s341, %s342
      %p354 = scmp.eq.s32.totalorder %s38, 1
      %p355 = por %p353, %p354
      %p357 = scmp.ne.s32.totalorder %s342, %s356
      %p358 = scmp.eq.s32.totalorder %s38, 0
      %p359 = por %p357, %p358
      %s361 = sadd.s32 %s360, 1
      %p364 = scmp.eq.s32.totalorder %s32, 1
      %p365 = scmp.ne.s32.totalorder %s360, %s362
      %p366 = scmp.eq.s32.totalorder %s32, 0
      %p367 = por %p365, %p366
      %p368 = scmp.ne.s32.totalorder %s360, %s362
      %p369 = scmp.eq.s32.totalorder %s37, 1
      %p370 = por %p368, %p369
      %p371 = scmp.ne.s32.totalorder %s362, %s363
      %p372 = scmp.eq.s32.totalorder %s37, 0
      %p373 = por %p371, %p372
      %p374 = scmp.ne.s32.totalorder %s362, %s363
      %p375 = scmp.eq.s32.totalorder %s38, 1
      %p376 = por %p374, %p375
      %p378 = scmp.ne.s32.totalorder %s363, %s377
      %p379 = scmp.eq.s32.totalorder %s38, 0
      %p380 = por %p378, %p379
      %s382 = sadd.s32 %s381, 1
      %p385 = scmp.eq.s32.totalorder %s32, 1
      %p386 = scmp.ne.s32.totalorder %s381, %s383
      %p387 = scmp.eq.s32.totalorder %s32, 0
      %p388 = por %p386, %p387
      %p389 = scmp.ne.s32.totalorder %s381, %s383
      %p390 = scmp.eq.s32.totalorder %s37, 1
      %p391 = por %p389, %p390
      %p392 = scmp.ne.s32.totalorder %s383, %s384
      %p393 = scmp.eq.s32.totalorder %s37, 0
      %p394 = por %p392, %p393
      %p395 = scmp.ne.s32.totalorder %s383, %s384
      %p396 = scmp.eq.s32.totalorder %s38, 1
      %p397 = por %p395, %p396
      %p399 = scmp.ne.s32.totalorder %s384, %s398
      %p400 = scmp.eq.s32.totalorder %s38, 0
      %p401 = por %p399, %p400
      %s403 = sadd.s32 %s402, 1
      %p406 = scmp.eq.s32.totalorder %s32, 1
      %p407 = scmp.ne.s32.totalorder %s402, %s404
      %p408 = scmp.eq.s32.totalorder %s32, 0
      %p409 = por %p407, %p408
      %p410 = scmp.ne.s32.totalorder %s402, %s404
      %p411 = scmp.eq.s32.totalorder %s37, 1
      %p412 = por %p410, %p411
      %p413 = scmp.ne.s32.totalorder %s404, %s405
      %p414 = scmp.eq.s32.totalorder %s37, 0
      %p415 = por %p413, %p414
      %p416 = scmp.ne.s32.totalorder %s404, %s405
      %p417 = scmp.eq.s32.totalorder %s38, 1
      %p418 = por %p416, %p417
      %p420 = scmp.ne.s32.totalorder %s405, %s419
      %p421 = scmp.eq.s32.totalorder %s38, 0
      %p422 = por %p420, %p421
      %s424 = sadd.s32 %s423, 1
      %p427 = scmp.eq.s32.totalorder %s32, 1
      %p428 = scmp.ne.s32.totalorder %s423, %s425
      %p429 = scmp.eq.s32.totalorder %s32, 0
      %p430 = por %p428, %p429
      %p431 = scmp.ne.s32.totalorder %s423, %s425
      %p432 = scmp.eq.s32.totalorder %s37, 1
      %p433 = por %p431, %p432
      %p434 = scmp.ne.s32.totalorder %s425, %s426
      %p435 = scmp.eq.s32.totalorder %s37, 0
      %p436 = por %p434, %p435
      %p437 = scmp.ne.s32.totalorder %s425, %s426
      %p438 = scmp.eq.s32.totalorder %s38, 1
      %p439 = por %p437, %p438
      %p441 = scmp.ne.s32.totalorder %s426, %s440
      %p442 = scmp.eq.s32.totalorder %s38, 0
      %p443 = por %p441, %p442
      %s445 = sadd.s32 %s444, 1
      %p448 = scmp.eq.s32.totalorder %s32, 1
      %p449 = scmp.ne.s32.totalorder %s444, %s446
      %p450 = scmp.eq.s32.totalorder %s32, 0
      %p451 = por %p449, %p450
      %p452 = scmp.ne.s32.totalorder %s444, %s446
      %p453 = scmp.eq.s32.totalorder %s37, 1
      %p454 = por %p452, %p453
      %p455 = scmp.ne.s32.totalorder %s446, %s447
      %p456 = scmp.eq.s32.totalorder %s37, 0
      %p457 = por %p455, %p456
      %p458 = scmp.ne.s32.totalorder %s446, %s447
      %p459 = scmp.eq.s32.totalorder %s38, 1
      %p460 = por %p458, %p459
      %p462 = scmp.ne.s32.totalorder %s447, %s461
      %p463 = scmp.eq.s32.totalorder %s38, 0
      %p464 = por %p462, %p463
      %s466 = sadd.s32 %s465, 1
      %p469 = scmp.eq.s32.totalorder %s32, 1
      %p470 = scmp.ne.s32.totalorder %s465, %s467
      %p471 = scmp.eq.s32.totalorder %s32, 0
      %p472 = por %p470, %p471
      %p473 = scmp.ne.s32.totalorder %s465, %s467
      %p474 = scmp.eq.s32.totalorder %s37, 1
      %p475 = por %p473, %p474
      %p476 = scmp.ne.s32.totalorder %s467, %s468
      %p477 = scmp.eq.s32.totalorder %s37, 0
      %p478 = por %p476, %p477
      %p479 = scmp.ne.s32.totalorder %s467, %s468
      %p480 = scmp.eq.s32.totalorder %s38, 1
      %p481 = por %p479, %p480
      %p483 = scmp.ne.s32.totalorder %s468, %s482
      %p484 = scmp.eq.s32.totalorder %s38, 0
      %p485 = por %p483, %p484
      %s487 = sadd.s32 %s486, 1
      %p490 = scmp.eq.s32.totalorder %s32, 1
      %p491 = scmp.ne.s32.totalorder %s486, %s488
      %p492 = scmp.eq.s32.totalorder %s32, 0
      %p493 = por %p491, %p492
      %p494 = scmp.ne.s32.totalorder %s486, %s488
      %p495 = scmp.eq.s32.totalorder %s37, 1
      %p496 = por %p494, %p495
      %p497 = scmp.ne.s32.totalorder %s488, %s489
      %p498 = scmp.eq.s32.totalorder %s37, 0
      %p499 = por %p497, %p498
      %p500 = scmp.ne.s32.totalorder %s488, %s489
      %p501 = scmp.eq.s32.totalorder %s38, 1
      %p502 = por %p500, %p501
      %p504 = scmp.ne.s32.totalorder %s489, %s503
      %p505 = scmp.eq.s32.totalorder %s38, 0
      %p506 = por %p504, %p505
      %s508 = sadd.s32 %s507, 1
      %p511 = scmp.eq.s32.totalorder %s32, 1
      %p512 = scmp.ne.s32.totalorder %s507, %s509
      %p513 = scmp.eq.s32.totalorder %s32, 0
      %p514 = por %p512, %p513
      %p515 = scmp.ne.s32.totalorder %s507, %s509
      %p516 = scmp.eq.s32.totalorder %s37, 1
      %p517 = por %p515, %p516
      %p518 = scmp.ne.s32.totalorder %s509, %s510
      %p519 = scmp.eq.s32.totalorder %s37, 0
      %p520 = por %p518, %p519
      %p521 = scmp.ne.s32.totalorder %s509, %s510
      %p522 = scmp.eq.s32.totalorder %s38, 1
      %p523 = por %p521, %p522
      %p525 = scmp.ne.s32.totalorder %s510, %s524
      %p526 = scmp.eq.s32.totalorder %s38, 0
      %p527 = por %p525, %p526
      %s528 = ssub.s32 %s32, %s39
      %p529 = scmp.eq.s32.totalorder %s528, 0
      %s531 = sadd.s32 %s530, 1
      %s532 = scalar_select %p529, %s530, %s531
      %p535 = pneg %p529
      %p536 = scmp.eq.s32.totalorder %s32, 1
      %p537 = por %p535, %p536
      %p538 = scmp.ne.s32.totalorder %s530, %s533
      %p539 = scmp.eq.s32.totalorder %s32, 0
      %p540 = por %p538, %p539
      %p541 = scmp.ne.s32.totalorder %s530, %s533
      %p542 = scmp.eq.s32.totalorder %s37, 1
      %p543 = por %p541, %p542
      %p544 = scmp.ne.s32.totalorder %s533, %s534
      %p545 = scmp.eq.s32.totalorder %s37, 0
      %p546 = por %p544, %p545
      %p547 = scmp.ne.s32.totalorder %s533, %s534
      %p548 = scmp.eq.s32.totalorder %s38, 1
      %p549 = por %p547, %p548
      %p551 = scmp.ne.s32.totalorder %s534, %s550
      %p552 = scmp.eq.s32.totalorder %s38, 0
      %p553 = por %p551, %p552
      %p554 = scmp.le.s32.totalorder 1, %s32
      %p555 = scmp.lt.s32.totalorder %s32, 3
      %p556 = pnand %p554, %p555
      %p557 = pneg %p556
      // Predicated region
      $region9: #{multiclass_cnn3_forward.1} parent=5 // pred_check
        _
      $region10: #{multiclass_cnn3_forward.1} parent=5 // pred_check_branch
        %559 = sbr.rel (%p556) target = $region12
      $region11: #{multiclass_cnn3_forward.1} parent=5 // pred_region
        %s560 = ssub.s32 %s32, 1
        // Predicated region
        $region13: #{multiclass_cnn3_forward.1} parent=11 // pred_check
          %p561 = pneg %p79
        $region14: #{multiclass_cnn3_forward.1} parent=11 // pred_check_branch
          %563 = sbr.rel (%p561) target = $region16
        $region15: #{multiclass_cnn3_forward.1} parent=11 // pred_region
          _
        $region16: #{multiclass_cnn3_forward.1} parent=11 // pred_fallthru
          _
        // Predicated region
        $region17: #{multiclass_cnn3_forward.1} parent=11 // pred_check
          %p564 = pneg %p100
        $region18: #{multiclass_cnn3_forward.1} parent=11 // pred_check_branch
          %566 = sbr.rel (%p564) target = $region20
        $region19: #{multiclass_cnn3_forward.1} parent=11 // pred_region
          _
        $region20: #{multiclass_cnn3_forward.1} parent=11 // pred_fallthru
          _
        // Predicated region
        $region21: #{multiclass_cnn3_forward.1} parent=11 // pred_check
          %p567 = pneg %p121
        $region22: #{multiclass_cnn3_forward.1} parent=11 // pred_check_branch
          %569 = sbr.rel (%p567) target = $region24
        $region23: #{multiclass_cnn3_forward.1} parent=11 // pred_region
          _
        $region24: #{multiclass_cnn3_forward.1} parent=11 // pred_fallthru
          _
        // Predicated region
        $region25: #{multiclass_cnn3_forward.1} parent=11 // pred_check
          %p570 = pneg %p142
        $region26: #{multiclass_cnn3_forward.1} parent=11 // pred_check_branch
          %572 = sbr.rel (%p570) target = $region28
        $region27: #{multiclass_cnn3_forward.1} parent=11 // pred_region
          _
        $region28: #{multiclass_cnn3_forward.1} parent=11 // pred_fallthru
          _
        // Predicated region
        $region29: #{multiclass_cnn3_forward.1} parent=11 // pred_check
          %p573 = pneg %p163
        $region30: #{multiclass_cnn3_forward.1} parent=11 // pred_check_branch
          %575 = sbr.rel (%p573) target = $region32
        $region31: #{multiclass_cnn3_forward.1} parent=11 // pred_region
          _
        $region32: #{multiclass_cnn3_forward.1} parent=11 // pred_fallthru
          _
        // Predicated region
        $region33: #{multiclass_cnn3_forward.1} parent=11 // pred_check
          %p576 = pneg %p184
        $region34: #{multiclass_cnn3_forward.1} parent=11 // pred_check_branch
          %578 = sbr.rel (%p576) target = $region36
        $region35: #{multiclass_cnn3_forward.1} parent=11 // pred_region
          _
        $region36: #{multiclass_cnn3_forward.1} parent=11 // pred_fallthru
          _
        // Predicated region
        $region37: #{multiclass_cnn3_forward.1} parent=11 // pred_check
          %p579 = pneg %p205
        $region38: #{multiclass_cnn3_forward.1} parent=11 // pred_check_branch
          %581 = sbr.rel (%p579) target = $region40
        $region39: #{multiclass_cnn3_forward.1} parent=11 // pred_region
          _
        $region40: #{multiclass_cnn3_forward.1} parent=11 // pred_fallthru
          _
        // Predicated region
        $region41: #{multiclass_cnn3_forward.1} parent=11 // pred_check
          %p582 = pneg %p226
        $region42: #{multiclass_cnn3_forward.1} parent=11 // pred_check_branch
          %584 = sbr.rel (%p582) target = $region44
        $region43: #{multiclass_cnn3_forward.1} parent=11 // pred_region
          _
        $region44: #{multiclass_cnn3_forward.1} parent=11 // pred_fallthru
          _
        // Predicated region
        $region45: #{multiclass_cnn3_forward.1} parent=11 // pred_check
          %p585 = pneg %p247
        $region46: #{multiclass_cnn3_forward.1} parent=11 // pred_check_branch
          %587 = sbr.rel (%p585) target = $region48
        $region47: #{multiclass_cnn3_forward.1} parent=11 // pred_region
          _
        $region48: #{multiclass_cnn3_forward.1} parent=11 // pred_fallthru
          _
        // Predicated region
        $region49: #{multiclass_cnn3_forward.1} parent=11 // pred_check
          %p588 = pneg %p268
        $region50: #{multiclass_cnn3_forward.1} parent=11 // pred_check_branch
          %590 = sbr.rel (%p588) target = $region52
        $region51: #{multiclass_cnn3_forward.1} parent=11 // pred_region
          _
        $region52: #{multiclass_cnn3_forward.1} parent=11 // pred_fallthru
          _
        // Predicated region
        $region53: #{multiclass_cnn3_forward.1} parent=11 // pred_check
          %p591 = pneg %p289
        $region54: #{multiclass_cnn3_forward.1} parent=11 // pred_check_branch
          %593 = sbr.rel (%p591) target = $region56
        $region55: #{multiclass_cnn3_forward.1} parent=11 // pred_region
          _
        $region56: #{multiclass_cnn3_forward.1} parent=11 // pred_fallthru
          _
        // Predicated region
        $region57: #{multiclass_cnn3_forward.1} parent=11 // pred_check
          %p594 = pneg %p310
        $region58: #{multiclass_cnn3_forward.1} parent=11 // pred_check_branch
          %596 = sbr.rel (%p594) target = $region60
        $region59: #{multiclass_cnn3_forward.1} parent=11 // pred_region
          _
        $region60: #{multiclass_cnn3_forward.1} parent=11 // pred_fallthru
          _
        // Predicated region
        $region61: #{multiclass_cnn3_forward.1} parent=11 // pred_check
          %p597 = pneg %p331
        $region62: #{multiclass_cnn3_forward.1} parent=11 // pred_check_branch
          %599 = sbr.rel (%p597) target = $region64
        $region63: #{multiclass_cnn3_forward.1} parent=11 // pred_region
          _
        $region64: #{multiclass_cnn3_forward.1} parent=11 // pred_fallthru
          _
        // Predicated region
        $region65: #{multiclass_cnn3_forward.1} parent=11 // pred_check
          %p600 = pneg %p352
        $region66: #{multiclass_cnn3_forward.1} parent=11 // pred_check_branch
          %602 = sbr.rel (%p600) target = $region68
        $region67: #{multiclass_cnn3_forward.1} parent=11 // pred_region
          _
        $region68: #{multiclass_cnn3_forward.1} parent=11 // pred_fallthru
          _
        // Predicated region
        $region69: #{multiclass_cnn3_forward.1} parent=11 // pred_check
          %p603 = pneg %p373
        $region70: #{multiclass_cnn3_forward.1} parent=11 // pred_check_branch
          %605 = sbr.rel (%p603) target = $region72
        $region71: #{multiclass_cnn3_forward.1} parent=11 // pred_region
          _
        $region72: #{multiclass_cnn3_forward.1} parent=11 // pred_fallthru
          _
        // Predicated region
        $region73: #{multiclass_cnn3_forward.1} parent=11 // pred_check
          %p606 = pneg %p394
        $region74: #{multiclass_cnn3_forward.1} parent=11 // pred_check_branch
          %608 = sbr.rel (%p606) target = $region76
        $region75: #{multiclass_cnn3_forward.1} parent=11 // pred_region
          _
        $region76: #{multiclass_cnn3_forward.1} parent=11 // pred_fallthru
          _
        // Predicated region
        $region77: #{multiclass_cnn3_forward.1} parent=11 // pred_check
          %p609 = pneg %p415
        $region78: #{multiclass_cnn3_forward.1} parent=11 // pred_check_branch
          %611 = sbr.rel (%p609) target = $region80
        $region79: #{multiclass_cnn3_forward.1} parent=11 // pred_region
          _
        $region80: #{multiclass_cnn3_forward.1} parent=11 // pred_fallthru
          _
        // Predicated region
        $region81: #{multiclass_cnn3_forward.1} parent=11 // pred_check
          %p612 = pneg %p436
        $region82: #{multiclass_cnn3_forward.1} parent=11 // pred_check_branch
          %614 = sbr.rel (%p612) target = $region84
        $region83: #{multiclass_cnn3_forward.1} parent=11 // pred_region
          _
        $region84: #{multiclass_cnn3_forward.1} parent=11 // pred_fallthru
          _
        // Predicated region
        $region85: #{multiclass_cnn3_forward.1} parent=11 // pred_check
          %p615 = pneg %p457
        $region86: #{multiclass_cnn3_forward.1} parent=11 // pred_check_branch
          %617 = sbr.rel (%p615) target = $region88
        $region87: #{multiclass_cnn3_forward.1} parent=11 // pred_region
          _
        $region88: #{multiclass_cnn3_forward.1} parent=11 // pred_fallthru
          _
        // Predicated region
        $region89: #{multiclass_cnn3_forward.1} parent=11 // pred_check
          %p618 = pneg %p478
        $region90: #{multiclass_cnn3_forward.1} parent=11 // pred_check_branch
          %620 = sbr.rel (%p618) target = $region92
        $region91: #{multiclass_cnn3_forward.1} parent=11 // pred_region
          _
        $region92: #{multiclass_cnn3_forward.1} parent=11 // pred_fallthru
          _
        // Predicated region
        $region93: #{multiclass_cnn3_forward.1} parent=11 // pred_check
          %p621 = pneg %p499
        $region94: #{multiclass_cnn3_forward.1} parent=11 // pred_check_branch
          %623 = sbr.rel (%p621) target = $region96
        $region95: #{multiclass_cnn3_forward.1} parent=11 // pred_region
          _
        $region96: #{multiclass_cnn3_forward.1} parent=11 // pred_fallthru
          _
        // Predicated region
        $region97: #{multiclass_cnn3_forward.1} parent=11 // pred_check
          %p624 = pneg %p520
        $region98: #{multiclass_cnn3_forward.1} parent=11 // pred_check_branch
          %626 = sbr.rel (%p624) target = $region100
        $region99: #{multiclass_cnn3_forward.1} parent=11 // pred_region
          _
        $region100: #{multiclass_cnn3_forward.1} parent=11 // pred_fallthru
          _
      $region12: #{multiclass_cnn3_forward.1} parent=5 // pred_fallthru
        _
      %p627 = scmp.lt.s32.totalorder %s32, 2
      // Predicated region
      $region101: #{multiclass_cnn3_forward.1} parent=5 // pred_check
        %p628 = pneg %p627
      $region102: #{multiclass_cnn3_forward.1} parent=5 // pred_check_branch
        %630 = sbr.rel (%p628) target = $region104
      $region103: #{multiclass_cnn3_forward.1} parent=5 // pred_region
        // Predicated region
        $region105: #{multiclass_cnn3_forward.1} parent=103 // pred_check
          %p631 = pneg %p52
        $region106: #{multiclass_cnn3_forward.1} parent=103 // pred_check_branch
          %633 = sbr.rel (%p631) target = $region108
        $region107: #{multiclass_cnn3_forward.1} parent=103 // pred_region
          %p634 = scmp.lt.s32.totalorder %s32, 1
          %s635 = scalar_select %p634, %s32, 1
          %s636 = smul.addr %s635, 128
          %s637 = smul.addr %s636, 4
          %s638 = scalar_lea.vmem %s0, %s637
        $region108: #{multiclass_cnn3_forward.1} parent=103 // pred_fallthru
          _
      $region104: #{multiclass_cnn3_forward.1} parent=5 // pred_fallthru
        _
      %p639 = scmp.le.s32.totalorder 1, %s32
      %p640 = scmp.lt.s32.totalorder %s32, 3
      %p641 = pnand %p639, %p640
      %p642 = pneg %p641
      // Predicated region
      $region109: #{multiclass_cnn3_forward.1} parent=5 // pred_check
        _
      $region110: #{multiclass_cnn3_forward.1} parent=5 // pred_check_branch
        %644 = sbr.rel (%p641) target = $region112
      $region111: #{multiclass_cnn3_forward.1} parent=5 // pred_region
        %s645 = ssub.s32 %s32, 1
        %p646 = scmp.lt.s32.totalorder %s37, 1
        %s647 = scalar_select %p646, %s37, 1
        %s648 = smul.addr %s647, 128
        %s649 = smul.addr %s648, 4
        %s650 = scalar_lea.vmem %s0, %s649
        %p651 = pneg %p58
        %p652 = pneg %p55
        %p653 = pneg %p79
        %p654 = pneg %p76
        %p655 = pneg %p100
        %p656 = pneg %p97
        %p657 = pneg %p121
        %p658 = pneg %p118
        %p659 = pneg %p142
        %p660 = pneg %p139
        %p661 = pneg %p163
        %p662 = pneg %p160
        %p663 = pneg %p184
        %p664 = pneg %p181
        %p665 = pneg %p205
        %p666 = pneg %p202
        %p667 = pneg %p226
        %p668 = pneg %p223
        %p669 = pneg %p247
        %p670 = pneg %p244
        %p671 = pneg %p268
        %p672 = pneg %p265
        %p673 = pneg %p289
        %p674 = pneg %p286
        %p675 = pneg %p310
        %p676 = pneg %p307
        %p677 = pneg %p331
        %p678 = pneg %p328
        %p679 = pneg %p352
        %p680 = pneg %p349
        %p681 = pneg %p373
        %p682 = pneg %p370
        %p683 = pneg %p394
        %p684 = pneg %p391
        %p685 = pneg %p415
        %p686 = pneg %p412
        %p687 = pneg %p436
        %p688 = pneg %p433
        %p689 = pneg %p457
        %p690 = pneg %p454
        %p691 = pneg %p478
        %p692 = pneg %p475
        %p693 = pneg %p499
        %p694 = pneg %p496
        %p695 = pneg %p520
        %p696 = pneg %p517
        %p697 = pneg %p546
        %p698 = pneg %p543
        %s699 = sand.u32 %s533, 1
        %s700 = scalar_lea.sflag [#allocation3], %s699
        %s701 = sand.u32 %s533, 1
        %s702 = scalar_lea.vmem [#allocation2], %s701
        %p703 = scmp.lt.s32.totalorder %s37, 1
        %s704 = scalar_select %p703, %s37, 1
        %s705 = smul.addr %s704, 128
        %s706 = smul.addr %s705, 4
        %s707 = scalar_lea.vmem %s0, %s706
        %v709 = vld [vmem:[%s707] sm:$0xf]
        %v710 = vld [vmem:[%s707 + $0x4] sm:$0xf]
        %v711 = vld [vmem:[%s707 + $0x8] sm:$0xf]
        %v712 = vld [vmem:[%s707 + $0xc] sm:$0xf]
        %v713 = vld [vmem:[%s707 + $0x10] sm:$0xf]
        %v714 = vld [vmem:[%s707 + $0x14] sm:$0xf]
        %v715 = vld [vmem:[%s707 + $0x18] sm:$0xf]
        %v716 = vld [vmem:[%s707 + $0x1c] sm:$0xf]
        %v717 = vld [vmem:[%s707 + $0x20] sm:$0xf]
        %v718 = vld [vmem:[%s707 + $0x24] sm:$0xf]
        %v719 = vld [vmem:[%s707 + $0x28] sm:$0xf]
        %v720 = vld [vmem:[%s707 + $0x2c] sm:$0xf]
        %v721 = vld [vmem:[%s707 + $0x30] sm:$0xf]
        %v722 = vld [vmem:[%s707 + $0x34] sm:$0xf]
        %v723 = vld [vmem:[%s707 + $0x38] sm:$0xf]
        %v724 = vld [vmem:[%s707 + $0x3c] sm:$0xf]
        %v725 = vld [vmem:[%s707 + $0x40] sm:$0xf]
        %v726 = vld [vmem:[%s707 + $0x44] sm:$0xf]
        %v727 = vld [vmem:[%s707 + $0x48] sm:$0xf]
        %v728 = vld [vmem:[%s707 + $0x4c] sm:$0xf]
        %v729 = vld [vmem:[%s707 + $0x50] sm:$0xf]
        %v730 = vld [vmem:[%s707 + $0x54] sm:$0xf]
        %v731 = vld [vmem:[%s707 + $0x58] sm:$0xf]
        %v732 = vld [vmem:[%s707 + $0x5c] sm:$0xf]
        %v733 = vld [vmem:[%s707 + $0x60] sm:$0xf]
        %v734 = vld [vmem:[%s707 + $0x64] sm:$0xf]
        %v735 = vld [vmem:[%s707 + $0x68] sm:$0xf]
        %v736 = vld [vmem:[%s707 + $0x6c] sm:$0xf]
        %v737 = vld [vmem:[%s707 + $0x70] sm:$0xf]
        %v738 = vld [vmem:[%s707 + $0x74] sm:$0xf]
        %v739 = vld [vmem:[%s707 + $0x78] sm:$0xf]
        %v740 = vld [vmem:[%s707 + $0x7c] sm:$0xf]
        %v741 = vld [vmem:[%s707 + $0x80] sm:$0xf]
        %v742 = vld [vmem:[%s707 + $0x84] sm:$0xf]
        %v743 = vld [vmem:[%s707 + $0x88] sm:$0xf]
        %v744 = vld [vmem:[%s707 + $0x8c] sm:$0xf]
        %v745 = vld [vmem:[%s707 + $0x90] sm:$0xf]
        %v746 = vld [vmem:[%s707 + $0x94] sm:$0xf]
        %v747 = vld [vmem:[%s707 + $0x98] sm:$0xf]
        %v748 = vld [vmem:[%s707 + $0x9c] sm:$0xf]
        %v749 = vld [vmem:[%s707 + $0xa0] sm:$0xf]
        %v750 = vld [vmem:[%s707 + $0xa4] sm:$0xf]
        %v751 = vld [vmem:[%s707 + $0xa8] sm:$0xf]
        %v752 = vld [vmem:[%s707 + $0xac] sm:$0xf]
        %v753 = vld [vmem:[%s707 + $0xb0] sm:$0xf]
        %v754 = vld [vmem:[%s707 + $0xb4] sm:$0xf]
        %v755 = vld [vmem:[%s707 + $0xb8] sm:$0xf]
        %v756 = vld [vmem:[%s707 + $0xbc] sm:$0xf]
        %v757 = vld [vmem:[%s707 + $0xc0] sm:$0xf]
        %v758 = vld [vmem:[%s707 + $0xc4] sm:$0xf]
        %v759 = vld [vmem:[%s707 + $0xc8] sm:$0xf]
        %v760 = vld [vmem:[%s707 + $0xcc] sm:$0xf]
        %v761 = vld [vmem:[%s707 + $0xd0] sm:$0xf]
        %v762 = vld [vmem:[%s707 + $0xd4] sm:$0xf]
        %v763 = vld [vmem:[%s707 + $0xd8] sm:$0xf]
        %v764 = vld [vmem:[%s707 + $0xdc] sm:$0xf]
        %v765 = vld [vmem:[%s707 + $0xe0] sm:$0xf]
        %v766 = vld [vmem:[%s707 + $0xe4] sm:$0xf]
        %v767 = vld [vmem:[%s707 + $0xe8] sm:$0xf]
        %v768 = vld [vmem:[%s707 + $0xec] sm:$0xf]
        %v769 = vld [vmem:[%s707 + $0xf0] sm:$0xf]
        %v770 = vld [vmem:[%s707 + $0xf4] sm:$0xf]
        %v771 = vld [vmem:[%s707 + $0xf8] sm:$0xf]
        %v772 = vld [vmem:[%s707 + $0xfc] sm:$0xf]
        %v773 = vld [vmem:[%s707 + $0x100] sm:$0xf]
        %v774 = vld [vmem:[%s707 + $0x104] sm:$0xf]
        %v775 = vld [vmem:[%s707 + $0x108] sm:$0xf]
        %v776 = vld [vmem:[%s707 + $0x10c] sm:$0xf]
        %v777 = vld [vmem:[%s707 + $0x110] sm:$0xf]
        %v778 = vld [vmem:[%s707 + $0x114] sm:$0xf]
        %v779 = vld [vmem:[%s707 + $0x118] sm:$0xf]
        %v780 = vld [vmem:[%s707 + $0x11c] sm:$0xf]
        %v781 = vld [vmem:[%s707 + $0x120] sm:$0xf]
        %v782 = vld [vmem:[%s707 + $0x124] sm:$0xf]
        %v783 = vld [vmem:[%s707 + $0x128] sm:$0xf]
        %v784 = vld [vmem:[%s707 + $0x12c] sm:$0xf]
        %v785 = vld [vmem:[%s707 + $0x130] sm:$0xf]
        %v786 = vld [vmem:[%s707 + $0x134] sm:$0xf]
        %v787 = vld [vmem:[%s707 + $0x138] sm:$0xf]
        %v788 = vld [vmem:[%s707 + $0x13c] sm:$0xf]
        %v789 = vld [vmem:[%s707 + $0x140] sm:$0xf]
        %v790 = vld [vmem:[%s707 + $0x144] sm:$0xf]
        %v791 = vld [vmem:[%s707 + $0x148] sm:$0xf]
        %v792 = vld [vmem:[%s707 + $0x14c] sm:$0xf]
        %v793 = vld [vmem:[%s707 + $0x150] sm:$0xf]
        %v794 = vld [vmem:[%s707 + $0x154] sm:$0xf]
        %v795 = vld [vmem:[%s707 + $0x158] sm:$0xf]
        %v796 = vld [vmem:[%s707 + $0x15c] sm:$0xf]
        %v797 = vld [vmem:[%s707 + $0x160] sm:$0xf]
        %v798 = vld [vmem:[%s707 + $0x164] sm:$0xf]
        %v799 = vld [vmem:[%s707 + $0x168] sm:$0xf]
        %v800 = vld [vmem:[%s707 + $0x16c] sm:$0xf]
        %v801 = vld [vmem:[%s707 + $0x170] sm:$0xf]
        %v802 = vld [vmem:[%s707 + $0x174] sm:$0xf]
        %v803 = vld [vmem:[%s707 + $0x178] sm:$0xf]
        %v804 = vld [vmem:[%s707 + $0x17c] sm:$0xf]
        %v805 = vld [vmem:[%s707 + $0x180] sm:$0xf]
        %v806 = vld [vmem:[%s707 + $0x184] sm:$0xf]
        %v807 = vld [vmem:[%s707 + $0x188] sm:$0xf]
        %v808 = vld [vmem:[%s707 + $0x18c] sm:$0xf]
        %v809 = vld [vmem:[%s707 + $0x190] sm:$0xf]
        %v810 = vld [vmem:[%s707 + $0x194] sm:$0xf]
        %v811 = vld [vmem:[%s707 + $0x198] sm:$0xf]
        %v812 = vld [vmem:[%s707 + $0x19c] sm:$0xf]
        %v813 = vld [vmem:[%s707 + $0x1a0] sm:$0xf]
        %v814 = vld [vmem:[%s707 + $0x1a4] sm:$0xf]
        %v815 = vld [vmem:[%s707 + $0x1a8] sm:$0xf]
        %v816 = vld [vmem:[%s707 + $0x1ac] sm:$0xf]
        %v817 = vld [vmem:[%s707 + $0x1b0] sm:$0xf]
        %v818 = vld [vmem:[%s707 + $0x1b4] sm:$0xf]
        %v819 = vld [vmem:[%s707 + $0x1b8] sm:$0xf]
        %v820 = vld [vmem:[%s707 + $0x1bc] sm:$0xf]
        %v821 = vld [vmem:[%s707 + $0x1c0] sm:$0xf]
        %v822 = vld [vmem:[%s707 + $0x1c4] sm:$0xf]
        %v823 = vld [vmem:[%s707 + $0x1c8] sm:$0xf]
        %v824 = vld [vmem:[%s707 + $0x1cc] sm:$0xf]
        %v825 = vld [vmem:[%s707 + $0x1d0] sm:$0xf]
        %v826 = vld [vmem:[%s707 + $0x1d4] sm:$0xf]
        %v827 = vld [vmem:[%s707 + $0x1d8] sm:$0xf]
        %v828 = vld [vmem:[%s707 + $0x1dc] sm:$0xf]
        %v829 = vld [vmem:[%s707 + $0x1e0] sm:$0xf]
        %v830 = vld [vmem:[%s707 + $0x1e4] sm:$0xf]
        %v831 = vld [vmem:[%s707 + $0x1e8] sm:$0xf]
        %v832 = vld [vmem:[%s707 + $0x1ec] sm:$0xf]
        %v833 = vld [vmem:[%s707 + $0x1f0] sm:$0xf]
        %v834 = vld [vmem:[%s707 + $0x1f4] sm:$0xf]
        %v835 = vld [vmem:[%s707 + $0x1f8] sm:$0xf]
        %v836 = vld [vmem:[%s707 + $0x1fc] sm:$0xf]
        %v837 = vld [vmem:[%s1] sm:$0xf]
        %v838 = vld [vmem:[%s1 + $0x4] sm:$0x1]
        %v839 = vld [vmem:[%s2] sm:$0x1]
        %v841 = vlaneseq
        %v842 = vshrl.u32 %v841, 7
        %v843 = vsub.s32 0, %v842
        %v844 = vrot.slane %v839, %v843
        %v974 = vunpack.c.l.b16 %v709
        %v975 = vunpack.c.l.b16 %v710
        %v976 = vunpack.c.l.b16 %v711
        %v977 = vunpack.c.l.b16 %v712
        %v978 = vunpack.c.l.b16 %v713
        %v979 = vunpack.c.l.b16 %v714
        %v980 = vunpack.c.l.b16 %v715
        %v981 = vunpack.c.l.b16 %v716
        %v982 = vunpack.c.l.b16 %v717
        %v983 = vunpack.c.l.b16 %v718
        %v984 = vunpack.c.l.b16 %v719
        %v985 = vunpack.c.l.b16 %v720
        %v986 = vunpack.c.l.b16 %v721
        %v987 = vunpack.c.l.b16 %v722
        %v988 = vunpack.c.l.b16 %v723
        %v989 = vunpack.c.l.b16 %v724
        %v990 = vunpack.c.l.b16 %v725
        %v991 = vunpack.c.l.b16 %v726
        %v992 = vunpack.c.l.b16 %v727
        %v993 = vunpack.c.l.b16 %v728
        %v994 = vunpack.c.l.b16 %v729
        %v995 = vunpack.c.l.b16 %v730
        %v996 = vunpack.c.l.b16 %v731
        %v997 = vunpack.c.l.b16 %v732
        %v998 = vunpack.c.l.b16 %v733
        %v999 = vunpack.c.l.b16 %v734
        %v1000 = vunpack.c.l.b16 %v735
        %v1001 = vunpack.c.l.b16 %v736
        %v1002 = vunpack.c.l.b16 %v737
        %v1003 = vunpack.c.l.b16 %v738
        %v1004 = vunpack.c.l.b16 %v739
        %v1005 = vunpack.c.l.b16 %v740
        %v1006 = vunpack.c.l.b16 %v741
        %v1007 = vunpack.c.l.b16 %v742
        %v1008 = vunpack.c.l.b16 %v743
        %v1009 = vunpack.c.l.b16 %v744
        %v1010 = vunpack.c.l.b16 %v745
        %v1011 = vunpack.c.l.b16 %v746
        %v1012 = vunpack.c.l.b16 %v747
        %v1013 = vunpack.c.l.b16 %v748
        %v1014 = vunpack.c.l.b16 %v749
        %v1015 = vunpack.c.l.b16 %v750
        %v1016 = vunpack.c.l.b16 %v751
        %v1017 = vunpack.c.l.b16 %v752
        %v1018 = vunpack.c.l.b16 %v753
        %v1019 = vunpack.c.l.b16 %v754
        %v1020 = vunpack.c.l.b16 %v755
        %v1021 = vunpack.c.l.b16 %v756
        %v1022 = vunpack.c.l.b16 %v757
        %v1023 = vunpack.c.l.b16 %v758
        %v1024 = vunpack.c.l.b16 %v759
        %v1025 = vunpack.c.l.b16 %v760
        %v1026 = vunpack.c.l.b16 %v761
        %v1027 = vunpack.c.l.b16 %v762
        %v1028 = vunpack.c.l.b16 %v763
        %v1029 = vunpack.c.l.b16 %v764
        %v1030 = vunpack.c.l.b16 %v765
        %v1031 = vunpack.c.l.b16 %v766
        %v1032 = vunpack.c.l.b16 %v767
        %v1033 = vunpack.c.l.b16 %v768
        %v1034 = vunpack.c.l.b16 %v769
        %v1035 = vunpack.c.l.b16 %v770
        %v1036 = vunpack.c.l.b16 %v771
        %v1037 = vunpack.c.l.b16 %v772
        %v1038 = vunpack.c.l.b16 %v773
        %v1039 = vunpack.c.l.b16 %v774
        %v1040 = vunpack.c.l.b16 %v775
        %v1041 = vunpack.c.l.b16 %v776
        %v1042 = vunpack.c.l.b16 %v777
        %v1043 = vunpack.c.l.b16 %v778
        %v1044 = vunpack.c.l.b16 %v779
        %v1045 = vunpack.c.l.b16 %v780
        %v1046 = vunpack.c.l.b16 %v781
        %v1047 = vunpack.c.l.b16 %v782
        %v1048 = vunpack.c.l.b16 %v783
        %v1049 = vunpack.c.l.b16 %v784
        %v1050 = vunpack.c.l.b16 %v785
        %v1051 = vunpack.c.l.b16 %v786
        %v1052 = vunpack.c.l.b16 %v787
        %v1053 = vunpack.c.l.b16 %v788
        %v1054 = vunpack.c.l.b16 %v789
        %v1055 = vunpack.c.l.b16 %v790
        %v1056 = vunpack.c.l.b16 %v791
        %v1057 = vunpack.c.l.b16 %v792
        %v1058 = vunpack.c.l.b16 %v793
        %v1059 = vunpack.c.l.b16 %v794
        %v1060 = vunpack.c.l.b16 %v795
        %v1061 = vunpack.c.l.b16 %v796
        %v1062 = vunpack.c.l.b16 %v797
        %v1063 = vunpack.c.l.b16 %v798
        %v1064 = vunpack.c.l.b16 %v799
        %v1065 = vunpack.c.l.b16 %v800
        %v1066 = vunpack.c.l.b16 %v801
        %v1067 = vunpack.c.l.b16 %v802
        %v1068 = vunpack.c.l.b16 %v803
        %v1069 = vunpack.c.l.b16 %v804
        %v1070 = vunpack.c.l.b16 %v805
        %v1071 = vunpack.c.l.b16 %v806
        %v1072 = vunpack.c.l.b16 %v807
        %v1073 = vunpack.c.l.b16 %v808
        %v1074 = vunpack.c.l.b16 %v809
        %v1075 = vunpack.c.l.b16 %v810
        %v1076 = vunpack.c.l.b16 %v811
        %v1077 = vunpack.c.l.b16 %v812
        %v1078 = vunpack.c.l.b16 %v813
        %v1079 = vunpack.c.l.b16 %v814
        %v1080 = vunpack.c.l.b16 %v815
        %v1081 = vunpack.c.l.b16 %v816
        %v1082 = vunpack.c.l.b16 %v817
        %v1083 = vunpack.c.l.b16 %v818
        %v1084 = vunpack.c.l.b16 %v819
        %v1085 = vunpack.c.l.b16 %v820
        %v1086 = vunpack.c.l.b16 %v821
        %v1087 = vunpack.c.l.b16 %v822
        %v1088 = vunpack.c.l.b16 %v823
        %v1089 = vunpack.c.l.b16 %v824
        %v1090 = vunpack.c.l.b16 %v825
        %v1091 = vunpack.c.l.b16 %v826
        %v1092 = vunpack.c.l.b16 %v827
        %v1093 = vunpack.c.l.b16 %v828
        %v1094 = vunpack.c.l.b16 %v829
        %v1095 = vunpack.c.l.b16 %v830
        %v1096 = vunpack.c.l.b16 %v831
        %v1097 = vunpack.c.l.b16 %v832
        %v1098 = vunpack.c.l.b16 %v833
        %v1099 = vunpack.c.l.b16 %v834
        %v1100 = vunpack.c.l.b16 %v835
        %v1101 = vunpack.c.l.b16 %v836
        %v1102 = vpack.c.b16 %v975, %v974
        %v1103 = vpack.c.b16 %v977, %v976
        %v1104 = vpack.c.b16 %v979, %v978
        %v1105 = vpack.c.b16 %v981, %v980
        %v1106 = vpack.c.b16 %v983, %v982
        %v1107 = vpack.c.b16 %v985, %v984
        %v1108 = vpack.c.b16 %v987, %v986
        %v1109 = vpack.c.b16 %v989, %v988
        %v1110 = vpack.c.b16 %v991, %v990
        %v1111 = vpack.c.b16 %v993, %v992
        %v1112 = vpack.c.b16 %v995, %v994
        %v1113 = vpack.c.b16 %v997, %v996
        %v1114 = vpack.c.b16 %v999, %v998
        %v1115 = vpack.c.b16 %v1001, %v1000
        %v1116 = vpack.c.b16 %v1003, %v1002
        %v1117 = vpack.c.b16 %v1005, %v1004
        %v1118 = vpack.c.b16 %v1007, %v1006
        %v1119 = vpack.c.b16 %v1009, %v1008
        %v1120 = vpack.c.b16 %v1011, %v1010
        %v1121 = vpack.c.b16 %v1013, %v1012
        %v1122 = vpack.c.b16 %v1015, %v1014
        %v1123 = vpack.c.b16 %v1017, %v1016
        %v1124 = vpack.c.b16 %v1019, %v1018
        %v1125 = vpack.c.b16 %v1021, %v1020
        %v1126 = vpack.c.b16 %v1023, %v1022
        %v1127 = vpack.c.b16 %v1025, %v1024
        %v1128 = vpack.c.b16 %v1027, %v1026
        %v1129 = vpack.c.b16 %v1029, %v1028
        %v1130 = vpack.c.b16 %v1031, %v1030
        %v1131 = vpack.c.b16 %v1033, %v1032
        %v1132 = vpack.c.b16 %v1035, %v1034
        %v1133 = vpack.c.b16 %v1037, %v1036
        %v1134 = vpack.c.b16 %v1039, %v1038
        %v1135 = vpack.c.b16 %v1041, %v1040
        %v1136 = vpack.c.b16 %v1043, %v1042
        %v1137 = vpack.c.b16 %v1045, %v1044
        %v1138 = vpack.c.b16 %v1047, %v1046
        %v1139 = vpack.c.b16 %v1049, %v1048
        %v1140 = vpack.c.b16 %v1051, %v1050
        %v1141 = vpack.c.b16 %v1053, %v1052
        %v1142 = vpack.c.b16 %v1055, %v1054
        %v1143 = vpack.c.b16 %v1057, %v1056
        %v1144 = vpack.c.b16 %v1059, %v1058
        %v1145 = vpack.c.b16 %v1061, %v1060
        %v1146 = vpack.c.b16 %v1063, %v1062
        %v1147 = vpack.c.b16 %v1065, %v1064
        %v1148 = vpack.c.b16 %v1067, %v1066
        %v1149 = vpack.c.b16 %v1069, %v1068
        %v1150 = vpack.c.b16 %v1071, %v1070
        %v1151 = vpack.c.b16 %v1073, %v1072
        %v1152 = vpack.c.b16 %v1075, %v1074
        %v1153 = vpack.c.b16 %v1077, %v1076
        %v1154 = vpack.c.b16 %v1079, %v1078
        %v1155 = vpack.c.b16 %v1081, %v1080
        %v1156 = vpack.c.b16 %v1083, %v1082
        %v1157 = vpack.c.b16 %v1085, %v1084
        %v1158 = vpack.c.b16 %v1087, %v1086
        %v1159 = vpack.c.b16 %v1089, %v1088
        %v1160 = vpack.c.b16 %v1091, %v1090
        %v1161 = vpack.c.b16 %v1093, %v1092
        %v1162 = vpack.c.b16 %v1095, %v1094
        %v1163 = vpack.c.b16 %v1097, %v1096
        %v1164 = vpack.c.b16 %v1099, %v1098
        %v1165 = vpack.c.b16 %v1101, %v1100
        %v1168 = vunpack.c.l.b16 %v837
        %v1169 = vunpack.c.l.b16 %v838
        %v1170 = vpack.c.b16 %v1169, %v1168
        %vm1171 = vcmask 72704
        %v1173 = vsel %vm1171, %v1102, 0
        %v1176 = vsel %vm1171, %v1103, 0
        %v1179 = vsel %vm1171, %v1104, 0
        %v1182 = vsel %vm1171, %v1105, 0
        %v1185 = vsel %vm1171, %v1106, 0
        %v1188 = vsel %vm1171, %v1107, 0
        %v1191 = vsel %vm1171, %v1108, 0
        %v1194 = vsel %vm1171, %v1109, 0
        %v1197 = vsel %vm1171, %v1110, 0
        %v1200 = vsel %vm1171, %v1111, 0
        %v1203 = vsel %vm1171, %v1112, 0
        %v1206 = vsel %vm1171, %v1113, 0
        %v1209 = vsel %vm1171, %v1114, 0
        %v1212 = vsel %vm1171, %v1115, 0
        %v1215 = vsel %vm1171, %v1116, 0
        %v1218 = vsel %vm1171, %v1117, 0
        %v1221 = vsel %vm1171, %v1118, 0
        %v1224 = vsel %vm1171, %v1119, 0
        %v1227 = vsel %vm1171, %v1120, 0
        %v1230 = vsel %vm1171, %v1121, 0
        %v1233 = vsel %vm1171, %v1122, 0
        %v1236 = vsel %vm1171, %v1123, 0
        %v1239 = vsel %vm1171, %v1124, 0
        %v1242 = vsel %vm1171, %v1125, 0
        %v1245 = vsel %vm1171, %v1126, 0
        %v1248 = vsel %vm1171, %v1127, 0
        %v1251 = vsel %vm1171, %v1128, 0
        %v1254 = vsel %vm1171, %v1129, 0
        %v1257 = vsel %vm1171, %v1130, 0
        %v1260 = vsel %vm1171, %v1131, 0
        %v1263 = vsel %vm1171, %v1132, 0
        %v1266 = vsel %vm1171, %v1133, 0
        %v1269 = vsel %vm1171, %v1134, 0
        %v1272 = vsel %vm1171, %v1135, 0
        %v1275 = vsel %vm1171, %v1136, 0
        %v1278 = vsel %vm1171, %v1137, 0
        %v1281 = vsel %vm1171, %v1138, 0
        %v1284 = vsel %vm1171, %v1139, 0
        %v1287 = vsel %vm1171, %v1140, 0
        %v1290 = vsel %vm1171, %v1141, 0
        %v1293 = vsel %vm1171, %v1142, 0
        %v1296 = vsel %vm1171, %v1143, 0
        %v1299 = vsel %vm1171, %v1144, 0
        %v1302 = vsel %vm1171, %v1145, 0
        %v1305 = vsel %vm1171, %v1146, 0
        %v1308 = vsel %vm1171, %v1147, 0
        %v1311 = vsel %vm1171, %v1148, 0
        %v1314 = vsel %vm1171, %v1149, 0
        %v1317 = vsel %vm1171, %v1150, 0
        %v1320 = vsel %vm1171, %v1151, 0
        %v1323 = vsel %vm1171, %v1152, 0
        %v1326 = vsel %vm1171, %v1153, 0
        %v1329 = vsel %vm1171, %v1154, 0
        %v1332 = vsel %vm1171, %v1155, 0
        %v1335 = vsel %vm1171, %v1156, 0
        %v1338 = vsel %vm1171, %v1157, 0
        %v1341 = vsel %vm1171, %v1158, 0
        %v1344 = vsel %vm1171, %v1159, 0
        %v1347 = vsel %vm1171, %v1160, 0
        %v1350 = vsel %vm1171, %v1161, 0
        %v1353 = vsel %vm1171, %v1162, 0
        %v1356 = vsel %vm1171, %v1163, 0
        %v1359 = vsel %vm1171, %v1164, 0
        %v1362 = vsel %vm1171, %v1165, 0
        %vm1364 = vcmask 1043456
        %vm1365 = vcmask 1044480
        %v1366 = vsel %vm1364, 4294967295, 65535
        %v1367 = vsel %vm1365, %v1366, 0
        %v1369 = vand.u32 %v1170, %v1367
        %1371 = vmatprep.subr.bf16.mxu0 0
        %1372 = vmatpush1.bf16.msra.mxu0 %v1369
        %1373 = vmatprep.subr.bf16.mxu0 0
        %1374 = vmatpush1.bf16.msra.mxu0 0
        %1375 = vmatprep.subr.bf16.mxu0 0
        %1376 = vmatpush1.bf16.msra.mxu0 0
        %1377 = vmatprep.subr.bf16.mxu0 0
        %1378 = vmatpush1.bf16.msra.mxu0 0
        %1379 = vmatprep.subr.bf16.mxu0 0
        %1380 = vmatpush1.bf16.msra.mxu0 0
        %1381 = vmatprep.subr.bf16.mxu0 0
        %1382 = vmatpush1.bf16.msra.mxu0 0
        %1383 = vmatprep.subr.bf16.mxu0 0
        %1384 = vmatpush1.bf16.msra.mxu0 0
        %1385 = vmatprep.subr.bf16.mxu0 0
        %1386 = vmatpush1.bf16.msra.mxu0 0
        %1387 = vmatprep.subr.bf16.mxu0 0
        %1388 = vmatpush1.bf16.msra.mxu0 0
        %1389 = vmatprep.subr.bf16.mxu0 0
        %1390 = vmatpush1.bf16.msra.mxu0 0
        %1391 = vmatprep.subr.bf16.mxu0 0
        %1392 = vmatpush1.bf16.msra.mxu0 0
        %1393 = vmatprep.subr.bf16.mxu0 0
        %1394 = vmatpush1.bf16.msra.mxu0 0
        %1395 = vmatprep.subr.bf16.mxu0 0
        %1396 = vmatpush1.bf16.msra.mxu0 0
        %1397 = vmatprep.subr.bf16.mxu0 0
        %1398 = vmatpush1.bf16.msra.mxu0 0
        %1399 = vmatprep.subr.bf16.mxu0 0
        %1400 = vmatpush1.bf16.msra.mxu0 0
        %1401 = vmatprep.subr.bf16.mxu0 0
        %1402 = vmatpush1.bf16.msra.mxu0 0
        %1403 = vmatprep.mubr.bf16.mxu0 0
        %1404 = vmatmul.mubr.bf16.gmra.mrb[0].mxu0 %v1173
        %v1405 = vpop.f32.mrb[0].mxu0
        %v1406 = vadd.f32 %v844, %v1405
        %v1407 = vpop.f32.mrb[0].mxu0
        %v1408 = vpop.f32.mrb[0].mxu0
        %v1409 = vadd.f32 %v844, %v1408
        %v1410 = vpop.f32.mrb[0].mxu0
        %1411 = vmatprep.mubr.bf16.mxu0 0
        %1412 = vmatmul.mubr.bf16.gmra.mrb[0].mxu0 %v1176
        %v1413 = vpop.f32.mrb[0].mxu0
        %v1414 = vadd.f32 %v844, %v1413
        %v1415 = vpop.f32.mrb[0].mxu0
        %v1416 = vpop.f32.mrb[0].mxu0
        %v1417 = vadd.f32 %v844, %v1416
        %v1418 = vpop.f32.mrb[0].mxu0
        %1419 = vmatprep.mubr.bf16.mxu0 0
        %1420 = vmatmul.mubr.bf16.gmra.mrb[0].mxu0 %v1179
        %v1421 = vpop.f32.mrb[0].mxu0
        %v1422 = vadd.f32 %v844, %v1421
        %v1423 = vpop.f32.mrb[0].mxu0
        %v1424 = vpop.f32.mrb[0].mxu0
        %v1425 = vadd.f32 %v844, %v1424
        %v1426 = vpop.f32.mrb[0].mxu0
        %1427 = vmatprep.mubr.bf16.mxu0 0
        %1428 = vmatmul.mubr.bf16.gmra.mrb[0].mxu0 %v1182
        %v1429 = vpop.f32.mrb[0].mxu0
        %v1430 = vadd.f32 %v844, %v1429
        %v1431 = vpop.f32.mrb[0].mxu0
        %v1432 = vpop.f32.mrb[0].mxu0
        %v1433 = vadd.f32 %v844, %v1432
        %v1434 = vpop.f32.mrb[0].mxu0
        %1435 = vmatprep.mubr.bf16.mxu0 0
        %1436 = vmatmul.mubr.bf16.gmra.mrb[0].mxu0 %v1185
        %v1437 = vpop.f32.mrb[0].mxu0
        %v1438 = vadd.f32 %v844, %v1437
        %v1439 = vpop.f32.mrb[0].mxu0
        %v1440 = vpop.f32.mrb[0].mxu0
        %v1441 = vadd.f32 %v844, %v1440
        %v1442 = vpop.f32.mrb[0].mxu0
        %1443 = vmatprep.mubr.bf16.mxu0 0
        %1444 = vmatmul.mubr.bf16.gmra.mrb[0].mxu0 %v1188
        %v1445 = vpop.f32.mrb[0].mxu0
        %v1446 = vadd.f32 %v844, %v1445
        %v1447 = vpop.f32.mrb[0].mxu0
        %v1448 = vpop.f32.mrb[0].mxu0
        %v1449 = vadd.f32 %v844, %v1448
        %v1450 = vpop.f32.mrb[0].mxu0
        %1451 = vmatprep.mubr.bf16.mxu0 0
        %1452 = vmatmul.mubr.bf16.gmra.mrb[0].mxu0 %v1191
        %v1453 = vpop.f32.mrb[0].mxu0
        %v1454 = vadd.f32 %v844, %v1453
        %v1455 = vpop.f32.mrb[0].mxu0
        %v1456 = vpop.f32.mrb[0].mxu0
        %v1457 = vadd.f32 %v844, %v1456
        %v1458 = vpop.f32.mrb[0].mxu0
        %1459 = vmatprep.mubr.bf16.mxu0 0
        %1460 = vmatmul.mubr.bf16.gmra.mrb[0].mxu0 %v1194
        %v1461 = vpop.f32.mrb[0].mxu0
        %v1462 = vadd.f32 %v844, %v1461
        %v1463 = vpop.f32.mrb[0].mxu0
        %v1464 = vpop.f32.mrb[0].mxu0
        %v1465 = vadd.f32 %v844, %v1464
        %v1466 = vpop.f32.mrb[0].mxu0
        %1467 = vmatprep.mubr.bf16.mxu0 0
        %1468 = vmatmul.mubr.bf16.gmra.mrb[0].mxu0 %v1197
        %v1469 = vpop.f32.mrb[0].mxu0
        %v1470 = vadd.f32 %v844, %v1469
        %v1471 = vpop.f32.mrb[0].mxu0
        %v1472 = vpop.f32.mrb[0].mxu0
        %v1473 = vadd.f32 %v844, %v1472
        %v1474 = vpop.f32.mrb[0].mxu0
        %1475 = vmatprep.mubr.bf16.mxu0 0
        %1476 = vmatmul.mubr.bf16.gmra.mrb[0].mxu0 %v1200
        %v1477 = vpop.f32.mrb[0].mxu0
        %v1478 = vadd.f32 %v844, %v1477
        %v1479 = vpop.f32.mrb[0].mxu0
        %v1480 = vpop.f32.mrb[0].mxu0
        %v1481 = vadd.f32 %v844, %v1480
        %v1482 = vpop.f32.mrb[0].mxu0
        %1483 = vmatprep.mubr.bf16.mxu0 0
        %1484 = vmatmul.mubr.bf16.gmra.mrb[0].mxu0 %v1203
        %v1485 = vpop.f32.mrb[0].mxu0
        %v1486 = vadd.f32 %v844, %v1485
        %v1487 = vpop.f32.mrb[0].mxu0
        %v1488 = vpop.f32.mrb[0].mxu0
        %v1489 = vadd.f32 %v844, %v1488
        %v1490 = vpop.f32.mrb[0].mxu0
        %1491 = vmatprep.mubr.bf16.mxu0 0
        %1492 = vmatmul.mubr.bf16.gmra.mrb[0].mxu0 %v1206
        %v1493 = vpop.f32.mrb[0].mxu0
        %v1494 = vadd.f32 %v844, %v1493
        %v1495 = vpop.f32.mrb[0].mxu0
        %v1496 = vpop.f32.mrb[0].mxu0
        %v1497 = vadd.f32 %v844, %v1496
        %v1498 = vpop.f32.mrb[0].mxu0
        %1499 = vmatprep.mubr.bf16.mxu0 0
        %1500 = vmatmul.mubr.bf16.gmra.mrb[0].mxu0 %v1209
        %v1501 = vpop.f32.mrb[0].mxu0
        %v1502 = vadd.f32 %v844, %v1501
        %v1503 = vpop.f32.mrb[0].mxu0
        %v1504 = vpop.f32.mrb[0].mxu0
        %v1505 = vadd.f32 %v844, %v1504
        %v1506 = vpop.f32.mrb[0].mxu0
        %1507 = vmatprep.mubr.bf16.mxu0 0
        %1508 = vmatmul.mubr.bf16.gmra.mrb[0].mxu0 %v1212
        %v1509 = vpop.f32.mrb[0].mxu0
        %v1510 = vadd.f32 %v844, %v1509
        %v1511 = vpop.f32.mrb[0].mxu0
        %v1512 = vpop.f32.mrb[0].mxu0
        %v1513 = vadd.f32 %v844, %v1512
        %v1514 = vpop.f32.mrb[0].mxu0
        %1515 = vmatprep.mubr.bf16.mxu0 0
        %1516 = vmatmul.mubr.bf16.gmra.mrb[0].mxu0 %v1215
        %v1517 = vpop.f32.mrb[0].mxu0
        %v1518 = vadd.f32 %v844, %v1517
        %v1519 = vpop.f32.mrb[0].mxu0
        %v1520 = vpop.f32.mrb[0].mxu0
        %v1521 = vadd.f32 %v844, %v1520
        %v1522 = vpop.f32.mrb[0].mxu0
        %1523 = vmatprep.mubr.bf16.mxu0 0
        %1524 = vmatmul.mubr.bf16.gmra.mrb[0].mxu0 %v1218
        %v1525 = vpop.f32.mrb[0].mxu0
        %v1526 = vadd.f32 %v844, %v1525
        %v1527 = vpop.f32.mrb[0].mxu0
        %v1528 = vpop.f32.mrb[0].mxu0
        %v1529 = vadd.f32 %v844, %v1528
        %v1530 = vpop.f32.mrb[0].mxu0
        %1531 = vmatprep.mubr.bf16.mxu0 0
        %1532 = vmatmul.mubr.bf16.gmra.mrb[0].mxu0 %v1221
        %v1533 = vpop.f32.mrb[0].mxu0
        %v1534 = vadd.f32 %v844, %v1533
        %v1535 = vpop.f32.mrb[0].mxu0
        %v1536 = vpop.f32.mrb[0].mxu0
        %v1537 = vadd.f32 %v844, %v1536
        %v1538 = vpop.f32.mrb[0].mxu0
        %1539 = vmatprep.mubr.bf16.mxu0 0
        %1540 = vmatmul.mubr.bf16.gmra.mrb[0].mxu0 %v1224
        %v1541 = vpop.f32.mrb[0].mxu0
        %v1542 = vadd.f32 %v844, %v1541
        %v1543 = vpop.f32.mrb[0].mxu0
        %v1544 = vpop.f32.mrb[0].mxu0
        %v1545 = vadd.f32 %v844, %v1544
        %v1546 = vpop.f32.mrb[0].mxu0
        %1547 = vmatprep.mubr.bf16.mxu0 0
        %1548 = vmatmul.mubr.bf16.gmra.mrb[0].mxu0 %v1227
        %v1549 = vpop.f32.mrb[0].mxu0
        %v1550 = vadd.f32 %v844, %v1549
        %v1551 = vpop.f32.mrb[0].mxu0
        %v1552 = vpop.f32.mrb[0].mxu0
        %v1553 = vadd.f32 %v844, %v1552
        %v1554 = vpop.f32.mrb[0].mxu0
        %1555 = vmatprep.mubr.bf16.mxu0 0
        %1556 = vmatmul.mubr.bf16.gmra.mrb[0].mxu0 %v1230
        %v1557 = vpop.f32.mrb[0].mxu0
        %v1558 = vadd.f32 %v844, %v1557
        %v1559 = vpop.f32.mrb[0].mxu0
        %v1560 = vpop.f32.mrb[0].mxu0
        %v1561 = vadd.f32 %v844, %v1560
        %v1562 = vpop.f32.mrb[0].mxu0
        %1563 = vmatprep.mubr.bf16.mxu0 0
        %1564 = vmatmul.mubr.bf16.gmra.mrb[0].mxu0 %v1233
        %v1565 = vpop.f32.mrb[0].mxu0
        %v1566 = vadd.f32 %v844, %v1565
        %v1567 = vpop.f32.mrb[0].mxu0
        %v1568 = vpop.f32.mrb[0].mxu0
        %v1569 = vadd.f32 %v844, %v1568
        %v1570 = vpop.f32.mrb[0].mxu0
        %1571 = vmatprep.mubr.bf16.mxu0 0
        %1572 = vmatmul.mubr.bf16.gmra.mrb[0].mxu0 %v1236
        %v1573 = vpop.f32.mrb[0].mxu0
        %v1574 = vadd.f32 %v844, %v1573
        %v1575 = vpop.f32.mrb[0].mxu0
        %v1576 = vpop.f32.mrb[0].mxu0
        %v1577 = vadd.f32 %v844, %v1576
        %v1578 = vpop.f32.mrb[0].mxu0
        %1579 = vmatprep.mubr.bf16.mxu0 0
        %1580 = vmatmul.mubr.bf16.gmra.mrb[0].mxu0 %v1239
        %v1581 = vpop.f32.mrb[0].mxu0
        %v1582 = vadd.f32 %v844, %v1581
        %v1583 = vpop.f32.mrb[0].mxu0
        %v1584 = vpop.f32.mrb[0].mxu0
        %v1585 = vadd.f32 %v844, %v1584
        %v1586 = vpop.f32.mrb[0].mxu0
        %1587 = vmatprep.mubr.bf16.mxu0 0
        %1588 = vmatmul.mubr.bf16.gmra.mrb[0].mxu0 %v1242
        %v1589 = vpop.f32.mrb[0].mxu0
        %v1590 = vadd.f32 %v844, %v1589
        %v1591 = vpop.f32.mrb[0].mxu0
        %v1592 = vpop.f32.mrb[0].mxu0
        %v1593 = vadd.f32 %v844, %v1592
        %v1594 = vpop.f32.mrb[0].mxu0
        %1595 = vmatprep.mubr.bf16.mxu0 0
        %1596 = vmatmul.mubr.bf16.gmra.mrb[0].mxu0 %v1245
        %v1597 = vpop.f32.mrb[0].mxu0
        %v1598 = vadd.f32 %v844, %v1597
        %v1599 = vpop.f32.mrb[0].mxu0
        %v1600 = vpop.f32.mrb[0].mxu0
        %v1601 = vadd.f32 %v844, %v1600
        %v1602 = vpop.f32.mrb[0].mxu0
        %1603 = vmatprep.mubr.bf16.mxu0 0
        %1604 = vmatmul.mubr.bf16.gmra.mrb[0].mxu0 %v1248
        %v1605 = vpop.f32.mrb[0].mxu0
        %v1606 = vadd.f32 %v844, %v1605
        %v1607 = vpop.f32.mrb[0].mxu0
        %v1608 = vpop.f32.mrb[0].mxu0
        %v1609 = vadd.f32 %v844, %v1608
        %v1610 = vpop.f32.mrb[0].mxu0
        %1611 = vmatprep.mubr.bf16.mxu0 0
        %1612 = vmatmul.mubr.bf16.gmra.mrb[0].mxu0 %v1251
        %v1613 = vpop.f32.mrb[0].mxu0
        %v1614 = vadd.f32 %v844, %v1613
        %v1615 = vpop.f32.mrb[0].mxu0
        %v1616 = vpop.f32.mrb[0].mxu0
        %v1617 = vadd.f32 %v844, %v1616
        %v1618 = vpop.f32.mrb[0].mxu0
        %1619 = vmatprep.mubr.bf16.mxu0 0
        %1620 = vmatmul.mubr.bf16.gmra.mrb[0].mxu0 %v1254
        %v1621 = vpop.f32.mrb[0].mxu0
        %v1622 = vadd.f32 %v844, %v1621
        %v1623 = vpop.f32.mrb[0].mxu0
        %v1624 = vpop.f32.mrb[0].mxu0
        %v1625 = vadd.f32 %v844, %v1624
        %v1626 = vpop.f32.mrb[0].mxu0
        %1627 = vmatprep.mubr.bf16.mxu0 0
        %1628 = vmatmul.mubr.bf16.gmra.mrb[0].mxu0 %v1257
        %v1629 = vpop.f32.mrb[0].mxu0
        %v1630 = vadd.f32 %v844, %v1629
        %v1631 = vpop.f32.mrb[0].mxu0
        %v1632 = vpop.f32.mrb[0].mxu0
        %v1633 = vadd.f32 %v844, %v1632
        %v1634 = vpop.f32.mrb[0].mxu0
        %1635 = vmatprep.mubr.bf16.mxu0 0
        %1636 = vmatmul.mubr.bf16.gmra.mrb[0].mxu0 %v1260
        %v1637 = vpop.f32.mrb[0].mxu0
        %v1638 = vadd.f32 %v844, %v1637
        %v1639 = vpop.f32.mrb[0].mxu0
        %v1640 = vpop.f32.mrb[0].mxu0
        %v1641 = vadd.f32 %v844, %v1640
        %v1642 = vpop.f32.mrb[0].mxu0
        %1643 = vmatprep.mubr.bf16.mxu0 0
        %1644 = vmatmul.mubr.bf16.gmra.mrb[0].mxu0 %v1263
        %v1645 = vpop.f32.mrb[0].mxu0
        %v1646 = vadd.f32 %v844, %v1645
        %v1647 = vpop.f32.mrb[0].mxu0
        %v1648 = vpop.f32.mrb[0].mxu0
        %v1649 = vadd.f32 %v844, %v1648
        %v1650 = vpop.f32.mrb[0].mxu0
        %1651 = vmatprep.mubr.bf16.mxu0 0
        %1652 = vmatmul.mubr.bf16.gmra.mrb[0].mxu0 %v1266
        %v1653 = vpop.f32.mrb[0].mxu0
        %v1654 = vadd.f32 %v844, %v1653
        %v1655 = vpop.f32.mrb[0].mxu0
        %v1656 = vpop.f32.mrb[0].mxu0
        %v1657 = vadd.f32 %v844, %v1656
        %v1658 = vpop.f32.mrb[0].mxu0
        %1659 = vmatprep.mubr.bf16.mxu0 0
        %1660 = vmatmul.mubr.bf16.gmra.mrb[0].mxu0 %v1269
        %v1661 = vpop.f32.mrb[0].mxu0
        %v1662 = vadd.f32 %v844, %v1661
        %v1663 = vpop.f32.mrb[0].mxu0
        %v1664 = vpop.f32.mrb[0].mxu0
        %v1665 = vadd.f32 %v844, %v1664
        %v1666 = vpop.f32.mrb[0].mxu0
        %1667 = vmatprep.mubr.bf16.mxu0 0
        %1668 = vmatmul.mubr.bf16.gmra.mrb[0].mxu0 %v1272
        %v1669 = vpop.f32.mrb[0].mxu0
        %v1670 = vadd.f32 %v844, %v1669
        %v1671 = vpop.f32.mrb[0].mxu0
        %v1672 = vpop.f32.mrb[0].mxu0
        %v1673 = vadd.f32 %v844, %v1672
        %v1674 = vpop.f32.mrb[0].mxu0
        %1675 = vmatprep.mubr.bf16.mxu0 0
        %1676 = vmatmul.mubr.bf16.gmra.mrb[0].mxu0 %v1275
        %v1677 = vpop.f32.mrb[0].mxu0
        %v1678 = vadd.f32 %v844, %v1677
        %v1679 = vpop.f32.mrb[0].mxu0
        %v1680 = vpop.f32.mrb[0].mxu0
        %v1681 = vadd.f32 %v844, %v1680
        %v1682 = vpop.f32.mrb[0].mxu0
        %1683 = vmatprep.mubr.bf16.mxu0 0
        %1684 = vmatmul.mubr.bf16.gmra.mrb[0].mxu0 %v1278
        %v1685 = vpop.f32.mrb[0].mxu0
        %v1686 = vadd.f32 %v844, %v1685
        %v1687 = vpop.f32.mrb[0].mxu0
        %v1688 = vpop.f32.mrb[0].mxu0
        %v1689 = vadd.f32 %v844, %v1688
        %v1690 = vpop.f32.mrb[0].mxu0
        %1691 = vmatprep.mubr.bf16.mxu0 0
        %1692 = vmatmul.mubr.bf16.gmra.mrb[0].mxu0 %v1281
        %v1693 = vpop.f32.mrb[0].mxu0
        %v1694 = vadd.f32 %v844, %v1693
        %v1695 = vpop.f32.mrb[0].mxu0
        %v1696 = vpop.f32.mrb[0].mxu0
        %v1697 = vadd.f32 %v844, %v1696
        %v1698 = vpop.f32.mrb[0].mxu0
        %1699 = vmatprep.mubr.bf16.mxu0 0
        %1700 = vmatmul.mubr.bf16.gmra.mrb[0].mxu0 %v1284
        %v1701 = vpop.f32.mrb[0].mxu0
        %v1702 = vadd.f32 %v844, %v1701
        %v1703 = vpop.f32.mrb[0].mxu0
        %v1704 = vpop.f32.mrb[0].mxu0
        %v1705 = vadd.f32 %v844, %v1704
        %v1706 = vpop.f32.mrb[0].mxu0
        %1707 = vmatprep.mubr.bf16.mxu0 0
        %1708 = vmatmul.mubr.bf16.gmra.mrb[0].mxu0 %v1287
        %v1709 = vpop.f32.mrb[0].mxu0
        %v1710 = vadd.f32 %v844, %v1709
        %v1711 = vpop.f32.mrb[0].mxu0
        %v1712 = vpop.f32.mrb[0].mxu0
        %v1713 = vadd.f32 %v844, %v1712
        %v1714 = vpop.f32.mrb[0].mxu0
        %1715 = vmatprep.mubr.bf16.mxu0 0
        %1716 = vmatmul.mubr.bf16.gmra.mrb[0].mxu0 %v1290
        %v1717 = vpop.f32.mrb[0].mxu0
        %v1718 = vadd.f32 %v844, %v1717
        %v1719 = vpop.f32.mrb[0].mxu0
        %v1720 = vpop.f32.mrb[0].mxu0
        %v1721 = vadd.f32 %v844, %v1720
        %v1722 = vpop.f32.mrb[0].mxu0
        %1723 = vmatprep.mubr.bf16.mxu0 0
        %1724 = vmatmul.mubr.bf16.gmra.mrb[0].mxu0 %v1293
        %v1725 = vpop.f32.mrb[0].mxu0
        %v1726 = vadd.f32 %v844, %v1725
        %v1727 = vpop.f32.mrb[0].mxu0
        %v1728 = vpop.f32.mrb[0].mxu0
        %v1729 = vadd.f32 %v844, %v1728
        %v1730 = vpop.f32.mrb[0].mxu0
        %1731 = vmatprep.mubr.bf16.mxu0 0
        %1732 = vmatmul.mubr.bf16.gmra.mrb[0].mxu0 %v1296
        %v1733 = vpop.f32.mrb[0].mxu0
        %v1734 = vadd.f32 %v844, %v1733
        %v1735 = vpop.f32.mrb[0].mxu0
        %v1736 = vpop.f32.mrb[0].mxu0
        %v1737 = vadd.f32 %v844, %v1736
        %v1738 = vpop.f32.mrb[0].mxu0
        %1739 = vmatprep.mubr.bf16.mxu0 0
        %1740 = vmatmul.mubr.bf16.gmra.mrb[0].mxu0 %v1299
        %v1741 = vpop.f32.mrb[0].mxu0
        %v1742 = vadd.f32 %v844, %v1741
        %v1743 = vpop.f32.mrb[0].mxu0
        %v1744 = vpop.f32.mrb[0].mxu0
        %v1745 = vadd.f32 %v844, %v1744
        %v1746 = vpop.f32.mrb[0].mxu0
        %1747 = vmatprep.mubr.bf16.mxu0 0
        %1748 = vmatmul.mubr.bf16.gmra.mrb[0].mxu0 %v1302
        %v1749 = vpop.f32.mrb[0].mxu0
        %v1750 = vadd.f32 %v844, %v1749
        %v1751 = vpop.f32.mrb[0].mxu0
        %v1752 = vpop.f32.mrb[0].mxu0
        %v1753 = vadd.f32 %v844, %v1752
        %v1754 = vpop.f32.mrb[0].mxu0
        %1755 = vmatprep.mubr.bf16.mxu0 0
        %1756 = vmatmul.mubr.bf16.gmra.mrb[0].mxu0 %v1305
        %v1757 = vpop.f32.mrb[0].mxu0
        %v1758 = vadd.f32 %v844, %v1757
        %v1759 = vpop.f32.mrb[0].mxu0
        %v1760 = vpop.f32.mrb[0].mxu0
        %v1761 = vadd.f32 %v844, %v1760
        %v1762 = vpop.f32.mrb[0].mxu0
        %1763 = vmatprep.mubr.bf16.mxu0 0
        %1764 = vmatmul.mubr.bf16.gmra.mrb[0].mxu0 %v1308
        %v1765 = vpop.f32.mrb[0].mxu0
        %v1766 = vadd.f32 %v844, %v1765
        %v1767 = vpop.f32.mrb[0].mxu0
        %v1768 = vpop.f32.mrb[0].mxu0
        %v1769 = vadd.f32 %v844, %v1768
        %v1770 = vpop.f32.mrb[0].mxu0
        %1771 = vmatprep.mubr.bf16.mxu0 0
        %1772 = vmatmul.mubr.bf16.gmra.mrb[0].mxu0 %v1311
        %v1773 = vpop.f32.mrb[0].mxu0
        %v1774 = vadd.f32 %v844, %v1773
        %v1775 = vpop.f32.mrb[0].mxu0
        %v1776 = vpop.f32.mrb[0].mxu0
        %v1777 = vadd.f32 %v844, %v1776
        %v1778 = vpop.f32.mrb[0].mxu0
        %1779 = vmatprep.mubr.bf16.mxu0 0
        %1780 = vmatmul.mubr.bf16.gmra.mrb[0].mxu0 %v1314
        %v1781 = vpop.f32.mrb[0].mxu0
        %v1782 = vadd.f32 %v844, %v1781
        %v1783 = vpop.f32.mrb[0].mxu0
        %v1784 = vpop.f32.mrb[0].mxu0
        %v1785 = vadd.f32 %v844, %v1784
        %v1786 = vpop.f32.mrb[0].mxu0
        %1787 = vmatprep.mubr.bf16.mxu0 0
        %1788 = vmatmul.mubr.bf16.gmra.mrb[0].mxu0 %v1317
        %v1789 = vpop.f32.mrb[0].mxu0
        %v1790 = vadd.f32 %v844, %v1789
        %v1791 = vpop.f32.mrb[0].mxu0
        %v1792 = vpop.f32.mrb[0].mxu0
        %v1793 = vadd.f32 %v844, %v1792
        %v1794 = vpop.f32.mrb[0].mxu0
        %1795 = vmatprep.mubr.bf16.mxu0 0
        %1796 = vmatmul.mubr.bf16.gmra.mrb[0].mxu0 %v1320
        %v1797 = vpop.f32.mrb[0].mxu0
        %v1798 = vadd.f32 %v844, %v1797
        %v1799 = vpop.f32.mrb[0].mxu0
        %v1800 = vpop.f32.mrb[0].mxu0
        %v1801 = vadd.f32 %v844, %v1800
        %v1802 = vpop.f32.mrb[0].mxu0
        %1803 = vmatprep.mubr.bf16.mxu0 0
        %1804 = vmatmul.mubr.bf16.gmra.mrb[0].mxu0 %v1323
        %v1805 = vpop.f32.mrb[0].mxu0
        %v1806 = vadd.f32 %v844, %v1805
        %v1807 = vpop.f32.mrb[0].mxu0
        %v1808 = vpop.f32.mrb[0].mxu0
        %v1809 = vadd.f32 %v844, %v1808
        %v1810 = vpop.f32.mrb[0].mxu0
        %1811 = vmatprep.mubr.bf16.mxu0 0
        %1812 = vmatmul.mubr.bf16.gmra.mrb[0].mxu0 %v1326
        %v1813 = vpop.f32.mrb[0].mxu0
        %v1814 = vadd.f32 %v844, %v1813
        %v1815 = vpop.f32.mrb[0].mxu0
        %v1816 = vpop.f32.mrb[0].mxu0
        %v1817 = vadd.f32 %v844, %v1816
        %v1818 = vpop.f32.mrb[0].mxu0
        %1819 = vmatprep.mubr.bf16.mxu0 0
        %1820 = vmatmul.mubr.bf16.gmra.mrb[0].mxu0 %v1329
        %v1821 = vpop.f32.mrb[0].mxu0
        %v1822 = vadd.f32 %v844, %v1821
        %v1823 = vpop.f32.mrb[0].mxu0
        %v1824 = vpop.f32.mrb[0].mxu0
        %v1825 = vadd.f32 %v844, %v1824
        %v1826 = vpop.f32.mrb[0].mxu0
        %1827 = vmatprep.mubr.bf16.mxu0 0
        %1828 = vmatmul.mubr.bf16.gmra.mrb[0].mxu0 %v1332
        %v1829 = vpop.f32.mrb[0].mxu0
        %v1830 = vadd.f32 %v844, %v1829
        %v1831 = vpop.f32.mrb[0].mxu0
        %v1832 = vpop.f32.mrb[0].mxu0
        %v1833 = vadd.f32 %v844, %v1832
        %v1834 = vpop.f32.mrb[0].mxu0
        %1835 = vmatprep.mubr.bf16.mxu0 0
        %1836 = vmatmul.mubr.bf16.gmra.mrb[0].mxu0 %v1335
        %v1837 = vpop.f32.mrb[0].mxu0
        %v1838 = vadd.f32 %v844, %v1837
        %v1839 = vpop.f32.mrb[0].mxu0
        %v1840 = vpop.f32.mrb[0].mxu0
        %v1841 = vadd.f32 %v844, %v1840
        %v1842 = vpop.f32.mrb[0].mxu0
        %1843 = vmatprep.mubr.bf16.mxu0 0
        %1844 = vmatmul.mubr.bf16.gmra.mrb[0].mxu0 %v1338
        %v1845 = vpop.f32.mrb[0].mxu0
        %v1846 = vadd.f32 %v844, %v1845
        %v1847 = vpop.f32.mrb[0].mxu0
        %v1848 = vpop.f32.mrb[0].mxu0
        %v1849 = vadd.f32 %v844, %v1848
        %v1850 = vpop.f32.mrb[0].mxu0
        %1851 = vmatprep.mubr.bf16.mxu0 0
        %1852 = vmatmul.mubr.bf16.gmra.mrb[0].mxu0 %v1341
        %v1853 = vpop.f32.mrb[0].mxu0
        %v1854 = vadd.f32 %v844, %v1853
        %v1855 = vpop.f32.mrb[0].mxu0
        %v1856 = vpop.f32.mrb[0].mxu0
        %v1857 = vadd.f32 %v844, %v1856
        %v1858 = vpop.f32.mrb[0].mxu0
        %1859 = vmatprep.mubr.bf16.mxu0 0
        %1860 = vmatmul.mubr.bf16.gmra.mrb[0].mxu0 %v1344
        %v1861 = vpop.f32.mrb[0].mxu0
        %v1862 = vadd.f32 %v844, %v1861
        %v1863 = vpop.f32.mrb[0].mxu0
        %v1864 = vpop.f32.mrb[0].mxu0
        %v1865 = vadd.f32 %v844, %v1864
        %v1866 = vpop.f32.mrb[0].mxu0
        %1867 = vmatprep.mubr.bf16.mxu0 0
        %1868 = vmatmul.mubr.bf16.gmra.mrb[0].mxu0 %v1347
        %v1869 = vpop.f32.mrb[0].mxu0
        %v1870 = vadd.f32 %v844, %v1869
        %v1871 = vpop.f32.mrb[0].mxu0
        %v1872 = vpop.f32.mrb[0].mxu0
        %v1873 = vadd.f32 %v844, %v1872
        %v1874 = vpop.f32.mrb[0].mxu0
        %1875 = vmatprep.mubr.bf16.mxu0 0
        %1876 = vmatmul.mubr.bf16.gmra.mrb[0].mxu0 %v1350
        %v1877 = vpop.f32.mrb[0].mxu0
        %v1878 = vadd.f32 %v844, %v1877
        %v1879 = vpop.f32.mrb[0].mxu0
        %v1880 = vpop.f32.mrb[0].mxu0
        %v1881 = vadd.f32 %v844, %v1880
        %v1882 = vpop.f32.mrb[0].mxu0
        %1883 = vmatprep.mubr.bf16.mxu0 0
        %1884 = vmatmul.mubr.bf16.gmra.mrb[0].mxu0 %v1353
        %v1885 = vpop.f32.mrb[0].mxu0
        %v1886 = vadd.f32 %v844, %v1885
        %v1887 = vpop.f32.mrb[0].mxu0
        %v1888 = vpop.f32.mrb[0].mxu0
        %v1889 = vadd.f32 %v844, %v1888
        %v1890 = vpop.f32.mrb[0].mxu0
        %1891 = vmatprep.mubr.bf16.mxu0 0
        %1892 = vmatmul.mubr.bf16.gmra.mrb[0].mxu0 %v1356
        %v1893 = vpop.f32.mrb[0].mxu0
        %v1894 = vadd.f32 %v844, %v1893
        %v1895 = vpop.f32.mrb[0].mxu0
        %v1896 = vpop.f32.mrb[0].mxu0
        %v1897 = vadd.f32 %v844, %v1896
        %v1898 = vpop.f32.mrb[0].mxu0
        %1899 = vmatprep.mubr.bf16.mxu0 0
        %1900 = vmatmul.mubr.bf16.gmra.mrb[0].mxu0 %v1359
        %v1901 = vpop.f32.mrb[0].mxu0
        %v1902 = vadd.f32 %v844, %v1901
        %v1903 = vpop.f32.mrb[0].mxu0
        %v1904 = vpop.f32.mrb[0].mxu0
        %v1905 = vadd.f32 %v844, %v1904
        %v1906 = vpop.f32.mrb[0].mxu0
        %1907 = vmatprep.mubr.bf16.mxu0 0
        %1908 = vmatmul.mubr.bf16.gmra.mrb[0].mxu0 %v1362
        %v1909 = vpop.f32.mrb[0].mxu0
        %v1910 = vadd.f32 %v844, %v1909
        %v1911 = vpop.f32.mrb[0].mxu0
        %v1912 = vpop.f32.mrb[0].mxu0
        %v1913 = vadd.f32 %v844, %v1912
        %v1914 = vpop.f32.mrb[0].mxu0
        %1915 = vdwg.mxu0
        %v1916 = vmax.f32 %v1406, 0.0
        %v1917 = vmax.f32 %v1409, 0.0
        %v1918 = vmax.f32 %v1414, 0.0
        %v1919 = vmax.f32 %v1417, 0.0
        %v1920 = vmax.f32 %v1422, 0.0
        %v1921 = vmax.f32 %v1425, 0.0
        %v1922 = vmax.f32 %v1430, 0.0
        %v1923 = vmax.f32 %v1433, 0.0
        %v1924 = vmax.f32 %v1438, 0.0
        %v1925 = vmax.f32 %v1441, 0.0
        %v1926 = vmax.f32 %v1446, 0.0
        %v1927 = vmax.f32 %v1449, 0.0
        %v1928 = vmax.f32 %v1454, 0.0
        %v1929 = vmax.f32 %v1457, 0.0
        %v1930 = vmax.f32 %v1462, 0.0
        %v1931 = vmax.f32 %v1465, 0.0
        %v1932 = vmax.f32 %v1470, 0.0
        %v1933 = vmax.f32 %v1473, 0.0
        %v1934 = vmax.f32 %v1478, 0.0
        %v1935 = vmax.f32 %v1481, 0.0
        %v1936 = vmax.f32 %v1486, 0.0
        %v1937 = vmax.f32 %v1489, 0.0
        %v1938 = vmax.f32 %v1494, 0.0
        %v1939 = vmax.f32 %v1497, 0.0
        %v1940 = vmax.f32 %v1502, 0.0
        %v1941 = vmax.f32 %v1505, 0.0
        %v1942 = vmax.f32 %v1510, 0.0
        %v1943 = vmax.f32 %v1513, 0.0
        %v1944 = vmax.f32 %v1518, 0.0
        %v1945 = vmax.f32 %v1521, 0.0
        %v1946 = vmax.f32 %v1526, 0.0
        %v1947 = vmax.f32 %v1529, 0.0
        %v1948 = vmax.f32 %v1534, 0.0
        %v1949 = vmax.f32 %v1537, 0.0
        %v1950 = vmax.f32 %v1542, 0.0
        %v1951 = vmax.f32 %v1545, 0.0
        %v1952 = vmax.f32 %v1550, 0.0
        %v1953 = vmax.f32 %v1553, 0.0
        %v1954 = vmax.f32 %v1558, 0.0
        %v1955 = vmax.f32 %v1561, 0.0
        %v1956 = vmax.f32 %v1566, 0.0
        %v1957 = vmax.f32 %v1569, 0.0
        %v1958 = vmax.f32 %v1574, 0.0
        %v1959 = vmax.f32 %v1577, 0.0
        %v1960 = vmax.f32 %v1582, 0.0
        %v1961 = vmax.f32 %v1585, 0.0
        %v1962 = vmax.f32 %v1590, 0.0
        %v1963 = vmax.f32 %v1593, 0.0
        %v1964 = vmax.f32 %v1598, 0.0
        %v1965 = vmax.f32 %v1601, 0.0
        %v1966 = vmax.f32 %v1606, 0.0
        %v1967 = vmax.f32 %v1609, 0.0
        %v1968 = vmax.f32 %v1614, 0.0
        %v1969 = vmax.f32 %v1617, 0.0
        %v1970 = vmax.f32 %v1622, 0.0
        %v1971 = vmax.f32 %v1625, 0.0
        %v1972 = vmax.f32 %v1630, 0.0
        %v1973 = vmax.f32 %v1633, 0.0
        %v1974 = vmax.f32 %v1638, 0.0
        %v1975 = vmax.f32 %v1641, 0.0
        %v1976 = vmax.f32 %v1646, 0.0
        %v1977 = vmax.f32 %v1649, 0.0
        %v1978 = vmax.f32 %v1654, 0.0
        %v1979 = vmax.f32 %v1657, 0.0
        %v1980 = vmax.f32 %v1662, 0.0
        %v1981 = vmax.f32 %v1665, 0.0
        %v1982 = vmax.f32 %v1670, 0.0
        %v1983 = vmax.f32 %v1673, 0.0
        %v1984 = vmax.f32 %v1678, 0.0
        %v1985 = vmax.f32 %v1681, 0.0
        %v1986 = vmax.f32 %v1686, 0.0
        %v1987 = vmax.f32 %v1689, 0.0
        %v1988 = vmax.f32 %v1694, 0.0
        %v1989 = vmax.f32 %v1697, 0.0
        %v1990 = vmax.f32 %v1702, 0.0
        %v1991 = vmax.f32 %v1705, 0.0
        %v1992 = vmax.f32 %v1710, 0.0
        %v1993 = vmax.f32 %v1713, 0.0
        %v1994 = vmax.f32 %v1718, 0.0
        %v1995 = vmax.f32 %v1721, 0.0
        %v1996 = vmax.f32 %v1726, 0.0
        %v1997 = vmax.f32 %v1729, 0.0
        %v1998 = vmax.f32 %v1734, 0.0
        %v1999 = vmax.f32 %v1737, 0.0
        %v2000 = vmax.f32 %v1742, 0.0
        %v2001 = vmax.f32 %v1745, 0.0
        %v2002 = vmax.f32 %v1750, 0.0
        %v2003 = vmax.f32 %v1753, 0.0
        %v2004 = vmax.f32 %v1758, 0.0
        %v2005 = vmax.f32 %v1761, 0.0
        %v2006 = vmax.f32 %v1766, 0.0
        %v2007 = vmax.f32 %v1769, 0.0
        %v2008 = vmax.f32 %v1774, 0.0
        %v2009 = vmax.f32 %v1777, 0.0
        %v2010 = vmax.f32 %v1782, 0.0
        %v2011 = vmax.f32 %v1785, 0.0
        %v2012 = vmax.f32 %v1790, 0.0
        %v2013 = vmax.f32 %v1793, 0.0
        %v2014 = vmax.f32 %v1798, 0.0
        %v2015 = vmax.f32 %v1801, 0.0
        %v2016 = vmax.f32 %v1806, 0.0
        %v2017 = vmax.f32 %v1809, 0.0
        %v2018 = vmax.f32 %v1814, 0.0
        %v2019 = vmax.f32 %v1817, 0.0
        %v2020 = vmax.f32 %v1822, 0.0
        %v2021 = vmax.f32 %v1825, 0.0
        %v2022 = vmax.f32 %v1830, 0.0
        %v2023 = vmax.f32 %v1833, 0.0
        %v2024 = vmax.f32 %v1838, 0.0
        %v2025 = vmax.f32 %v1841, 0.0
        %v2026 = vmax.f32 %v1846, 0.0
        %v2027 = vmax.f32 %v1849, 0.0
        %v2028 = vmax.f32 %v1854, 0.0
        %v2029 = vmax.f32 %v1857, 0.0
        %v2030 = vmax.f32 %v1862, 0.0
        %v2031 = vmax.f32 %v1865, 0.0
        %v2032 = vmax.f32 %v1870, 0.0
        %v2033 = vmax.f32 %v1873, 0.0
        %v2034 = vmax.f32 %v1878, 0.0
        %v2035 = vmax.f32 %v1881, 0.0
        %v2036 = vmax.f32 %v1886, 0.0
        %v2037 = vmax.f32 %v1889, 0.0
        %v2038 = vmax.f32 %v1894, 0.0
        %v2039 = vmax.f32 %v1897, 0.0
        %v2040 = vmax.f32 %v1902, 0.0
        %v2041 = vmax.f32 %v1905, 0.0
        %v2042 = vmax.f32 %v1910, 0.0
        %v2043 = vmax.f32 %v1913, 0.0
        %vm2044 = vcmask 523264
        %v2045 = vsel %vm2044, %v1916, 0.0
        %v2046 = vsel %vm2044, %v1917, 0.0
        %v2047 = vadd.f32 %v2045, %v2046
        %v2048 = vsel %vm2044, %v1918, 0.0
        %v2049 = vadd.f32 %v2047, %v2048
        %v2050 = vsel %vm2044, %v1919, 0.0
        %v2051 = vadd.f32 %v2049, %v2050
        %v2052 = vsel %vm2044, %v1920, 0.0
        %v2053 = vadd.f32 %v2051, %v2052
        %v2054 = vsel %vm2044, %v1921, 0.0
        %v2055 = vadd.f32 %v2053, %v2054
        %v2056 = vsel %vm2044, %v1922, 0.0
        %v2057 = vadd.f32 %v2055, %v2056
        %v2058 = vsel %vm2044, %v1923, 0.0
        %v2059 = vadd.f32 %v2057, %v2058
        %v2060 = vsel %vm2044, %v1924, 0.0
        %v2061 = vadd.f32 %v2059, %v2060
        %v2062 = vsel %vm2044, %v1925, 0.0
        %v2063 = vadd.f32 %v2061, %v2062
        %v2064 = vsel %vm2044, %v1926, 0.0
        %v2065 = vadd.f32 %v2063, %v2064
        %v2066 = vsel %vm2044, %v1927, 0.0
        %v2067 = vadd.f32 %v2065, %v2066
        %v2068 = vsel %vm2044, %v1928, 0.0
        %v2069 = vadd.f32 %v2067, %v2068
        %v2070 = vsel %vm2044, %v1929, 0.0
        %v2071 = vadd.f32 %v2069, %v2070
        %v2072 = vsel %vm2044, %v1930, 0.0
        %v2073 = vadd.f32 %v2071, %v2072
        %v2074 = vsel %vm2044, %v1931, 0.0
        %v2075 = vadd.f32 %v2073, %v2074
        %v2076 = vsel %vm2044, %v1932, 0.0
        %v2077 = vadd.f32 %v2075, %v2076
        %v2078 = vsel %vm2044, %v1933, 0.0
        %v2079 = vadd.f32 %v2077, %v2078
        %v2080 = vsel %vm2044, %v1934, 0.0
        %v2081 = vadd.f32 %v2079, %v2080
        %v2082 = vsel %vm2044, %v1935, 0.0
        %v2083 = vadd.f32 %v2081, %v2082
        %v2084 = vsel %vm2044, %v1936, 0.0
        %v2085 = vadd.f32 %v2083, %v2084
        %v2086 = vsel %vm2044, %v1937, 0.0
        %v2087 = vadd.f32 %v2085, %v2086
        %v2088 = vsel %vm2044, %v1938, 0.0
        %v2089 = vadd.f32 %v2087, %v2088
        %v2090 = vsel %vm2044, %v1939, 0.0
        %v2091 = vadd.f32 %v2089, %v2090
        %v2092 = vsel %vm2044, %v1940, 0.0
        %v2093 = vadd.f32 %v2091, %v2092
        %v2094 = vsel %vm2044, %v1941, 0.0
        %v2095 = vadd.f32 %v2093, %v2094
        %v2096 = vsel %vm2044, %v1942, 0.0
        %v2097 = vadd.f32 %v2095, %v2096
        %v2098 = vsel %vm2044, %v1943, 0.0
        %v2099 = vadd.f32 %v2097, %v2098
        %v2100 = vsel %vm2044, %v1944, 0.0
        %v2101 = vadd.f32 %v2099, %v2100
        %v2102 = vsel %vm2044, %v1945, 0.0
        %v2103 = vadd.f32 %v2101, %v2102
        %v2104 = vsel %vm2044, %v1946, 0.0
        %v2105 = vadd.f32 %v2103, %v2104
        %v2106 = vsel %vm2044, %v1947, 0.0
        %v2107 = vadd.f32 %v2105, %v2106
        %v2108 = vsel %vm2044, %v1948, 0.0
        %v2109 = vadd.f32 %v2107, %v2108
        %v2110 = vsel %vm2044, %v1949, 0.0
        %v2111 = vadd.f32 %v2109, %v2110
        %v2112 = vsel %vm2044, %v1950, 0.0
        %v2113 = vadd.f32 %v2111, %v2112
        %v2114 = vsel %vm2044, %v1951, 0.0
        %v2115 = vadd.f32 %v2113, %v2114
        %v2116 = vsel %vm2044, %v1952, 0.0
        %v2117 = vadd.f32 %v2115, %v2116
        %v2118 = vsel %vm2044, %v1953, 0.0
        %v2119 = vadd.f32 %v2117, %v2118
        %v2120 = vsel %vm2044, %v1954, 0.0
        %v2121 = vadd.f32 %v2119, %v2120
        %v2122 = vsel %vm2044, %v1955, 0.0
        %v2123 = vadd.f32 %v2121, %v2122
        %v2124 = vsel %vm2044, %v1956, 0.0
        %v2125 = vadd.f32 %v2123, %v2124
        %v2126 = vsel %vm2044, %v1957, 0.0
        %v2127 = vadd.f32 %v2125, %v2126
        %v2128 = vsel %vm2044, %v1958, 0.0
        %v2129 = vadd.f32 %v2127, %v2128
        %v2130 = vsel %vm2044, %v1959, 0.0
        %v2131 = vadd.f32 %v2129, %v2130
        %v2132 = vsel %vm2044, %v1960, 0.0
        %v2133 = vadd.f32 %v2131, %v2132
        %v2134 = vsel %vm2044, %v1961, 0.0
        %v2135 = vadd.f32 %v2133, %v2134
        %v2136 = vsel %vm2044, %v1962, 0.0
        %v2137 = vadd.f32 %v2135, %v2136
        %v2138 = vsel %vm2044, %v1963, 0.0
        %v2139 = vadd.f32 %v2137, %v2138
        %v2140 = vsel %vm2044, %v1964, 0.0
        %v2141 = vadd.f32 %v2139, %v2140
        %v2142 = vsel %vm2044, %v1965, 0.0
        %v2143 = vadd.f32 %v2141, %v2142
        %v2144 = vsel %vm2044, %v1966, 0.0
        %v2145 = vadd.f32 %v2143, %v2144
        %v2146 = vsel %vm2044, %v1967, 0.0
        %v2147 = vadd.f32 %v2145, %v2146
        %v2148 = vsel %vm2044, %v1968, 0.0
        %v2149 = vadd.f32 %v2147, %v2148
        %v2150 = vsel %vm2044, %v1969, 0.0
        %v2151 = vadd.f32 %v2149, %v2150
        %v2152 = vsel %vm2044, %v1970, 0.0
        %v2153 = vadd.f32 %v2151, %v2152
        %v2154 = vsel %vm2044, %v1971, 0.0
        %v2155 = vadd.f32 %v2153, %v2154
        %v2156 = vsel %vm2044, %v1972, 0.0
        %v2157 = vadd.f32 %v2155, %v2156
        %v2158 = vsel %vm2044, %v1973, 0.0
        %v2159 = vadd.f32 %v2157, %v2158
        %v2160 = vsel %vm2044, %v1974, 0.0
        %v2161 = vadd.f32 %v2159, %v2160
        %v2162 = vsel %vm2044, %v1975, 0.0
        %v2163 = vadd.f32 %v2161, %v2162
        %v2164 = vsel %vm2044, %v1976, 0.0
        %v2165 = vadd.f32 %v2163, %v2164
        %v2166 = vsel %vm2044, %v1977, 0.0
        %v2167 = vadd.f32 %v2165, %v2166
        %v2168 = vsel %vm2044, %v1978, 0.0
        %v2169 = vadd.f32 %v2167, %v2168
        %v2170 = vsel %vm2044, %v1979, 0.0
        %v2171 = vadd.f32 %v2169, %v2170
        %v2172 = vsel %vm2044, %v1980, 0.0
        %v2173 = vadd.f32 %v2171, %v2172
        %v2174 = vsel %vm2044, %v1981, 0.0
        %v2175 = vadd.f32 %v2173, %v2174
        %v2176 = vsel %vm2044, %v1982, 0.0
        %v2177 = vadd.f32 %v2175, %v2176
        %v2178 = vsel %vm2044, %v1983, 0.0
        %v2179 = vadd.f32 %v2177, %v2178
        %v2180 = vsel %vm2044, %v1984, 0.0
        %v2181 = vadd.f32 %v2179, %v2180
        %v2182 = vsel %vm2044, %v1985, 0.0
        %v2183 = vadd.f32 %v2181, %v2182
        %v2184 = vsel %vm2044, %v1986, 0.0
        %v2185 = vadd.f32 %v2183, %v2184
        %v2186 = vsel %vm2044, %v1987, 0.0
        %v2187 = vadd.f32 %v2185, %v2186
        %v2188 = vsel %vm2044, %v1988, 0.0
        %v2189 = vadd.f32 %v2187, %v2188
        %v2190 = vsel %vm2044, %v1989, 0.0
        %v2191 = vadd.f32 %v2189, %v2190
        %v2192 = vsel %vm2044, %v1990, 0.0
        %v2193 = vadd.f32 %v2191, %v2192
        %v2194 = vsel %vm2044, %v1991, 0.0
        %v2195 = vadd.f32 %v2193, %v2194
        %v2196 = vsel %vm2044, %v1992, 0.0
        %v2197 = vadd.f32 %v2195, %v2196
        %v2198 = vsel %vm2044, %v1993, 0.0
        %v2199 = vadd.f32 %v2197, %v2198
        %v2200 = vsel %vm2044, %v1994, 0.0
        %v2201 = vadd.f32 %v2199, %v2200
        %v2202 = vsel %vm2044, %v1995, 0.0
        %v2203 = vadd.f32 %v2201, %v2202
        %v2204 = vsel %vm2044, %v1996, 0.0
        %v2205 = vadd.f32 %v2203, %v2204
        %v2206 = vsel %vm2044, %v1997, 0.0
        %v2207 = vadd.f32 %v2205, %v2206
        %v2208 = vsel %vm2044, %v1998, 0.0
        %v2209 = vadd.f32 %v2207, %v2208
        %v2210 = vsel %vm2044, %v1999, 0.0
        %v2211 = vadd.f32 %v2209, %v2210
        %v2212 = vsel %vm2044, %v2000, 0.0
        %v2213 = vadd.f32 %v2211, %v2212
        %v2214 = vsel %vm2044, %v2001, 0.0
        %v2215 = vadd.f32 %v2213, %v2214
        %v2216 = vsel %vm2044, %v2002, 0.0
        %v2217 = vadd.f32 %v2215, %v2216
        %v2218 = vsel %vm2044, %v2003, 0.0
        %v2219 = vadd.f32 %v2217, %v2218
        %v2220 = vsel %vm2044, %v2004, 0.0
        %v2221 = vadd.f32 %v2219, %v2220
        %v2222 = vsel %vm2044, %v2005, 0.0
        %v2223 = vadd.f32 %v2221, %v2222
        %v2224 = vsel %vm2044, %v2006, 0.0
        %v2225 = vadd.f32 %v2223, %v2224
        %v2226 = vsel %vm2044, %v2007, 0.0
        %v2227 = vadd.f32 %v2225, %v2226
        %v2228 = vsel %vm2044, %v2008, 0.0
        %v2229 = vadd.f32 %v2227, %v2228
        %v2230 = vsel %vm2044, %v2009, 0.0
        %v2231 = vadd.f32 %v2229, %v2230
        %v2232 = vsel %vm2044, %v2010, 0.0
        %v2233 = vadd.f32 %v2231, %v2232
        %v2234 = vsel %vm2044, %v2011, 0.0
        %v2235 = vadd.f32 %v2233, %v2234
        %v2236 = vsel %vm2044, %v2012, 0.0
        %v2237 = vadd.f32 %v2235, %v2236
        %v2238 = vsel %vm2044, %v2013, 0.0
        %v2239 = vadd.f32 %v2237, %v2238
        %v2240 = vsel %vm2044, %v2014, 0.0
        %v2241 = vadd.f32 %v2239, %v2240
        %v2242 = vsel %vm2044, %v2015, 0.0
        %v2243 = vadd.f32 %v2241, %v2242
        %v2244 = vsel %vm2044, %v2016, 0.0
        %v2245 = vadd.f32 %v2243, %v2244
        %v2246 = vsel %vm2044, %v2017, 0.0
        %v2247 = vadd.f32 %v2245, %v2246
        %v2248 = vsel %vm2044, %v2018, 0.0
        %v2249 = vadd.f32 %v2247, %v2248
        %v2250 = vsel %vm2044, %v2019, 0.0
        %v2251 = vadd.f32 %v2249, %v2250
        %v2252 = vsel %vm2044, %v2020, 0.0
        %v2253 = vadd.f32 %v2251, %v2252
        %v2254 = vsel %vm2044, %v2021, 0.0
        %v2255 = vadd.f32 %v2253, %v2254
        %v2256 = vsel %vm2044, %v2022, 0.0
        %v2257 = vadd.f32 %v2255, %v2256
        %v2258 = vsel %vm2044, %v2023, 0.0
        %v2259 = vadd.f32 %v2257, %v2258
        %v2260 = vsel %vm2044, %v2024, 0.0
        %v2261 = vadd.f32 %v2259, %v2260
        %v2262 = vsel %vm2044, %v2025, 0.0
        %v2263 = vadd.f32 %v2261, %v2262
        %v2264 = vsel %vm2044, %v2026, 0.0
        %v2265 = vadd.f32 %v2263, %v2264
        %v2266 = vsel %vm2044, %v2027, 0.0
        %v2267 = vadd.f32 %v2265, %v2266
        %v2268 = vsel %vm2044, %v2028, 0.0
        %v2269 = vadd.f32 %v2267, %v2268
        %v2270 = vsel %vm2044, %v2029, 0.0
        %v2271 = vadd.f32 %v2269, %v2270
        %v2272 = vsel %vm2044, %v2030, 0.0
        %v2273 = vadd.f32 %v2271, %v2272
        %v2274 = vsel %vm2044, %v2031, 0.0
        %v2275 = vadd.f32 %v2273, %v2274
        %v2276 = vsel %vm2044, %v2032, 0.0
        %v2277 = vadd.f32 %v2275, %v2276
        %v2278 = vsel %vm2044, %v2033, 0.0
        %v2279 = vadd.f32 %v2277, %v2278
        %v2280 = vsel %vm2044, %v2034, 0.0
        %v2281 = vadd.f32 %v2279, %v2280
        %v2282 = vsel %vm2044, %v2035, 0.0
        %v2283 = vadd.f32 %v2281, %v2282
        %v2284 = vsel %vm2044, %v2036, 0.0
        %v2285 = vadd.f32 %v2283, %v2284
        %v2286 = vsel %vm2044, %v2037, 0.0
        %v2287 = vadd.f32 %v2285, %v2286
        %v2288 = vsel %vm2044, %v2038, 0.0
        %v2289 = vadd.f32 %v2287, %v2288
        %v2290 = vsel %vm2044, %v2039, 0.0
        %v2291 = vadd.f32 %v2289, %v2290
        %v2292 = vsel %vm2044, %v2040, 0.0
        %v2293 = vadd.f32 %v2291, %v2292
        %v2294 = vsel %vm2044, %v2041, 0.0
        %v2295 = vadd.f32 %v2293, %v2294
        %v2296 = vsel %vm2044, %v2042, 0.0
        %v2297 = vadd.f32 %v2295, %v2296
        %v2298 = vsel %vm2044, %v2043, 0.0
        %v2299 = vadd.f32 %v2297, %v2298
        %v2300 = vrot.slane %v2299, 4
        %v2301 = vadd.f32 %v2299, %v2300
        %v2302 = vrot.slane %v2301, 2
        %v2303 = vadd.f32 %v2301, %v2302
        %v2304 = vrot.slane %v2303, 1
        %v2305 = vadd.f32 %v2303, %v2304
        %v2306 = vmul.f32 %v2305, 0.0009765625
        %v2307 = vmax.f32 %v1916, %v1948
        %v2308 = vmax.f32 %v1917, %v1949
        %v2309 = vmax.f32 %v1918, %v1950
        %v2310 = vmax.f32 %v1919, %v1951
        %v2311 = vmax.f32 %v1920, %v1952
        %v2312 = vmax.f32 %v1921, %v1953
        %v2313 = vmax.f32 %v1922, %v1954
        %v2314 = vmax.f32 %v1923, %v1955
        %v2315 = vmax.f32 %v1924, %v1956
        %v2316 = vmax.f32 %v1925, %v1957
        %v2317 = vmax.f32 %v1926, %v1958
        %v2318 = vmax.f32 %v1927, %v1959
        %v2319 = vmax.f32 %v1928, %v1960
        %v2320 = vmax.f32 %v1929, %v1961
        %v2321 = vmax.f32 %v1930, %v1962
        %v2322 = vmax.f32 %v1931, %v1963
        %v2323 = vmax.f32 %v1932, %v1964
        %v2324 = vmax.f32 %v1933, %v1965
        %v2325 = vmax.f32 %v1934, %v1966
        %v2326 = vmax.f32 %v1935, %v1967
        %v2327 = vmax.f32 %v1936, %v1968
        %v2328 = vmax.f32 %v1937, %v1969
        %v2329 = vmax.f32 %v1938, %v1970
        %v2330 = vmax.f32 %v1939, %v1971
        %v2331 = vmax.f32 %v1940, %v1972
        %v2332 = vmax.f32 %v1941, %v1973
        %v2333 = vmax.f32 %v1942, %v1974
        %v2334 = vmax.f32 %v1943, %v1975
        %v2335 = vmax.f32 %v1944, %v1976
        %v2336 = vmax.f32 %v1945, %v1977
        %v2337 = vmax.f32 %v1946, %v1978
        %v2338 = vmax.f32 %v1947, %v1979
        %v2339 = vmax.f32 %v1980, %v2012
        %v2340 = vmax.f32 %v1981, %v2013
        %v2341 = vmax.f32 %v1982, %v2014
        %v2342 = vmax.f32 %v1983, %v2015
        %v2343 = vmax.f32 %v1984, %v2016
        %v2344 = vmax.f32 %v1985, %v2017
        %v2345 = vmax.f32 %v1986, %v2018
        %v2346 = vmax.f32 %v1987, %v2019
        %v2347 = vmax.f32 %v1988, %v2020
        %v2348 = vmax.f32 %v1989, %v2021
        %v2349 = vmax.f32 %v1990, %v2022
        %v2350 = vmax.f32 %v1991, %v2023
        %v2351 = vmax.f32 %v1992, %v2024
        %v2352 = vmax.f32 %v1993, %v2025
        %v2353 = vmax.f32 %v1994, %v2026
        %v2354 = vmax.f32 %v1995, %v2027
        %v2355 = vmax.f32 %v1996, %v2028
        %v2356 = vmax.f32 %v1997, %v2029
        %v2357 = vmax.f32 %v1998, %v2030
        %v2358 = vmax.f32 %v1999, %v2031
        %v2359 = vmax.f32 %v2000, %v2032
        %v2360 = vmax.f32 %v2001, %v2033
        %v2361 = vmax.f32 %v2002, %v2034
        %v2362 = vmax.f32 %v2003, %v2035
        %v2363 = vmax.f32 %v2004, %v2036
        %v2364 = vmax.f32 %v2005, %v2037
        %v2365 = vmax.f32 %v2006, %v2038
        %v2366 = vmax.f32 %v2007, %v2039
        %v2367 = vmax.f32 %v2008, %v2040
        %v2368 = vmax.f32 %v2009, %v2041
        %v2369 = vmax.f32 %v2010, %v2042
        %v2370 = vmax.f32 %v2011, %v2043
        %v2371 = vmax.f32 %v2307, %v2339
        %v2372 = vmax.f32 %v2308, %v2340
        %v2373 = vmax.f32 %v2309, %v2341
        %v2374 = vmax.f32 %v2310, %v2342
        %v2375 = vmax.f32 %v2311, %v2343
        %v2376 = vmax.f32 %v2312, %v2344
        %v2377 = vmax.f32 %v2313, %v2345
        %v2378 = vmax.f32 %v2314, %v2346
        %v2379 = vmax.f32 %v2315, %v2347
        %v2380 = vmax.f32 %v2316, %v2348
        %v2381 = vmax.f32 %v2317, %v2349
        %v2382 = vmax.f32 %v2318, %v2350
        %v2383 = vmax.f32 %v2319, %v2351
        %v2384 = vmax.f32 %v2320, %v2352
        %v2385 = vmax.f32 %v2321, %v2353
        %v2386 = vmax.f32 %v2322, %v2354
        %v2387 = vmax.f32 %v2323, %v2355
        %v2388 = vmax.f32 %v2324, %v2356
        %v2389 = vmax.f32 %v2325, %v2357
        %v2390 = vmax.f32 %v2326, %v2358
        %v2391 = vmax.f32 %v2327, %v2359
        %v2392 = vmax.f32 %v2328, %v2360
        %v2393 = vmax.f32 %v2329, %v2361
        %v2394 = vmax.f32 %v2330, %v2362
        %v2395 = vmax.f32 %v2331, %v2363
        %v2396 = vmax.f32 %v2332, %v2364
        %v2397 = vmax.f32 %v2333, %v2365
        %v2398 = vmax.f32 %v2334, %v2366
        %v2399 = vmax.f32 %v2335, %v2367
        %v2400 = vmax.f32 %v2336, %v2368
        %v2401 = vmax.f32 %v2337, %v2369
        %v2402 = vmax.f32 %v2338, %v2370
        %v2403 = vld [vmem:[%s3] sm:$0xff]
        %v2404 = vld [vmem:[%s3 + $0x8] sm:$0xff]
        %v2405 = vld [vmem:[%s3 + $0x10] sm:$0xff]
        %v2406 = vld [vmem:[%s3 + $0x18] sm:$0xff]
        %v2407 = vld [vmem:[%s3 + $0x20] sm:$0xff]
        %v2408 = vld [vmem:[%s3 + $0x28] sm:$0xff]
        %v2409 = vld [vmem:[%s3 + $0x30] sm:$0xff]
        %v2410 = vld [vmem:[%s3 + $0x38] sm:$0xff]
        %v2411 = vld [vmem:[%s4] sm:$0x1]
        %v2413 = vsel %vm2044, %v2306, 0
        %2415 = vmatprep.subr.mxu0 0.0
        %2416 = vmatpush1.msra.mxu0 %v2403
        %2417 = vmatprep.subr.mxu0 0.0
        %2418 = vmatpush1.msra.mxu0 %v2404
        %2419 = vmatprep.subr.mxu0 0.0
        %2420 = vmatpush1.msra.mxu0 %v2405
        %2421 = vmatprep.subr.mxu0 0.0
        %2422 = vmatpush1.msra.mxu0 %v2406
        %2423 = vmatprep.subr.mxu0 0.0
        %2424 = vmatpush1.msra.mxu0 %v2407
        %2425 = vmatprep.subr.mxu0 0.0
        %2426 = vmatpush1.msra.mxu0 %v2408
        %2427 = vmatprep.subr.mxu0 0.0
        %2428 = vmatpush1.msra.mxu0 %v2409
        %2429 = vmatprep.subr.mxu0 0.0
        %2430 = vmatpush1.msra.mxu0 %v2410
        %2431 = vmatprep.subr.mxu0 0.0
        %2432 = vmatpush1.msra.mxu0 0.0
        %2433 = vmatprep.subr.mxu0 0.0
        %2434 = vmatpush1.msra.mxu0 0.0
        %2435 = vmatprep.subr.mxu0 0.0
        %2436 = vmatpush1.msra.mxu0 0.0
        %2437 = vmatprep.subr.mxu0 0.0
        %2438 = vmatpush1.msra.mxu0 0.0
        %2439 = vmatprep.subr.mxu0 0.0
        %2440 = vmatpush1.msra.mxu0 0.0
        %2441 = vmatprep.subr.mxu0 0.0
        %2442 = vmatpush1.msra.mxu0 0.0
        %2443 = vmatprep.subr.mxu0 0.0
        %2444 = vmatpush1.msra.mxu0 0.0
        %2445 = vmatprep.subr.mxu0 0.0
        %2446 = vmatpush1.msra.mxu0 0.0
        %2447 = vmatprep.subr.mxu0 0.0
        %2448 = vmatpush1.msra.mxu0 0.0
        %2449 = vmatprep.subr.mxu0 0.0
        %2450 = vmatpush1.msra.mxu0 0.0
        %2451 = vmatprep.subr.mxu0 0.0
        %2452 = vmatpush1.msra.mxu0 0.0
        %2453 = vmatprep.subr.mxu0 0.0
        %2454 = vmatpush1.msra.mxu0 0.0
        %2455 = vmatprep.subr.mxu0 0.0
        %2456 = vmatpush1.msra.mxu0 0.0
        %2457 = vmatprep.subr.mxu0 0.0
        %2458 = vmatpush1.msra.mxu0 0.0
        %2459 = vmatprep.subr.mxu0 0.0
        %2460 = vmatpush1.msra.mxu0 0.0
        %2461 = vmatprep.subr.mxu0 0.0
        %2462 = vmatpush1.msra.mxu0 0.0
        %2463 = vmatprep.subr.mxu0 0.0
        %2464 = vmatpush1.msra.mxu0 0.0
        %2465 = vmatprep.subr.mxu0 0.0
        %2466 = vmatpush1.msra.mxu0 0.0
        %2467 = vmatprep.subr.mxu0 0.0
        %2468 = vmatpush1.msra.mxu0 0.0
        %2469 = vmatprep.subr.mxu0 0.0
        %2470 = vmatpush1.msra.mxu0 0.0
        %2471 = vmatprep.subr.mxu0 0.0
        %2472 = vmatpush1.msra.mxu0 0.0
        %2473 = vmatprep.subr.mxu0 0.0
        %2474 = vmatpush1.msra.mxu0 0.0
        %2475 = vmatprep.subr.mxu0 0.0
        %2476 = vmatpush1.msra.mxu0 0.0
        %2477 = vmatprep.subr.mxu0 0.0
        %2478 = vmatpush1.msra.mxu0 0.0
        %2479 = vmatprep.mubr.f32.mxu0 0.0
        %2480 = vmatmul.mubr.f32.gmra.mrb[0].mxu0 %v2413
        %v2481 = vpop.f32.mrb[0].mxu0
        %v2482 = vadd.f32 %v2411, %v2481
        %v2483 = vpop.f32.mrb[0].mxu0
        %2484 = vdwg.mxu0
        %v2485 = vmax.f32 %v2482, 0.0
        %v2486 = vld [vmem:[%s5] sm:$0xf]
        %v2487 = vld [vmem:[%s6] sm:$0x1]
        %vm2488 = vcmask 31744
        %v2490 = vsel %vm2488, %v2485, 0
        %v2493 = vsel %vm1364, %v2486, 0
        %2495 = vmatprep.subr.mxu0 0.0
        %2496 = vmatpush1.msra.mxu0 %v2493
        %2497 = vmatprep.subr.mxu0 0.0
        %2498 = vmatpush1.msra.mxu0 0.0
        %2499 = vmatprep.subr.mxu0 0.0
        %2500 = vmatpush1.msra.mxu0 0.0
        %2501 = vmatprep.subr.mxu0 0.0
        %2502 = vmatpush1.msra.mxu0 0.0
        %2503 = vmatprep.subr.mxu0 0.0
        %2504 = vmatpush1.msra.mxu0 0.0
        %2505 = vmatprep.subr.mxu0 0.0
        %2506 = vmatpush1.msra.mxu0 0.0
        %2507 = vmatprep.subr.mxu0 0.0
        %2508 = vmatpush1.msra.mxu0 0.0
        %2509 = vmatprep.subr.mxu0 0.0
        %2510 = vmatpush1.msra.mxu0 0.0
        %2511 = vmatprep.subr.mxu0 0.0
        %2512 = vmatpush1.msra.mxu0 0.0
        %2513 = vmatprep.subr.mxu0 0.0
        %2514 = vmatpush1.msra.mxu0 0.0
        %2515 = vmatprep.subr.mxu0 0.0
        %2516 = vmatpush1.msra.mxu0 0.0
        %2517 = vmatprep.subr.mxu0 0.0
        %2518 = vmatpush1.msra.mxu0 0.0
        %2519 = vmatprep.subr.mxu0 0.0
        %2520 = vmatpush1.msra.mxu0 0.0
        %2521 = vmatprep.subr.mxu0 0.0
        %2522 = vmatpush1.msra.mxu0 0.0
        %2523 = vmatprep.subr.mxu0 0.0
        %2524 = vmatpush1.msra.mxu0 0.0
        %2525 = vmatprep.subr.mxu0 0.0
        %2526 = vmatpush1.msra.mxu0 0.0
        %2527 = vmatprep.subr.mxu0 0.0
        %2528 = vmatpush1.msra.mxu0 0.0
        %2529 = vmatprep.subr.mxu0 0.0
        %2530 = vmatpush1.msra.mxu0 0.0
        %2531 = vmatprep.subr.mxu0 0.0
        %2532 = vmatpush1.msra.mxu0 0.0
        %2533 = vmatprep.subr.mxu0 0.0
        %2534 = vmatpush1.msra.mxu0 0.0
        %2535 = vmatprep.subr.mxu0 0.0
        %2536 = vmatpush1.msra.mxu0 0.0
        %2537 = vmatprep.subr.mxu0 0.0
        %2538 = vmatpush1.msra.mxu0 0.0
        %2539 = vmatprep.subr.mxu0 0.0
        %2540 = vmatpush1.msra.mxu0 0.0
        %2541 = vmatprep.subr.mxu0 0.0
        %2542 = vmatpush1.msra.mxu0 0.0
        %2543 = vmatprep.subr.mxu0 0.0
        %2544 = vmatpush1.msra.mxu0 0.0
        %2545 = vmatprep.subr.mxu0 0.0
        %2546 = vmatpush1.msra.mxu0 0.0
        %2547 = vmatprep.subr.mxu0 0.0
        %2548 = vmatpush1.msra.mxu0 0.0
        %2549 = vmatprep.subr.mxu0 0.0
        %2550 = vmatpush1.msra.mxu0 0.0
        %2551 = vmatprep.subr.mxu0 0.0
        %2552 = vmatpush1.msra.mxu0 0.0
        %2553 = vmatprep.subr.mxu0 0.0
        %2554 = vmatpush1.msra.mxu0 0.0
        %2555 = vmatprep.subr.mxu0 0.0
        %2556 = vmatpush1.msra.mxu0 0.0
        %2557 = vmatprep.subr.mxu0 0.0
        %2558 = vmatpush1.msra.mxu0 0.0
        %2559 = vmatprep.mubr.f32.mxu0 0.0
        %2560 = vmatmul.mubr.f32.gmra.mrb[0].mxu0 %v2490
        %v2561 = vpop.f32.mrb[0].mxu0
        %v2562 = vadd.f32 %v2487, %v2561
        %v2563 = vpop.f32.mrb[0].mxu0
        %2564 = vdwg.mxu0
        %v2565 = vsub.f32 0.0, %v2562
        %v2566 = vmul.f32 %v2565, 1.442695
        %v2567 = vpow.pop %v2566
        %v2568 = vadd.f32 %v2567, 1.0
        %v2569 = vrcp.pop %v2568
        %v2570 = vmul.f32 1.0, %v2569
        %v2571 = vlaneseq
        %v2572 = vshrl.u32 %v2571, 7
        %v2573 = vsub.s32 0, %v2572
        %v2574 = vrot.slane %v2570, %v2573
        %v2575 = vmul.f32 %v2371, %v2574
        %v2576 = vmul.f32 %v2372, %v2574
        %v2577 = vmul.f32 %v2373, %v2574
        %v2578 = vmul.f32 %v2374, %v2574
        %v2579 = vmul.f32 %v2375, %v2574
        %v2580 = vmul.f32 %v2376, %v2574
        %v2581 = vmul.f32 %v2377, %v2574
        %v2582 = vmul.f32 %v2378, %v2574
        %v2583 = vmul.f32 %v2379, %v2574
        %v2584 = vmul.f32 %v2380, %v2574
        %v2585 = vmul.f32 %v2381, %v2574
        %v2586 = vmul.f32 %v2382, %v2574
        %v2587 = vmul.f32 %v2383, %v2574
        %v2588 = vmul.f32 %v2384, %v2574
        %v2589 = vmul.f32 %v2385, %v2574
        %v2590 = vmul.f32 %v2386, %v2574
        %v2591 = vmul.f32 %v2387, %v2574
        %v2592 = vmul.f32 %v2388, %v2574
        %v2593 = vmul.f32 %v2389, %v2574
        %v2594 = vmul.f32 %v2390, %v2574
        %v2595 = vmul.f32 %v2391, %v2574
        %v2596 = vmul.f32 %v2392, %v2574
        %v2597 = vmul.f32 %v2393, %v2574
        %v2598 = vmul.f32 %v2394, %v2574
        %v2599 = vmul.f32 %v2395, %v2574
        %v2600 = vmul.f32 %v2396, %v2574
        %v2601 = vmul.f32 %v2397, %v2574
        %v2602 = vmul.f32 %v2398, %v2574
        %v2603 = vmul.f32 %v2399, %v2574
        %v2604 = vmul.f32 %v2400, %v2574
        %v2605 = vmul.f32 %v2401, %v2574
        %v2606 = vmul.f32 %v2402, %v2574
        %v2607 = vpack.c.bf16 %v2576, %v2575
        %v2608 = vpack.c.bf16 %v2578, %v2577
        %v2609 = vpack.c.bf16 %v2580, %v2579
        %v2610 = vpack.c.bf16 %v2582, %v2581
        %v2611 = vpack.c.bf16 %v2584, %v2583
        %v2612 = vpack.c.bf16 %v2586, %v2585
        %v2613 = vpack.c.bf16 %v2588, %v2587
        %v2614 = vpack.c.bf16 %v2590, %v2589
        %v2615 = vpack.c.bf16 %v2592, %v2591
        %v2616 = vpack.c.bf16 %v2594, %v2593
        %v2617 = vpack.c.bf16 %v2596, %v2595
        %v2618 = vpack.c.bf16 %v2598, %v2597
        %v2619 = vpack.c.bf16 %v2600, %v2599
        %v2620 = vpack.c.bf16 %v2602, %v2601
        %v2621 = vpack.c.bf16 %v2604, %v2603
        %v2622 = vpack.c.bf16 %v2606, %v2605
        %v2627 = vunpack.c.l.b16 %v2607
        %v2628 = vunpack.c.h.b16 %v2607
        %v2629 = vunpack.c.l.b16 %v2608
        %v2630 = vunpack.c.h.b16 %v2608
        %v2631 = vunpack.c.l.b16 %v2609
        %v2632 = vunpack.c.h.b16 %v2609
        %v2633 = vunpack.c.l.b16 %v2610
        %v2634 = vunpack.c.h.b16 %v2610
        %v2635 = vpack.c.b16 %v2627, %v2627
        %v2636 = vpack.c.b16 %v2628, %v2628
        %v2637 = vpack.c.b16 %v2629, %v2629
        %v2638 = vpack.c.b16 %v2630, %v2630
        %v2639 = vpack.c.b16 %v2631, %v2631
        %v2640 = vpack.c.b16 %v2632, %v2632
        %v2641 = vpack.c.b16 %v2633, %v2633
        %v2642 = vpack.c.b16 %v2634, %v2634
        %v2647 = vunpack.c.l.b16 %v2611
        %v2648 = vunpack.c.h.b16 %v2611
        %v2649 = vunpack.c.l.b16 %v2612
        %v2650 = vunpack.c.h.b16 %v2612
        %v2651 = vunpack.c.l.b16 %v2613
        %v2652 = vunpack.c.h.b16 %v2613
        %v2653 = vunpack.c.l.b16 %v2614
        %v2654 = vunpack.c.h.b16 %v2614
        %v2659 = vunpack.c.l.b16 %v2615
        %v2660 = vunpack.c.h.b16 %v2615
        %v2661 = vunpack.c.l.b16 %v2616
        %v2662 = vunpack.c.h.b16 %v2616
        %v2663 = vunpack.c.l.b16 %v2617
        %v2664 = vunpack.c.h.b16 %v2617
        %v2665 = vunpack.c.l.b16 %v2618
        %v2666 = vunpack.c.h.b16 %v2618
        %v2667 = vpack.c.b16 %v2659, %v2659
        %v2668 = vpack.c.b16 %v2660, %v2660
        %v2669 = vpack.c.b16 %v2661, %v2661
        %v2670 = vpack.c.b16 %v2662, %v2662
        %v2671 = vpack.c.b16 %v2663, %v2663
        %v2672 = vpack.c.b16 %v2664, %v2664
        %v2673 = vpack.c.b16 %v2665, %v2665
        %v2674 = vpack.c.b16 %v2666, %v2666
        %v2679 = vunpack.c.l.b16 %v2619
        %v2680 = vunpack.c.h.b16 %v2619
        %v2681 = vunpack.c.l.b16 %v2620
        %v2682 = vunpack.c.h.b16 %v2620
        %v2683 = vunpack.c.l.b16 %v2621
        %v2684 = vunpack.c.h.b16 %v2621
        %v2685 = vunpack.c.l.b16 %v2622
        %v2686 = vunpack.c.h.b16 %v2622
        %v2687 = vpack.c.b16 %v2679, %v2679
        %v2688 = vpack.c.b16 %v2680, %v2680
        %v2689 = vpack.c.b16 %v2681, %v2681
        %v2690 = vpack.c.b16 %v2682, %v2682
        %v2691 = vpack.c.b16 %v2683, %v2683
        %v2692 = vpack.c.b16 %v2684, %v2684
        %v2693 = vpack.c.b16 %v2685, %v2685
        %v2694 = vpack.c.b16 %v2686, %v2686
        %v2697 = vsel %vm1364, %v2635, 0
        %v2699 = vsel %vm1364, %v2636, 0
        %v2701 = vsel %vm1364, %v2637, 0
        %v2703 = vsel %vm1364, %v2638, 0
        %v2705 = vsel %vm1364, %v2639, 0
        %v2707 = vsel %vm1364, %v2640, 0
        %v2709 = vsel %vm1364, %v2641, 0
        %v2711 = vsel %vm1364, %v2642, 0
        %v2713 = vunpack.c.l.b16 0
        %v2714 = vpack.c.b16 %v2647, %v2647
        %v2715 = vpack.c.b16 %v2648, %v2648
        %v2716 = vpack.c.b16 %v2649, %v2649
        %v2717 = vpack.c.b16 %v2650, %v2650
        %v2718 = vpack.c.b16 %v2651, %v2651
        %v2719 = vpack.c.b16 %v2652, %v2652
        %v2720 = vpack.c.b16 %v2653, %v2653
        %v2721 = vpack.c.b16 %v2654, %v2654
        %v2722 = vpack.c.b16 %v2713, %v2713
        %v2724 = vshrl.u32 %v2714, 16
        %v2726 = vrot.slane %v2724, 7
        %v2727 = vshll.u32 %v2714, 16
        %v2729 = vor.u32 %v2726, %v2727
        %v2731 = vshrl.u32 %v2715, 16
        %v2733 = vrot.slane %v2731, 7
        %v2734 = vshll.u32 %v2715, 16
        %v2736 = vor.u32 %v2733, %v2734
        %v2738 = vshrl.u32 %v2716, 16
        %v2740 = vrot.slane %v2738, 7
        %v2741 = vshll.u32 %v2716, 16
        %v2743 = vor.u32 %v2740, %v2741
        %v2745 = vshrl.u32 %v2717, 16
        %v2747 = vrot.slane %v2745, 7
        %v2748 = vshll.u32 %v2717, 16
        %v2750 = vor.u32 %v2747, %v2748
        %v2752 = vshrl.u32 %v2718, 16
        %v2754 = vrot.slane %v2752, 7
        %v2755 = vshll.u32 %v2718, 16
        %v2757 = vor.u32 %v2754, %v2755
        %v2759 = vshrl.u32 %v2719, 16
        %v2761 = vrot.slane %v2759, 7
        %v2762 = vshll.u32 %v2719, 16
        %v2764 = vor.u32 %v2761, %v2762
        %v2766 = vshrl.u32 %v2720, 16
        %v2768 = vrot.slane %v2766, 7
        %v2769 = vshll.u32 %v2720, 16
        %v2771 = vor.u32 %v2768, %v2769
        %v2773 = vshrl.u32 %v2721, 16
        %v2775 = vrot.slane %v2773, 7
        %v2776 = vshll.u32 %v2721, 16
        %v2778 = vor.u32 %v2775, %v2776
        %v2780 = vshrl.u32 %v2722, 16
        %v2782 = vrot.slane %v2780, 7
        %v2783 = vshll.u32 %v2722, 16
        %v2785 = vor.u32 %v2782, %v2783
        %vm2795 = vcmask 1040384
        %vm2796 = vsmask.f32 256
        %vm2797 = vmand %vm2795, %vm2796
        %v2798 = vsel %vm2797, 0, %v2729
        %v2799 = vsel %vm2797, 0, %v2736
        %v2800 = vsel %vm2797, 0, %v2743
        %v2801 = vsel %vm2797, 0, %v2750
        %v2802 = vsel %vm2797, 0, %v2757
        %v2803 = vsel %vm2797, 0, %v2764
        %v2804 = vsel %vm2797, 0, %v2771
        %v2805 = vsel %vm2797, 0, %v2778
        %v2806 = vsel %vm2797, 0, %v2785
        %v2808 = vsel %vm1364, %v2667, 0
        %v2810 = vsel %vm1364, %v2668, 0
        %v2812 = vsel %vm1364, %v2669, 0
        %v2814 = vsel %vm1364, %v2670, 0
        %v2816 = vsel %vm1364, %v2671, 0
        %v2818 = vsel %vm1364, %v2672, 0
        %v2820 = vsel %vm1364, %v2673, 0
        %v2822 = vsel %vm1364, %v2674, 0
        %v2823 = vshrl.u32 0, 16
        %v2825 = vrot.slane %v2823, 7
        %v2826 = vshll.u32 0, 16
        %v2828 = vor.u32 %v2825, %v2826
        %v2830 = vshrl.u32 %v2687, 16
        %v2832 = vrot.slane %v2830, 7
        %v2833 = vshll.u32 %v2687, 16
        %v2835 = vor.u32 %v2832, %v2833
        %v2837 = vshrl.u32 %v2688, 16
        %v2839 = vrot.slane %v2837, 7
        %v2840 = vshll.u32 %v2688, 16
        %v2842 = vor.u32 %v2839, %v2840
        %v2844 = vshrl.u32 %v2689, 16
        %v2846 = vrot.slane %v2844, 7
        %v2847 = vshll.u32 %v2689, 16
        %v2849 = vor.u32 %v2846, %v2847
        %v2851 = vshrl.u32 %v2690, 16
        %v2853 = vrot.slane %v2851, 7
        %v2854 = vshll.u32 %v2690, 16
        %v2856 = vor.u32 %v2853, %v2854
        %v2858 = vshrl.u32 %v2691, 16
        %v2860 = vrot.slane %v2858, 7
        %v2861 = vshll.u32 %v2691, 16
        %v2863 = vor.u32 %v2860, %v2861
        %v2865 = vshrl.u32 %v2692, 16
        %v2867 = vrot.slane %v2865, 7
        %v2868 = vshll.u32 %v2692, 16
        %v2870 = vor.u32 %v2867, %v2868
        %v2872 = vshrl.u32 %v2693, 16
        %v2874 = vrot.slane %v2872, 7
        %v2875 = vshll.u32 %v2693, 16
        %v2877 = vor.u32 %v2874, %v2875
        %v2879 = vshrl.u32 %v2694, 16
        %v2881 = vrot.slane %v2879, 7
        %v2882 = vshll.u32 %v2694, 16
        %v2884 = vor.u32 %v2881, %v2882
        %v2894 = vsel %vm2797, 0, %v2828
        %v2895 = vsel %vm2797, 0, %v2835
        %v2896 = vsel %vm2797, 0, %v2842
        %v2897 = vsel %vm2797, 0, %v2849
        %v2898 = vsel %vm2797, 0, %v2856
        %v2899 = vsel %vm2797, 0, %v2863
        %v2900 = vsel %vm2797, 0, %v2870
        %v2901 = vsel %vm2797, 0, %v2877
        %v2902 = vsel %vm2797, 0, %v2884
        %v2911 = vunpack.c.l.b16 %v2894
        %v2912 = vunpack.c.h.b16 %v2894
        %v2913 = vunpack.c.l.b16 %v2895
        %v2914 = vunpack.c.h.b16 %v2895
        %v2915 = vunpack.c.l.b16 %v2896
        %v2916 = vunpack.c.h.b16 %v2896
        %v2917 = vunpack.c.l.b16 %v2897
        %v2918 = vunpack.c.h.b16 %v2897
        %v2919 = vunpack.c.l.b16 %v2898
        %v2920 = vunpack.c.h.b16 %v2898
        %v2921 = vunpack.c.l.b16 %v2899
        %v2922 = vunpack.c.h.b16 %v2899
        %v2923 = vunpack.c.l.b16 %v2900
        %v2924 = vunpack.c.h.b16 %v2900
        %v2925 = vunpack.c.l.b16 %v2901
        %v2926 = vunpack.c.h.b16 %v2901
        %v2927 = vpack.c.b16 %v2911, %v2911
        %v2928 = vpack.c.b16 %v2912, %v2912
        %v2929 = vpack.c.b16 %v2913, %v2913
        %v2930 = vpack.c.b16 %v2914, %v2914
        %v2931 = vpack.c.b16 %v2915, %v2915
        %v2932 = vpack.c.b16 %v2916, %v2916
        %v2933 = vpack.c.b16 %v2917, %v2917
        %v2934 = vpack.c.b16 %v2918, %v2918
        %v2935 = vpack.c.b16 %v2919, %v2919
        %v2936 = vpack.c.b16 %v2920, %v2920
        %v2937 = vpack.c.b16 %v2921, %v2921
        %v2938 = vpack.c.b16 %v2922, %v2922
        %v2939 = vpack.c.b16 %v2923, %v2923
        %v2940 = vpack.c.b16 %v2924, %v2924
        %v2941 = vpack.c.b16 %v2925, %v2925
        %v2942 = vpack.c.b16 %v2926, %v2926
        %vm2943 = vsmask.f32 3328
        %vm2944 = vsmask.f32 7440
        %vm2945 = vmor %vm2943, %vm2944
        %v2947 = vshrl.u32 %v2927, 16
        %v2949 = vrot.slane %v2947, 4
        %v2950 = vshll.u32 %v2927, 16
        %v2952 = vrot.slane %v2950, 5
        %v2953 = vor.u32 %v2949, %v2952
        %v2954 = vrot.slane %v2953, 4
        %v2956 = vshll.u32 %v2928, 16
        %v2958 = vrot.slane %v2956, 5
        %v2959 = vsel %vm2945, %v2954, %v2958
        %v2961 = vshrl.u32 %v2929, 16
        %v2963 = vrot.slane %v2961, 4
        %v2964 = vshll.u32 %v2929, 16
        %v2966 = vrot.slane %v2964, 5
        %v2967 = vor.u32 %v2963, %v2966
        %v2968 = vrot.slane %v2967, 4
        %v2970 = vshll.u32 %v2930, 16
        %v2972 = vrot.slane %v2970, 5
        %v2973 = vsel %vm2945, %v2968, %v2972
        %v2975 = vshrl.u32 %v2931, 16
        %v2977 = vrot.slane %v2975, 4
        %v2978 = vshll.u32 %v2931, 16
        %v2980 = vrot.slane %v2978, 5
        %v2981 = vor.u32 %v2977, %v2980
        %v2982 = vrot.slane %v2981, 4
        %v2984 = vshll.u32 %v2932, 16
        %v2986 = vrot.slane %v2984, 5
        %v2987 = vsel %vm2945, %v2982, %v2986
        %v2989 = vshrl.u32 %v2933, 16
        %v2991 = vrot.slane %v2989, 4
        %v2992 = vshll.u32 %v2933, 16
        %v2994 = vrot.slane %v2992, 5
        %v2995 = vor.u32 %v2991, %v2994
        %v2996 = vrot.slane %v2995, 4
        %v2998 = vshll.u32 %v2934, 16
        %v3000 = vrot.slane %v2998, 5
        %v3001 = vsel %vm2945, %v2996, %v3000
        %v3003 = vshrl.u32 %v2935, 16
        %v3005 = vrot.slane %v3003, 4
        %v3006 = vshll.u32 %v2935, 16
        %v3008 = vrot.slane %v3006, 5
        %v3009 = vor.u32 %v3005, %v3008
        %v3010 = vrot.slane %v3009, 4
        %v3012 = vshll.u32 %v2936, 16
        %v3014 = vrot.slane %v3012, 5
        %v3015 = vsel %vm2945, %v3010, %v3014
        %v3017 = vshrl.u32 %v2937, 16
        %v3019 = vrot.slane %v3017, 4
        %v3020 = vshll.u32 %v2937, 16
        %v3022 = vrot.slane %v3020, 5
        %v3023 = vor.u32 %v3019, %v3022
        %v3024 = vrot.slane %v3023, 4
        %v3026 = vshll.u32 %v2938, 16
        %v3028 = vrot.slane %v3026, 5
        %v3029 = vsel %vm2945, %v3024, %v3028
        %v3031 = vshrl.u32 %v2939, 16
        %v3033 = vrot.slane %v3031, 4
        %v3034 = vshll.u32 %v2939, 16
        %v3036 = vrot.slane %v3034, 5
        %v3037 = vor.u32 %v3033, %v3036
        %v3038 = vrot.slane %v3037, 4
        %v3040 = vshll.u32 %v2940, 16
        %v3042 = vrot.slane %v3040, 5
        %v3043 = vsel %vm2945, %v3038, %v3042
        %v3045 = vshrl.u32 %v2941, 16
        %v3047 = vrot.slane %v3045, 4
        %v3048 = vshll.u32 %v2941, 16
        %v3050 = vrot.slane %v3048, 5
        %v3051 = vor.u32 %v3047, %v3050
        %v3052 = vrot.slane %v3051, 4
        %v3054 = vshll.u32 %v2942, 16
        %v3056 = vrot.slane %v3054, 5
        %v3057 = vsel %vm2945, %v3052, %v3056
        %v3066 = vunpack.c.l.b16 %v2798
        %v3067 = vunpack.c.h.b16 %v2798
        %v3068 = vunpack.c.l.b16 %v2799
        %v3069 = vunpack.c.h.b16 %v2799
        %v3070 = vunpack.c.l.b16 %v2800
        %v3071 = vunpack.c.h.b16 %v2800
        %v3072 = vunpack.c.l.b16 %v2801
        %v3073 = vunpack.c.h.b16 %v2801
        %v3074 = vunpack.c.l.b16 %v2802
        %v3075 = vunpack.c.h.b16 %v2802
        %v3076 = vunpack.c.l.b16 %v2803
        %v3077 = vunpack.c.h.b16 %v2803
        %v3078 = vunpack.c.l.b16 %v2804
        %v3079 = vunpack.c.h.b16 %v2804
        %v3080 = vunpack.c.l.b16 %v2805
        %v3081 = vunpack.c.h.b16 %v2805
        %v3082 = vpack.c.b16 %v3066, %v3066
        %v3083 = vpack.c.b16 %v3067, %v3067
        %v3084 = vpack.c.b16 %v3068, %v3068
        %v3085 = vpack.c.b16 %v3069, %v3069
        %v3086 = vpack.c.b16 %v3070, %v3070
        %v3087 = vpack.c.b16 %v3071, %v3071
        %v3088 = vpack.c.b16 %v3072, %v3072
        %v3089 = vpack.c.b16 %v3073, %v3073
        %v3090 = vpack.c.b16 %v3074, %v3074
        %v3091 = vpack.c.b16 %v3075, %v3075
        %v3092 = vpack.c.b16 %v3076, %v3076
        %v3093 = vpack.c.b16 %v3077, %v3077
        %v3094 = vpack.c.b16 %v3078, %v3078
        %v3095 = vpack.c.b16 %v3079, %v3079
        %v3096 = vpack.c.b16 %v3080, %v3080
        %v3097 = vpack.c.b16 %v3081, %v3081
        %v3099 = vshrl.u32 %v3082, 16
        %v3101 = vrot.slane %v3099, 4
        %v3102 = vshll.u32 %v3082, 16
        %v3104 = vrot.slane %v3102, 5
        %v3105 = vor.u32 %v3101, %v3104
        %v3106 = vrot.slane %v3105, 4
        %v3108 = vshll.u32 %v3083, 16
        %v3110 = vrot.slane %v3108, 5
        %v3111 = vsel %vm2945, %v3106, %v3110
        %v3113 = vshrl.u32 %v3084, 16
        %v3115 = vrot.slane %v3113, 4
        %v3116 = vshll.u32 %v3084, 16
        %v3118 = vrot.slane %v3116, 5
        %v3119 = vor.u32 %v3115, %v3118
        %v3120 = vrot.slane %v3119, 4
        %v3122 = vshll.u32 %v3085, 16
        %v3124 = vrot.slane %v3122, 5
        %v3125 = vsel %vm2945, %v3120, %v3124
        %v3127 = vshrl.u32 %v3086, 16
        %v3129 = vrot.slane %v3127, 4
        %v3130 = vshll.u32 %v3086, 16
        %v3132 = vrot.slane %v3130, 5
        %v3133 = vor.u32 %v3129, %v3132
        %v3134 = vrot.slane %v3133, 4
        %v3136 = vshll.u32 %v3087, 16
        %v3138 = vrot.slane %v3136, 5
        %v3139 = vsel %vm2945, %v3134, %v3138
        %v3141 = vshrl.u32 %v3088, 16
        %v3143 = vrot.slane %v3141, 4
        %v3144 = vshll.u32 %v3088, 16
        %v3146 = vrot.slane %v3144, 5
        %v3147 = vor.u32 %v3143, %v3146
        %v3148 = vrot.slane %v3147, 4
        %v3150 = vshll.u32 %v3089, 16
        %v3152 = vrot.slane %v3150, 5
        %v3153 = vsel %vm2945, %v3148, %v3152
        %v3155 = vshrl.u32 %v3090, 16
        %v3157 = vrot.slane %v3155, 4
        %v3158 = vshll.u32 %v3090, 16
        %v3160 = vrot.slane %v3158, 5
        %v3161 = vor.u32 %v3157, %v3160
        %v3162 = vrot.slane %v3161, 4
        %v3164 = vshll.u32 %v3091, 16
        %v3166 = vrot.slane %v3164, 5
        %v3167 = vsel %vm2945, %v3162, %v3166
        %v3169 = vshrl.u32 %v3092, 16
        %v3171 = vrot.slane %v3169, 4
        %v3172 = vshll.u32 %v3092, 16
        %v3174 = vrot.slane %v3172, 5
        %v3175 = vor.u32 %v3171, %v3174
        %v3176 = vrot.slane %v3175, 4
        %v3178 = vshll.u32 %v3093, 16
        %v3180 = vrot.slane %v3178, 5
        %v3181 = vsel %vm2945, %v3176, %v3180
        %v3183 = vshrl.u32 %v3094, 16
        %v3185 = vrot.slane %v3183, 4
        %v3186 = vshll.u32 %v3094, 16
        %v3188 = vrot.slane %v3186, 5
        %v3189 = vor.u32 %v3185, %v3188
        %v3190 = vrot.slane %v3189, 4
        %v3192 = vshll.u32 %v3095, 16
        %v3194 = vrot.slane %v3192, 5
        %v3195 = vsel %vm2945, %v3190, %v3194
        %v3197 = vshrl.u32 %v3096, 16
        %v3199 = vrot.slane %v3197, 4
        %v3200 = vshll.u32 %v3096, 16
        %v3202 = vrot.slane %v3200, 5
        %v3203 = vor.u32 %v3199, %v3202
        %v3204 = vrot.slane %v3203, 4
        %v3206 = vshll.u32 %v3097, 16
        %v3208 = vrot.slane %v3206, 5
        %v3209 = vsel %vm2945, %v3204, %v3208
        %v3211 = vunpack.c.l.b16 %v2902
        %v3212 = vunpack.c.h.b16 %v2902
        %v3213 = vpack.c.b16 %v3211, %v3211
        %v3214 = vpack.c.b16 %v3212, %v3212
        %v3216 = vshrl.u32 %v3213, 16
        %v3218 = vrot.slane %v3216, 4
        %v3219 = vshll.u32 %v3213, 16
        %v3221 = vrot.slane %v3219, 5
        %v3222 = vor.u32 %v3218, %v3221
        %v3223 = vrot.slane %v3222, 4
        %v3225 = vshll.u32 %v3214, 16
        %v3227 = vrot.slane %v3225, 5
        %v3228 = vsel %vm2945, %v3223, %v3227
        %v3229 = vpack.c.b16 %v2913, %v2911
        %v3230 = vpack.c.b16 %v2917, %v2915
        %v3231 = vpack.c.b16 %v2921, %v2919
        %v3232 = vpack.c.b16 %v2925, %v2923
        %v3241 = vunpack.c.l.b16 0
        %v3242 = vunpack.c.l.b16 %v2808
        %v3243 = vunpack.c.l.b16 %v2810
        %v3244 = vunpack.c.l.b16 %v2812
        %v3245 = vunpack.c.l.b16 %v2814
        %v3246 = vunpack.c.l.b16 %v2816
        %v3247 = vunpack.c.l.b16 %v2818
        %v3248 = vunpack.c.l.b16 %v2820
        %v3249 = vpack.c.b16 %v3242, %v3241
        %v3250 = vpack.c.b16 %v3244, %v3243
        %v3251 = vpack.c.b16 %v3246, %v3245
        %v3252 = vpack.c.b16 %v3248, %v3247
        %3253 = vrot.lane.b32.xlu0 %v3249, 64
        %v3254 = vpop.permute.xlu0 %3253
        %3255 = vrot.lane.b32.xlu0 %v3250, 64
        %v3256 = vpop.permute.xlu0 %3255
        %3257 = vrot.lane.b32.xlu0 %v3251, 64
        %v3258 = vpop.permute.xlu0 %3257
        %3259 = vrot.lane.b32.xlu0 %v3252, 64
        %v3260 = vpop.permute.xlu0 %3259
        %v3261 = vunpack.c.l.b16 %v2959
        %v3262 = vunpack.c.l.b16 %v2973
        %v3263 = vunpack.c.l.b16 %v2987
        %v3264 = vunpack.c.l.b16 %v3001
        %v3265 = vunpack.c.l.b16 %v3015
        %v3266 = vunpack.c.l.b16 %v3029
        %v3267 = vunpack.c.l.b16 %v3043
        %v3268 = vunpack.c.l.b16 %v3057
        %v3269 = vpack.c.b16 %v3262, %v3261
        %v3270 = vpack.c.b16 %v3264, %v3263
        %v3271 = vpack.c.b16 %v3266, %v3265
        %v3272 = vpack.c.b16 %v3268, %v3267
        %v3273 = vpack.c.b16 %v3068, %v3066
        %v3274 = vpack.c.b16 %v3072, %v3070
        %v3275 = vpack.c.b16 %v3076, %v3074
        %v3276 = vpack.c.b16 %v3080, %v3078
        %3277 = vrot.lane.b32.xlu0 %v3273, 64
        %v3278 = vpop.permute.xlu0 %3277
        %3279 = vrot.lane.b32.xlu0 %v3274, 64
        %v3280 = vpop.permute.xlu0 %3279
        %3281 = vrot.lane.b32.xlu0 %v3275, 64
        %v3282 = vpop.permute.xlu0 %3281
        %3283 = vrot.lane.b32.xlu0 %v3276, 64
        %v3284 = vpop.permute.xlu0 %3283
        %v3293 = vunpack.c.l.b16 %v2697
        %v3294 = vunpack.c.l.b16 %v2699
        %v3295 = vunpack.c.l.b16 %v2701
        %v3296 = vunpack.c.l.b16 %v2703
        %v3297 = vunpack.c.l.b16 %v2705
        %v3298 = vunpack.c.l.b16 %v2707
        %v3299 = vunpack.c.l.b16 %v2709
        %v3300 = vunpack.c.l.b16 %v2711
        %v3301 = vpack.c.b16 %v3294, %v3293
        %v3302 = vpack.c.b16 %v3296, %v3295
        %v3303 = vpack.c.b16 %v3298, %v3297
        %v3304 = vpack.c.b16 %v3300, %v3299
        %v3305 = vunpack.c.l.b16 %v3111
        %v3306 = vunpack.c.l.b16 %v3125
        %v3307 = vunpack.c.l.b16 %v3139
        %v3308 = vunpack.c.l.b16 %v3153
        %v3309 = vunpack.c.l.b16 %v3167
        %v3310 = vunpack.c.l.b16 %v3181
        %v3311 = vunpack.c.l.b16 %v3195
        %v3312 = vunpack.c.l.b16 %v3209
        %v3313 = vpack.c.b16 %v3306, %v3305
        %v3314 = vpack.c.b16 %v3308, %v3307
        %v3315 = vpack.c.b16 %v3310, %v3309
        %v3316 = vpack.c.b16 %v3312, %v3311
        %3317 = vrot.lane.b32.xlu0 %v3313, 64
        %v3318 = vpop.permute.xlu0 %3317
        %3319 = vrot.lane.b32.xlu0 %v3314, 64
        %v3320 = vpop.permute.xlu0 %3319
        %3321 = vrot.lane.b32.xlu0 %v3315, 64
        %v3322 = vpop.permute.xlu0 %3321
        %3323 = vrot.lane.b32.xlu0 %v3316, 64
        %v3324 = vpop.permute.xlu0 %3323
        %v3325 = vpack.c.b16 %v2915, %v2913
        %v3326 = vpack.c.b16 %v2919, %v2917
        %v3327 = vpack.c.b16 %v2923, %v2921
        %v3328 = vpack.c.b16 %v3211, %v2925
        %v3330 = vunpack.c.l.b16 %v2822
        %v3331 = vpack.c.b16 %v3243, %v3242
        %v3332 = vpack.c.b16 %v3245, %v3244
        %v3333 = vpack.c.b16 %v3247, %v3246
        %v3334 = vpack.c.b16 %v3330, %v3248
        %3335 = vrot.lane.b32.xlu0 %v3331, 64
        %v3336 = vpop.permute.xlu0 %3335
        %3337 = vrot.lane.b32.xlu0 %v3332, 64
        %v3338 = vpop.permute.xlu0 %3337
        %3339 = vrot.lane.b32.xlu0 %v3333, 64
        %v3340 = vpop.permute.xlu0 %3339
        %3341 = vrot.lane.b32.xlu0 %v3334, 64
        %v3342 = vpop.permute.xlu0 %3341
        %v3343 = vunpack.c.l.b16 %v3228
        %v3344 = vpack.c.b16 %v3263, %v3262
        %v3345 = vpack.c.b16 %v3265, %v3264
        %v3346 = vpack.c.b16 %v3267, %v3266
        %v3347 = vpack.c.b16 %v3343, %v3268
        %v3350 = vsel %vm2044, %v3229, %v3254
        %v3354 = vsel %vm2044, %v3230, %v3256
        %v3358 = vsel %vm2044, %v3231, %v3258
        %v3362 = vsel %vm2044, %v3232, %v3260
        %v3366 = vsel %vm2044, %v3269, %v3278
        %v3370 = vsel %vm2044, %v3270, %v3280
        %v3374 = vsel %vm2044, %v3271, %v3282
        %v3378 = vsel %vm2044, %v3272, %v3284
        %v3382 = vsel %vm2044, %v3301, %v3318
        %v3386 = vsel %vm2044, %v3302, %v3320
        %v3390 = vsel %vm2044, %v3303, %v3322
        %v3394 = vsel %vm2044, %v3304, %v3324
        %v3398 = vsel %vm2044, %v3325, %v3336
        %v3402 = vsel %vm2044, %v3326, %v3338
        %v3406 = vsel %vm2044, %v3327, %v3340
        %v3410 = vsel %vm2044, %v3328, %v3342
        %v3412 = vunpack.c.h.b16 0
        %v3413 = vunpack.c.h.b16 %v2808
        %v3414 = vunpack.c.h.b16 %v2810
        %v3415 = vunpack.c.h.b16 %v2812
        %v3416 = vunpack.c.h.b16 %v2814
        %v3417 = vunpack.c.h.b16 %v2816
        %v3418 = vunpack.c.h.b16 %v2818
        %v3419 = vunpack.c.h.b16 %v2820
        %v3420 = vpack.c.b16 %v3241, %v3241
        %v3421 = vpack.c.b16 %v3412, %v3412
        %v3422 = vpack.c.b16 %v3242, %v3242
        %v3423 = vpack.c.b16 %v3413, %v3413
        %v3424 = vpack.c.b16 %v3243, %v3243
        %v3425 = vpack.c.b16 %v3414, %v3414
        %v3426 = vpack.c.b16 %v3244, %v3244
        %v3427 = vpack.c.b16 %v3415, %v3415
        %v3428 = vpack.c.b16 %v3245, %v3245
        %v3429 = vpack.c.b16 %v3416, %v3416
        %v3430 = vpack.c.b16 %v3246, %v3246
        %v3431 = vpack.c.b16 %v3417, %v3417
        %v3432 = vpack.c.b16 %v3247, %v3247
        %v3433 = vpack.c.b16 %v3418, %v3418
        %v3434 = vpack.c.b16 %v3248, %v3248
        %v3435 = vpack.c.b16 %v3419, %v3419
        %v3437 = vshrl.u32 %v3420, 16
        %v3439 = vrot.slane %v3437, 4
        %v3440 = vshll.u32 %v3420, 16
        %v3442 = vrot.slane %v3440, 5
        %v3443 = vor.u32 %v3439, %v3442
        %v3444 = vrot.slane %v3443, 4
        %v3446 = vshll.u32 %v3421, 16
        %v3448 = vrot.slane %v3446, 5
        %v3449 = vsel %vm2945, %v3444, %v3448
        %v3451 = vshrl.u32 %v3422, 16
        %v3453 = vrot.slane %v3451, 4
        %v3454 = vshll.u32 %v3422, 16
        %v3456 = vrot.slane %v3454, 5
        %v3457 = vor.u32 %v3453, %v3456
        %v3458 = vrot.slane %v3457, 4
        %v3460 = vshll.u32 %v3423, 16
        %v3462 = vrot.slane %v3460, 5
        %v3463 = vsel %vm2945, %v3458, %v3462
        %v3465 = vshrl.u32 %v3424, 16
        %v3467 = vrot.slane %v3465, 4
        %v3468 = vshll.u32 %v3424, 16
        %v3470 = vrot.slane %v3468, 5
        %v3471 = vor.u32 %v3467, %v3470
        %v3472 = vrot.slane %v3471, 4
        %v3474 = vshll.u32 %v3425, 16
        %v3476 = vrot.slane %v3474, 5
        %v3477 = vsel %vm2945, %v3472, %v3476
        %v3479 = vshrl.u32 %v3426, 16
        %v3481 = vrot.slane %v3479, 4
        %v3482 = vshll.u32 %v3426, 16
        %v3484 = vrot.slane %v3482, 5
        %v3485 = vor.u32 %v3481, %v3484
        %v3486 = vrot.slane %v3485, 4
        %v3488 = vshll.u32 %v3427, 16
        %v3490 = vrot.slane %v3488, 5
        %v3491 = vsel %vm2945, %v3486, %v3490
        %v3493 = vshrl.u32 %v3428, 16
        %v3495 = vrot.slane %v3493, 4
        %v3496 = vshll.u32 %v3428, 16
        %v3498 = vrot.slane %v3496, 5
        %v3499 = vor.u32 %v3495, %v3498
        %v3500 = vrot.slane %v3499, 4
        %v3502 = vshll.u32 %v3429, 16
        %v3504 = vrot.slane %v3502, 5
        %v3505 = vsel %vm2945, %v3500, %v3504
        %v3507 = vshrl.u32 %v3430, 16
        %v3509 = vrot.slane %v3507, 4
        %v3510 = vshll.u32 %v3430, 16
        %v3512 = vrot.slane %v3510, 5
        %v3513 = vor.u32 %v3509, %v3512
        %v3514 = vrot.slane %v3513, 4
        %v3516 = vshll.u32 %v3431, 16
        %v3518 = vrot.slane %v3516, 5
        %v3519 = vsel %vm2945, %v3514, %v3518
        %v3521 = vshrl.u32 %v3432, 16
        %v3523 = vrot.slane %v3521, 4
        %v3524 = vshll.u32 %v3432, 16
        %v3526 = vrot.slane %v3524, 5
        %v3527 = vor.u32 %v3523, %v3526
        %v3528 = vrot.slane %v3527, 4
        %v3530 = vshll.u32 %v3433, 16
        %v3532 = vrot.slane %v3530, 5
        %v3533 = vsel %vm2945, %v3528, %v3532
        %v3535 = vshrl.u32 %v3434, 16
        %v3537 = vrot.slane %v3535, 4
        %v3538 = vshll.u32 %v3434, 16
        %v3540 = vrot.slane %v3538, 5
        %v3541 = vor.u32 %v3537, %v3540
        %v3542 = vrot.slane %v3541, 4
        %v3544 = vshll.u32 %v3435, 16
        %v3546 = vrot.slane %v3544, 5
        %v3547 = vsel %vm2945, %v3542, %v3546
        %v3548 = vunpack.c.h.b16 %v2697
        %v3549 = vunpack.c.h.b16 %v2699
        %v3550 = vunpack.c.h.b16 %v2701
        %v3551 = vunpack.c.h.b16 %v2703
        %v3552 = vunpack.c.h.b16 %v2705
        %v3553 = vunpack.c.h.b16 %v2707
        %v3554 = vunpack.c.h.b16 %v2709
        %v3555 = vunpack.c.h.b16 %v2711
        %v3556 = vpack.c.b16 %v3293, %v3293
        %v3557 = vpack.c.b16 %v3548, %v3548
        %v3558 = vpack.c.b16 %v3294, %v3294
        %v3559 = vpack.c.b16 %v3549, %v3549
        %v3560 = vpack.c.b16 %v3295, %v3295
        %v3561 = vpack.c.b16 %v3550, %v3550
        %v3562 = vpack.c.b16 %v3296, %v3296
        %v3563 = vpack.c.b16 %v3551, %v3551
        %v3564 = vpack.c.b16 %v3297, %v3297
        %v3565 = vpack.c.b16 %v3552, %v3552
        %v3566 = vpack.c.b16 %v3298, %v3298
        %v3567 = vpack.c.b16 %v3553, %v3553
        %v3568 = vpack.c.b16 %v3299, %v3299
        %v3569 = vpack.c.b16 %v3554, %v3554
        %v3570 = vpack.c.b16 %v3300, %v3300
        %v3571 = vpack.c.b16 %v3555, %v3555
        %v3573 = vshrl.u32 %v3556, 16
        %v3575 = vrot.slane %v3573, 4
        %v3576 = vshll.u32 %v3556, 16
        %v3578 = vrot.slane %v3576, 5
        %v3579 = vor.u32 %v3575, %v3578
        %v3580 = vrot.slane %v3579, 4
        %v3582 = vshll.u32 %v3557, 16
        %v3584 = vrot.slane %v3582, 5
        %v3585 = vsel %vm2945, %v3580, %v3584
        %v3587 = vshrl.u32 %v3558, 16
        %v3589 = vrot.slane %v3587, 4
        %v3590 = vshll.u32 %v3558, 16
        %v3592 = vrot.slane %v3590, 5
        %v3593 = vor.u32 %v3589, %v3592
        %v3594 = vrot.slane %v3593, 4
        %v3596 = vshll.u32 %v3559, 16
        %v3598 = vrot.slane %v3596, 5
        %v3599 = vsel %vm2945, %v3594, %v3598
        %v3601 = vshrl.u32 %v3560, 16
        %v3603 = vrot.slane %v3601, 4
        %v3604 = vshll.u32 %v3560, 16
        %v3606 = vrot.slane %v3604, 5
        %v3607 = vor.u32 %v3603, %v3606
        %v3608 = vrot.slane %v3607, 4
        %v3610 = vshll.u32 %v3561, 16
        %v3612 = vrot.slane %v3610, 5
        %v3613 = vsel %vm2945, %v3608, %v3612
        %v3615 = vshrl.u32 %v3562, 16
        %v3617 = vrot.slane %v3615, 4
        %v3618 = vshll.u32 %v3562, 16
        %v3620 = vrot.slane %v3618, 5
        %v3621 = vor.u32 %v3617, %v3620
        %v3622 = vrot.slane %v3621, 4
        %v3624 = vshll.u32 %v3563, 16
        %v3626 = vrot.slane %v3624, 5
        %v3627 = vsel %vm2945, %v3622, %v3626
        %v3629 = vshrl.u32 %v3564, 16
        %v3631 = vrot.slane %v3629, 4
        %v3632 = vshll.u32 %v3564, 16
        %v3634 = vrot.slane %v3632, 5
        %v3635 = vor.u32 %v3631, %v3634
        %v3636 = vrot.slane %v3635, 4
        %v3638 = vshll.u32 %v3565, 16
        %v3640 = vrot.slane %v3638, 5
        %v3641 = vsel %vm2945, %v3636, %v3640
        %v3643 = vshrl.u32 %v3566, 16
        %v3645 = vrot.slane %v3643, 4
        %v3646 = vshll.u32 %v3566, 16
        %v3648 = vrot.slane %v3646, 5
        %v3649 = vor.u32 %v3645, %v3648
        %v3650 = vrot.slane %v3649, 4
        %v3652 = vshll.u32 %v3567, 16
        %v3654 = vrot.slane %v3652, 5
        %v3655 = vsel %vm2945, %v3650, %v3654
        %v3657 = vshrl.u32 %v3568, 16
        %v3659 = vrot.slane %v3657, 4
        %v3660 = vshll.u32 %v3568, 16
        %v3662 = vrot.slane %v3660, 5
        %v3663 = vor.u32 %v3659, %v3662
        %v3664 = vrot.slane %v3663, 4
        %v3666 = vshll.u32 %v3569, 16
        %v3668 = vrot.slane %v3666, 5
        %v3669 = vsel %vm2945, %v3664, %v3668
        %v3671 = vshrl.u32 %v3570, 16
        %v3673 = vrot.slane %v3671, 4
        %v3674 = vshll.u32 %v3570, 16
        %v3676 = vrot.slane %v3674, 5
        %v3677 = vor.u32 %v3673, %v3676
        %v3678 = vrot.slane %v3677, 4
        %v3680 = vshll.u32 %v3571, 16
        %v3682 = vrot.slane %v3680, 5
        %v3683 = vsel %vm2945, %v3678, %v3682
        %v3684 = vunpack.c.h.b16 %v2822
        %v3685 = vpack.c.b16 %v3330, %v3330
        %v3686 = vpack.c.b16 %v3684, %v3684
        %v3688 = vshrl.u32 %v3685, 16
        %v3690 = vrot.slane %v3688, 4
        %v3691 = vshll.u32 %v3685, 16
        %v3693 = vrot.slane %v3691, 5
        %v3694 = vor.u32 %v3690, %v3693
        %v3695 = vrot.slane %v3694, 4
        %v3697 = vshll.u32 %v3686, 16
        %v3699 = vrot.slane %v3697, 5
        %v3700 = vsel %vm2945, %v3695, %v3699
        %3701 = vrot.lane.b32.xlu0 %v3269, 64
        %v3702 = vpop.permute.xlu0 %3701
        %3703 = vrot.lane.b32.xlu0 %v3270, 64
        %v3704 = vpop.permute.xlu0 %3703
        %3705 = vrot.lane.b32.xlu0 %v3271, 64
        %v3706 = vpop.permute.xlu0 %3705
        %3707 = vrot.lane.b32.xlu0 %v3272, 64
        %v3708 = vpop.permute.xlu0 %3707
        %v3709 = vunpack.c.l.b16 %v3449
        %v3710 = vunpack.c.l.b16 %v3463
        %v3711 = vunpack.c.l.b16 %v3477
        %v3712 = vunpack.c.l.b16 %v3491
        %v3713 = vunpack.c.l.b16 %v3505
        %v3714 = vunpack.c.l.b16 %v3519
        %v3715 = vunpack.c.l.b16 %v3533
        %v3716 = vunpack.c.l.b16 %v3547
        %v3717 = vpack.c.b16 %v3710, %v3709
        %v3718 = vpack.c.b16 %v3712, %v3711
        %v3719 = vpack.c.b16 %v3714, %v3713
        %v3720 = vpack.c.b16 %v3716, %v3715
        %3721 = vrot.lane.b32.xlu0 %v3301, 64
        %v3722 = vpop.permute.xlu0 %3721
        %3723 = vrot.lane.b32.xlu0 %v3302, 64
        %v3724 = vpop.permute.xlu0 %3723
        %3725 = vrot.lane.b32.xlu0 %v3303, 64
        %v3726 = vpop.permute.xlu0 %3725
        %3727 = vrot.lane.b32.xlu0 %v3304, 64
        %v3728 = vpop.permute.xlu0 %3727
        %v3729 = vunpack.c.l.b16 %v3585
        %v3730 = vunpack.c.l.b16 %v3599
        %v3731 = vunpack.c.l.b16 %v3613
        %v3732 = vunpack.c.l.b16 %v3627
        %v3733 = vunpack.c.l.b16 %v3641
        %v3734 = vunpack.c.l.b16 %v3655
        %v3735 = vunpack.c.l.b16 %v3669
        %v3736 = vunpack.c.l.b16 %v3683
        %v3737 = vpack.c.b16 %v3730, %v3729
        %v3738 = vpack.c.b16 %v3732, %v3731
        %v3739 = vpack.c.b16 %v3734, %v3733
        %v3740 = vpack.c.b16 %v3736, %v3735
        %3741 = vrot.lane.b32.xlu0 %v3737, 64
        %v3742 = vpop.permute.xlu0 %3741
        %3743 = vrot.lane.b32.xlu0 %v3738, 64
        %v3744 = vpop.permute.xlu0 %3743
        %3745 = vrot.lane.b32.xlu0 %v3739, 64
        %v3746 = vpop.permute.xlu0 %3745
        %3747 = vrot.lane.b32.xlu0 %v3740, 64
        %v3748 = vpop.permute.xlu0 %3747
        %3749 = vrot.lane.b32.xlu0 %v3344, 64
        %v3750 = vpop.permute.xlu0 %3749
        %3751 = vrot.lane.b32.xlu0 %v3345, 64
        %v3752 = vpop.permute.xlu0 %3751
        %3753 = vrot.lane.b32.xlu0 %v3346, 64
        %v3754 = vpop.permute.xlu0 %3753
        %3755 = vrot.lane.b32.xlu0 %v3347, 64
        %v3756 = vpop.permute.xlu0 %3755
        %v3757 = vunpack.c.l.b16 %v3700
        %v3758 = vpack.c.b16 %v3711, %v3710
        %v3759 = vpack.c.b16 %v3713, %v3712
        %v3760 = vpack.c.b16 %v3715, %v3714
        %v3761 = vpack.c.b16 %v3757, %v3716
        %v3764 = vsel %vm2044, %v3249, %v3702
        %v3768 = vsel %vm2044, %v3250, %v3704
        %v3772 = vsel %vm2044, %v3251, %v3706
        %v3776 = vsel %vm2044, %v3252, %v3708
        %v3780 = vsel %vm2044, %v3717, %v3722
        %v3784 = vsel %vm2044, %v3718, %v3724
        %v3788 = vsel %vm2044, %v3719, %v3726
        %v3792 = vsel %vm2044, %v3720, %v3728
        %v3796 = vsel %vm2044, %v3313, %v3742
        %v3800 = vsel %vm2044, %v3314, %v3744
        %v3804 = vsel %vm2044, %v3315, %v3746
        %v3808 = vsel %vm2044, %v3316, %v3748
        %v3812 = vsel %vm2044, %v3331, %v3750
        %v3816 = vsel %vm2044, %v3332, %v3752
        %v3820 = vsel %vm2044, %v3333, %v3754
        %v3824 = vsel %vm2044, %v3334, %v3756
        %v3827 = vunpack.c.l.b16 %v2806
        %v3828 = vunpack.c.h.b16 %v2806
        %v3829 = vpack.c.b16 %v3827, %v3827
        %v3830 = vpack.c.b16 %v3828, %v3828
        %v3832 = vshrl.u32 %v3829, 16
        %v3834 = vrot.slane %v3832, 4
        %v3835 = vshll.u32 %v3829, 16
        %v3837 = vrot.slane %v3835, 5
        %v3838 = vor.u32 %v3834, %v3837
        %v3839 = vrot.slane %v3838, 4
        %v3841 = vshll.u32 %v3830, 16
        %v3843 = vrot.slane %v3841, 5
        %v3844 = vsel %vm2945, %v3839, %v3843
        %3845 = vrot.lane.b32.xlu0 %v3325, 64
        %v3846 = vpop.permute.xlu0 %3845
        %3847 = vrot.lane.b32.xlu0 %v3326, 64
        %v3848 = vpop.permute.xlu0 %3847
        %3849 = vrot.lane.b32.xlu0 %v3327, 64
        %v3850 = vpop.permute.xlu0 %3849
        %3851 = vrot.lane.b32.xlu0 %v3328, 64
        %v3852 = vpop.permute.xlu0 %3851
        %v3853 = vpack.c.b16 %v3070, %v3068
        %v3854 = vpack.c.b16 %v3074, %v3072
        %v3855 = vpack.c.b16 %v3078, %v3076
        %v3856 = vpack.c.b16 %v3827, %v3080
        %v3857 = vpack.c.b16 %v3295, %v3294
        %v3858 = vpack.c.b16 %v3297, %v3296
        %v3859 = vpack.c.b16 %v3299, %v3298
        %v3860 = vpack.c.b16 %v3241, %v3300
        %3861 = vrot.lane.b32.xlu0 %v3857, 64
        %v3862 = vpop.permute.xlu0 %3861
        %3863 = vrot.lane.b32.xlu0 %v3858, 64
        %v3864 = vpop.permute.xlu0 %3863
        %3865 = vrot.lane.b32.xlu0 %v3859, 64
        %v3866 = vpop.permute.xlu0 %3865
        %3867 = vrot.lane.b32.xlu0 %v3860, 64
        %v3868 = vpop.permute.xlu0 %3867
        %v3869 = vunpack.c.l.b16 %v3844
        %v3870 = vpack.c.b16 %v3307, %v3306
        %v3871 = vpack.c.b16 %v3309, %v3308
        %v3872 = vpack.c.b16 %v3311, %v3310
        %v3873 = vpack.c.b16 %v3869, %v3312
        %v3875 = vsel %vm2044, %v3273, %v3722
        %v3878 = vsel %vm2044, %v3274, %v3724
        %v3881 = vsel %vm2044, %v3275, %v3726
        %v3884 = vsel %vm2044, %v3276, %v3728
        %v3887 = vsel %vm2044, %v3313, %v3846
        %v3890 = vsel %vm2044, %v3314, %v3848
        %v3893 = vsel %vm2044, %v3315, %v3850
        %v3896 = vsel %vm2044, %v3316, %v3852
        %v3900 = vsel %vm2044, %v3853, %v3862
        %v3904 = vsel %vm2044, %v3854, %v3864
        %v3908 = vsel %vm2044, %v3855, %v3866
        %v3912 = vsel %vm2044, %v3856, %v3868
        %3914 = vrot.lane.b32.xlu0 %v3758, 64
        %v3915 = vpop.permute.xlu0 %3914
        %3916 = vrot.lane.b32.xlu0 %v3759, 64
        %v3917 = vpop.permute.xlu0 %3916
        %3918 = vrot.lane.b32.xlu0 %v3760, 64
        %v3919 = vpop.permute.xlu0 %3918
        %3920 = vrot.lane.b32.xlu0 %v3761, 64
        %v3921 = vpop.permute.xlu0 %3920
        %3922 = vrot.lane.b32.xlu0 %v3870, 64
        %v3923 = vpop.permute.xlu0 %3922
        %3924 = vrot.lane.b32.xlu0 %v3871, 64
        %v3925 = vpop.permute.xlu0 %3924
        %3926 = vrot.lane.b32.xlu0 %v3872, 64
        %v3927 = vpop.permute.xlu0 %3926
        %3928 = vrot.lane.b32.xlu0 %v3873, 64
        %v3929 = vpop.permute.xlu0 %3928
        %v3930 = vpack.c.b16 %v3731, %v3730
        %v3931 = vpack.c.b16 %v3733, %v3732
        %v3932 = vpack.c.b16 %v3735, %v3734
        %v3933 = vpack.c.b16 %v3709, %v3736
        %v3935 = vsel %vm2044, %v3737, %v3336
        %v3938 = vsel %vm2044, %v3738, %v3338
        %v3941 = vsel %vm2044, %v3739, %v3340
        %v3944 = vsel %vm2044, %v3740, %v3342
        %v3948 = vsel %vm2044, %v3344, %v3915
        %v3952 = vsel %vm2044, %v3345, %v3917
        %v3956 = vsel %vm2044, %v3346, %v3919
        %v3960 = vsel %vm2044, %v3347, %v3921
        %v3964 = vsel %vm2044, %v3857, %v3923
        %v3968 = vsel %vm2044, %v3858, %v3925
        %v3972 = vsel %vm2044, %v3859, %v3927
        %v3976 = vsel %vm2044, %v3860, %v3929
        %v3978 = vld [vmem:[%s7] sm:$0xf]
        %v3979 = vld [vmem:[%s7 + $0x4] sm:$0xf]
        %v3980 = vld [vmem:[%s7 + $0x8] sm:$0xf]
        %v3981 = vld [vmem:[%s7 + $0xc] sm:$0xf]
        %v3982 = vld [vmem:[%s7 + $0x10] sm:$0xf]
        %v3983 = vld [vmem:[%s7 + $0x14] sm:$0xf]
        %v3984 = vld [vmem:[%s7 + $0x18] sm:$0xf]
        %v3985 = vld [vmem:[%s7 + $0x1c] sm:$0xf]
        %v3986 = vld [vmem:[%s7 + $0x20] sm:$0xf]
        %v3987 = vld [vmem:[%s7 + $0x24] sm:$0xf]
        %v3988 = vld [vmem:[%s7 + $0x28] sm:$0xf]
        %v3989 = vld [vmem:[%s7 + $0x2c] sm:$0xf]
        %v3990 = vld [vmem:[%s7 + $0x30] sm:$0xf]
        %v3991 = vld [vmem:[%s7 + $0x34] sm:$0xf]
        %v3992 = vld [vmem:[%s7 + $0x38] sm:$0xf]
        %v3993 = vld [vmem:[%s7 + $0x3c] sm:$0xf]
        %v3994 = vld [vmem:[%s7 + $0x40] sm:$0xf]
        %v3995 = vld [vmem:[%s7 + $0x44] sm:$0xf]
        %v3996 = vld [vmem:[%s7 + $0x48] sm:$0xf]
        %v3997 = vld [vmem:[%s7 + $0x4c] sm:$0xf]
        %v3998 = vld [vmem:[%s7 + $0x50] sm:$0xf]
        %v3999 = vld [vmem:[%s7 + $0x54] sm:$0xf]
        %v4000 = vld [vmem:[%s7 + $0x58] sm:$0xf]
        %v4001 = vld [vmem:[%s7 + $0x5c] sm:$0xf]
        %v4002 = vld [vmem:[%s7 + $0x60] sm:$0xf]
        %v4003 = vld [vmem:[%s7 + $0x64] sm:$0xf]
        %v4004 = vld [vmem:[%s7 + $0x68] sm:$0xf]
        %v4005 = vld [vmem:[%s7 + $0x6c] sm:$0xf]
        %v4006 = vld [vmem:[%s7 + $0x70] sm:$0xf]
        %v4007 = vld [vmem:[%s7 + $0x74] sm:$0xf]
        %v4008 = vld [vmem:[%s7 + $0x78] sm:$0xf]
        %v4009 = vld [vmem:[%s7 + $0x7c] sm:$0xf]
        %v4010 = vld [vmem:[%s7 + $0x80] sm:$0xf]
        %v4011 = vld [vmem:[%s7 + $0x84] sm:$0xf]
        %v4012 = vld [vmem:[%s7 + $0x88] sm:$0xf]
        %v4013 = vld [vmem:[%s7 + $0x8c] sm:$0xf]
        %v4014 = vld [vmem:[%s7 + $0x90] sm:$0xf]
        %v4015 = vld [vmem:[%s7 + $0x94] sm:$0xf]
        %v4016 = vld [vmem:[%s7 + $0x98] sm:$0xf]
        %v4017 = vld [vmem:[%s7 + $0x9c] sm:$0xf]
        %v4018 = vld [vmem:[%s7 + $0xa0] sm:$0xf]
        %v4019 = vld [vmem:[%s7 + $0xa4] sm:$0xf]
        %v4020 = vld [vmem:[%s7 + $0xa8] sm:$0xf]
        %v4021 = vld [vmem:[%s7 + $0xac] sm:$0xf]
        %v4022 = vld [vmem:[%s7 + $0xb0] sm:$0xf]
        %v4023 = vld [vmem:[%s7 + $0xb4] sm:$0xf]
        %v4024 = vld [vmem:[%s7 + $0xb8] sm:$0xf]
        %v4025 = vld [vmem:[%s7 + $0xbc] sm:$0xf]
        %v4026 = vld [vmem:[%s7 + $0xc0] sm:$0xf]
        %v4027 = vld [vmem:[%s7 + $0xc4] sm:$0xf]
        %v4028 = vld [vmem:[%s7 + $0xc8] sm:$0xf]
        %v4029 = vld [vmem:[%s7 + $0xcc] sm:$0xf]
        %v4030 = vld [vmem:[%s7 + $0xd0] sm:$0xf]
        %v4031 = vld [vmem:[%s7 + $0xd4] sm:$0xf]
        %v4032 = vld [vmem:[%s7 + $0xd8] sm:$0xf]
        %v4033 = vld [vmem:[%s7 + $0xdc] sm:$0xf]
        %v4034 = vld [vmem:[%s7 + $0xe0] sm:$0xf]
        %v4035 = vld [vmem:[%s7 + $0xe4] sm:$0xf]
        %v4036 = vld [vmem:[%s7 + $0xe8] sm:$0xf]
        %v4037 = vld [vmem:[%s7 + $0xec] sm:$0xf]
        %v4038 = vld [vmem:[%s7 + $0xf0] sm:$0xf]
        %v4039 = vld [vmem:[%s7 + $0xf4] sm:$0xf]
        %v4040 = vld [vmem:[%s7 + $0xf8] sm:$0xf]
        %v4041 = vld [vmem:[%s7 + $0xfc] sm:$0xf]
        %v4042 = vld [vmem:[%s7 + $0x100] sm:$0xf]
        %v4043 = vld [vmem:[%s7 + $0x104] sm:$0xf]
        %v4044 = vld [vmem:[%s7 + $0x108] sm:$0xf]
        %v4045 = vld [vmem:[%s7 + $0x10c] sm:$0xf]
        %v4046 = vld [vmem:[%s7 + $0x110] sm:$0xf]
        %v4047 = vld [vmem:[%s7 + $0x114] sm:$0xf]
        %v4048 = vld [vmem:[%s7 + $0x118] sm:$0xf]
        %v4049 = vld [vmem:[%s7 + $0x11c] sm:$0xf]
        %v4050 = vld [vmem:[%s8] sm:$0x1]
        %v4052 = vlaneseq
        %v4053 = vshrl.u32 %v4052, 7
        %v4054 = vsub.s32 0, %v4053
        %v4055 = vrot.slane %v4050, %v4054
        %v4129 = vunpack.c.l.b16 %v3978
        %v4130 = vunpack.c.l.b16 %v3979
        %v4131 = vunpack.c.l.b16 %v3980
        %v4132 = vunpack.c.l.b16 %v3981
        %v4133 = vunpack.c.l.b16 %v3982
        %v4134 = vunpack.c.l.b16 %v3983
        %v4135 = vunpack.c.l.b16 %v3984
        %v4136 = vunpack.c.l.b16 %v3985
        %v4137 = vunpack.c.l.b16 %v3986
        %v4138 = vunpack.c.l.b16 %v3987
        %v4139 = vunpack.c.l.b16 %v3988
        %v4140 = vunpack.c.l.b16 %v3989
        %v4141 = vunpack.c.l.b16 %v3990
        %v4142 = vunpack.c.l.b16 %v3991
        %v4143 = vunpack.c.l.b16 %v3992
        %v4144 = vunpack.c.l.b16 %v3993
        %v4145 = vunpack.c.l.b16 %v3994
        %v4146 = vunpack.c.l.b16 %v3995
        %v4147 = vunpack.c.l.b16 %v3996
        %v4148 = vunpack.c.l.b16 %v3997
        %v4149 = vunpack.c.l.b16 %v3998
        %v4150 = vunpack.c.l.b16 %v3999
        %v4151 = vunpack.c.l.b16 %v4000
        %v4152 = vunpack.c.l.b16 %v4001
        %v4153 = vunpack.c.l.b16 %v4002
        %v4154 = vunpack.c.l.b16 %v4003
        %v4155 = vunpack.c.l.b16 %v4004
        %v4156 = vunpack.c.l.b16 %v4005
        %v4157 = vunpack.c.l.b16 %v4006
        %v4158 = vunpack.c.l.b16 %v4007
        %v4159 = vunpack.c.l.b16 %v4008
        %v4160 = vunpack.c.l.b16 %v4009
        %v4161 = vunpack.c.l.b16 %v4010
        %v4162 = vunpack.c.l.b16 %v4011
        %v4163 = vunpack.c.l.b16 %v4012
        %v4164 = vunpack.c.l.b16 %v4013
        %v4165 = vunpack.c.l.b16 %v4014
        %v4166 = vunpack.c.l.b16 %v4015
        %v4167 = vunpack.c.l.b16 %v4016
        %v4168 = vunpack.c.l.b16 %v4017
        %v4169 = vunpack.c.l.b16 %v4018
        %v4170 = vunpack.c.l.b16 %v4019
        %v4171 = vunpack.c.l.b16 %v4020
        %v4172 = vunpack.c.l.b16 %v4021
        %v4173 = vunpack.c.l.b16 %v4022
        %v4174 = vunpack.c.l.b16 %v4023
        %v4175 = vunpack.c.l.b16 %v4024
        %v4176 = vunpack.c.l.b16 %v4025
        %v4177 = vunpack.c.l.b16 %v4026
        %v4178 = vunpack.c.l.b16 %v4027
        %v4179 = vunpack.c.l.b16 %v4028
        %v4180 = vunpack.c.l.b16 %v4029
        %v4181 = vunpack.c.l.b16 %v4030
        %v4182 = vunpack.c.l.b16 %v4031
        %v4183 = vunpack.c.l.b16 %v4032
        %v4184 = vunpack.c.l.b16 %v4033
        %v4185 = vunpack.c.l.b16 %v4034
        %v4186 = vunpack.c.l.b16 %v4035
        %v4187 = vunpack.c.l.b16 %v4036
        %v4188 = vunpack.c.l.b16 %v4037
        %v4189 = vunpack.c.l.b16 %v4038
        %v4190 = vunpack.c.l.b16 %v4039
        %v4191 = vunpack.c.l.b16 %v4040
        %v4192 = vunpack.c.l.b16 %v4041
        %v4193 = vunpack.c.l.b16 %v4042
        %v4194 = vunpack.c.l.b16 %v4043
        %v4195 = vunpack.c.l.b16 %v4044
        %v4196 = vunpack.c.l.b16 %v4045
        %v4197 = vunpack.c.l.b16 %v4046
        %v4198 = vunpack.c.l.b16 %v4047
        %v4199 = vunpack.c.l.b16 %v4048
        %v4200 = vunpack.c.l.b16 %v4049
        %v4201 = vpack.c.b16 %v4130, %v4129
        %v4202 = vpack.c.b16 %v4132, %v4131
        %v4203 = vpack.c.b16 %v4134, %v4133
        %v4204 = vpack.c.b16 %v4136, %v4135
        %v4205 = vpack.c.b16 %v4138, %v4137
        %v4206 = vpack.c.b16 %v4140, %v4139
        %v4207 = vpack.c.b16 %v4142, %v4141
        %v4208 = vpack.c.b16 %v4144, %v4143
        %v4209 = vpack.c.b16 %v4146, %v4145
        %v4210 = vpack.c.b16 %v4148, %v4147
        %v4211 = vpack.c.b16 %v4150, %v4149
        %v4212 = vpack.c.b16 %v4152, %v4151
        %v4213 = vpack.c.b16 %v4154, %v4153
        %v4214 = vpack.c.b16 %v4156, %v4155
        %v4215 = vpack.c.b16 %v4158, %v4157
        %v4216 = vpack.c.b16 %v4160, %v4159
        %v4217 = vpack.c.b16 %v4162, %v4161
        %v4218 = vpack.c.b16 %v4164, %v4163
        %v4219 = vpack.c.b16 %v4166, %v4165
        %v4220 = vpack.c.b16 %v4168, %v4167
        %v4221 = vpack.c.b16 %v4170, %v4169
        %v4222 = vpack.c.b16 %v4172, %v4171
        %v4223 = vpack.c.b16 %v4174, %v4173
        %v4224 = vpack.c.b16 %v4176, %v4175
        %v4225 = vpack.c.b16 %v4178, %v4177
        %v4226 = vpack.c.b16 %v4180, %v4179
        %v4227 = vpack.c.b16 %v4182, %v4181
        %v4228 = vpack.c.b16 %v4184, %v4183
        %v4229 = vpack.c.b16 %v4186, %v4185
        %v4230 = vpack.c.b16 %v4188, %v4187
        %v4231 = vpack.c.b16 %v4190, %v4189
        %v4232 = vpack.c.b16 %v4192, %v4191
        %v4233 = vpack.c.b16 %v4194, %v4193
        %v4234 = vpack.c.b16 %v4196, %v4195
        %v4235 = vpack.c.b16 %v4198, %v4197
        %v4236 = vpack.c.b16 %v4200, %v4199
        %v4273 = vsel %vm2044, %v3344, 0
        %v4275 = vsel %vm2044, %v3345, 0
        %v4277 = vsel %vm2044, %v3346, 0
        %v4279 = vsel %vm2044, %v3347, 0
        %v4282 = vsel %vm2044, %v3758, 0
        %v4285 = vsel %vm2044, %v3759, 0
        %v4288 = vsel %vm2044, %v3760, 0
        %v4291 = vsel %vm2044, %v3761, 0
        %v4294 = vsel %vm2044, %v3870, 0
        %v4297 = vsel %vm2044, %v3871, 0
        %v4300 = vsel %vm2044, %v3872, 0
        %v4303 = vsel %vm2044, %v3873, 0
        %v4306 = vsel %vm2044, %v3930, 0
        %v4309 = vsel %vm2044, %v3931, 0
        %v4312 = vsel %vm2044, %v3932, 0
        %v4315 = vsel %vm2044, %v3933, 0
        %4317 = vmatprep.subr.bf16.mxu0 0
        %4318 = vmatpush1.bf16.msra.mxu0 %v4201
        %4319 = vmatprep.subr.bf16.mxu0 0
        %4320 = vmatpush1.bf16.msra.mxu0 %v4202
        %4321 = vmatprep.subr.bf16.mxu0 0
        %4322 = vmatpush1.bf16.msra.mxu0 %v4203
        %4323 = vmatprep.subr.bf16.mxu0 0
        %4324 = vmatpush1.bf16.msra.mxu0 %v4204
        %4325 = vmatprep.subr.bf16.mxu0 0
        %4326 = vmatpush1.bf16.msra.mxu0 %v4205
        %4327 = vmatprep.subr.bf16.mxu0 0
        %4328 = vmatpush1.bf16.msra.mxu0 %v4206
        %4329 = vmatprep.subr.bf16.mxu0 0
        %4330 = vmatpush1.bf16.msra.mxu0 %v4207
        %4331 = vmatprep.subr.bf16.mxu0 0
        %4332 = vmatpush1.bf16.msra.mxu0 %v4208
        %4333 = vmatprep.subr.bf16.mxu0 0
        %4334 = vmatpush1.bf16.msra.mxu0 %v4209
        %4335 = vmatprep.subr.bf16.mxu0 0
        %4336 = vmatpush1.bf16.msra.mxu0 %v4210
        %4337 = vmatprep.subr.bf16.mxu0 0
        %4338 = vmatpush1.bf16.msra.mxu0 %v4211
        %4339 = vmatprep.subr.bf16.mxu0 0
        %4340 = vmatpush1.bf16.msra.mxu0 %v4212
        %4341 = vmatprep.subr.bf16.mxu0 0
        %4342 = vmatpush1.bf16.msra.mxu0 %v4213
        %4343 = vmatprep.subr.bf16.mxu0 0
        %4344 = vmatpush1.bf16.msra.mxu0 %v4214
        %4345 = vmatprep.subr.bf16.mxu0 0
        %4346 = vmatpush1.bf16.msra.mxu0 %v4215
        %4347 = vmatprep.subr.bf16.mxu0 0
        %4348 = vmatpush1.bf16.msra.mxu0 %v4216
        %4349 = vmatprep.mubr.bf16.mxu0 %v3366
        %4350 = vmatmul.mubr.bf16.gmra.mrb[0].mxu0 %v3350
        %v4351 = vpop.f32.mrb[0].mxu0
        %v4352 = vadd.f32 %v4055, %v4351
        %v4353 = vpop.f32.mrb[0].mxu0
        %v4354 = vpop.f32.mrb[0].mxu0
        %v4355 = vadd.f32 %v4055, %v4354
        %v4356 = vpop.f32.mrb[0].mxu0
        %4357 = vmatprep.mubr.bf16.mxu0 %v3370
        %4358 = vmatmul.mubr.bf16.gmra.mrb[0].mxu0 %v3354
        %v4359 = vpop.f32.mrb[0].mxu0
        %v4360 = vadd.f32 %v4055, %v4359
        %v4361 = vpop.f32.mrb[0].mxu0
        %v4362 = vpop.f32.mrb[0].mxu0
        %v4363 = vadd.f32 %v4055, %v4362
        %v4364 = vpop.f32.mrb[0].mxu0
        %4365 = vmatprep.mubr.bf16.mxu0 %v3374
        %4366 = vmatmul.mubr.bf16.gmra.mrb[0].mxu0 %v3358
        %v4367 = vpop.f32.mrb[0].mxu0
        %v4368 = vadd.f32 %v4055, %v4367
        %v4369 = vpop.f32.mrb[0].mxu0
        %v4370 = vpop.f32.mrb[0].mxu0
        %v4371 = vadd.f32 %v4055, %v4370
        %v4372 = vpop.f32.mrb[0].mxu0
        %4373 = vmatprep.mubr.bf16.mxu0 %v3378
        %4374 = vmatmul.mubr.bf16.gmra.mrb[0].mxu0 %v3362
        %v4375 = vpop.f32.mrb[0].mxu0
        %v4376 = vadd.f32 %v4055, %v4375
        %v4377 = vpop.f32.mrb[0].mxu0
        %v4378 = vpop.f32.mrb[0].mxu0
        %v4379 = vadd.f32 %v4055, %v4378
        %v4380 = vpop.f32.mrb[0].mxu0
        %4381 = vmatprep.mubr.bf16.mxu0 %v3780
        %4382 = vmatmul.mubr.bf16.gmra.mrb[0].mxu0 %v3764
        %v4383 = vpop.f32.mrb[0].mxu0
        %v4384 = vadd.f32 %v4055, %v4383
        %v4385 = vpop.f32.mrb[0].mxu0
        %v4386 = vpop.f32.mrb[0].mxu0
        %v4387 = vadd.f32 %v4055, %v4386
        %v4388 = vpop.f32.mrb[0].mxu0
        %4389 = vmatprep.mubr.bf16.mxu0 %v3784
        %4390 = vmatmul.mubr.bf16.gmra.mrb[0].mxu0 %v3768
        %v4391 = vpop.f32.mrb[0].mxu0
        %v4392 = vadd.f32 %v4055, %v4391
        %v4393 = vpop.f32.mrb[0].mxu0
        %v4394 = vpop.f32.mrb[0].mxu0
        %v4395 = vadd.f32 %v4055, %v4394
        %v4396 = vpop.f32.mrb[0].mxu0
        %4397 = vmatprep.mubr.bf16.mxu0 %v3788
        %4398 = vmatmul.mubr.bf16.gmra.mrb[0].mxu0 %v3772
        %v4399 = vpop.f32.mrb[0].mxu0
        %v4400 = vadd.f32 %v4055, %v4399
        %v4401 = vpop.f32.mrb[0].mxu0
        %v4402 = vpop.f32.mrb[0].mxu0
        %v4403 = vadd.f32 %v4055, %v4402
        %v4404 = vpop.f32.mrb[0].mxu0
        %4405 = vmatprep.mubr.bf16.mxu0 %v3792
        %4406 = vmatmul.mubr.bf16.gmra.mrb[0].mxu0 %v3776
        %v4407 = vpop.f32.mrb[0].mxu0
        %v4408 = vadd.f32 %v4055, %v4407
        %v4409 = vpop.f32.mrb[0].mxu0
        %v4410 = vpop.f32.mrb[0].mxu0
        %v4411 = vadd.f32 %v4055, %v4410
        %v4412 = vpop.f32.mrb[0].mxu0
        %4413 = vmatprep.mubr.bf16.mxu0 %v3887
        %4414 = vmatmul.mubr.bf16.gmra.mrb[0].mxu0 %v3875
        %v4415 = vpop.f32.mrb[0].mxu0
        %v4416 = vadd.f32 %v4055, %v4415
        %v4417 = vpop.f32.mrb[0].mxu0
        %v4418 = vpop.f32.mrb[0].mxu0
        %v4419 = vadd.f32 %v4055, %v4418
        %v4420 = vpop.f32.mrb[0].mxu0
        %4421 = vmatprep.mubr.bf16.mxu0 %v3890
        %4422 = vmatmul.mubr.bf16.gmra.mrb[0].mxu0 %v3878
        %v4423 = vpop.f32.mrb[0].mxu0
        %v4424 = vadd.f32 %v4055, %v4423
        %v4425 = vpop.f32.mrb[0].mxu0
        %v4426 = vpop.f32.mrb[0].mxu0
        %v4427 = vadd.f32 %v4055, %v4426
        %v4428 = vpop.f32.mrb[0].mxu0
        %4429 = vmatprep.mubr.bf16.mxu0 %v3893
        %4430 = vmatmul.mubr.bf16.gmra.mrb[0].mxu0 %v3881
        %v4431 = vpop.f32.mrb[0].mxu0
        %v4432 = vadd.f32 %v4055, %v4431
        %v4433 = vpop.f32.mrb[0].mxu0
        %v4434 = vpop.f32.mrb[0].mxu0
        %v4435 = vadd.f32 %v4055, %v4434
        %v4436 = vpop.f32.mrb[0].mxu0
        %4437 = vmatprep.mubr.bf16.mxu0 %v3896
        %4438 = vmatmul.mubr.bf16.gmra.mrb[0].mxu0 %v3884
        %v4439 = vpop.f32.mrb[0].mxu0
        %v4440 = vadd.f32 %v4055, %v4439
        %v4441 = vpop.f32.mrb[0].mxu0
        %v4442 = vpop.f32.mrb[0].mxu0
        %v4443 = vadd.f32 %v4055, %v4442
        %v4444 = vpop.f32.mrb[0].mxu0
        %4445 = vmatprep.mubr.bf16.mxu0 %v3935
        %4446 = vmatmul.mubr.bf16.gmra.mrb[0].mxu0 %v3382
        %v4447 = vpop.f32.mrb[0].mxu0
        %v4448 = vadd.f32 %v4055, %v4447
        %v4449 = vpop.f32.mrb[0].mxu0
        %v4450 = vpop.f32.mrb[0].mxu0
        %v4451 = vadd.f32 %v4055, %v4450
        %v4452 = vpop.f32.mrb[0].mxu0
        %4453 = vmatprep.mubr.bf16.mxu0 %v3938
        %4454 = vmatmul.mubr.bf16.gmra.mrb[0].mxu0 %v3386
        %v4455 = vpop.f32.mrb[0].mxu0
        %v4456 = vadd.f32 %v4055, %v4455
        %v4457 = vpop.f32.mrb[0].mxu0
        %v4458 = vpop.f32.mrb[0].mxu0
        %v4459 = vadd.f32 %v4055, %v4458
        %v4460 = vpop.f32.mrb[0].mxu0
        %4461 = vmatprep.mubr.bf16.mxu0 %v3941
        %4462 = vmatmul.mubr.bf16.gmra.mrb[0].mxu0 %v3390
        %v4463 = vpop.f32.mrb[0].mxu0
        %v4464 = vadd.f32 %v4055, %v4463
        %v4465 = vpop.f32.mrb[0].mxu0
        %v4466 = vpop.f32.mrb[0].mxu0
        %v4467 = vadd.f32 %v4055, %v4466
        %v4468 = vpop.f32.mrb[0].mxu0
        %4469 = vmatprep.mubr.bf16.mxu0 %v3944
        %4470 = vmatmul.mubr.bf16.gmra.mrb[0].mxu0 %v3394
        %v4471 = vpop.f32.mrb[0].mxu0
        %v4472 = vadd.f32 %v4055, %v4471
        %v4473 = vpop.f32.mrb[0].mxu0
        %v4474 = vpop.f32.mrb[0].mxu0
        %v4475 = vadd.f32 %v4055, %v4474
        %v4476 = vpop.f32.mrb[0].mxu0
        %4477 = vdwg.mxu0
        %4478 = vmatprep.subr.bf16.mxu0 0
        %4479 = vmatpush1.bf16.msra.mxu0 %v4217
        %4480 = vmatprep.subr.bf16.mxu0 0
        %4481 = vmatpush1.bf16.msra.mxu0 %v4218
        %4482 = vmatprep.subr.bf16.mxu0 0
        %4483 = vmatpush1.bf16.msra.mxu0 %v4219
        %4484 = vmatprep.subr.bf16.mxu0 0
        %4485 = vmatpush1.bf16.msra.mxu0 %v4220
        %4486 = vmatprep.subr.bf16.mxu0 0
        %4487 = vmatpush1.bf16.msra.mxu0 %v4221
        %4488 = vmatprep.subr.bf16.mxu0 0
        %4489 = vmatpush1.bf16.msra.mxu0 %v4222
        %4490 = vmatprep.subr.bf16.mxu0 0
        %4491 = vmatpush1.bf16.msra.mxu0 %v4223
        %4492 = vmatprep.subr.bf16.mxu0 0
        %4493 = vmatpush1.bf16.msra.mxu0 %v4224
        %4494 = vmatprep.subr.bf16.mxu0 0
        %4495 = vmatpush1.bf16.msra.mxu0 %v4225
        %4496 = vmatprep.subr.bf16.mxu0 0
        %4497 = vmatpush1.bf16.msra.mxu0 %v4226
        %4498 = vmatprep.subr.bf16.mxu0 0
        %4499 = vmatpush1.bf16.msra.mxu0 %v4227
        %4500 = vmatprep.subr.bf16.mxu0 0
        %4501 = vmatpush1.bf16.msra.mxu0 %v4228
        %4502 = vmatprep.subr.bf16.mxu0 0
        %4503 = vmatpush1.bf16.msra.mxu0 %v4229
        %4504 = vmatprep.subr.bf16.mxu0 0
        %4505 = vmatpush1.bf16.msra.mxu0 %v4230
        %4506 = vmatprep.subr.bf16.mxu0 0
        %4507 = vmatpush1.bf16.msra.mxu0 %v4231
        %4508 = vmatprep.subr.bf16.mxu0 0
        %4509 = vmatpush1.bf16.msra.mxu0 %v4232
        %4510 = vmatprep.mubr.bf16.mxu0 %v3398
        %4511 = vmatmul.mubr.bf16.gmra.mrb[0].mxu0 %v3382
        %v4512 = vpop.f32.mrb[0].mxu0
        %v4513 = vadd.f32 %v4352, %v4512
        %v4514 = vpop.f32.mrb[0].mxu0
        %v4515 = vpop.f32.mrb[0].mxu0
        %v4516 = vadd.f32 %v4355, %v4515
        %v4517 = vpop.f32.mrb[0].mxu0
        %4518 = vmatprep.mubr.bf16.mxu0 %v3402
        %4519 = vmatmul.mubr.bf16.gmra.mrb[0].mxu0 %v3386
        %v4520 = vpop.f32.mrb[0].mxu0
        %v4521 = vadd.f32 %v4360, %v4520
        %v4522 = vpop.f32.mrb[0].mxu0
        %v4523 = vpop.f32.mrb[0].mxu0
        %v4524 = vadd.f32 %v4363, %v4523
        %v4525 = vpop.f32.mrb[0].mxu0
        %4526 = vmatprep.mubr.bf16.mxu0 %v3406
        %4527 = vmatmul.mubr.bf16.gmra.mrb[0].mxu0 %v3390
        %v4528 = vpop.f32.mrb[0].mxu0
        %v4529 = vadd.f32 %v4368, %v4528
        %v4530 = vpop.f32.mrb[0].mxu0
        %v4531 = vpop.f32.mrb[0].mxu0
        %v4532 = vadd.f32 %v4371, %v4531
        %v4533 = vpop.f32.mrb[0].mxu0
        %4534 = vmatprep.mubr.bf16.mxu0 %v3410
        %4535 = vmatmul.mubr.bf16.gmra.mrb[0].mxu0 %v3394
        %v4536 = vpop.f32.mrb[0].mxu0
        %v4537 = vadd.f32 %v4376, %v4536
        %v4538 = vpop.f32.mrb[0].mxu0
        %v4539 = vpop.f32.mrb[0].mxu0
        %v4540 = vadd.f32 %v4379, %v4539
        %v4541 = vpop.f32.mrb[0].mxu0
        %4542 = vmatprep.mubr.bf16.mxu0 %v3812
        %4543 = vmatmul.mubr.bf16.gmra.mrb[0].mxu0 %v3796
        %v4544 = vpop.f32.mrb[0].mxu0
        %v4545 = vadd.f32 %v4384, %v4544
        %v4546 = vpop.f32.mrb[0].mxu0
        %v4547 = vpop.f32.mrb[0].mxu0
        %v4548 = vadd.f32 %v4387, %v4547
        %v4549 = vpop.f32.mrb[0].mxu0
        %4550 = vmatprep.mubr.bf16.mxu0 %v3816
        %4551 = vmatmul.mubr.bf16.gmra.mrb[0].mxu0 %v3800
        %v4552 = vpop.f32.mrb[0].mxu0
        %v4553 = vadd.f32 %v4392, %v4552
        %v4554 = vpop.f32.mrb[0].mxu0
        %v4555 = vpop.f32.mrb[0].mxu0
        %v4556 = vadd.f32 %v4395, %v4555
        %v4557 = vpop.f32.mrb[0].mxu0
        %4558 = vmatprep.mubr.bf16.mxu0 %v3820
        %4559 = vmatmul.mubr.bf16.gmra.mrb[0].mxu0 %v3804
        %v4560 = vpop.f32.mrb[0].mxu0
        %v4561 = vadd.f32 %v4400, %v4560
        %v4562 = vpop.f32.mrb[0].mxu0
        %v4563 = vpop.f32.mrb[0].mxu0
        %v4564 = vadd.f32 %v4403, %v4563
        %v4565 = vpop.f32.mrb[0].mxu0
        %4566 = vmatprep.mubr.bf16.mxu0 %v3824
        %4567 = vmatmul.mubr.bf16.gmra.mrb[0].mxu0 %v3808
        %v4568 = vpop.f32.mrb[0].mxu0
        %v4569 = vadd.f32 %v4408, %v4568
        %v4570 = vpop.f32.mrb[0].mxu0
        %v4571 = vpop.f32.mrb[0].mxu0
        %v4572 = vadd.f32 %v4411, %v4571
        %v4573 = vpop.f32.mrb[0].mxu0
        %4574 = vmatprep.mubr.bf16.mxu0 %v3900
        %4575 = vmatmul.mubr.bf16.gmra.mrb[0].mxu0 %v3812
        %v4576 = vpop.f32.mrb[0].mxu0
        %v4577 = vadd.f32 %v4416, %v4576
        %v4578 = vpop.f32.mrb[0].mxu0
        %v4579 = vpop.f32.mrb[0].mxu0
        %v4580 = vadd.f32 %v4419, %v4579
        %v4581 = vpop.f32.mrb[0].mxu0
        %4582 = vmatprep.mubr.bf16.mxu0 %v3904
        %4583 = vmatmul.mubr.bf16.gmra.mrb[0].mxu0 %v3816
        %v4584 = vpop.f32.mrb[0].mxu0
        %v4585 = vadd.f32 %v4424, %v4584
        %v4586 = vpop.f32.mrb[0].mxu0
        %v4587 = vpop.f32.mrb[0].mxu0
        %v4588 = vadd.f32 %v4427, %v4587
        %v4589 = vpop.f32.mrb[0].mxu0
        %4590 = vmatprep.mubr.bf16.mxu0 %v3908
        %4591 = vmatmul.mubr.bf16.gmra.mrb[0].mxu0 %v3820
        %v4592 = vpop.f32.mrb[0].mxu0
        %v4593 = vadd.f32 %v4432, %v4592
        %v4594 = vpop.f32.mrb[0].mxu0
        %v4595 = vpop.f32.mrb[0].mxu0
        %v4596 = vadd.f32 %v4435, %v4595
        %v4597 = vpop.f32.mrb[0].mxu0
        %4598 = vmatprep.mubr.bf16.mxu0 %v3912
        %4599 = vmatmul.mubr.bf16.gmra.mrb[0].mxu0 %v3824
        %v4600 = vpop.f32.mrb[0].mxu0
        %v4601 = vadd.f32 %v4440, %v4600
        %v4602 = vpop.f32.mrb[0].mxu0
        %v4603 = vpop.f32.mrb[0].mxu0
        %v4604 = vadd.f32 %v4443, %v4603
        %v4605 = vpop.f32.mrb[0].mxu0
        %4606 = vmatprep.mubr.bf16.mxu0 %v3964
        %4607 = vmatmul.mubr.bf16.gmra.mrb[0].mxu0 %v3948
        %v4608 = vpop.f32.mrb[0].mxu0
        %v4609 = vadd.f32 %v4448, %v4608
        %v4610 = vpop.f32.mrb[0].mxu0
        %v4611 = vpop.f32.mrb[0].mxu0
        %v4612 = vadd.f32 %v4451, %v4611
        %v4613 = vpop.f32.mrb[0].mxu0
        %4614 = vmatprep.mubr.bf16.mxu0 %v3968
        %4615 = vmatmul.mubr.bf16.gmra.mrb[0].mxu0 %v3952
        %v4616 = vpop.f32.mrb[0].mxu0
        %v4617 = vadd.f32 %v4456, %v4616
        %v4618 = vpop.f32.mrb[0].mxu0
        %v4619 = vpop.f32.mrb[0].mxu0
        %v4620 = vadd.f32 %v4459, %v4619
        %v4621 = vpop.f32.mrb[0].mxu0
        %4622 = vmatprep.mubr.bf16.mxu0 %v3972
        %4623 = vmatmul.mubr.bf16.gmra.mrb[0].mxu0 %v3956
        %v4624 = vpop.f32.mrb[0].mxu0
        %v4625 = vadd.f32 %v4464, %v4624
        %v4626 = vpop.f32.mrb[0].mxu0
        %v4627 = vpop.f32.mrb[0].mxu0
        %v4628 = vadd.f32 %v4467, %v4627
        %v4629 = vpop.f32.mrb[0].mxu0
        %4630 = vmatprep.mubr.bf16.mxu0 %v3976
        %4631 = vmatmul.mubr.bf16.gmra.mrb[0].mxu0 %v3960
        %v4632 = vpop.f32.mrb[0].mxu0
        %v4633 = vadd.f32 %v4472, %v4632
        %v4634 = vpop.f32.mrb[0].mxu0
        %v4635 = vpop.f32.mrb[0].mxu0
        %v4636 = vadd.f32 %v4475, %v4635
        %v4637 = vpop.f32.mrb[0].mxu0
        %4638 = vdwg.mxu0
        %4639 = vmatprep.subr.bf16.mxu0 0
        %4640 = vmatpush1.bf16.msra.mxu0 %v4233
        %4641 = vmatprep.subr.bf16.mxu0 0
        %4642 = vmatpush1.bf16.msra.mxu0 %v4234
        %4643 = vmatprep.subr.bf16.mxu0 0
        %4644 = vmatpush1.bf16.msra.mxu0 %v4235
        %4645 = vmatprep.subr.bf16.mxu0 0
        %4646 = vmatpush1.bf16.msra.mxu0 %v4236
        %4647 = vmatprep.subr.bf16.mxu0 0
        %4648 = vmatpush1.bf16.msra.mxu0 0
        %4649 = vmatprep.subr.bf16.mxu0 0
        %4650 = vmatpush1.bf16.msra.mxu0 0
        %4651 = vmatprep.subr.bf16.mxu0 0
        %4652 = vmatpush1.bf16.msra.mxu0 0
        %4653 = vmatprep.subr.bf16.mxu0 0
        %4654 = vmatpush1.bf16.msra.mxu0 0
        %4655 = vmatprep.subr.bf16.mxu0 0
        %4656 = vmatpush1.bf16.msra.mxu0 0
        %4657 = vmatprep.subr.bf16.mxu0 0
        %4658 = vmatpush1.bf16.msra.mxu0 0
        %4659 = vmatprep.subr.bf16.mxu0 0
        %4660 = vmatpush1.bf16.msra.mxu0 0
        %4661 = vmatprep.subr.bf16.mxu0 0
        %4662 = vmatpush1.bf16.msra.mxu0 0
        %4663 = vmatprep.subr.bf16.mxu0 0
        %4664 = vmatpush1.bf16.msra.mxu0 0
        %4665 = vmatprep.subr.bf16.mxu0 0
        %4666 = vmatpush1.bf16.msra.mxu0 0
        %4667 = vmatprep.subr.bf16.mxu0 0
        %4668 = vmatpush1.bf16.msra.mxu0 0
        %4669 = vmatprep.subr.bf16.mxu0 0
        %4670 = vmatpush1.bf16.msra.mxu0 0
        %4671 = vmatprep.mubr.bf16.mxu0 0
        %4672 = vmatmul.mubr.bf16.gmra.mrb[0].mxu0 %v4273
        %v4673 = vpop.f32.mrb[0].mxu0
        %v4674 = vadd.f32 %v4513, %v4673
        %v4675 = vpop.f32.mrb[0].mxu0
        %v4676 = vpop.f32.mrb[0].mxu0
        %v4677 = vadd.f32 %v4516, %v4676
        %v4678 = vpop.f32.mrb[0].mxu0
        %4679 = vmatprep.mubr.bf16.mxu0 0
        %4680 = vmatmul.mubr.bf16.gmra.mrb[0].mxu0 %v4275
        %v4681 = vpop.f32.mrb[0].mxu0
        %v4682 = vadd.f32 %v4521, %v4681
        %v4683 = vpop.f32.mrb[0].mxu0
        %v4684 = vpop.f32.mrb[0].mxu0
        %v4685 = vadd.f32 %v4524, %v4684
        %v4686 = vpop.f32.mrb[0].mxu0
        %4687 = vmatprep.mubr.bf16.mxu0 0
        %4688 = vmatmul.mubr.bf16.gmra.mrb[0].mxu0 %v4277
        %v4689 = vpop.f32.mrb[0].mxu0
        %v4690 = vadd.f32 %v4529, %v4689
        %v4691 = vpop.f32.mrb[0].mxu0
        %v4692 = vpop.f32.mrb[0].mxu0
        %v4693 = vadd.f32 %v4532, %v4692
        %v4694 = vpop.f32.mrb[0].mxu0
        %4695 = vmatprep.mubr.bf16.mxu0 0
        %4696 = vmatmul.mubr.bf16.gmra.mrb[0].mxu0 %v4279
        %v4697 = vpop.f32.mrb[0].mxu0
        %v4698 = vadd.f32 %v4537, %v4697
        %v4699 = vpop.f32.mrb[0].mxu0
        %v4700 = vpop.f32.mrb[0].mxu0
        %v4701 = vadd.f32 %v4540, %v4700
        %v4702 = vpop.f32.mrb[0].mxu0
        %4703 = vmatprep.mubr.bf16.mxu0 0
        %4704 = vmatmul.mubr.bf16.gmra.mrb[0].mxu0 %v4282
        %v4705 = vpop.f32.mrb[0].mxu0
        %v4706 = vadd.f32 %v4545, %v4705
        %v4707 = vpop.f32.mrb[0].mxu0
        %v4708 = vpop.f32.mrb[0].mxu0
        %v4709 = vadd.f32 %v4548, %v4708
        %v4710 = vpop.f32.mrb[0].mxu0
        %4711 = vmatprep.mubr.bf16.mxu0 0
        %4712 = vmatmul.mubr.bf16.gmra.mrb[0].mxu0 %v4285
        %v4713 = vpop.f32.mrb[0].mxu0
        %v4714 = vadd.f32 %v4553, %v4713
        %v4715 = vpop.f32.mrb[0].mxu0
        %v4716 = vpop.f32.mrb[0].mxu0
        %v4717 = vadd.f32 %v4556, %v4716
        %v4718 = vpop.f32.mrb[0].mxu0
        %4719 = vmatprep.mubr.bf16.mxu0 0
        %4720 = vmatmul.mubr.bf16.gmra.mrb[0].mxu0 %v4288
        %v4721 = vpop.f32.mrb[0].mxu0
        %v4722 = vadd.f32 %v4561, %v4721
        %v4723 = vpop.f32.mrb[0].mxu0
        %v4724 = vpop.f32.mrb[0].mxu0
        %v4725 = vadd.f32 %v4564, %v4724
        %v4726 = vpop.f32.mrb[0].mxu0
        %4727 = vmatprep.mubr.bf16.mxu0 0
        %4728 = vmatmul.mubr.bf16.gmra.mrb[0].mxu0 %v4291
        %v4729 = vpop.f32.mrb[0].mxu0
        %v4730 = vadd.f32 %v4569, %v4729
        %v4731 = vpop.f32.mrb[0].mxu0
        %v4732 = vpop.f32.mrb[0].mxu0
        %v4733 = vadd.f32 %v4572, %v4732
        %v4734 = vpop.f32.mrb[0].mxu0
        %4735 = vmatprep.mubr.bf16.mxu0 0
        %4736 = vmatmul.mubr.bf16.gmra.mrb[0].mxu0 %v4294
        %v4737 = vpop.f32.mrb[0].mxu0
        %v4738 = vadd.f32 %v4577, %v4737
        %v4739 = vpop.f32.mrb[0].mxu0
        %v4740 = vpop.f32.mrb[0].mxu0
        %v4741 = vadd.f32 %v4580, %v4740
        %v4742 = vpop.f32.mrb[0].mxu0
        %4743 = vmatprep.mubr.bf16.mxu0 0
        %4744 = vmatmul.mubr.bf16.gmra.mrb[0].mxu0 %v4297
        %v4745 = vpop.f32.mrb[0].mxu0
        %v4746 = vadd.f32 %v4585, %v4745
        %v4747 = vpop.f32.mrb[0].mxu0
        %v4748 = vpop.f32.mrb[0].mxu0
        %v4749 = vadd.f32 %v4588, %v4748
        %v4750 = vpop.f32.mrb[0].mxu0
        %4751 = vmatprep.mubr.bf16.mxu0 0
        %4752 = vmatmul.mubr.bf16.gmra.mrb[0].mxu0 %v4300
        %v4753 = vpop.f32.mrb[0].mxu0
        %v4754 = vadd.f32 %v4593, %v4753
        %v4755 = vpop.f32.mrb[0].mxu0
        %v4756 = vpop.f32.mrb[0].mxu0
        %v4757 = vadd.f32 %v4596, %v4756
        %v4758 = vpop.f32.mrb[0].mxu0
        %4759 = vmatprep.mubr.bf16.mxu0 0
        %4760 = vmatmul.mubr.bf16.gmra.mrb[0].mxu0 %v4303
        %v4761 = vpop.f32.mrb[0].mxu0
        %v4762 = vadd.f32 %v4601, %v4761
        %v4763 = vpop.f32.mrb[0].mxu0
        %v4764 = vpop.f32.mrb[0].mxu0
        %v4765 = vadd.f32 %v4604, %v4764
        %v4766 = vpop.f32.mrb[0].mxu0
        %4767 = vmatprep.mubr.bf16.mxu0 0
        %4768 = vmatmul.mubr.bf16.gmra.mrb[0].mxu0 %v4306
        %v4769 = vpop.f32.mrb[0].mxu0
        %v4770 = vadd.f32 %v4609, %v4769
        %v4771 = vpop.f32.mrb[0].mxu0
        %v4772 = vpop.f32.mrb[0].mxu0
        %v4773 = vadd.f32 %v4612, %v4772
        %v4774 = vpop.f32.mrb[0].mxu0
        %4775 = vmatprep.mubr.bf16.mxu0 0
        %4776 = vmatmul.mubr.bf16.gmra.mrb[0].mxu0 %v4309
        %v4777 = vpop.f32.mrb[0].mxu0
        %v4778 = vadd.f32 %v4617, %v4777
        %v4779 = vpop.f32.mrb[0].mxu0
        %v4780 = vpop.f32.mrb[0].mxu0
        %v4781 = vadd.f32 %v4620, %v4780
        %v4782 = vpop.f32.mrb[0].mxu0
        %4783 = vmatprep.mubr.bf16.mxu0 0
        %4784 = vmatmul.mubr.bf16.gmra.mrb[0].mxu0 %v4312
        %v4785 = vpop.f32.mrb[0].mxu0
        %v4786 = vadd.f32 %v4625, %v4785
        %v4787 = vpop.f32.mrb[0].mxu0
        %v4788 = vpop.f32.mrb[0].mxu0
        %v4789 = vadd.f32 %v4628, %v4788
        %v4790 = vpop.f32.mrb[0].mxu0
        %4791 = vmatprep.mubr.bf16.mxu0 0
        %4792 = vmatmul.mubr.bf16.gmra.mrb[0].mxu0 %v4315
        %v4793 = vpop.f32.mrb[0].mxu0
        %v4794 = vadd.f32 %v4633, %v4793
        %v4795 = vpop.f32.mrb[0].mxu0
        %v4796 = vpop.f32.mrb[0].mxu0
        %v4797 = vadd.f32 %v4636, %v4796
        %v4798 = vpop.f32.mrb[0].mxu0
        %4799 = vdwg.mxu0
        %v4800 = vmax.f32 %v4674, 0.0
        %v4801 = vmax.f32 %v4677, 0.0
        %v4802 = vmax.f32 %v4682, 0.0
        %v4803 = vmax.f32 %v4685, 0.0
        %v4804 = vmax.f32 %v4690, 0.0
        %v4805 = vmax.f32 %v4693, 0.0
        %v4806 = vmax.f32 %v4698, 0.0
        %v4807 = vmax.f32 %v4701, 0.0
        %v4808 = vmax.f32 %v4706, 0.0
        %v4809 = vmax.f32 %v4709, 0.0
        %v4810 = vmax.f32 %v4714, 0.0
        %v4811 = vmax.f32 %v4717, 0.0
        %v4812 = vmax.f32 %v4722, 0.0
        %v4813 = vmax.f32 %v4725, 0.0
        %v4814 = vmax.f32 %v4730, 0.0
        %v4815 = vmax.f32 %v4733, 0.0
        %v4816 = vmax.f32 %v4738, 0.0
        %v4817 = vmax.f32 %v4741, 0.0
        %v4818 = vmax.f32 %v4746, 0.0
        %v4819 = vmax.f32 %v4749, 0.0
        %v4820 = vmax.f32 %v4754, 0.0
        %v4821 = vmax.f32 %v4757, 0.0
        %v4822 = vmax.f32 %v4762, 0.0
        %v4823 = vmax.f32 %v4765, 0.0
        %v4824 = vmax.f32 %v4770, 0.0
        %v4825 = vmax.f32 %v4773, 0.0
        %v4826 = vmax.f32 %v4778, 0.0
        %v4827 = vmax.f32 %v4781, 0.0
        %v4828 = vmax.f32 %v4786, 0.0
        %v4829 = vmax.f32 %v4789, 0.0
        %v4830 = vmax.f32 %v4794, 0.0
        %v4831 = vmax.f32 %v4797, 0.0
        %v4832 = vadd.f32 %v4800, %v4801
        %v4833 = vadd.f32 %v4832, %v4802
        %v4834 = vadd.f32 %v4833, %v4803
        %v4835 = vadd.f32 %v4834, %v4804
        %v4836 = vadd.f32 %v4835, %v4805
        %v4837 = vadd.f32 %v4836, %v4806
        %v4838 = vadd.f32 %v4837, %v4807
        %v4839 = vadd.f32 %v4838, %v4808
        %v4840 = vadd.f32 %v4839, %v4809
        %v4841 = vadd.f32 %v4840, %v4810
        %v4842 = vadd.f32 %v4841, %v4811
        %v4843 = vadd.f32 %v4842, %v4812
        %v4844 = vadd.f32 %v4843, %v4813
        %v4845 = vadd.f32 %v4844, %v4814
        %v4846 = vadd.f32 %v4845, %v4815
        %v4847 = vadd.f32 %v4846, %v4816
        %v4848 = vadd.f32 %v4847, %v4817
        %v4849 = vadd.f32 %v4848, %v4818
        %v4850 = vadd.f32 %v4849, %v4819
        %v4851 = vadd.f32 %v4850, %v4820
        %v4852 = vadd.f32 %v4851, %v4821
        %v4853 = vadd.f32 %v4852, %v4822
        %v4854 = vadd.f32 %v4853, %v4823
        %v4855 = vadd.f32 %v4854, %v4824
        %v4856 = vadd.f32 %v4855, %v4825
        %v4857 = vadd.f32 %v4856, %v4826
        %v4858 = vadd.f32 %v4857, %v4827
        %v4859 = vadd.f32 %v4858, %v4828
        %v4860 = vadd.f32 %v4859, %v4829
        %v4861 = vadd.f32 %v4860, %v4830
        %v4862 = vadd.f32 %v4861, %v4831
        %v4863 = vrot.slane %v4862, 4
        %v4864 = vadd.f32 %v4862, %v4863
        %v4865 = vrot.slane %v4864, 2
        %v4866 = vadd.f32 %v4864, %v4865
        %v4867 = vrot.slane %v4866, 1
        %v4868 = vadd.f32 %v4866, %v4867
        %v4869 = vmul.f32 %v4868, 0.00390625
        %v4870 = vmax.f32 %v4800, %v4808
        %v4871 = vmax.f32 %v4801, %v4809
        %v4872 = vmax.f32 %v4802, %v4810
        %v4873 = vmax.f32 %v4803, %v4811
        %v4874 = vmax.f32 %v4804, %v4812
        %v4875 = vmax.f32 %v4805, %v4813
        %v4876 = vmax.f32 %v4806, %v4814
        %v4877 = vmax.f32 %v4807, %v4815
        %v4878 = vmax.f32 %v4816, %v4824
        %v4879 = vmax.f32 %v4817, %v4825
        %v4880 = vmax.f32 %v4818, %v4826
        %v4881 = vmax.f32 %v4819, %v4827
        %v4882 = vmax.f32 %v4820, %v4828
        %v4883 = vmax.f32 %v4821, %v4829
        %v4884 = vmax.f32 %v4822, %v4830
        %v4885 = vmax.f32 %v4823, %v4831
        %v4886 = vmax.f32 %v4870, %v4878
        %v4887 = vmax.f32 %v4871, %v4879
        %v4888 = vmax.f32 %v4872, %v4880
        %v4889 = vmax.f32 %v4873, %v4881
        %v4890 = vmax.f32 %v4874, %v4882
        %v4891 = vmax.f32 %v4875, %v4883
        %v4892 = vmax.f32 %v4876, %v4884
        %v4893 = vmax.f32 %v4877, %v4885
        %v4894 = vld [vmem:[%s9] sm:$0xff]
        %v4895 = vld [vmem:[%s9 + $0x8] sm:$0xff]
        %v4896 = vld [vmem:[%s9 + $0x10] sm:$0xff]
        %v4897 = vld [vmem:[%s9 + $0x18] sm:$0xff]
        %v4898 = vld [vmem:[%s9 + $0x20] sm:$0xff]
        %v4899 = vld [vmem:[%s9 + $0x28] sm:$0xff]
        %v4900 = vld [vmem:[%s9 + $0x30] sm:$0xff]
        %v4901 = vld [vmem:[%s9 + $0x38] sm:$0xff]
        %v4902 = vld [vmem:[%s9 + $0x40] sm:$0xff]
        %v4903 = vld [vmem:[%s9 + $0x48] sm:$0xff]
        %v4904 = vld [vmem:[%s9 + $0x50] sm:$0xff]
        %v4905 = vld [vmem:[%s9 + $0x58] sm:$0xff]
        %v4906 = vld [vmem:[%s9 + $0x60] sm:$0xff]
        %v4907 = vld [vmem:[%s9 + $0x68] sm:$0xff]
        %v4908 = vld [vmem:[%s9 + $0x70] sm:$0xff]
        %v4909 = vld [vmem:[%s9 + $0x78] sm:$0xff]
        %v4910 = vld [vmem:[%s10] sm:$0x1]
        %4911 = vmatprep.subr.mxu0 0.0
        %4912 = vmatpush1.msra.mxu0 %v4894
        %4913 = vmatprep.subr.mxu0 0.0
        %4914 = vmatpush1.msra.mxu0 %v4895
        %4915 = vmatprep.subr.mxu0 0.0
        %4916 = vmatpush1.msra.mxu0 %v4896
        %4917 = vmatprep.subr.mxu0 0.0
        %4918 = vmatpush1.msra.mxu0 %v4897
        %4919 = vmatprep.subr.mxu0 0.0
        %4920 = vmatpush1.msra.mxu0 %v4898
        %4921 = vmatprep.subr.mxu0 0.0
        %4922 = vmatpush1.msra.mxu0 %v4899
        %4923 = vmatprep.subr.mxu0 0.0
        %4924 = vmatpush1.msra.mxu0 %v4900
        %4925 = vmatprep.subr.mxu0 0.0
        %4926 = vmatpush1.msra.mxu0 %v4901
        %4927 = vmatprep.subr.mxu0 0.0
        %4928 = vmatpush1.msra.mxu0 %v4902
        %4929 = vmatprep.subr.mxu0 0.0
        %4930 = vmatpush1.msra.mxu0 %v4903
        %4931 = vmatprep.subr.mxu0 0.0
        %4932 = vmatpush1.msra.mxu0 %v4904
        %4933 = vmatprep.subr.mxu0 0.0
        %4934 = vmatpush1.msra.mxu0 %v4905
        %4935 = vmatprep.subr.mxu0 0.0
        %4936 = vmatpush1.msra.mxu0 %v4906
        %4937 = vmatprep.subr.mxu0 0.0
        %4938 = vmatpush1.msra.mxu0 %v4907
        %4939 = vmatprep.subr.mxu0 0.0
        %4940 = vmatpush1.msra.mxu0 %v4908
        %4941 = vmatprep.subr.mxu0 0.0
        %4942 = vmatpush1.msra.mxu0 %v4909
        %4943 = vmatprep.subr.mxu0 0.0
        %4944 = vmatpush1.msra.mxu0 0.0
        %4945 = vmatprep.subr.mxu0 0.0
        %4946 = vmatpush1.msra.mxu0 0.0
        %4947 = vmatprep.subr.mxu0 0.0
        %4948 = vmatpush1.msra.mxu0 0.0
        %4949 = vmatprep.subr.mxu0 0.0
        %4950 = vmatpush1.msra.mxu0 0.0
        %4951 = vmatprep.subr.mxu0 0.0
        %4952 = vmatpush1.msra.mxu0 0.0
        %4953 = vmatprep.subr.mxu0 0.0
        %4954 = vmatpush1.msra.mxu0 0.0
        %4955 = vmatprep.subr.mxu0 0.0
        %4956 = vmatpush1.msra.mxu0 0.0
        %4957 = vmatprep.subr.mxu0 0.0
        %4958 = vmatpush1.msra.mxu0 0.0
        %4959 = vmatprep.subr.mxu0 0.0
        %4960 = vmatpush1.msra.mxu0 0.0
        %4961 = vmatprep.subr.mxu0 0.0
        %4962 = vmatpush1.msra.mxu0 0.0
        %4963 = vmatprep.subr.mxu0 0.0
        %4964 = vmatpush1.msra.mxu0 0.0
        %4965 = vmatprep.subr.mxu0 0.0
        %4966 = vmatpush1.msra.mxu0 0.0
        %4967 = vmatprep.subr.mxu0 0.0
        %4968 = vmatpush1.msra.mxu0 0.0
        %4969 = vmatprep.subr.mxu0 0.0
        %4970 = vmatpush1.msra.mxu0 0.0
        %4971 = vmatprep.subr.mxu0 0.0
        %4972 = vmatpush1.msra.mxu0 0.0
        %4973 = vmatprep.subr.mxu0 0.0
        %4974 = vmatpush1.msra.mxu0 0.0
        %4975 = vmatprep.mubr.f32.mxu0 0.0
        %4976 = vmatmul.mubr.f32.gmra.mrb[0].mxu0 %v4869
        %v4977 = vpop.f32.mrb[0].mxu0
        %v4978 = vadd.f32 %v4910, %v4977
        %v4979 = vpop.f32.mrb[0].mxu0
        %4980 = vdwg.mxu0
        %v4981 = vmax.f32 %v4978, 0.0
        %v4982 = vld [vmem:[%s11] sm:$0xff]
        %v4983 = vld [vmem:[%s12] sm:$0x1]
        %vm4984 = vcmask 64512
        %v4986 = vsel %vm4984, %v4981, 0
        %4988 = vmatprep.subr.mxu0 0.0
        %4989 = vmatpush1.msra.mxu0 %v4982
        %4990 = vmatprep.subr.mxu0 0.0
        %4991 = vmatpush1.msra.mxu0 0.0
        %4992 = vmatprep.subr.mxu0 0.0
        %4993 = vmatpush1.msra.mxu0 0.0
        %4994 = vmatprep.subr.mxu0 0.0
        %4995 = vmatpush1.msra.mxu0 0.0
        %4996 = vmatprep.subr.mxu0 0.0
        %4997 = vmatpush1.msra.mxu0 0.0
        %4998 = vmatprep.subr.mxu0 0.0
        %4999 = vmatpush1.msra.mxu0 0.0
        %5000 = vmatprep.subr.mxu0 0.0
        %5001 = vmatpush1.msra.mxu0 0.0
        %5002 = vmatprep.subr.mxu0 0.0
        %5003 = vmatpush1.msra.mxu0 0.0
        %5004 = vmatprep.subr.mxu0 0.0
        %5005 = vmatpush1.msra.mxu0 0.0
        %5006 = vmatprep.subr.mxu0 0.0
        %5007 = vmatpush1.msra.mxu0 0.0
        %5008 = vmatprep.subr.mxu0 0.0
        %5009 = vmatpush1.msra.mxu0 0.0
        %5010 = vmatprep.subr.mxu0 0.0
        %5011 = vmatpush1.msra.mxu0 0.0
        %5012 = vmatprep.subr.mxu0 0.0
        %5013 = vmatpush1.msra.mxu0 0.0
        %5014 = vmatprep.subr.mxu0 0.0
        %5015 = vmatpush1.msra.mxu0 0.0
        %5016 = vmatprep.subr.mxu0 0.0
        %5017 = vmatpush1.msra.mxu0 0.0
        %5018 = vmatprep.subr.mxu0 0.0
        %5019 = vmatpush1.msra.mxu0 0.0
        %5020 = vmatprep.subr.mxu0 0.0
        %5021 = vmatpush1.msra.mxu0 0.0
        %5022 = vmatprep.subr.mxu0 0.0
        %5023 = vmatpush1.msra.mxu0 0.0
        %5024 = vmatprep.subr.mxu0 0.0
        %5025 = vmatpush1.msra.mxu0 0.0
        %5026 = vmatprep.subr.mxu0 0.0
        %5027 = vmatpush1.msra.mxu0 0.0
        %5028 = vmatprep.subr.mxu0 0.0
        %5029 = vmatpush1.msra.mxu0 0.0
        %5030 = vmatprep.subr.mxu0 0.0
        %5031 = vmatpush1.msra.mxu0 0.0
        %5032 = vmatprep.subr.mxu0 0.0
        %5033 = vmatpush1.msra.mxu0 0.0
        %5034 = vmatprep.subr.mxu0 0.0
        %5035 = vmatpush1.msra.mxu0 0.0
        %5036 = vmatprep.subr.mxu0 0.0
        %5037 = vmatpush1.msra.mxu0 0.0
        %5038 = vmatprep.subr.mxu0 0.0
        %5039 = vmatpush1.msra.mxu0 0.0
        %5040 = vmatprep.subr.mxu0 0.0
        %5041 = vmatpush1.msra.mxu0 0.0
        %5042 = vmatprep.subr.mxu0 0.0
        %5043 = vmatpush1.msra.mxu0 0.0
        %5044 = vmatprep.subr.mxu0 0.0
        %5045 = vmatpush1.msra.mxu0 0.0
        %5046 = vmatprep.subr.mxu0 0.0
        %5047 = vmatpush1.msra.mxu0 0.0
        %5048 = vmatprep.subr.mxu0 0.0
        %5049 = vmatpush1.msra.mxu0 0.0
        %5050 = vmatprep.subr.mxu0 0.0
        %5051 = vmatpush1.msra.mxu0 0.0
        %5052 = vmatprep.mubr.f32.mxu0 0.0
        %5053 = vmatmul.mubr.f32.gmra.mrb[0].mxu0 %v4986
        %v5054 = vpop.f32.mrb[0].mxu0
        %v5055 = vadd.f32 %v4983, %v5054
        %v5056 = vpop.f32.mrb[0].mxu0
        %5057 = vdwg.mxu0
        %v5058 = vsub.f32 0.0, %v5055
        %v5059 = vmul.f32 %v5058, 1.442695
        %v5060 = vpow.pop %v5059
        %v5061 = vadd.f32 %v5060, 1.0
        %v5062 = vrcp.pop %v5061
        %v5063 = vmul.f32 1.0, %v5062
        %v5064 = vlaneseq
        %v5065 = vshrl.u32 %v5064, 7
        %v5066 = vsub.s32 0, %v5065
        %v5067 = vrot.slane %v5063, %v5066
        %v5068 = vmul.f32 %v4886, %v5067
        %v5069 = vmul.f32 %v4887, %v5067
        %v5070 = vmul.f32 %v4888, %v5067
        %v5071 = vmul.f32 %v4889, %v5067
        %v5072 = vmul.f32 %v4890, %v5067
        %v5073 = vmul.f32 %v4891, %v5067
        %v5074 = vmul.f32 %v4892, %v5067
        %v5075 = vmul.f32 %v4893, %v5067
        %v5076 = vpack.c.bf16 %v5069, %v5068
        %v5077 = vpack.c.bf16 %v5071, %v5070
        %v5078 = vpack.c.bf16 %v5073, %v5072
        %v5079 = vpack.c.bf16 %v5075, %v5074
        %v5084 = vunpack.c.l.b16 %v5076
        %v5085 = vunpack.c.h.b16 %v5076
        %v5086 = vunpack.c.l.b16 %v5077
        %v5087 = vunpack.c.h.b16 %v5077
        %v5088 = vunpack.c.l.b16 %v5078
        %v5089 = vunpack.c.h.b16 %v5078
        %v5090 = vunpack.c.l.b16 %v5079
        %v5091 = vunpack.c.h.b16 %v5079
        %v5092 = vpack.c.b16 %v5084, %v5084
        %v5093 = vpack.c.b16 %v5085, %v5085
        %v5094 = vpack.c.b16 %v5086, %v5086
        %v5095 = vpack.c.b16 %v5087, %v5087
        %v5096 = vpack.c.b16 %v5088, %v5088
        %v5097 = vpack.c.b16 %v5089, %v5089
        %v5098 = vpack.c.b16 %v5090, %v5090
        %v5099 = vpack.c.b16 %v5091, %v5091
        %v5101 = vshrl.u32 %v5092, 16
        %v5103 = vrot.slane %v5101, 7
        %v5104 = vshll.u32 %v5092, 16
        %v5106 = vor.u32 %v5103, %v5104
        %v5108 = vshrl.u32 %v5093, 16
        %v5110 = vrot.slane %v5108, 7
        %v5111 = vshll.u32 %v5093, 16
        %v5113 = vor.u32 %v5110, %v5111
        %v5115 = vshrl.u32 %v5094, 16
        %v5117 = vrot.slane %v5115, 7
        %v5118 = vshll.u32 %v5094, 16
        %v5120 = vor.u32 %v5117, %v5118
        %v5122 = vshrl.u32 %v5095, 16
        %v5124 = vrot.slane %v5122, 7
        %v5125 = vshll.u32 %v5095, 16
        %v5127 = vor.u32 %v5124, %v5125
        %v5129 = vshrl.u32 %v5096, 16
        %v5131 = vrot.slane %v5129, 7
        %v5132 = vshll.u32 %v5096, 16
        %v5134 = vor.u32 %v5131, %v5132
        %v5136 = vshrl.u32 %v5097, 16
        %v5138 = vrot.slane %v5136, 7
        %v5139 = vshll.u32 %v5097, 16
        %v5141 = vor.u32 %v5138, %v5139
        %v5143 = vshrl.u32 %v5098, 16
        %v5145 = vrot.slane %v5143, 7
        %v5146 = vshll.u32 %v5098, 16
        %v5148 = vor.u32 %v5145, %v5146
        %v5150 = vshrl.u32 %v5099, 16
        %v5152 = vrot.slane %v5150, 7
        %v5153 = vshll.u32 %v5099, 16
        %v5155 = vor.u32 %v5152, %v5153
        %v5164 = vsel %vm2797, 0, %v5106
        %v5165 = vsel %vm2797, 0, %v5113
        %v5166 = vsel %vm2797, 0, %v5120
        %v5167 = vsel %vm2797, 0, %v5127
        %v5168 = vsel %vm2797, 0, %v5134
        %v5169 = vsel %vm2797, 0, %v5141
        %v5170 = vsel %vm2797, 0, %v5148
        %v5171 = vsel %vm2797, 0, %v5155
        %vm5172 = vcmask 1044480
        %vm5173 = vsmask.f32 4352
        %vm5174 = vmand %vm5172, %vm5173
        %v5175 = vsel %vm5174, %v2894, 0
        %v5176 = vsel %vm5174, %v5164, 0
        %v5177 = vsel %vm5174, %v5165, 0
        %v5178 = vsel %vm5174, %v5166, 0
        %v5179 = vsel %vm5174, %v5167, 0
        %v5180 = vsel %vm5174, %v5168, 0
        %v5181 = vsel %vm5174, %v5169, 0
        %v5182 = vsel %vm5174, %v5170, 0
        %v5183 = vsel %vm5174, %v5171, 0
        %v5192 = vunpack.c.l.b16 %v5175
        %v5193 = vunpack.c.h.b16 %v5175
        %v5194 = vunpack.c.l.b16 %v5176
        %v5195 = vunpack.c.h.b16 %v5176
        %v5196 = vunpack.c.l.b16 %v5177
        %v5197 = vunpack.c.h.b16 %v5177
        %v5198 = vunpack.c.l.b16 %v5178
        %v5199 = vunpack.c.h.b16 %v5178
        %v5200 = vunpack.c.l.b16 %v5179
        %v5201 = vunpack.c.h.b16 %v5179
        %v5202 = vunpack.c.l.b16 %v5180
        %v5203 = vunpack.c.h.b16 %v5180
        %v5204 = vunpack.c.l.b16 %v5181
        %v5205 = vunpack.c.h.b16 %v5181
        %v5206 = vunpack.c.l.b16 %v5182
        %v5207 = vunpack.c.h.b16 %v5182
        %v5208 = vpack.c.b16 %v5192, %v5192
        %v5209 = vpack.c.b16 %v5193, %v5193
        %v5210 = vpack.c.b16 %v5194, %v5194
        %v5211 = vpack.c.b16 %v5195, %v5195
        %v5212 = vpack.c.b16 %v5196, %v5196
        %v5213 = vpack.c.b16 %v5197, %v5197
        %v5214 = vpack.c.b16 %v5198, %v5198
        %v5215 = vpack.c.b16 %v5199, %v5199
        %v5216 = vpack.c.b16 %v5200, %v5200
        %v5217 = vpack.c.b16 %v5201, %v5201
        %v5218 = vpack.c.b16 %v5202, %v5202
        %v5219 = vpack.c.b16 %v5203, %v5203
        %v5220 = vpack.c.b16 %v5204, %v5204
        %v5221 = vpack.c.b16 %v5205, %v5205
        %v5222 = vpack.c.b16 %v5206, %v5206
        %v5223 = vpack.c.b16 %v5207, %v5207
        %v5225 = vshrl.u32 %v5208, 16
        %v5227 = vrot.slane %v5225, 4
        %v5228 = vshll.u32 %v5208, 16
        %v5230 = vrot.slane %v5228, 5
        %v5231 = vor.u32 %v5227, %v5230
        %v5232 = vrot.slane %v5231, 4
        %v5234 = vshll.u32 %v5209, 16
        %v5236 = vrot.slane %v5234, 5
        %v5237 = vsel %vm2945, %v5232, %v5236
        %v5239 = vshrl.u32 %v5210, 16
        %v5241 = vrot.slane %v5239, 4
        %v5242 = vshll.u32 %v5210, 16
        %v5244 = vrot.slane %v5242, 5
        %v5245 = vor.u32 %v5241, %v5244
        %v5246 = vrot.slane %v5245, 4
        %v5248 = vshll.u32 %v5211, 16
        %v5250 = vrot.slane %v5248, 5
        %v5251 = vsel %vm2945, %v5246, %v5250
        %v5253 = vshrl.u32 %v5212, 16
        %v5255 = vrot.slane %v5253, 4
        %v5256 = vshll.u32 %v5212, 16
        %v5258 = vrot.slane %v5256, 5
        %v5259 = vor.u32 %v5255, %v5258
        %v5260 = vrot.slane %v5259, 4
        %v5262 = vshll.u32 %v5213, 16
        %v5264 = vrot.slane %v5262, 5
        %v5265 = vsel %vm2945, %v5260, %v5264
        %v5267 = vshrl.u32 %v5214, 16
        %v5269 = vrot.slane %v5267, 4
        %v5270 = vshll.u32 %v5214, 16
        %v5272 = vrot.slane %v5270, 5
        %v5273 = vor.u32 %v5269, %v5272
        %v5274 = vrot.slane %v5273, 4
        %v5276 = vshll.u32 %v5215, 16
        %v5278 = vrot.slane %v5276, 5
        %v5279 = vsel %vm2945, %v5274, %v5278
        %v5281 = vshrl.u32 %v5216, 16
        %v5283 = vrot.slane %v5281, 4
        %v5284 = vshll.u32 %v5216, 16
        %v5286 = vrot.slane %v5284, 5
        %v5287 = vor.u32 %v5283, %v5286
        %v5288 = vrot.slane %v5287, 4
        %v5290 = vshll.u32 %v5217, 16
        %v5292 = vrot.slane %v5290, 5
        %v5293 = vsel %vm2945, %v5288, %v5292
        %v5295 = vshrl.u32 %v5218, 16
        %v5297 = vrot.slane %v5295, 4
        %v5298 = vshll.u32 %v5218, 16
        %v5300 = vrot.slane %v5298, 5
        %v5301 = vor.u32 %v5297, %v5300
        %v5302 = vrot.slane %v5301, 4
        %v5304 = vshll.u32 %v5219, 16
        %v5306 = vrot.slane %v5304, 5
        %v5307 = vsel %vm2945, %v5302, %v5306
        %v5309 = vshrl.u32 %v5220, 16
        %v5311 = vrot.slane %v5309, 4
        %v5312 = vshll.u32 %v5220, 16
        %v5314 = vrot.slane %v5312, 5
        %v5315 = vor.u32 %v5311, %v5314
        %v5316 = vrot.slane %v5315, 4
        %v5318 = vshll.u32 %v5221, 16
        %v5320 = vrot.slane %v5318, 5
        %v5321 = vsel %vm2945, %v5316, %v5320
        %v5323 = vshrl.u32 %v5222, 16
        %v5325 = vrot.slane %v5323, 4
        %v5326 = vshll.u32 %v5222, 16
        %v5328 = vrot.slane %v5326, 5
        %v5329 = vor.u32 %v5325, %v5328
        %v5330 = vrot.slane %v5329, 4
        %v5332 = vshll.u32 %v5223, 16
        %v5334 = vrot.slane %v5332, 5
        %v5335 = vsel %vm2945, %v5330, %v5334
        %vm5336 = vcmask 1042432
        %vm5337 = vcmask 1046532
        %vm5338 = vmor %vm5336, %vm5337
        %v5339 = vrot.slane %v5208, 5
        %v5340 = vrot.slane %v5339, 4
        %v5341 = vrot.slane %v5209, 5
        %v5342 = vsel %vm5338, %v5340, %v5341
        %v5343 = vrot.slane %v5210, 5
        %v5344 = vrot.slane %v5343, 4
        %v5345 = vrot.slane %v5211, 5
        %v5346 = vsel %vm5338, %v5344, %v5345
        %v5347 = vrot.slane %v5212, 5
        %v5348 = vrot.slane %v5347, 4
        %v5349 = vrot.slane %v5213, 5
        %v5350 = vsel %vm5338, %v5348, %v5349
        %v5351 = vrot.slane %v5214, 5
        %v5352 = vrot.slane %v5351, 4
        %v5353 = vrot.slane %v5215, 5
        %v5354 = vsel %vm5338, %v5352, %v5353
        %v5355 = vrot.slane %v5216, 5
        %v5356 = vrot.slane %v5355, 4
        %v5357 = vrot.slane %v5217, 5
        %v5358 = vsel %vm5338, %v5356, %v5357
        %v5359 = vrot.slane %v5218, 5
        %v5360 = vrot.slane %v5359, 4
        %v5361 = vrot.slane %v5219, 5
        %v5362 = vsel %vm5338, %v5360, %v5361
        %v5363 = vrot.slane %v5220, 5
        %v5364 = vrot.slane %v5363, 4
        %v5365 = vrot.slane %v5221, 5
        %v5366 = vsel %vm5338, %v5364, %v5365
        %v5367 = vrot.slane %v5222, 5
        %v5368 = vrot.slane %v5367, 4
        %v5369 = vrot.slane %v5223, 5
        %v5370 = vsel %vm5338, %v5368, %v5369
        %v5372 = vunpack.c.l.b16 %v5183
        %v5373 = vunpack.c.h.b16 %v5183
        %v5374 = vpack.c.b16 %v5372, %v5372
        %v5375 = vpack.c.b16 %v5373, %v5373
        %v5377 = vshrl.u32 %v5374, 16
        %v5379 = vrot.slane %v5377, 4
        %v5380 = vshll.u32 %v5374, 16
        %v5382 = vrot.slane %v5380, 5
        %v5383 = vor.u32 %v5379, %v5382
        %v5384 = vrot.slane %v5383, 4
        %v5386 = vshll.u32 %v5375, 16
        %v5388 = vrot.slane %v5386, 5
        %v5389 = vsel %vm2945, %v5384, %v5388
        %v5390 = vrot.slane %v5374, 5
        %v5391 = vrot.slane %v5390, 4
        %v5392 = vrot.slane %v5375, 5
        %v5393 = vsel %vm5338, %v5391, %v5392
        %v5394 = vpack.c.b16 %v5194, %v5192
        %v5395 = vpack.c.b16 %v5198, %v5196
        %v5396 = vpack.c.b16 %v5202, %v5200
        %v5397 = vpack.c.b16 %v5206, %v5204
        %v5402 = vunpack.c.l.b16 %v5237
        %v5403 = vunpack.c.l.b16 %v5251
        %v5404 = vunpack.c.l.b16 %v5265
        %v5405 = vunpack.c.l.b16 %v5279
        %v5406 = vunpack.c.l.b16 %v5293
        %v5407 = vunpack.c.l.b16 %v5307
        %v5408 = vunpack.c.l.b16 %v5321
        %v5409 = vunpack.c.l.b16 %v5335
        %v5410 = vpack.c.b16 %v5403, %v5402
        %v5411 = vpack.c.b16 %v5405, %v5404
        %v5412 = vpack.c.b16 %v5407, %v5406
        %v5413 = vpack.c.b16 %v5409, %v5408
        %v5418 = vunpack.c.l.b16 %v5342
        %v5419 = vunpack.c.l.b16 %v5346
        %v5420 = vunpack.c.l.b16 %v5350
        %v5421 = vunpack.c.l.b16 %v5354
        %v5422 = vunpack.c.l.b16 %v5358
        %v5423 = vunpack.c.l.b16 %v5362
        %v5424 = vunpack.c.l.b16 %v5366
        %v5425 = vunpack.c.l.b16 %v5370
        %v5426 = vpack.c.b16 %v5419, %v5418
        %v5427 = vpack.c.b16 %v5421, %v5420
        %v5428 = vpack.c.b16 %v5423, %v5422
        %v5429 = vpack.c.b16 %v5425, %v5424
        %v5434 = vpack.c.b16 %v5196, %v5194
        %v5435 = vpack.c.b16 %v5200, %v5198
        %v5436 = vpack.c.b16 %v5204, %v5202
        %v5437 = vpack.c.b16 %v5372, %v5206
        %v5442 = vunpack.c.l.b16 %v5389
        %v5443 = vpack.c.b16 %v5404, %v5403
        %v5444 = vpack.c.b16 %v5406, %v5405
        %v5445 = vpack.c.b16 %v5408, %v5407
        %v5446 = vpack.c.b16 %v5442, %v5409
        %v5451 = vunpack.c.l.b16 %v5393
        %v5452 = vpack.c.b16 %v5420, %v5419
        %v5453 = vpack.c.b16 %v5422, %v5421
        %v5454 = vpack.c.b16 %v5424, %v5423
        %v5455 = vpack.c.b16 %v5451, %v5425
        %v5460 = vpack.c.b16 %v5192, %v5372
        %v5462 = vpack.c.b16 %v5402, %v5442
        %v5464 = vpack.c.b16 %v5418, %v5451
        %v5466 = vld [vmem:[%s13] sm:$0xff]
        %v5467 = vld [vmem:[%s13 + $0x8] sm:$0xff]
        %v5468 = vld [vmem:[%s13 + $0x10] sm:$0xff]
        %v5469 = vld [vmem:[%s13 + $0x18] sm:$0xff]
        %v5470 = vld [vmem:[%s13 + $0x20] sm:$0xff]
        %v5471 = vld [vmem:[%s13 + $0x28] sm:$0xff]
        %v5472 = vld [vmem:[%s13 + $0x30] sm:$0xff]
        %v5473 = vld [vmem:[%s13 + $0x38] sm:$0xff]
        %v5474 = vld [vmem:[%s13 + $0x40] sm:$0xff]
        %v5475 = vld [vmem:[%s13 + $0x48] sm:$0xff]
        %v5476 = vld [vmem:[%s13 + $0x50] sm:$0xff]
        %v5477 = vld [vmem:[%s13 + $0x58] sm:$0xff]
        %v5478 = vld [vmem:[%s13 + $0x60] sm:$0xff]
        %v5479 = vld [vmem:[%s13 + $0x68] sm:$0xff]
        %v5480 = vld [vmem:[%s13 + $0x70] sm:$0xff]
        %v5481 = vld [vmem:[%s13 + $0x78] sm:$0xff]
        %v5482 = vld [vmem:[%s13 + $0x80] sm:$0xff]
        %v5483 = vld [vmem:[%s13 + $0x88] sm:$0xff]
        %v5484 = vld [vmem:[%s13 + $0x90] sm:$0xff]
        %v5485 = vld [vmem:[%s13 + $0x98] sm:$0xff]
        %v5486 = vld [vmem:[%s13 + $0xa0] sm:$0xff]
        %v5487 = vld [vmem:[%s13 + $0xa8] sm:$0xff]
        %v5488 = vld [vmem:[%s13 + $0xb0] sm:$0xff]
        %v5489 = vld [vmem:[%s13 + $0xb8] sm:$0xff]
        %v5490 = vld [vmem:[%s13 + $0xc0] sm:$0xff]
        %v5491 = vld [vmem:[%s13 + $0xc8] sm:$0xff]
        %v5492 = vld [vmem:[%s13 + $0xd0] sm:$0xff]
        %v5493 = vld [vmem:[%s13 + $0xd8] sm:$0xff]
        %v5494 = vld [vmem:[%s13 + $0xe0] sm:$0xff]
        %v5495 = vld [vmem:[%s13 + $0xe8] sm:$0xff]
        %v5496 = vld [vmem:[%s13 + $0xf0] sm:$0xff]
        %v5497 = vld [vmem:[%s13 + $0xf8] sm:$0xff]
        %v5498 = vld [vmem:[%s13 + $0x100] sm:$0xff]
        %v5499 = vld [vmem:[%s13 + $0x108] sm:$0xff]
        %v5500 = vld [vmem:[%s13 + $0x110] sm:$0xff]
        %v5501 = vld [vmem:[%s13 + $0x118] sm:$0xff]
        %v5502 = vld [vmem:[%s13 + $0x120] sm:$0xff]
        %v5503 = vld [vmem:[%s13 + $0x128] sm:$0xff]
        %v5504 = vld [vmem:[%s13 + $0x130] sm:$0xff]
        %v5505 = vld [vmem:[%s13 + $0x138] sm:$0xff]
        %v5506 = vld [vmem:[%s13 + $0x140] sm:$0xff]
        %v5507 = vld [vmem:[%s13 + $0x148] sm:$0xff]
        %v5508 = vld [vmem:[%s13 + $0x150] sm:$0xff]
        %v5509 = vld [vmem:[%s13 + $0x158] sm:$0xff]
        %v5510 = vld [vmem:[%s13 + $0x160] sm:$0xff]
        %v5511 = vld [vmem:[%s13 + $0x168] sm:$0xff]
        %v5512 = vld [vmem:[%s13 + $0x170] sm:$0xff]
        %v5513 = vld [vmem:[%s13 + $0x178] sm:$0xff]
        %v5514 = vld [vmem:[%s13 + $0x180] sm:$0xff]
        %v5515 = vld [vmem:[%s13 + $0x188] sm:$0xff]
        %v5516 = vld [vmem:[%s13 + $0x190] sm:$0xff]
        %v5517 = vld [vmem:[%s13 + $0x198] sm:$0xff]
        %v5518 = vld [vmem:[%s13 + $0x1a0] sm:$0xff]
        %v5519 = vld [vmem:[%s13 + $0x1a8] sm:$0xff]
        %v5520 = vld [vmem:[%s13 + $0x1b0] sm:$0xff]
        %v5521 = vld [vmem:[%s13 + $0x1b8] sm:$0xff]
        %v5522 = vld [vmem:[%s13 + $0x1c0] sm:$0xff]
        %v5523 = vld [vmem:[%s13 + $0x1c8] sm:$0xff]
        %v5524 = vld [vmem:[%s13 + $0x1d0] sm:$0xff]
        %v5525 = vld [vmem:[%s13 + $0x1d8] sm:$0xff]
        %v5526 = vld [vmem:[%s13 + $0x1e0] sm:$0xff]
        %v5527 = vld [vmem:[%s13 + $0x1e8] sm:$0xff]
        %v5528 = vld [vmem:[%s13 + $0x1f0] sm:$0xff]
        %v5529 = vld [vmem:[%s13 + $0x1f8] sm:$0xff]
        %v5530 = vld [vmem:[%s13 + $0x200] sm:$0xff]
        %v5531 = vld [vmem:[%s13 + $0x208] sm:$0xff]
        %v5532 = vld [vmem:[%s13 + $0x210] sm:$0xff]
        %v5533 = vld [vmem:[%s13 + $0x218] sm:$0xff]
        %v5534 = vld [vmem:[%s13 + $0x220] sm:$0xff]
        %v5535 = vld [vmem:[%s13 + $0x228] sm:$0xff]
        %v5536 = vld [vmem:[%s13 + $0x230] sm:$0xff]
        %v5537 = vld [vmem:[%s13 + $0x238] sm:$0xff]
        %v5538 = vld [vmem:[%s13 + $0x240] sm:$0xff]
        %v5539 = vld [vmem:[%s13 + $0x248] sm:$0xff]
        %v5540 = vld [vmem:[%s13 + $0x250] sm:$0xff]
        %v5541 = vld [vmem:[%s13 + $0x258] sm:$0xff]
        %v5542 = vld [vmem:[%s13 + $0x260] sm:$0xff]
        %v5543 = vld [vmem:[%s13 + $0x268] sm:$0xff]
        %v5544 = vld [vmem:[%s13 + $0x270] sm:$0xff]
        %v5545 = vld [vmem:[%s13 + $0x278] sm:$0xff]
        %v5546 = vld [vmem:[%s13 + $0x280] sm:$0xff]
        %v5547 = vld [vmem:[%s13 + $0x288] sm:$0xff]
        %v5548 = vld [vmem:[%s13 + $0x290] sm:$0xff]
        %v5549 = vld [vmem:[%s13 + $0x298] sm:$0xff]
        %v5550 = vld [vmem:[%s13 + $0x2a0] sm:$0xff]
        %v5551 = vld [vmem:[%s13 + $0x2a8] sm:$0xff]
        %v5552 = vld [vmem:[%s13 + $0x2b0] sm:$0xff]
        %v5553 = vld [vmem:[%s13 + $0x2b8] sm:$0xff]
        %v5554 = vld [vmem:[%s13 + $0x2c0] sm:$0xff]
        %v5555 = vld [vmem:[%s13 + $0x2c8] sm:$0xff]
        %v5556 = vld [vmem:[%s13 + $0x2d0] sm:$0xff]
        %v5557 = vld [vmem:[%s13 + $0x2d8] sm:$0xff]
        %v5558 = vld [vmem:[%s13 + $0x2e0] sm:$0xff]
        %v5559 = vld [vmem:[%s13 + $0x2e8] sm:$0xff]
        %v5560 = vld [vmem:[%s13 + $0x2f0] sm:$0xff]
        %v5561 = vld [vmem:[%s13 + $0x2f8] sm:$0xff]
        %v5562 = vld [vmem:[%s13 + $0x300] sm:$0xff]
        %v5563 = vld [vmem:[%s13 + $0x308] sm:$0xff]
        %v5564 = vld [vmem:[%s13 + $0x310] sm:$0xff]
        %v5565 = vld [vmem:[%s13 + $0x318] sm:$0xff]
        %v5566 = vld [vmem:[%s13 + $0x320] sm:$0xff]
        %v5567 = vld [vmem:[%s13 + $0x328] sm:$0xff]
        %v5568 = vld [vmem:[%s13 + $0x330] sm:$0xff]
        %v5569 = vld [vmem:[%s13 + $0x338] sm:$0xff]
        %v5570 = vld [vmem:[%s13 + $0x340] sm:$0xff]
        %v5571 = vld [vmem:[%s13 + $0x348] sm:$0xff]
        %v5572 = vld [vmem:[%s13 + $0x350] sm:$0xff]
        %v5573 = vld [vmem:[%s13 + $0x358] sm:$0xff]
        %v5574 = vld [vmem:[%s13 + $0x360] sm:$0xff]
        %v5575 = vld [vmem:[%s13 + $0x368] sm:$0xff]
        %v5576 = vld [vmem:[%s13 + $0x370] sm:$0xff]
        %v5577 = vld [vmem:[%s13 + $0x378] sm:$0xff]
        %v5578 = vld [vmem:[%s13 + $0x380] sm:$0xff]
        %v5579 = vld [vmem:[%s13 + $0x388] sm:$0xff]
        %v5580 = vld [vmem:[%s13 + $0x390] sm:$0xff]
        %v5581 = vld [vmem:[%s13 + $0x398] sm:$0xff]
        %v5582 = vld [vmem:[%s13 + $0x3a0] sm:$0xff]
        %v5583 = vld [vmem:[%s13 + $0x3a8] sm:$0xff]
        %v5584 = vld [vmem:[%s13 + $0x3b0] sm:$0xff]
        %v5585 = vld [vmem:[%s13 + $0x3b8] sm:$0xff]
        %v5586 = vld [vmem:[%s13 + $0x3c0] sm:$0xff]
        %v5587 = vld [vmem:[%s13 + $0x3c8] sm:$0xff]
        %v5588 = vld [vmem:[%s13 + $0x3d0] sm:$0xff]
        %v5589 = vld [vmem:[%s13 + $0x3d8] sm:$0xff]
        %v5590 = vld [vmem:[%s13 + $0x3e0] sm:$0xff]
        %v5591 = vld [vmem:[%s13 + $0x3e8] sm:$0xff]
        %v5592 = vld [vmem:[%s13 + $0x3f0] sm:$0xff]
        %v5593 = vld [vmem:[%s13 + $0x3f8] sm:$0xff]
        %v5594 = vld [vmem:[%s13 + $0x400] sm:$0xff]
        %v5595 = vld [vmem:[%s13 + $0x408] sm:$0xff]
        %v5596 = vld [vmem:[%s13 + $0x410] sm:$0xff]
        %v5597 = vld [vmem:[%s13 + $0x418] sm:$0xff]
        %v5598 = vld [vmem:[%s13 + $0x420] sm:$0xff]
        %v5599 = vld [vmem:[%s13 + $0x428] sm:$0xff]
        %v5600 = vld [vmem:[%s13 + $0x430] sm:$0xff]
        %v5601 = vld [vmem:[%s13 + $0x438] sm:$0xff]
        %v5602 = vld [vmem:[%s13 + $0x440] sm:$0xff]
        %v5603 = vld [vmem:[%s13 + $0x448] sm:$0xff]
        %v5604 = vld [vmem:[%s13 + $0x450] sm:$0xff]
        %v5605 = vld [vmem:[%s13 + $0x458] sm:$0xff]
        %v5606 = vld [vmem:[%s13 + $0x460] sm:$0xff]
        %v5607 = vld [vmem:[%s13 + $0x468] sm:$0xff]
        %v5608 = vld [vmem:[%s13 + $0x470] sm:$0xff]
        %v5609 = vld [vmem:[%s13 + $0x478] sm:$0xff]
        %v5610 = vld [vmem:[%s14] sm:$0x3]
        %v5612 = vlaneseq
        %v5613 = vshrl.u32 %v5612, 7
        %v5614 = vsub.s32 0, %v5613
        %v5615 = vrot.slane %v5610, %v5614
        %v5616 = vlaneseq
        %v5617 = vshrl.u32 %v5616, 7
        %v5618 = vsub.s32 1, %v5617
        %v5619 = vrot.slane %v5610, %v5618
        %v5766 = vunpack.c.l.b16 %v5466
        %v5767 = vunpack.c.h.b16 %v5466
        %v5768 = vunpack.c.l.b16 %v5467
        %v5769 = vunpack.c.h.b16 %v5467
        %v5770 = vunpack.c.l.b16 %v5468
        %v5771 = vunpack.c.h.b16 %v5468
        %v5772 = vunpack.c.l.b16 %v5469
        %v5773 = vunpack.c.h.b16 %v5469
        %v5774 = vunpack.c.l.b16 %v5470
        %v5775 = vunpack.c.h.b16 %v5470
        %v5776 = vunpack.c.l.b16 %v5471
        %v5777 = vunpack.c.h.b16 %v5471
        %v5778 = vunpack.c.l.b16 %v5472
        %v5779 = vunpack.c.h.b16 %v5472
        %v5780 = vunpack.c.l.b16 %v5473
        %v5781 = vunpack.c.h.b16 %v5473
        %v5782 = vunpack.c.l.b16 %v5474
        %v5783 = vunpack.c.h.b16 %v5474
        %v5784 = vunpack.c.l.b16 %v5475
        %v5785 = vunpack.c.h.b16 %v5475
        %v5786 = vunpack.c.l.b16 %v5476
        %v5787 = vunpack.c.h.b16 %v5476
        %v5788 = vunpack.c.l.b16 %v5477
        %v5789 = vunpack.c.h.b16 %v5477
        %v5790 = vunpack.c.l.b16 %v5478
        %v5791 = vunpack.c.h.b16 %v5478
        %v5792 = vunpack.c.l.b16 %v5479
        %v5793 = vunpack.c.h.b16 %v5479
        %v5794 = vunpack.c.l.b16 %v5480
        %v5795 = vunpack.c.h.b16 %v5480
        %v5796 = vunpack.c.l.b16 %v5481
        %v5797 = vunpack.c.h.b16 %v5481
        %v5798 = vunpack.c.l.b16 %v5482
        %v5799 = vunpack.c.h.b16 %v5482
        %v5800 = vunpack.c.l.b16 %v5483
        %v5801 = vunpack.c.h.b16 %v5483
        %v5802 = vunpack.c.l.b16 %v5484
        %v5803 = vunpack.c.h.b16 %v5484
        %v5804 = vunpack.c.l.b16 %v5485
        %v5805 = vunpack.c.h.b16 %v5485
        %v5806 = vunpack.c.l.b16 %v5486
        %v5807 = vunpack.c.h.b16 %v5486
        %v5808 = vunpack.c.l.b16 %v5487
        %v5809 = vunpack.c.h.b16 %v5487
        %v5810 = vunpack.c.l.b16 %v5488
        %v5811 = vunpack.c.h.b16 %v5488
        %v5812 = vunpack.c.l.b16 %v5489
        %v5813 = vunpack.c.h.b16 %v5489
        %v5814 = vunpack.c.l.b16 %v5490
        %v5815 = vunpack.c.h.b16 %v5490
        %v5816 = vunpack.c.l.b16 %v5491
        %v5817 = vunpack.c.h.b16 %v5491
        %v5818 = vunpack.c.l.b16 %v5492
        %v5819 = vunpack.c.h.b16 %v5492
        %v5820 = vunpack.c.l.b16 %v5493
        %v5821 = vunpack.c.h.b16 %v5493
        %v5822 = vunpack.c.l.b16 %v5494
        %v5823 = vunpack.c.h.b16 %v5494
        %v5824 = vunpack.c.l.b16 %v5495
        %v5825 = vunpack.c.h.b16 %v5495
        %v5826 = vunpack.c.l.b16 %v5496
        %v5827 = vunpack.c.h.b16 %v5496
        %v5828 = vunpack.c.l.b16 %v5497
        %v5829 = vunpack.c.h.b16 %v5497
        %v5830 = vunpack.c.l.b16 %v5498
        %v5831 = vunpack.c.h.b16 %v5498
        %v5832 = vunpack.c.l.b16 %v5499
        %v5833 = vunpack.c.h.b16 %v5499
        %v5834 = vunpack.c.l.b16 %v5500
        %v5835 = vunpack.c.h.b16 %v5500
        %v5836 = vunpack.c.l.b16 %v5501
        %v5837 = vunpack.c.h.b16 %v5501
        %v5838 = vunpack.c.l.b16 %v5502
        %v5839 = vunpack.c.h.b16 %v5502
        %v5840 = vunpack.c.l.b16 %v5503
        %v5841 = vunpack.c.h.b16 %v5503
        %v5842 = vunpack.c.l.b16 %v5504
        %v5843 = vunpack.c.h.b16 %v5504
        %v5844 = vunpack.c.l.b16 %v5505
        %v5845 = vunpack.c.h.b16 %v5505
        %v5846 = vunpack.c.l.b16 %v5506
        %v5847 = vunpack.c.h.b16 %v5506
        %v5848 = vunpack.c.l.b16 %v5507
        %v5849 = vunpack.c.h.b16 %v5507
        %v5850 = vunpack.c.l.b16 %v5508
        %v5851 = vunpack.c.h.b16 %v5508
        %v5852 = vunpack.c.l.b16 %v5509
        %v5853 = vunpack.c.h.b16 %v5509
        %v5854 = vunpack.c.l.b16 %v5510
        %v5855 = vunpack.c.h.b16 %v5510
        %v5856 = vunpack.c.l.b16 %v5511
        %v5857 = vunpack.c.h.b16 %v5511
        %v5858 = vunpack.c.l.b16 %v5512
        %v5859 = vunpack.c.h.b16 %v5512
        %v5860 = vunpack.c.l.b16 %v5513
        %v5861 = vunpack.c.h.b16 %v5513
        %v5862 = vunpack.c.l.b16 %v5514
        %v5863 = vunpack.c.h.b16 %v5514
        %v5864 = vunpack.c.l.b16 %v5515
        %v5865 = vunpack.c.h.b16 %v5515
        %v5866 = vunpack.c.l.b16 %v5516
        %v5867 = vunpack.c.h.b16 %v5516
        %v5868 = vunpack.c.l.b16 %v5517
        %v5869 = vunpack.c.h.b16 %v5517
        %v5870 = vunpack.c.l.b16 %v5518
        %v5871 = vunpack.c.h.b16 %v5518
        %v5872 = vunpack.c.l.b16 %v5519
        %v5873 = vunpack.c.h.b16 %v5519
        %v5874 = vunpack.c.l.b16 %v5520
        %v5875 = vunpack.c.h.b16 %v5520
        %v5876 = vunpack.c.l.b16 %v5521
        %v5877 = vunpack.c.h.b16 %v5521
        %v5878 = vunpack.c.l.b16 %v5522
        %v5879 = vunpack.c.h.b16 %v5522
        %v5880 = vunpack.c.l.b16 %v5523
        %v5881 = vunpack.c.h.b16 %v5523
        %v5882 = vunpack.c.l.b16 %v5524
        %v5883 = vunpack.c.h.b16 %v5524
        %v5884 = vunpack.c.l.b16 %v5525
        %v5885 = vunpack.c.h.b16 %v5525
        %v5886 = vunpack.c.l.b16 %v5526
        %v5887 = vunpack.c.h.b16 %v5526
        %v5888 = vunpack.c.l.b16 %v5527
        %v5889 = vunpack.c.h.b16 %v5527
        %v5890 = vunpack.c.l.b16 %v5528
        %v5891 = vunpack.c.h.b16 %v5528
        %v5892 = vunpack.c.l.b16 %v5529
        %v5893 = vunpack.c.h.b16 %v5529
        %v5894 = vunpack.c.l.b16 %v5530
        %v5895 = vunpack.c.h.b16 %v5530
        %v5896 = vunpack.c.l.b16 %v5531
        %v5897 = vunpack.c.h.b16 %v5531
        %v5898 = vunpack.c.l.b16 %v5532
        %v5899 = vunpack.c.h.b16 %v5532
        %v5900 = vunpack.c.l.b16 %v5533
        %v5901 = vunpack.c.h.b16 %v5533
        %v5902 = vunpack.c.l.b16 %v5534
        %v5903 = vunpack.c.h.b16 %v5534
        %v5904 = vunpack.c.l.b16 %v5535
        %v5905 = vunpack.c.h.b16 %v5535
        %v5906 = vunpack.c.l.b16 %v5536
        %v5907 = vunpack.c.h.b16 %v5536
        %v5908 = vunpack.c.l.b16 %v5537
        %v5909 = vunpack.c.h.b16 %v5537
        %v5910 = vunpack.c.l.b16 %v5538
        %v5911 = vunpack.c.h.b16 %v5538
        %v5912 = vunpack.c.l.b16 %v5539
        %v5913 = vunpack.c.h.b16 %v5539
        %v5914 = vunpack.c.l.b16 %v5540
        %v5915 = vunpack.c.h.b16 %v5540
        %v5916 = vunpack.c.l.b16 %v5541
        %v5917 = vunpack.c.h.b16 %v5541
        %v5918 = vunpack.c.l.b16 %v5542
        %v5919 = vunpack.c.h.b16 %v5542
        %v5920 = vunpack.c.l.b16 %v5543
        %v5921 = vunpack.c.h.b16 %v5543
        %v5922 = vunpack.c.l.b16 %v5544
        %v5923 = vunpack.c.h.b16 %v5544
        %v5924 = vunpack.c.l.b16 %v5545
        %v5925 = vunpack.c.h.b16 %v5545
        %v5926 = vunpack.c.l.b16 %v5546
        %v5927 = vunpack.c.h.b16 %v5546
        %v5928 = vunpack.c.l.b16 %v5547
        %v5929 = vunpack.c.h.b16 %v5547
        %v5930 = vunpack.c.l.b16 %v5548
        %v5931 = vunpack.c.h.b16 %v5548
        %v5932 = vunpack.c.l.b16 %v5549
        %v5933 = vunpack.c.h.b16 %v5549
        %v5934 = vunpack.c.l.b16 %v5550
        %v5935 = vunpack.c.h.b16 %v5550
        %v5936 = vunpack.c.l.b16 %v5551
        %v5937 = vunpack.c.h.b16 %v5551
        %v5938 = vunpack.c.l.b16 %v5552
        %v5939 = vunpack.c.h.b16 %v5552
        %v5940 = vunpack.c.l.b16 %v5553
        %v5941 = vunpack.c.h.b16 %v5553
        %v5942 = vunpack.c.l.b16 %v5554
        %v5943 = vunpack.c.h.b16 %v5554
        %v5944 = vunpack.c.l.b16 %v5555
        %v5945 = vunpack.c.h.b16 %v5555
        %v5946 = vunpack.c.l.b16 %v5556
        %v5947 = vunpack.c.h.b16 %v5556
        %v5948 = vunpack.c.l.b16 %v5557
        %v5949 = vunpack.c.h.b16 %v5557
        %v5950 = vunpack.c.l.b16 %v5558
        %v5951 = vunpack.c.h.b16 %v5558
        %v5952 = vunpack.c.l.b16 %v5559
        %v5953 = vunpack.c.h.b16 %v5559
        %v5954 = vunpack.c.l.b16 %v5560
        %v5955 = vunpack.c.h.b16 %v5560
        %v5956 = vunpack.c.l.b16 %v5561
        %v5957 = vunpack.c.h.b16 %v5561
        %v5958 = vunpack.c.l.b16 %v5562
        %v5959 = vunpack.c.h.b16 %v5562
        %v5960 = vunpack.c.l.b16 %v5563
        %v5961 = vunpack.c.h.b16 %v5563
        %v5962 = vunpack.c.l.b16 %v5564
        %v5963 = vunpack.c.h.b16 %v5564
        %v5964 = vunpack.c.l.b16 %v5565
        %v5965 = vunpack.c.h.b16 %v5565
        %v5966 = vunpack.c.l.b16 %v5566
        %v5967 = vunpack.c.h.b16 %v5566
        %v5968 = vunpack.c.l.b16 %v5567
        %v5969 = vunpack.c.h.b16 %v5567
        %v5970 = vunpack.c.l.b16 %v5568
        %v5971 = vunpack.c.h.b16 %v5568
        %v5972 = vunpack.c.l.b16 %v5569
        %v5973 = vunpack.c.h.b16 %v5569
        %v5974 = vunpack.c.l.b16 %v5570
        %v5975 = vunpack.c.h.b16 %v5570
        %v5976 = vunpack.c.l.b16 %v5571
        %v5977 = vunpack.c.h.b16 %v5571
        %v5978 = vunpack.c.l.b16 %v5572
        %v5979 = vunpack.c.h.b16 %v5572
        %v5980 = vunpack.c.l.b16 %v5573
        %v5981 = vunpack.c.h.b16 %v5573
        %v5982 = vunpack.c.l.b16 %v5574
        %v5983 = vunpack.c.h.b16 %v5574
        %v5984 = vunpack.c.l.b16 %v5575
        %v5985 = vunpack.c.h.b16 %v5575
        %v5986 = vunpack.c.l.b16 %v5576
        %v5987 = vunpack.c.h.b16 %v5576
        %v5988 = vunpack.c.l.b16 %v5577
        %v5989 = vunpack.c.h.b16 %v5577
        %v5990 = vunpack.c.l.b16 %v5578
        %v5991 = vunpack.c.h.b16 %v5578
        %v5992 = vunpack.c.l.b16 %v5579
        %v5993 = vunpack.c.h.b16 %v5579
        %v5994 = vunpack.c.l.b16 %v5580
        %v5995 = vunpack.c.h.b16 %v5580
        %v5996 = vunpack.c.l.b16 %v5581
        %v5997 = vunpack.c.h.b16 %v5581
        %v5998 = vunpack.c.l.b16 %v5582
        %v5999 = vunpack.c.h.b16 %v5582
        %v6000 = vunpack.c.l.b16 %v5583
        %v6001 = vunpack.c.h.b16 %v5583
        %v6002 = vunpack.c.l.b16 %v5584
        %v6003 = vunpack.c.h.b16 %v5584
        %v6004 = vunpack.c.l.b16 %v5585
        %v6005 = vunpack.c.h.b16 %v5585
        %v6006 = vunpack.c.l.b16 %v5586
        %v6007 = vunpack.c.h.b16 %v5586
        %v6008 = vunpack.c.l.b16 %v5587
        %v6009 = vunpack.c.h.b16 %v5587
        %v6010 = vunpack.c.l.b16 %v5588
        %v6011 = vunpack.c.h.b16 %v5588
        %v6012 = vunpack.c.l.b16 %v5589
        %v6013 = vunpack.c.h.b16 %v5589
        %v6014 = vunpack.c.l.b16 %v5590
        %v6015 = vunpack.c.h.b16 %v5590
        %v6016 = vunpack.c.l.b16 %v5591
        %v6017 = vunpack.c.h.b16 %v5591
        %v6018 = vunpack.c.l.b16 %v5592
        %v6019 = vunpack.c.h.b16 %v5592
        %v6020 = vunpack.c.l.b16 %v5593
        %v6021 = vunpack.c.h.b16 %v5593
        %v6022 = vunpack.c.l.b16 %v5594
        %v6023 = vunpack.c.h.b16 %v5594
        %v6024 = vunpack.c.l.b16 %v5595
        %v6025 = vunpack.c.h.b16 %v5595
        %v6026 = vunpack.c.l.b16 %v5596
        %v6027 = vunpack.c.h.b16 %v5596
        %v6028 = vunpack.c.l.b16 %v5597
        %v6029 = vunpack.c.h.b16 %v5597
        %v6030 = vunpack.c.l.b16 %v5598
        %v6031 = vunpack.c.h.b16 %v5598
        %v6032 = vunpack.c.l.b16 %v5599
        %v6033 = vunpack.c.h.b16 %v5599
        %v6034 = vunpack.c.l.b16 %v5600
        %v6035 = vunpack.c.h.b16 %v5600
        %v6036 = vunpack.c.l.b16 %v5601
        %v6037 = vunpack.c.h.b16 %v5601
        %v6038 = vunpack.c.l.b16 %v5602
        %v6039 = vunpack.c.h.b16 %v5602
        %v6040 = vunpack.c.l.b16 %v5603
        %v6041 = vunpack.c.h.b16 %v5603
        %v6042 = vunpack.c.l.b16 %v5604
        %v6043 = vunpack.c.h.b16 %v5604
        %v6044 = vunpack.c.l.b16 %v5605
        %v6045 = vunpack.c.h.b16 %v5605
        %v6046 = vunpack.c.l.b16 %v5606
        %v6047 = vunpack.c.h.b16 %v5606
        %v6048 = vunpack.c.l.b16 %v5607
        %v6049 = vunpack.c.h.b16 %v5607
        %v6050 = vunpack.c.l.b16 %v5608
        %v6051 = vunpack.c.h.b16 %v5608
        %v6052 = vunpack.c.l.b16 %v5609
        %v6053 = vunpack.c.h.b16 %v5609
        %v6054 = vpack.c.b16 %v5768, %v5766
        %v6055 = vpack.c.b16 %v5769, %v5767
        %v6056 = vpack.c.b16 %v5772, %v5770
        %v6057 = vpack.c.b16 %v5773, %v5771
        %v6058 = vpack.c.b16 %v5776, %v5774
        %v6059 = vpack.c.b16 %v5777, %v5775
        %v6060 = vpack.c.b16 %v5780, %v5778
        %v6061 = vpack.c.b16 %v5781, %v5779
        %v6062 = vpack.c.b16 %v5784, %v5782
        %v6063 = vpack.c.b16 %v5785, %v5783
        %v6064 = vpack.c.b16 %v5788, %v5786
        %v6065 = vpack.c.b16 %v5789, %v5787
        %v6066 = vpack.c.b16 %v5792, %v5790
        %v6067 = vpack.c.b16 %v5793, %v5791
        %v6068 = vpack.c.b16 %v5796, %v5794
        %v6069 = vpack.c.b16 %v5797, %v5795
        %v6070 = vpack.c.b16 %v5800, %v5798
        %v6071 = vpack.c.b16 %v5801, %v5799
        %v6072 = vpack.c.b16 %v5804, %v5802
        %v6073 = vpack.c.b16 %v5805, %v5803
        %v6074 = vpack.c.b16 %v5808, %v5806
        %v6075 = vpack.c.b16 %v5809, %v5807
        %v6076 = vpack.c.b16 %v5812, %v5810
        %v6077 = vpack.c.b16 %v5813, %v5811
        %v6078 = vpack.c.b16 %v5816, %v5814
        %v6079 = vpack.c.b16 %v5817, %v5815
        %v6080 = vpack.c.b16 %v5820, %v5818
        %v6081 = vpack.c.b16 %v5821, %v5819
        %v6082 = vpack.c.b16 %v5824, %v5822
        %v6083 = vpack.c.b16 %v5825, %v5823
        %v6084 = vpack.c.b16 %v5828, %v5826
        %v6085 = vpack.c.b16 %v5829, %v5827
        %v6086 = vpack.c.b16 %v5832, %v5830
        %v6087 = vpack.c.b16 %v5833, %v5831
        %v6088 = vpack.c.b16 %v5836, %v5834
        %v6089 = vpack.c.b16 %v5837, %v5835
        %v6090 = vpack.c.b16 %v5840, %v5838
        %v6091 = vpack.c.b16 %v5841, %v5839
        %v6092 = vpack.c.b16 %v5844, %v5842
        %v6093 = vpack.c.b16 %v5845, %v5843
        %v6094 = vpack.c.b16 %v5848, %v5846
        %v6095 = vpack.c.b16 %v5849, %v5847
        %v6096 = vpack.c.b16 %v5852, %v5850
        %v6097 = vpack.c.b16 %v5853, %v5851
        %v6098 = vpack.c.b16 %v5856, %v5854
        %v6099 = vpack.c.b16 %v5857, %v5855
        %v6100 = vpack.c.b16 %v5860, %v5858
        %v6101 = vpack.c.b16 %v5861, %v5859
        %v6102 = vpack.c.b16 %v5864, %v5862
        %v6103 = vpack.c.b16 %v5865, %v5863
        %v6104 = vpack.c.b16 %v5868, %v5866
        %v6105 = vpack.c.b16 %v5869, %v5867
        %v6106 = vpack.c.b16 %v5872, %v5870
        %v6107 = vpack.c.b16 %v5873, %v5871
        %v6108 = vpack.c.b16 %v5876, %v5874
        %v6109 = vpack.c.b16 %v5877, %v5875
        %v6110 = vpack.c.b16 %v5880, %v5878
        %v6111 = vpack.c.b16 %v5881, %v5879
        %v6112 = vpack.c.b16 %v5884, %v5882
        %v6113 = vpack.c.b16 %v5885, %v5883
        %v6114 = vpack.c.b16 %v5888, %v5886
        %v6115 = vpack.c.b16 %v5889, %v5887
        %v6116 = vpack.c.b16 %v5892, %v5890
        %v6117 = vpack.c.b16 %v5893, %v5891
        %v6118 = vpack.c.b16 %v5896, %v5894
        %v6119 = vpack.c.b16 %v5897, %v5895
        %v6120 = vpack.c.b16 %v5900, %v5898
        %v6121 = vpack.c.b16 %v5901, %v5899
        %v6122 = vpack.c.b16 %v5904, %v5902
        %v6123 = vpack.c.b16 %v5905, %v5903
        %v6124 = vpack.c.b16 %v5908, %v5906
        %v6125 = vpack.c.b16 %v5909, %v5907
        %v6126 = vpack.c.b16 %v5912, %v5910
        %v6127 = vpack.c.b16 %v5913, %v5911
        %v6128 = vpack.c.b16 %v5916, %v5914
        %v6129 = vpack.c.b16 %v5917, %v5915
        %v6130 = vpack.c.b16 %v5920, %v5918
        %v6131 = vpack.c.b16 %v5921, %v5919
        %v6132 = vpack.c.b16 %v5924, %v5922
        %v6133 = vpack.c.b16 %v5925, %v5923
        %v6134 = vpack.c.b16 %v5928, %v5926
        %v6135 = vpack.c.b16 %v5929, %v5927
        %v6136 = vpack.c.b16 %v5932, %v5930
        %v6137 = vpack.c.b16 %v5933, %v5931
        %v6138 = vpack.c.b16 %v5936, %v5934
        %v6139 = vpack.c.b16 %v5937, %v5935
        %v6140 = vpack.c.b16 %v5940, %v5938
        %v6141 = vpack.c.b16 %v5941, %v5939
        %v6142 = vpack.c.b16 %v5944, %v5942
        %v6143 = vpack.c.b16 %v5945, %v5943
        %v6144 = vpack.c.b16 %v5948, %v5946
        %v6145 = vpack.c.b16 %v5949, %v5947
        %v6146 = vpack.c.b16 %v5952, %v5950
        %v6147 = vpack.c.b16 %v5953, %v5951
        %v6148 = vpack.c.b16 %v5956, %v5954
        %v6149 = vpack.c.b16 %v5957, %v5955
        %v6150 = vpack.c.b16 %v5960, %v5958
        %v6151 = vpack.c.b16 %v5961, %v5959
        %v6152 = vpack.c.b16 %v5964, %v5962
        %v6153 = vpack.c.b16 %v5965, %v5963
        %v6154 = vpack.c.b16 %v5968, %v5966
        %v6155 = vpack.c.b16 %v5969, %v5967
        %v6156 = vpack.c.b16 %v5972, %v5970
        %v6157 = vpack.c.b16 %v5973, %v5971
        %v6158 = vpack.c.b16 %v5976, %v5974
        %v6159 = vpack.c.b16 %v5977, %v5975
        %v6160 = vpack.c.b16 %v5980, %v5978
        %v6161 = vpack.c.b16 %v5981, %v5979
        %v6162 = vpack.c.b16 %v5984, %v5982
        %v6163 = vpack.c.b16 %v5985, %v5983
        %v6164 = vpack.c.b16 %v5988, %v5986
        %v6165 = vpack.c.b16 %v5989, %v5987
        %v6166 = vpack.c.b16 %v5992, %v5990
        %v6167 = vpack.c.b16 %v5993, %v5991
        %v6168 = vpack.c.b16 %v5996, %v5994
        %v6169 = vpack.c.b16 %v5997, %v5995
        %v6170 = vpack.c.b16 %v6000, %v5998
        %v6171 = vpack.c.b16 %v6001, %v5999
        %v6172 = vpack.c.b16 %v6004, %v6002
        %v6173 = vpack.c.b16 %v6005, %v6003
        %v6174 = vpack.c.b16 %v6008, %v6006
        %v6175 = vpack.c.b16 %v6009, %v6007
        %v6176 = vpack.c.b16 %v6012, %v6010
        %v6177 = vpack.c.b16 %v6013, %v6011
        %v6178 = vpack.c.b16 %v6016, %v6014
        %v6179 = vpack.c.b16 %v6017, %v6015
        %v6180 = vpack.c.b16 %v6020, %v6018
        %v6181 = vpack.c.b16 %v6021, %v6019
        %v6182 = vpack.c.b16 %v6024, %v6022
        %v6183 = vpack.c.b16 %v6025, %v6023
        %v6184 = vpack.c.b16 %v6028, %v6026
        %v6185 = vpack.c.b16 %v6029, %v6027
        %v6186 = vpack.c.b16 %v6032, %v6030
        %v6187 = vpack.c.b16 %v6033, %v6031
        %v6188 = vpack.c.b16 %v6036, %v6034
        %v6189 = vpack.c.b16 %v6037, %v6035
        %v6190 = vpack.c.b16 %v6040, %v6038
        %v6191 = vpack.c.b16 %v6041, %v6039
        %v6192 = vpack.c.b16 %v6044, %v6042
        %v6193 = vpack.c.b16 %v6045, %v6043
        %v6194 = vpack.c.b16 %v6048, %v6046
        %v6195 = vpack.c.b16 %v6049, %v6047
        %v6196 = vpack.c.b16 %v6052, %v6050
        %v6197 = vpack.c.b16 %v6053, %v6051
        %6342 = vmatprep.subr.bf16.mxu0 %v6055
        %6343 = vmatpush1.bf16.msra.mxu0 %v6054
        %6344 = vmatprep.subr.bf16.mxu0 %v6057
        %6345 = vmatpush1.bf16.msra.mxu0 %v6056
        %6346 = vmatprep.subr.bf16.mxu0 %v6059
        %6347 = vmatpush1.bf16.msra.mxu0 %v6058
        %6348 = vmatprep.subr.bf16.mxu0 %v6061
        %6349 = vmatpush1.bf16.msra.mxu0 %v6060
        %6350 = vmatprep.subr.bf16.mxu0 %v6063
        %6351 = vmatpush1.bf16.msra.mxu0 %v6062
        %6352 = vmatprep.subr.bf16.mxu0 %v6065
        %6353 = vmatpush1.bf16.msra.mxu0 %v6064
        %6354 = vmatprep.subr.bf16.mxu0 %v6067
        %6355 = vmatpush1.bf16.msra.mxu0 %v6066
        %6356 = vmatprep.subr.bf16.mxu0 %v6069
        %6357 = vmatpush1.bf16.msra.mxu0 %v6068
        %6358 = vmatprep.subr.bf16.mxu0 %v6071
        %6359 = vmatpush1.bf16.msra.mxu0 %v6070
        %6360 = vmatprep.subr.bf16.mxu0 %v6073
        %6361 = vmatpush1.bf16.msra.mxu0 %v6072
        %6362 = vmatprep.subr.bf16.mxu0 %v6075
        %6363 = vmatpush1.bf16.msra.mxu0 %v6074
        %6364 = vmatprep.subr.bf16.mxu0 %v6077
        %6365 = vmatpush1.bf16.msra.mxu0 %v6076
        %6366 = vmatprep.subr.bf16.mxu0 %v6079
        %6367 = vmatpush1.bf16.msra.mxu0 %v6078
        %6368 = vmatprep.subr.bf16.mxu0 %v6081
        %6369 = vmatpush1.bf16.msra.mxu0 %v6080
        %6370 = vmatprep.subr.bf16.mxu0 %v6083
        %6371 = vmatpush1.bf16.msra.mxu0 %v6082
        %6372 = vmatprep.subr.bf16.mxu0 %v6085
        %6373 = vmatpush1.bf16.msra.mxu0 %v6084
        %6374 = vmatprep.mubr.bf16.mxu0 %v5410
        %6375 = vmatmul.mubr.bf16.gmra.mrb[0].mxu0 %v5394
        %v6376 = vpop.f32.mrb[0].mxu0
        %v6377 = vadd.f32 %v5615, %v6376
        %v6378 = vpop.f32.mrb[0].mxu0
        %v6379 = vadd.f32 %v5619, %v6378
        %v6380 = vpop.f32.mrb[0].mxu0
        %v6381 = vadd.f32 %v5615, %v6380
        %v6382 = vpop.f32.mrb[0].mxu0
        %v6383 = vadd.f32 %v5619, %v6382
        %6384 = vmatprep.mubr.bf16.mxu0 %v5411
        %6385 = vmatmul.mubr.bf16.gmra.mrb[0].mxu0 %v5395
        %v6386 = vpop.f32.mrb[0].mxu0
        %v6387 = vadd.f32 %v5615, %v6386
        %v6388 = vpop.f32.mrb[0].mxu0
        %v6389 = vadd.f32 %v5619, %v6388
        %v6390 = vpop.f32.mrb[0].mxu0
        %v6391 = vadd.f32 %v5615, %v6390
        %v6392 = vpop.f32.mrb[0].mxu0
        %v6393 = vadd.f32 %v5619, %v6392
        %6394 = vmatprep.mubr.bf16.mxu0 %v5412
        %6395 = vmatmul.mubr.bf16.gmra.mrb[0].mxu0 %v5396
        %v6396 = vpop.f32.mrb[0].mxu0
        %v6397 = vadd.f32 %v5615, %v6396
        %v6398 = vpop.f32.mrb[0].mxu0
        %v6399 = vadd.f32 %v5619, %v6398
        %v6400 = vpop.f32.mrb[0].mxu0
        %v6401 = vadd.f32 %v5615, %v6400
        %v6402 = vpop.f32.mrb[0].mxu0
        %v6403 = vadd.f32 %v5619, %v6402
        %6404 = vmatprep.mubr.bf16.mxu0 %v5413
        %6405 = vmatmul.mubr.bf16.gmra.mrb[0].mxu0 %v5397
        %v6406 = vpop.f32.mrb[0].mxu0
        %v6407 = vadd.f32 %v5615, %v6406
        %v6408 = vpop.f32.mrb[0].mxu0
        %v6409 = vadd.f32 %v5619, %v6408
        %v6410 = vpop.f32.mrb[0].mxu0
        %v6411 = vadd.f32 %v5615, %v6410
        %v6412 = vpop.f32.mrb[0].mxu0
        %v6413 = vadd.f32 %v5619, %v6412
        %6414 = vdwg.mxu0
        %6415 = vmatprep.subr.bf16.mxu0 %v6087
        %6416 = vmatpush1.bf16.msra.mxu0 %v6086
        %6417 = vmatprep.subr.bf16.mxu0 %v6089
        %6418 = vmatpush1.bf16.msra.mxu0 %v6088
        %6419 = vmatprep.subr.bf16.mxu0 %v6091
        %6420 = vmatpush1.bf16.msra.mxu0 %v6090
        %6421 = vmatprep.subr.bf16.mxu0 %v6093
        %6422 = vmatpush1.bf16.msra.mxu0 %v6092
        %6423 = vmatprep.subr.bf16.mxu0 %v6095
        %6424 = vmatpush1.bf16.msra.mxu0 %v6094
        %6425 = vmatprep.subr.bf16.mxu0 %v6097
        %6426 = vmatpush1.bf16.msra.mxu0 %v6096
        %6427 = vmatprep.subr.bf16.mxu0 %v6099
        %6428 = vmatpush1.bf16.msra.mxu0 %v6098
        %6429 = vmatprep.subr.bf16.mxu0 %v6101
        %6430 = vmatpush1.bf16.msra.mxu0 %v6100
        %6431 = vmatprep.subr.bf16.mxu0 %v6103
        %6432 = vmatpush1.bf16.msra.mxu0 %v6102
        %6433 = vmatprep.subr.bf16.mxu0 %v6105
        %6434 = vmatpush1.bf16.msra.mxu0 %v6104
        %6435 = vmatprep.subr.bf16.mxu0 %v6107
        %6436 = vmatpush1.bf16.msra.mxu0 %v6106
        %6437 = vmatprep.subr.bf16.mxu0 %v6109
        %6438 = vmatpush1.bf16.msra.mxu0 %v6108
        %6439 = vmatprep.subr.bf16.mxu0 %v6111
        %6440 = vmatpush1.bf16.msra.mxu0 %v6110
        %6441 = vmatprep.subr.bf16.mxu0 %v6113
        %6442 = vmatpush1.bf16.msra.mxu0 %v6112
        %6443 = vmatprep.subr.bf16.mxu0 %v6115
        %6444 = vmatpush1.bf16.msra.mxu0 %v6114
        %6445 = vmatprep.subr.bf16.mxu0 %v6117
        %6446 = vmatpush1.bf16.msra.mxu0 %v6116
        %6447 = vmatprep.mubr.bf16.mxu0 %v5434
        %6448 = vmatmul.mubr.bf16.gmra.mrb[0].mxu0 %v5426
        %v6449 = vpop.f32.mrb[0].mxu0
        %v6450 = vadd.f32 %v6377, %v6449
        %v6451 = vpop.f32.mrb[0].mxu0
        %v6452 = vadd.f32 %v6379, %v6451
        %v6453 = vpop.f32.mrb[0].mxu0
        %v6454 = vadd.f32 %v6381, %v6453
        %v6455 = vpop.f32.mrb[0].mxu0
        %v6456 = vadd.f32 %v6383, %v6455
        %6457 = vmatprep.mubr.bf16.mxu0 %v5435
        %6458 = vmatmul.mubr.bf16.gmra.mrb[0].mxu0 %v5427
        %v6459 = vpop.f32.mrb[0].mxu0
        %v6460 = vadd.f32 %v6387, %v6459
        %v6461 = vpop.f32.mrb[0].mxu0
        %v6462 = vadd.f32 %v6389, %v6461
        %v6463 = vpop.f32.mrb[0].mxu0
        %v6464 = vadd.f32 %v6391, %v6463
        %v6465 = vpop.f32.mrb[0].mxu0
        %v6466 = vadd.f32 %v6393, %v6465
        %6467 = vmatprep.mubr.bf16.mxu0 %v5436
        %6468 = vmatmul.mubr.bf16.gmra.mrb[0].mxu0 %v5428
        %v6469 = vpop.f32.mrb[0].mxu0
        %v6470 = vadd.f32 %v6397, %v6469
        %v6471 = vpop.f32.mrb[0].mxu0
        %v6472 = vadd.f32 %v6399, %v6471
        %v6473 = vpop.f32.mrb[0].mxu0
        %v6474 = vadd.f32 %v6401, %v6473
        %v6475 = vpop.f32.mrb[0].mxu0
        %v6476 = vadd.f32 %v6403, %v6475
        %6477 = vmatprep.mubr.bf16.mxu0 %v5437
        %6478 = vmatmul.mubr.bf16.gmra.mrb[0].mxu0 %v5429
        %v6479 = vpop.f32.mrb[0].mxu0
        %v6480 = vadd.f32 %v6407, %v6479
        %v6481 = vpop.f32.mrb[0].mxu0
        %v6482 = vadd.f32 %v6409, %v6481
        %v6483 = vpop.f32.mrb[0].mxu0
        %v6484 = vadd.f32 %v6411, %v6483
        %v6485 = vpop.f32.mrb[0].mxu0
        %v6486 = vadd.f32 %v6413, %v6485
        %6487 = vdwg.mxu0
        %6488 = vmatprep.subr.bf16.mxu0 %v6119
        %6489 = vmatpush1.bf16.msra.mxu0 %v6118
        %6490 = vmatprep.subr.bf16.mxu0 %v6121
        %6491 = vmatpush1.bf16.msra.mxu0 %v6120
        %6492 = vmatprep.subr.bf16.mxu0 %v6123
        %6493 = vmatpush1.bf16.msra.mxu0 %v6122
        %6494 = vmatprep.subr.bf16.mxu0 %v6125
        %6495 = vmatpush1.bf16.msra.mxu0 %v6124
        %6496 = vmatprep.subr.bf16.mxu0 %v6127
        %6497 = vmatpush1.bf16.msra.mxu0 %v6126
        %6498 = vmatprep.subr.bf16.mxu0 %v6129
        %6499 = vmatpush1.bf16.msra.mxu0 %v6128
        %6500 = vmatprep.subr.bf16.mxu0 %v6131
        %6501 = vmatpush1.bf16.msra.mxu0 %v6130
        %6502 = vmatprep.subr.bf16.mxu0 %v6133
        %6503 = vmatpush1.bf16.msra.mxu0 %v6132
        %6504 = vmatprep.subr.bf16.mxu0 %v6135
        %6505 = vmatpush1.bf16.msra.mxu0 %v6134
        %6506 = vmatprep.subr.bf16.mxu0 %v6137
        %6507 = vmatpush1.bf16.msra.mxu0 %v6136
        %6508 = vmatprep.subr.bf16.mxu0 %v6139
        %6509 = vmatpush1.bf16.msra.mxu0 %v6138
        %6510 = vmatprep.subr.bf16.mxu0 %v6141
        %6511 = vmatpush1.bf16.msra.mxu0 %v6140
        %6512 = vmatprep.subr.bf16.mxu0 %v6143
        %6513 = vmatpush1.bf16.msra.mxu0 %v6142
        %6514 = vmatprep.subr.bf16.mxu0 %v6145
        %6515 = vmatpush1.bf16.msra.mxu0 %v6144
        %6516 = vmatprep.subr.bf16.mxu0 %v6147
        %6517 = vmatpush1.bf16.msra.mxu0 %v6146
        %6518 = vmatprep.subr.bf16.mxu0 %v6149
        %6519 = vmatpush1.bf16.msra.mxu0 %v6148
        %6520 = vmatprep.mubr.bf16.mxu0 %v5452
        %6521 = vmatmul.mubr.bf16.gmra.mrb[0].mxu0 %v5443
        %v6522 = vpop.f32.mrb[0].mxu0
        %v6523 = vadd.f32 %v6450, %v6522
        %v6524 = vpop.f32.mrb[0].mxu0
        %v6525 = vadd.f32 %v6452, %v6524
        %v6526 = vpop.f32.mrb[0].mxu0
        %v6527 = vadd.f32 %v6454, %v6526
        %v6528 = vpop.f32.mrb[0].mxu0
        %v6529 = vadd.f32 %v6456, %v6528
        %6530 = vmatprep.mubr.bf16.mxu0 %v5453
        %6531 = vmatmul.mubr.bf16.gmra.mrb[0].mxu0 %v5444
        %v6532 = vpop.f32.mrb[0].mxu0
        %v6533 = vadd.f32 %v6460, %v6532
        %v6534 = vpop.f32.mrb[0].mxu0
        %v6535 = vadd.f32 %v6462, %v6534
        %v6536 = vpop.f32.mrb[0].mxu0
        %v6537 = vadd.f32 %v6464, %v6536
        %v6538 = vpop.f32.mrb[0].mxu0
        %v6539 = vadd.f32 %v6466, %v6538
        %6540 = vmatprep.mubr.bf16.mxu0 %v5454
        %6541 = vmatmul.mubr.bf16.gmra.mrb[0].mxu0 %v5445
        %v6542 = vpop.f32.mrb[0].mxu0
        %v6543 = vadd.f32 %v6470, %v6542
        %v6544 = vpop.f32.mrb[0].mxu0
        %v6545 = vadd.f32 %v6472, %v6544
        %v6546 = vpop.f32.mrb[0].mxu0
        %v6547 = vadd.f32 %v6474, %v6546
        %v6548 = vpop.f32.mrb[0].mxu0
        %v6549 = vadd.f32 %v6476, %v6548
        %6550 = vmatprep.mubr.bf16.mxu0 %v5455
        %6551 = vmatmul.mubr.bf16.gmra.mrb[0].mxu0 %v5446
        %v6552 = vpop.f32.mrb[0].mxu0
        %v6553 = vadd.f32 %v6480, %v6552
        %v6554 = vpop.f32.mrb[0].mxu0
        %v6555 = vadd.f32 %v6482, %v6554
        %v6556 = vpop.f32.mrb[0].mxu0
        %v6557 = vadd.f32 %v6484, %v6556
        %v6558 = vpop.f32.mrb[0].mxu0
        %v6559 = vadd.f32 %v6486, %v6558
        %6560 = vdwg.mxu0
        %6561 = vmatprep.subr.bf16.mxu0 %v6151
        %6562 = vmatpush1.bf16.msra.mxu0 %v6150
        %6563 = vmatprep.subr.bf16.mxu0 %v6153
        %6564 = vmatpush1.bf16.msra.mxu0 %v6152
        %6565 = vmatprep.subr.bf16.mxu0 %v6155
        %6566 = vmatpush1.bf16.msra.mxu0 %v6154
        %6567 = vmatprep.subr.bf16.mxu0 %v6157
        %6568 = vmatpush1.bf16.msra.mxu0 %v6156
        %6569 = vmatprep.subr.bf16.mxu0 %v6159
        %6570 = vmatpush1.bf16.msra.mxu0 %v6158
        %6571 = vmatprep.subr.bf16.mxu0 %v6161
        %6572 = vmatpush1.bf16.msra.mxu0 %v6160
        %6573 = vmatprep.subr.bf16.mxu0 %v6163
        %6574 = vmatpush1.bf16.msra.mxu0 %v6162
        %6575 = vmatprep.subr.bf16.mxu0 %v6165
        %6576 = vmatpush1.bf16.msra.mxu0 %v6164
        %6577 = vmatprep.subr.bf16.mxu0 %v6167
        %6578 = vmatpush1.bf16.msra.mxu0 %v6166
        %6579 = vmatprep.subr.bf16.mxu0 %v6169
        %6580 = vmatpush1.bf16.msra.mxu0 %v6168
        %6581 = vmatprep.subr.bf16.mxu0 %v6171
        %6582 = vmatpush1.bf16.msra.mxu0 %v6170
        %6583 = vmatprep.subr.bf16.mxu0 %v6173
        %6584 = vmatpush1.bf16.msra.mxu0 %v6172
        %6585 = vmatprep.subr.bf16.mxu0 %v6175
        %6586 = vmatpush1.bf16.msra.mxu0 %v6174
        %6587 = vmatprep.subr.bf16.mxu0 %v6177
        %6588 = vmatpush1.bf16.msra.mxu0 %v6176
        %6589 = vmatprep.subr.bf16.mxu0 %v6179
        %6590 = vmatpush1.bf16.msra.mxu0 %v6178
        %6591 = vmatprep.subr.bf16.mxu0 %v6181
        %6592 = vmatpush1.bf16.msra.mxu0 %v6180
        %6593 = vmatprep.mubr.bf16.mxu0 %v5411
        %6594 = vmatmul.mubr.bf16.gmra.mrb[0].mxu0 %v5395
        %v6595 = vpop.f32.mrb[0].mxu0
        %v6596 = vadd.f32 %v6523, %v6595
        %v6597 = vpop.f32.mrb[0].mxu0
        %v6598 = vadd.f32 %v6525, %v6597
        %v6599 = vpop.f32.mrb[0].mxu0
        %v6600 = vadd.f32 %v6527, %v6599
        %v6601 = vpop.f32.mrb[0].mxu0
        %v6602 = vadd.f32 %v6529, %v6601
        %6603 = vmatprep.mubr.bf16.mxu0 %v5412
        %6604 = vmatmul.mubr.bf16.gmra.mrb[0].mxu0 %v5396
        %v6605 = vpop.f32.mrb[0].mxu0
        %v6606 = vadd.f32 %v6533, %v6605
        %v6607 = vpop.f32.mrb[0].mxu0
        %v6608 = vadd.f32 %v6535, %v6607
        %v6609 = vpop.f32.mrb[0].mxu0
        %v6610 = vadd.f32 %v6537, %v6609
        %v6611 = vpop.f32.mrb[0].mxu0
        %v6612 = vadd.f32 %v6539, %v6611
        %6613 = vmatprep.mubr.bf16.mxu0 %v5413
        %6614 = vmatmul.mubr.bf16.gmra.mrb[0].mxu0 %v5397
        %v6615 = vpop.f32.mrb[0].mxu0
        %v6616 = vadd.f32 %v6543, %v6615
        %v6617 = vpop.f32.mrb[0].mxu0
        %v6618 = vadd.f32 %v6545, %v6617
        %v6619 = vpop.f32.mrb[0].mxu0
        %v6620 = vadd.f32 %v6547, %v6619
        %v6621 = vpop.f32.mrb[0].mxu0
        %v6622 = vadd.f32 %v6549, %v6621
        %6623 = vmatprep.mubr.bf16.mxu0 %v5462
        %6624 = vmatmul.mubr.bf16.gmra.mrb[0].mxu0 %v5460
        %v6625 = vpop.f32.mrb[0].mxu0
        %v6626 = vadd.f32 %v6553, %v6625
        %v6627 = vpop.f32.mrb[0].mxu0
        %v6628 = vadd.f32 %v6555, %v6627
        %v6629 = vpop.f32.mrb[0].mxu0
        %v6630 = vadd.f32 %v6557, %v6629
        %v6631 = vpop.f32.mrb[0].mxu0
        %v6632 = vadd.f32 %v6559, %v6631
        %6633 = vdwg.mxu0
        %6634 = vmatprep.subr.bf16.mxu0 %v6183
        %6635 = vmatpush1.bf16.msra.mxu0 %v6182
        %6636 = vmatprep.subr.bf16.mxu0 %v6185
        %6637 = vmatpush1.bf16.msra.mxu0 %v6184
        %6638 = vmatprep.subr.bf16.mxu0 %v6187
        %6639 = vmatpush1.bf16.msra.mxu0 %v6186
        %6640 = vmatprep.subr.bf16.mxu0 %v6189
        %6641 = vmatpush1.bf16.msra.mxu0 %v6188
        %6642 = vmatprep.subr.bf16.mxu0 %v6191
        %6643 = vmatpush1.bf16.msra.mxu0 %v6190
        %6644 = vmatprep.subr.bf16.mxu0 %v6193
        %6645 = vmatpush1.bf16.msra.mxu0 %v6192
        %6646 = vmatprep.subr.bf16.mxu0 %v6195
        %6647 = vmatpush1.bf16.msra.mxu0 %v6194
        %6648 = vmatprep.subr.bf16.mxu0 %v6197
        %6649 = vmatpush1.bf16.msra.mxu0 %v6196
        %6650 = vmatprep.subr.bf16.mxu0 0
        %6651 = vmatpush1.bf16.msra.mxu0 0
        %6652 = vmatprep.subr.bf16.mxu0 0
        %6653 = vmatpush1.bf16.msra.mxu0 0
        %6654 = vmatprep.subr.bf16.mxu0 0
        %6655 = vmatpush1.bf16.msra.mxu0 0
        %6656 = vmatprep.subr.bf16.mxu0 0
        %6657 = vmatpush1.bf16.msra.mxu0 0
        %6658 = vmatprep.subr.bf16.mxu0 0
        %6659 = vmatpush1.bf16.msra.mxu0 0
        %6660 = vmatprep.subr.bf16.mxu0 0
        %6661 = vmatpush1.bf16.msra.mxu0 0
        %6662 = vmatprep.subr.bf16.mxu0 0
        %6663 = vmatpush1.bf16.msra.mxu0 0
        %6664 = vmatprep.subr.bf16.mxu0 0
        %6665 = vmatpush1.bf16.msra.mxu0 0
        %6666 = vmatprep.mubr.bf16.mxu0 0
        %6667 = vmatmul.mubr.bf16.gmra.mrb[0].mxu0 %v5427
        %v6668 = vpop.f32.mrb[0].mxu0
        %v6669 = vadd.f32 %v6596, %v6668
        %v6670 = vpop.f32.mrb[0].mxu0
        %v6671 = vadd.f32 %v6598, %v6670
        %v6672 = vpop.f32.mrb[0].mxu0
        %v6673 = vadd.f32 %v6600, %v6672
        %v6674 = vpop.f32.mrb[0].mxu0
        %v6675 = vadd.f32 %v6602, %v6674
        %6676 = vmatprep.mubr.bf16.mxu0 0
        %6677 = vmatmul.mubr.bf16.gmra.mrb[0].mxu0 %v5428
        %v6678 = vpop.f32.mrb[0].mxu0
        %v6679 = vadd.f32 %v6606, %v6678
        %v6680 = vpop.f32.mrb[0].mxu0
        %v6681 = vadd.f32 %v6608, %v6680
        %v6682 = vpop.f32.mrb[0].mxu0
        %v6683 = vadd.f32 %v6610, %v6682
        %v6684 = vpop.f32.mrb[0].mxu0
        %v6685 = vadd.f32 %v6612, %v6684
        %6686 = vmatprep.mubr.bf16.mxu0 0
        %6687 = vmatmul.mubr.bf16.gmra.mrb[0].mxu0 %v5429
        %v6688 = vpop.f32.mrb[0].mxu0
        %v6689 = vadd.f32 %v6616, %v6688
        %v6690 = vpop.f32.mrb[0].mxu0
        %v6691 = vadd.f32 %v6618, %v6690
        %v6692 = vpop.f32.mrb[0].mxu0
        %v6693 = vadd.f32 %v6620, %v6692
        %v6694 = vpop.f32.mrb[0].mxu0
        %v6695 = vadd.f32 %v6622, %v6694
        %6696 = vmatprep.mubr.bf16.mxu0 0
        %6697 = vmatmul.mubr.bf16.gmra.mrb[0].mxu0 %v5464
        %v6698 = vpop.f32.mrb[0].mxu0
        %v6699 = vadd.f32 %v6626, %v6698
        %v6700 = vpop.f32.mrb[0].mxu0
        %v6701 = vadd.f32 %v6628, %v6700
        %v6702 = vpop.f32.mrb[0].mxu0
        %v6703 = vadd.f32 %v6630, %v6702
        %v6704 = vpop.f32.mrb[0].mxu0
        %v6705 = vadd.f32 %v6632, %v6704
        %6706 = vdwg.mxu0
        %v6707 = vmax.f32 %v6669, 0.0
        %v6708 = vmax.f32 %v6671, 0.0
        %v6709 = vmax.f32 %v6673, 0.0
        %v6710 = vmax.f32 %v6675, 0.0
        %v6711 = vmax.f32 %v6679, 0.0
        %v6712 = vmax.f32 %v6681, 0.0
        %v6713 = vmax.f32 %v6683, 0.0
        %v6714 = vmax.f32 %v6685, 0.0
        %v6715 = vmax.f32 %v6689, 0.0
        %v6716 = vmax.f32 %v6691, 0.0
        %v6717 = vmax.f32 %v6693, 0.0
        %v6718 = vmax.f32 %v6695, 0.0
        %v6719 = vmax.f32 %v6699, 0.0
        %v6720 = vmax.f32 %v6701, 0.0
        %v6721 = vmax.f32 %v6703, 0.0
        %v6722 = vmax.f32 %v6705, 0.0
        %v6723 = vadd.f32 %v6707, %v6709
        %v6724 = vadd.f32 %v6723, %v6711
        %v6725 = vadd.f32 %v6724, %v6713
        %v6726 = vadd.f32 %v6725, %v6715
        %v6727 = vadd.f32 %v6726, %v6717
        %v6728 = vadd.f32 %v6727, %v6719
        %v6729 = vadd.f32 %v6728, %v6721
        %v6730 = vrot.slane %v6729, 4
        %v6731 = vadd.f32 %v6729, %v6730
        %v6732 = vrot.slane %v6731, 2
        %v6733 = vadd.f32 %v6731, %v6732
        %v6734 = vrot.slane %v6733, 1
        %v6735 = vadd.f32 %v6733, %v6734
        %v6736 = vadd.f32 %v6708, %v6710
        %v6737 = vadd.f32 %v6736, %v6712
        %v6738 = vadd.f32 %v6737, %v6714
        %v6739 = vadd.f32 %v6738, %v6716
        %v6740 = vadd.f32 %v6739, %v6718
        %v6741 = vadd.f32 %v6740, %v6720
        %v6742 = vadd.f32 %v6741, %v6722
        %v6743 = vrot.slane %v6742, 4
        %v6744 = vadd.f32 %v6742, %v6743
        %v6745 = vrot.slane %v6744, 2
        %v6746 = vadd.f32 %v6744, %v6745
        %v6747 = vrot.slane %v6746, 1
        %v6748 = vadd.f32 %v6746, %v6747
        %v6749 = vmul.f32 %v6735, 0.015625
        %v6750 = vmul.f32 %v6748, 0.015625
        %v6751 = vld [vmem:[%s15] sm:$0xff]
        %v6752 = vld [vmem:[%s15 + $0x8] sm:$0xff]
        %v6753 = vld [vmem:[%s15 + $0x10] sm:$0xff]
        %v6754 = vld [vmem:[%s15 + $0x18] sm:$0xff]
        %v6755 = vld [vmem:[%s15 + $0x20] sm:$0xff]
        %v6756 = vld [vmem:[%s15 + $0x28] sm:$0xff]
        %v6757 = vld [vmem:[%s15 + $0x30] sm:$0xff]
        %v6758 = vld [vmem:[%s15 + $0x38] sm:$0xff]
        %v6759 = vld [vmem:[%s15 + $0x40] sm:$0xff]
        %v6760 = vld [vmem:[%s15 + $0x48] sm:$0xff]
        %v6761 = vld [vmem:[%s15 + $0x50] sm:$0xff]
        %v6762 = vld [vmem:[%s15 + $0x58] sm:$0xff]
        %v6763 = vld [vmem:[%s15 + $0x60] sm:$0xff]
        %v6764 = vld [vmem:[%s15 + $0x68] sm:$0xff]
        %v6765 = vld [vmem:[%s15 + $0x70] sm:$0xff]
        %v6766 = vld [vmem:[%s15 + $0x78] sm:$0xff]
        %v6767 = vld [vmem:[%s15 + $0x80] sm:$0xff]
        %v6768 = vld [vmem:[%s15 + $0x88] sm:$0xff]
        %v6769 = vld [vmem:[%s15 + $0x90] sm:$0xff]
        %v6770 = vld [vmem:[%s15 + $0x98] sm:$0xff]
        %v6771 = vld [vmem:[%s15 + $0xa0] sm:$0xff]
        %v6772 = vld [vmem:[%s15 + $0xa8] sm:$0xff]
        %v6773 = vld [vmem:[%s15 + $0xb0] sm:$0xff]
        %v6774 = vld [vmem:[%s15 + $0xb8] sm:$0xff]
        %v6775 = vld [vmem:[%s15 + $0xc0] sm:$0xff]
        %v6776 = vld [vmem:[%s15 + $0xc8] sm:$0xff]
        %v6777 = vld [vmem:[%s15 + $0xd0] sm:$0xff]
        %v6778 = vld [vmem:[%s15 + $0xd8] sm:$0xff]
        %v6779 = vld [vmem:[%s15 + $0xe0] sm:$0xff]
        %v6780 = vld [vmem:[%s15 + $0xe8] sm:$0xff]
        %v6781 = vld [vmem:[%s15 + $0xf0] sm:$0xff]
        %v6782 = vld [vmem:[%s15 + $0xf8] sm:$0xff]
        %v6783 = vld [vmem:[%s16] sm:$0x1]
        %6784 = vmatprep.subr.mxu0 0.0
        %6785 = vmatpush1.msra.mxu0 %v6751
        %6786 = vmatprep.subr.mxu0 0.0
        %6787 = vmatpush1.msra.mxu0 %v6752
        %6788 = vmatprep.subr.mxu0 0.0
        %6789 = vmatpush1.msra.mxu0 %v6753
        %6790 = vmatprep.subr.mxu0 0.0
        %6791 = vmatpush1.msra.mxu0 %v6754
        %6792 = vmatprep.subr.mxu0 0.0
        %6793 = vmatpush1.msra.mxu0 %v6755
        %6794 = vmatprep.subr.mxu0 0.0
        %6795 = vmatpush1.msra.mxu0 %v6756
        %6796 = vmatprep.subr.mxu0 0.0
        %6797 = vmatpush1.msra.mxu0 %v6757
        %6798 = vmatprep.subr.mxu0 0.0
        %6799 = vmatpush1.msra.mxu0 %v6758
        %6800 = vmatprep.subr.mxu0 0.0
        %6801 = vmatpush1.msra.mxu0 %v6759
        %6802 = vmatprep.subr.mxu0 0.0
        %6803 = vmatpush1.msra.mxu0 %v6760
        %6804 = vmatprep.subr.mxu0 0.0
        %6805 = vmatpush1.msra.mxu0 %v6761
        %6806 = vmatprep.subr.mxu0 0.0
        %6807 = vmatpush1.msra.mxu0 %v6762
        %6808 = vmatprep.subr.mxu0 0.0
        %6809 = vmatpush1.msra.mxu0 %v6763
        %6810 = vmatprep.subr.mxu0 0.0
        %6811 = vmatpush1.msra.mxu0 %v6764
        %6812 = vmatprep.subr.mxu0 0.0
        %6813 = vmatpush1.msra.mxu0 %v6765
        %6814 = vmatprep.subr.mxu0 0.0
        %6815 = vmatpush1.msra.mxu0 %v6766
        %6816 = vmatprep.subr.mxu0 0.0
        %6817 = vmatpush1.msra.mxu0 %v6767
        %6818 = vmatprep.subr.mxu0 0.0
        %6819 = vmatpush1.msra.mxu0 %v6768
        %6820 = vmatprep.subr.mxu0 0.0
        %6821 = vmatpush1.msra.mxu0 %v6769
        %6822 = vmatprep.subr.mxu0 0.0
        %6823 = vmatpush1.msra.mxu0 %v6770
        %6824 = vmatprep.subr.mxu0 0.0
        %6825 = vmatpush1.msra.mxu0 %v6771
        %6826 = vmatprep.subr.mxu0 0.0
        %6827 = vmatpush1.msra.mxu0 %v6772
        %6828 = vmatprep.subr.mxu0 0.0
        %6829 = vmatpush1.msra.mxu0 %v6773
        %6830 = vmatprep.subr.mxu0 0.0
        %6831 = vmatpush1.msra.mxu0 %v6774
        %6832 = vmatprep.subr.mxu0 0.0
        %6833 = vmatpush1.msra.mxu0 %v6775
        %6834 = vmatprep.subr.mxu0 0.0
        %6835 = vmatpush1.msra.mxu0 %v6776
        %6836 = vmatprep.subr.mxu0 0.0
        %6837 = vmatpush1.msra.mxu0 %v6777
        %6838 = vmatprep.subr.mxu0 0.0
        %6839 = vmatpush1.msra.mxu0 %v6778
        %6840 = vmatprep.subr.mxu0 0.0
        %6841 = vmatpush1.msra.mxu0 %v6779
        %6842 = vmatprep.subr.mxu0 0.0
        %6843 = vmatpush1.msra.mxu0 %v6780
        %6844 = vmatprep.subr.mxu0 0.0
        %6845 = vmatpush1.msra.mxu0 %v6781
        %6846 = vmatprep.subr.mxu0 0.0
        %6847 = vmatpush1.msra.mxu0 %v6782
        %6848 = vmatprep.mubr.f32.mxu0 %v6750
        %6849 = vmatmul.mubr.f32.gmra.mrb[0].mxu0 %v6749
        %v6850 = vpop.f32.mrb[0].mxu0
        %v6851 = vadd.f32 %v6783, %v6850
        %v6852 = vpop.f32.mrb[0].mxu0
        %6853 = vdwg.mxu0
        %v6854 = vmax.f32 %v6851, 0.0
        %v6855 = vld [vmem:[%s17] sm:$0xff]
        %v6856 = vld [vmem:[%s17 + $0x8] sm:$0xff]
        %v6857 = vld [vmem:[%s17 + $0x10] sm:$0xff]
        %v6858 = vld [vmem:[%s17 + $0x18] sm:$0xff]
        %v6859 = vld [vmem:[%s18] sm:$0x3]
        %v6861 = vlaneseq
        %v6862 = vshrl.u32 %v6861, 7
        %v6863 = vsub.s32 0, %v6862
        %v6864 = vrot.slane %v6859, %v6863
        %v6865 = vlaneseq
        %v6866 = vshrl.u32 %v6865, 7
        %v6867 = vsub.s32 1, %v6866
        %v6868 = vrot.slane %v6859, %v6867
        %vm6871 = vcmask 130048
        %v6873 = vsel %vm6871, %v6854, 0
        %6875 = vmatprep.subr.mxu0 %v6856
        %6876 = vmatpush1.msra.mxu0 %v6855
        %6877 = vmatprep.subr.mxu0 %v6858
        %6878 = vmatpush1.msra.mxu0 %v6857
        %6879 = vmatprep.subr.mxu0 0.0
        %6880 = vmatpush1.msra.mxu0 0.0
        %6881 = vmatprep.subr.mxu0 0.0
        %6882 = vmatpush1.msra.mxu0 0.0
        %6883 = vmatprep.subr.mxu0 0.0
        %6884 = vmatpush1.msra.mxu0 0.0
        %6885 = vmatprep.subr.mxu0 0.0
        %6886 = vmatpush1.msra.mxu0 0.0
        %6887 = vmatprep.subr.mxu0 0.0
        %6888 = vmatpush1.msra.mxu0 0.0
        %6889 = vmatprep.subr.mxu0 0.0
        %6890 = vmatpush1.msra.mxu0 0.0
        %6891 = vmatprep.subr.mxu0 0.0
        %6892 = vmatpush1.msra.mxu0 0.0
        %6893 = vmatprep.subr.mxu0 0.0
        %6894 = vmatpush1.msra.mxu0 0.0
        %6895 = vmatprep.subr.mxu0 0.0
        %6896 = vmatpush1.msra.mxu0 0.0
        %6897 = vmatprep.subr.mxu0 0.0
        %6898 = vmatpush1.msra.mxu0 0.0
        %6899 = vmatprep.subr.mxu0 0.0
        %6900 = vmatpush1.msra.mxu0 0.0
        %6901 = vmatprep.subr.mxu0 0.0
        %6902 = vmatpush1.msra.mxu0 0.0
        %6903 = vmatprep.subr.mxu0 0.0
        %6904 = vmatpush1.msra.mxu0 0.0
        %6905 = vmatprep.subr.mxu0 0.0
        %6906 = vmatpush1.msra.mxu0 0.0
        %6907 = vmatprep.subr.mxu0 0.0
        %6908 = vmatpush1.msra.mxu0 0.0
        %6909 = vmatprep.subr.mxu0 0.0
        %6910 = vmatpush1.msra.mxu0 0.0
        %6911 = vmatprep.subr.mxu0 0.0
        %6912 = vmatpush1.msra.mxu0 0.0
        %6913 = vmatprep.subr.mxu0 0.0
        %6914 = vmatpush1.msra.mxu0 0.0
        %6915 = vmatprep.subr.mxu0 0.0
        %6916 = vmatpush1.msra.mxu0 0.0
        %6917 = vmatprep.subr.mxu0 0.0
        %6918 = vmatpush1.msra.mxu0 0.0
        %6919 = vmatprep.subr.mxu0 0.0
        %6920 = vmatpush1.msra.mxu0 0.0
        %6921 = vmatprep.subr.mxu0 0.0
        %6922 = vmatpush1.msra.mxu0 0.0
        %6923 = vmatprep.subr.mxu0 0.0
        %6924 = vmatpush1.msra.mxu0 0.0
        %6925 = vmatprep.subr.mxu0 0.0
        %6926 = vmatpush1.msra.mxu0 0.0
        %6927 = vmatprep.subr.mxu0 0.0
        %6928 = vmatpush1.msra.mxu0 0.0
        %6929 = vmatprep.subr.mxu0 0.0
        %6930 = vmatpush1.msra.mxu0 0.0
        %6931 = vmatprep.subr.mxu0 0.0
        %6932 = vmatpush1.msra.mxu0 0.0
        %6933 = vmatprep.subr.mxu0 0.0
        %6934 = vmatpush1.msra.mxu0 0.0
        %6935 = vmatprep.subr.mxu0 0.0
        %6936 = vmatpush1.msra.mxu0 0.0
        %6937 = vmatprep.subr.mxu0 0.0
        %6938 = vmatpush1.msra.mxu0 0.0
        %6939 = vmatprep.mubr.f32.mxu0 0.0
        %6940 = vmatmul.mubr.f32.gmra.mrb[0].mxu0 %v6873
        %v6941 = vpop.f32.mrb[0].mxu0
        %v6942 = vadd.f32 %v6864, %v6941
        %v6943 = vpop.f32.mrb[0].mxu0
        %v6944 = vadd.f32 %v6868, %v6943
        %6945 = vdwg.mxu0
        %v6946 = vsub.f32 0.0, %v6942
        %v6947 = vsub.f32 0.0, %v6944
        %v6948 = vmul.f32 %v6946, 1.442695
        %v6949 = vpow.pop %v6948
        %v6950 = vmul.f32 %v6947, 1.442695
        %v6951 = vpow.pop %v6950
        %v6952 = vadd.f32 %v6949, 1.0
        %v6953 = vadd.f32 %v6951, 1.0
        %v6954 = vrcp.pop %v6952
        %v6955 = vmul.f32 1.0, %v6954
        %v6956 = vrcp.pop %v6953
        %v6957 = vmul.f32 1.0, %v6956
        %v6958 = vmul.f32 %v6749, %v6955
        %v6959 = vmul.f32 %v6750, %v6957
        %v6960 = vld [vmem:[%s19] sm:$0xff]
        %v6961 = vld [vmem:[%s19 + $0x8] sm:$0xff]
        %v6962 = vld [vmem:[%s19 + $0x10] sm:$0xff]
        %v6963 = vld [vmem:[%s19 + $0x18] sm:$0xff]
        %v6964 = vld [vmem:[%s19 + $0x20] sm:$0xff]
        %v6965 = vld [vmem:[%s19 + $0x28] sm:$0xff]
        %v6966 = vld [vmem:[%s19 + $0x30] sm:$0xff]
        %v6967 = vld [vmem:[%s19 + $0x38] sm:$0xff]
        %v6968 = vld [vmem:[%s19 + $0x40] sm:$0xff]
        %v6969 = vld [vmem:[%s19 + $0x48] sm:$0xff]
        %v6970 = vld [vmem:[%s19 + $0x50] sm:$0xff]
        %v6971 = vld [vmem:[%s19 + $0x58] sm:$0xff]
        %v6972 = vld [vmem:[%s19 + $0x60] sm:$0xff]
        %v6973 = vld [vmem:[%s19 + $0x68] sm:$0xff]
        %v6974 = vld [vmem:[%s19 + $0x70] sm:$0xff]
        %v6975 = vld [vmem:[%s19 + $0x78] sm:$0xff]
        %v6976 = vld [vmem:[%s19 + $0x80] sm:$0xff]
        %v6977 = vld [vmem:[%s19 + $0x88] sm:$0xff]
        %v6978 = vld [vmem:[%s19 + $0x90] sm:$0xff]
        %v6979 = vld [vmem:[%s19 + $0x98] sm:$0xff]
        %v6980 = vld [vmem:[%s19 + $0xa0] sm:$0xff]
        %v6981 = vld [vmem:[%s19 + $0xa8] sm:$0xff]
        %v6982 = vld [vmem:[%s19 + $0xb0] sm:$0xff]
        %v6983 = vld [vmem:[%s19 + $0xb8] sm:$0xff]
        %v6984 = vld [vmem:[%s19 + $0xc0] sm:$0xff]
        %v6985 = vld [vmem:[%s19 + $0xc8] sm:$0xff]
        %v6986 = vld [vmem:[%s19 + $0xd0] sm:$0xff]
        %v6987 = vld [vmem:[%s19 + $0xd8] sm:$0xff]
        %v6988 = vld [vmem:[%s19 + $0xe0] sm:$0xff]
        %v6989 = vld [vmem:[%s19 + $0xe8] sm:$0xff]
        %v6990 = vld [vmem:[%s19 + $0xf0] sm:$0xff]
        %v6991 = vld [vmem:[%s19 + $0xf8] sm:$0xff]
        %v6992 = vld [vmem:[%s20] sm:$0x1]
        %6993 = vmatprep.subr.mxu0 0.0
        %6994 = vmatpush1.msra.mxu0 %v6960
        %6995 = vmatprep.subr.mxu0 0.0
        %6996 = vmatpush1.msra.mxu0 %v6961
        %6997 = vmatprep.subr.mxu0 0.0
        %6998 = vmatpush1.msra.mxu0 %v6962
        %6999 = vmatprep.subr.mxu0 0.0
        %7000 = vmatpush1.msra.mxu0 %v6963
        %7001 = vmatprep.subr.mxu0 0.0
        %7002 = vmatpush1.msra.mxu0 %v6964
        %7003 = vmatprep.subr.mxu0 0.0
        %7004 = vmatpush1.msra.mxu0 %v6965
        %7005 = vmatprep.subr.mxu0 0.0
        %7006 = vmatpush1.msra.mxu0 %v6966
        %7007 = vmatprep.subr.mxu0 0.0
        %7008 = vmatpush1.msra.mxu0 %v6967
        %7009 = vmatprep.subr.mxu0 0.0
        %7010 = vmatpush1.msra.mxu0 %v6968
        %7011 = vmatprep.subr.mxu0 0.0
        %7012 = vmatpush1.msra.mxu0 %v6969
        %7013 = vmatprep.subr.mxu0 0.0
        %7014 = vmatpush1.msra.mxu0 %v6970
        %7015 = vmatprep.subr.mxu0 0.0
        %7016 = vmatpush1.msra.mxu0 %v6971
        %7017 = vmatprep.subr.mxu0 0.0
        %7018 = vmatpush1.msra.mxu0 %v6972
        %7019 = vmatprep.subr.mxu0 0.0
        %7020 = vmatpush1.msra.mxu0 %v6973
        %7021 = vmatprep.subr.mxu0 0.0
        %7022 = vmatpush1.msra.mxu0 %v6974
        %7023 = vmatprep.subr.mxu0 0.0
        %7024 = vmatpush1.msra.mxu0 %v6975
        %7025 = vmatprep.subr.mxu0 0.0
        %7026 = vmatpush1.msra.mxu0 %v6976
        %7027 = vmatprep.subr.mxu0 0.0
        %7028 = vmatpush1.msra.mxu0 %v6977
        %7029 = vmatprep.subr.mxu0 0.0
        %7030 = vmatpush1.msra.mxu0 %v6978
        %7031 = vmatprep.subr.mxu0 0.0
        %7032 = vmatpush1.msra.mxu0 %v6979
        %7033 = vmatprep.subr.mxu0 0.0
        %7034 = vmatpush1.msra.mxu0 %v6980
        %7035 = vmatprep.subr.mxu0 0.0
        %7036 = vmatpush1.msra.mxu0 %v6981
        %7037 = vmatprep.subr.mxu0 0.0
        %7038 = vmatpush1.msra.mxu0 %v6982
        %7039 = vmatprep.subr.mxu0 0.0
        %7040 = vmatpush1.msra.mxu0 %v6983
        %7041 = vmatprep.subr.mxu0 0.0
        %7042 = vmatpush1.msra.mxu0 %v6984
        %7043 = vmatprep.subr.mxu0 0.0
        %7044 = vmatpush1.msra.mxu0 %v6985
        %7045 = vmatprep.subr.mxu0 0.0
        %7046 = vmatpush1.msra.mxu0 %v6986
        %7047 = vmatprep.subr.mxu0 0.0
        %7048 = vmatpush1.msra.mxu0 %v6987
        %7049 = vmatprep.subr.mxu0 0.0
        %7050 = vmatpush1.msra.mxu0 %v6988
        %7051 = vmatprep.subr.mxu0 0.0
        %7052 = vmatpush1.msra.mxu0 %v6989
        %7053 = vmatprep.subr.mxu0 0.0
        %7054 = vmatpush1.msra.mxu0 %v6990
        %7055 = vmatprep.subr.mxu0 0.0
        %7056 = vmatpush1.msra.mxu0 %v6991
        %7057 = vmatprep.mubr.f32.mxu0 %v6959
        %7058 = vmatmul.mubr.f32.gmra.mrb[0].mxu0 %v6958
        %v7059 = vpop.f32.mrb[0].mxu0
        %v7060 = vadd.f32 %v6992, %v7059
        %v7061 = vpop.f32.mrb[0].mxu0
        %7062 = vdwg.mxu0
        %v7063 = vmax.f32 %v7060, 0.0
        %v7064 = vld [vmem:[%s21] sm:$0xff]
        %v7065 = vld [vmem:[%s21 + $0x8] sm:$0xff]
        %v7066 = vld [vmem:[%s21 + $0x10] sm:$0xff]
        %v7067 = vld [vmem:[%s21 + $0x18] sm:$0xff]
        %v7068 = vld [vmem:[%s21 + $0x20] sm:$0xff]
        %v7069 = vld [vmem:[%s21 + $0x28] sm:$0xff]
        %v7070 = vld [vmem:[%s21 + $0x30] sm:$0xff]
        %v7071 = vld [vmem:[%s21 + $0x38] sm:$0xff]
        %v7072 = vld [vmem:[%s21 + $0x40] sm:$0xff]
        %v7073 = vld [vmem:[%s21 + $0x48] sm:$0xff]
        %v7074 = vld [vmem:[%s21 + $0x50] sm:$0xff]
        %v7075 = vld [vmem:[%s21 + $0x58] sm:$0xff]
        %v7076 = vld [vmem:[%s21 + $0x60] sm:$0xff]
        %v7077 = vld [vmem:[%s21 + $0x68] sm:$0xff]
        %v7078 = vld [vmem:[%s21 + $0x70] sm:$0xff]
        %v7079 = vld [vmem:[%s21 + $0x78] sm:$0xff]
        %v7080 = vld [vmem:[%s22] sm:$0x1]
        %7081 = vmatprep.subr.mxu0 0.0
        %7082 = vmatpush1.msra.mxu0 %v7064
        %7083 = vmatprep.subr.mxu0 0.0
        %7084 = vmatpush1.msra.mxu0 %v7065
        %7085 = vmatprep.subr.mxu0 0.0
        %7086 = vmatpush1.msra.mxu0 %v7066
        %7087 = vmatprep.subr.mxu0 0.0
        %7088 = vmatpush1.msra.mxu0 %v7067
        %7089 = vmatprep.subr.mxu0 0.0
        %7090 = vmatpush1.msra.mxu0 %v7068
        %7091 = vmatprep.subr.mxu0 0.0
        %7092 = vmatpush1.msra.mxu0 %v7069
        %7093 = vmatprep.subr.mxu0 0.0
        %7094 = vmatpush1.msra.mxu0 %v7070
        %7095 = vmatprep.subr.mxu0 0.0
        %7096 = vmatpush1.msra.mxu0 %v7071
        %7097 = vmatprep.subr.mxu0 0.0
        %7098 = vmatpush1.msra.mxu0 %v7072
        %7099 = vmatprep.subr.mxu0 0.0
        %7100 = vmatpush1.msra.mxu0 %v7073
        %7101 = vmatprep.subr.mxu0 0.0
        %7102 = vmatpush1.msra.mxu0 %v7074
        %7103 = vmatprep.subr.mxu0 0.0
        %7104 = vmatpush1.msra.mxu0 %v7075
        %7105 = vmatprep.subr.mxu0 0.0
        %7106 = vmatpush1.msra.mxu0 %v7076
        %7107 = vmatprep.subr.mxu0 0.0
        %7108 = vmatpush1.msra.mxu0 %v7077
        %7109 = vmatprep.subr.mxu0 0.0
        %7110 = vmatpush1.msra.mxu0 %v7078
        %7111 = vmatprep.subr.mxu0 0.0
        %7112 = vmatpush1.msra.mxu0 %v7079
        %7113 = vmatprep.subr.mxu0 0.0
        %7114 = vmatpush1.msra.mxu0 0.0
        %7115 = vmatprep.subr.mxu0 0.0
        %7116 = vmatpush1.msra.mxu0 0.0
        %7117 = vmatprep.subr.mxu0 0.0
        %7118 = vmatpush1.msra.mxu0 0.0
        %7119 = vmatprep.subr.mxu0 0.0
        %7120 = vmatpush1.msra.mxu0 0.0
        %7121 = vmatprep.subr.mxu0 0.0
        %7122 = vmatpush1.msra.mxu0 0.0
        %7123 = vmatprep.subr.mxu0 0.0
        %7124 = vmatpush1.msra.mxu0 0.0
        %7125 = vmatprep.subr.mxu0 0.0
        %7126 = vmatpush1.msra.mxu0 0.0
        %7127 = vmatprep.subr.mxu0 0.0
        %7128 = vmatpush1.msra.mxu0 0.0
        %7129 = vmatprep.subr.mxu0 0.0
        %7130 = vmatpush1.msra.mxu0 0.0
        %7131 = vmatprep.subr.mxu0 0.0
        %7132 = vmatpush1.msra.mxu0 0.0
        %7133 = vmatprep.subr.mxu0 0.0
        %7134 = vmatpush1.msra.mxu0 0.0
        %7135 = vmatprep.subr.mxu0 0.0
        %7136 = vmatpush1.msra.mxu0 0.0
        %7137 = vmatprep.subr.mxu0 0.0
        %7138 = vmatpush1.msra.mxu0 0.0
        %7139 = vmatprep.subr.mxu0 0.0
        %7140 = vmatpush1.msra.mxu0 0.0
        %7141 = vmatprep.subr.mxu0 0.0
        %7142 = vmatpush1.msra.mxu0 0.0
        %7143 = vmatprep.subr.mxu0 0.0
        %7144 = vmatpush1.msra.mxu0 0.0
        %7145 = vmatprep.mubr.f32.mxu0 0.0
        %7146 = vmatmul.mubr.f32.gmra.mrb[0].mxu0 %v7063
        %v7147 = vpop.f32.mrb[0].mxu0
        %v7148 = vadd.f32 %v7080, %v7147
        %v7149 = vpop.f32.mrb[0].mxu0
        %7150 = vdwg.mxu0
        %vm7151 = vcmask 16384
        %7152 = vst.msk [vmem:[%s702] sm:$0x1] %vm7151, %v7148
        %s7153 = sand.u32 %s533, 1
        %s7154 = scalar_lea.sflag [#allocation3], %s7153
        %s7155 = sand.u32 %s533, 1
        %s7156 = scalar_lea.vmem [#allocation2], %s7155
        // Predicated region
        $region113: #{multiclass_cnn3_forward.1} parent=111 // pred_check
          %p7157 = pneg %p543
        $region114: #{multiclass_cnn3_forward.1} parent=111 // pred_check_branch
          %7159 = sbr.rel (%p7157) target = $region116
        $region115: #{multiclass_cnn3_forward.1} parent=111 // pred_region
          %s7161 = ssub.s32 16, 16
          %7162 = vsyncadd %s7154, %s7161
          %s7163 = smul.addr %s37, 16
          %s7164 = scalar_lea.hbm %s23, %s7163
          %s7166 = sshll.u32 %s7156, 4
          %s7167 = int_to_ptr.vmem [resolvable:$true] %s7166
          %7169 = dma.vmem_to_hbm [thread:$0]  %s7167, 16, %s7164, %s7154
        $region116: #{multiclass_cnn3_forward.1} parent=111 // pred_fallthru
          _
      $region112: #{multiclass_cnn3_forward.1} parent=5 // pred_fallthru
        _
      %p7170 = scmp.le.s32.totalorder 2, %s32
      // Predicated region
      $region117: #{multiclass_cnn3_forward.1} parent=5 // pred_check
        %p7171 = pneg %p7170
      $region118: #{multiclass_cnn3_forward.1} parent=5 // pred_check_branch
        %7173 = sbr.rel (%p7171) target = $region120
      $region119: #{multiclass_cnn3_forward.1} parent=5 // pred_region
        %s7174 = ssub.s32 %s32, 2
        // Predicated region
        $region121: #{multiclass_cnn3_forward.1} parent=119 // pred_check
          %p7175 = pneg %p549
        $region122: #{multiclass_cnn3_forward.1} parent=119 // pred_check_branch
          %7177 = sbr.rel (%p7175) target = $region124
        $region123: #{multiclass_cnn3_forward.1} parent=119 // pred_region
          %s7178 = sand.u32 %s534, 1
          %s7179 = scalar_lea.sflag [#allocation3], %s7178
          %s7180 = sand.u32 %s534, 1
          %s7181 = scalar_lea.vmem [#allocation2], %s7180
          %7182 = dma.done %s7179, 16
        $region124: #{multiclass_cnn3_forward.1} parent=119 // pred_fallthru
          _
      $region120: #{multiclass_cnn3_forward.1} parent=5 // pred_fallthru
        _
    $region6: #{multiclass_cnn3_forward.1} parent=1 // loop_footer
      %s36 = sadd.s32 1, %s32
    $region7: #{multiclass_cnn3_forward.1} parent=1 // loop_footer_branch
      %31 = sbr.rel target = $region3
    $region8: #{multiclass_cnn3_forward.1} parent=1 // loop_exit
      _
    %7183 = vsyncpa [#allocation3], 1
    %s7184 = scalar_lea.sflag [#allocation3], 1
    %7185 = vsyncpa %s7184, 1

</llo_original>
